<compile_context>
chip_gen: v7x
topology: tpu7x:2x2x1
jax: 0.10.0
libtpu: 0.0.40
codegen_flags: <defaults>
</compile_context>

<pallas_src>
import functools
import math

import jax
import jax.numpy as jnp
from jax.experimental import pallas as pl
from jax.experimental.pallas import tpu as pltpu


# ----------------------------------------------------------------------------
# Kernel: grid = (row tiles i, neighbor tiles j); j is the sequential reduction axis.
# ----------------------------------------------------------------------------
def _bilinear_attn_kernel(adj_ref, mx_ref, klt_ref, wq_ref, wv_ref, bias_ref,
                          out_ref, s_cat_scr, m_scr, l_scr,
                          *, d_ego, d_local, d_global):
    j = pl.program_id(1)
    nj = pl.num_programs(1)

    # ---- once per row tile: fused query-side projection + running-stat init ----------
    @pl.when(j == 0)
    def _init():
        # Column layout of the fused projection (scales / k_global folded in by wrapper):
        #   [0 : d_ego)                  -> ego scores
        #   [d_ego : d_ego + d_local)    -> scaled local queries
        #   [d_ego + d_local : d_cat)    -> global scores
        s_cat = jnp.dot(mx_ref[...], wq_ref[...], preferred_element_type=jnp.float32)
        s_cat_scr[...] = s_cat
        ego_max = jnp.max(s_cat[:, :d_ego], axis=1, keepdims=True)
        glob_max = jnp.max(s_cat[:, d_ego + d_local:], axis=1, keepdims=True)
        m_scr[...] = jnp.maximum(ego_max, glob_max)     # running shared max
        l_scr[...] = jnp.zeros_like(l_scr)              # running masked local exp-sums

    # ---- every (i, j): online softmax accumulation over this neighbor tile -----------
    s_cat = s_cat_scr[...]
    q_l = s_cat[:, d_ego:d_ego + d_local]               # [TI, d_local]  (1/D^2 folded in)
    k_l = klt_ref[...]                                  # [d_local, TJ]  lane-dense keys

    # local_scores[i, h, j] = q_l[i, h] * k_l[h, j]
    s_blk = q_l[:, :, None] * k_l[None, :, :]           # [TI, d_local, TJ]

    m_prev = m_scr[...]                                  # [TI, 1]
    m_blk = jnp.max(jnp.max(s_blk, axis=2), axis=1, keepdims=True)
    m_new = jnp.maximum(m_prev, m_blk)                   # unmasked bound: exact after norm
    alpha = jnp.exp(m_prev - m_new)                      # rescale previous sums

    e_blk = jnp.exp(s_blk - m_new[:, :, None])           # [TI, d_local, TJ]
    mask = adj_ref[...].astype(jnp.float32)              # int8 -> f32, [TI, TJ]
    e_blk = e_blk * mask[:, None, :]                     # multiplicative mask post-exp

    l_scr[...] = l_scr[...] * alpha + jnp.sum(e_blk, axis=2)
    m_scr[...] = m_new

    # ---- once per row tile: join ego/local/global under the shared softmax -----------
    @pl.when(j == nj - 1)
    def _finalize():
        s_fin = s_cat_scr[...]
        m_fin = m_scr[...]
        ego_e = jnp.exp(s_fin[:, :d_ego] - m_fin)                                    # [TI, d_ego]
        glob_e = jnp.exp(s_fin[:, d_ego + d_local:d_ego + d_local + d_global] - m_fin)
        attn = jnp.concatenate([ego_e, l_scr[...], glob_e], axis=1)                  # [TI, d_cat]
        denom = jnp.sum(attn, axis=1, keepdims=True)     # = sum(ego)+sum(local)+sum(global)
        attn = attn * pl.reciprocal(denom, approx=False)
        res = jnp.dot(attn, wv_ref[...], preferred_element_type=jnp.float32)         # [TI, D]
        out_ref[...] = res + bias_ref[...]


# ----------------------------------------------------------------------------
# Wrapper: re-parameterization, scale/k_global folding, padding, pallas_call.
# ----------------------------------------------------------------------------
def bilinear_attention_forward(params, adj_bool, x, masked_x, *, tile_i=128, tile_j=256):
    """Forward of BilinearAttention (dense adjacency, d_global > 0). Returns `res` only."""
    # TODO(synk): score_local_sparse (adj_list) path and the d_global == 0 branch are not
    #             implemented; the (partial results, attention weights) tuples of the
    #             PyTorch forward are not returned.
    assert tile_i % 32 == 0 and tile_j % 128 == 0

    elu = jax.nn.elu
    x = x.astype(jnp.float32)
    mx = masked_x.astype(jnp.float32)
    N, D = x.shape

    d_ego = params["v_ego_w"].shape[1]
    d_local = params["q_local_w"].shape[0]
    d_global = params["q_global_w"].shape[0]
    d_cat = d_ego + d_local + d_global

    inv_d = 1.0 / D
    inv_d2 = inv_d * inv_d

    # Non-negative re-parameterization (ELU + 1), done once on parameters.
    w_ego = elu(params["v_ego_w"]) + 1.0          # [D, d_ego]
    w_ego2 = w_ego + params["v_ego_shift"]        # [D, d_ego]   (NonNegLinear2.weight2)
    wq_l = params["q_local_w"]                    # [d_local, D]
    wk_l = elu(params["k_local_w"]) + 1.0         # [d_local, D]
    wv_l = elu(params["v_local_w"]) + 1.0         # [D, d_local]
    wq_g = params["q_global_w"]                   # [d_global, D]
    wk_g = elu(params["k_global_w"]) + 1.0        # [d_global, D]
    wv_g = elu(params["v_global_w"]) + 1.0        # [D, d_global]
    bias = (elu(params["bias"]) + 1.0).astype(jnp.float32)   # [1, D]

    # Hoisted: x_bar over the true N rows of *unmasked* x (matches PyTorch); the global
    # key is folded directly into the global query weight columns.
    x_bar = jnp.mean(x, axis=0, keepdims=True)    # [1, D]
    k_g = x_bar @ wk_g.T                          # [1, d_global]

    # Fused query-side projection with all 1/D scales folded into the weights.
    wq_cat = jnp.concatenate(
        [w_ego2 * inv_d,                # ego scores   = mx @ (w_ego2 / D)
         wq_l.T * inv_d2,               # local query  = mx @ (Wq_l^T / D^2)
         wq_g.T * (k_g * inv_d2)],      # global score = mx @ (Wq_g^T * k_g / D^2)
        axis=1).astype(jnp.float32)     # [D, d_cat]
    # Fused value-side projection (rows ordered ego | local | global).
    wv_cat = jnp.concatenate([w_ego.T, wv_l.T, wv_g.T], axis=0).astype(jnp.float32)  # [d_cat, D]

    # Precomputed local keys, lane-dense [d_local, N], streamed per neighbor tile.
    k_l_t = jnp.transpose(x @ wk_l.T)             # [d_local, N]

    # Pad the cell axis up to tile multiples (row and neighbor axes independently).
    n_i = pl.cdiv(N, tile_i) * tile_i
    n_j = pl.cdiv(N, tile_j) * tile_j
    mx_p = jnp.pad(mx, ((0, n_i - N), (0, 0)))
    adj_p = jnp.pad(adj_bool.astype(jnp.int8), ((0, n_i - N), (0, n_j - N)))
    klt_p = jnp.pad(k_l_t, ((0, 0), (0, n_j - N)))

    grid = (n_i // tile_i, n_j // tile_j)
    kernel = functools.partial(_bilinear_attn_kernel,
                               d_ego=d_ego, d_local=d_local, d_global=d_global)

    out = pl.pallas_call(
        kernel,
        out_shape=jax.ShapeDtypeStruct((n_i, D), jnp.float32),
        grid_spec=pltpu.PrefetchScalarGridSpec(
            num_scalar_prefetch=0,
            grid=grid,
            in_specs=[
                pl.BlockSpec((tile_i, tile_j), lambda i, j: (i, j)),    # adj (int8)
                pl.BlockSpec((tile_i, D), lambda i, j: (i, 0)),         # masked_x rows
                pl.BlockSpec((d_local, tile_j), lambda i, j: (0, j)),   # local keys^T
                pl.BlockSpec((D, d_cat), lambda i, j: (0, 0)),          # fused q weights
                pl.BlockSpec((d_cat, D), lambda i, j: (0, 0)),          # fused v weights
                pl.BlockSpec((1, D), lambda i, j: (0, 0)),              # bias
            ],
            out_specs=pl.BlockSpec((tile_i, D), lambda i, j: (i, 0)),
            scratch_shapes=[
                pltpu.VMEM((tile_i, d_cat), jnp.float32),   # fused q-side scores
                pltpu.VMEM((tile_i, 1), jnp.float32),       # running shared max
                pltpu.VMEM((tile_i, d_local), jnp.float32), # running local exp-sums
            ]),
        compiler_params=pltpu.CompilerParams(
            dimension_semantics=("parallel", "arbitrary"),
            vmem_limit_bytes=32 * 1024 * 1024),
    )(adj_p, mx_p, klt_p, wq_cat, wv_cat, bias)

    return out[:N]


# ----------------------------------------------------------------------------
# Pure-JAX reference (literal transcription of the PyTorch forward) for checking.
# ----------------------------------------------------------------------------
def spaceformer_reference(params, adj_bool, x, masked_x):
    elu = jax.nn.elu
    N, D = x.shape

    w_ego = elu(params["v_ego_w"]) + 1.0
    w_ego2 = w_ego + params["v_ego_shift"]

    ego_scores = (masked_x @ w_ego2) / D

    q_l = masked_x @ params["q_local_w"].T
    k_l = x @ (elu(params["k_local_w"]) + 1.0).T
    local_scores = q_l.T[:, :, None] * k_l.T[:, None, :] / D / D
    local_scores = jnp.where(adj_bool[None, :, :], local_scores, -1e9)
    local_scores = jnp.transpose(local_scores, (1, 0, 2))

    x_bar = jnp.mean(x, axis=0, keepdims=True)
    q_g = masked_x @ params["q_global_w"].T
    k_g = x_bar @ (elu(params["k_global_w"]) + 1.0).T
    global_scores = q_g.T[:, :, None] * k_g.T[:, None, :] / D / D
    global_scores = jnp.transpose(global_scores, (1, 0, 2))

    max_local = jnp.max(local_scores.reshape(N, -1), axis=1, keepdims=True)
    max_ego = jnp.max(ego_scores, axis=1, keepdims=True)
    max_score = jnp.max(
        jnp.concatenate([global_scores.reshape(N, -1), max_ego, max_local], axis=1),
        axis=1, keepdims=True)

    ego_e = jnp.exp(ego_scores - max_score)
    local_e = jnp.exp(local_scores - max_score[:, :, None])
    local_s = jnp.sum(local_e, axis=-1)
    glob_e = jnp.exp(global_scores - max_score[:, :, None])
    glob_s = jnp.sum(glob_e, axis=-1)

    sum_score = (ego_e.sum(-1, keepdims=True)
                 + local_s.sum(-1, keepdims=True)
                 + glob_s.sum(-1, keepdims=True))

    ego_attn = ego_e / sum_score
    local_attn = local_s / sum_score
    glob_attn = glob_s / sum_score

    ego_res = ego_attn @ w_ego.T
    local_res = local_attn @ (elu(params["v_local_w"]) + 1.0).T
    glob_res = glob_attn @ (elu(params["v_global_w"]) + 1.0).T

    return ego_res + local_res + glob_res + (elu(params["bias"]) + 1.0)


def _make_inputs(key, N, D, d_ego, d_local, d_global):
    ks = jax.random.split(key, 11)
    bound = 1.0 / math.sqrt(D)
    params = {
        "bias":        jnp.zeros((1, D), jnp.float32),
        "v_ego_w":     jax.random.normal(ks[0], (D, d_ego), jnp.float32) - 3.0,
        "v_ego_shift": jax.random.normal(ks[1], (1,), jnp.float32),
        "q_local_w":   jax.random.uniform(ks[2], (d_local, D), jnp.float32, -bound, bound),
        "k_local_w":   jax.random.normal(ks[3], (d_local, D), jnp.float32) - 3.0,
        "v_local_w":   jax.random.normal(ks[4], (D, d_local), jnp.float32) - 3.0,
        "q_global_w":  jax.random.uniform(ks[5], (d_global, D), jnp.float32, -bound, bound),
        "k_global_w":  jax.random.normal(ks[6], (d_global, D), jnp.float32) - 3.0,
        "v_global_w":  jax.random.normal(ks[7], (D, d_global), jnp.float32) - 3.0,
    }
    x = jax.random.uniform(ks[8], (N, D), jnp.float32)
    drop = jax.random.uniform(ks[9], (N, D)) < 0.2
    masked_x = jnp.where(drop, 0.0, x)                                   # SpaceFormer.masking
    adj = (jax.random.uniform(ks[10], (N, N)) < 0.3) | jnp.eye(N, dtype=bool)
    return params, adj, x, masked_x


if __name__ == "__main__":
    key = jax.random.PRNGKey(0)
    k1, k2 = jax.random.split(key)

    # Config 1: tile-aligned shapes; grid (4 row tiles x 2 neighbor tiles) exercises the
    # online shared softmax across neighbor tiles.
    params, adj, x, mx = _make_inputs(k1, N=512, D=128, d_ego=8, d_local=8, d_global=4)
    out = jax.block_until_ready(
        bilinear_attention_forward(params, adj, x, mx, tile_i=128, tile_j=256))
    ref = spaceformer_reference(params, adj, x, mx)
    assert out.shape == ref.shape
    err = float(jnp.max(jnp.abs(out - ref)))
    assert err < 1e-4, f"config 1 mismatch: max abs err = {err}"

    # Config 2: N, D not multiples of the tiles -> exercises the zero-padding path.
    params, adj, x, mx = _make_inputs(k2, N=200, D=64, d_ego=8, d_local=8, d_global=4)
    out = jax.block_until_ready(
        bilinear_attention_forward(params, adj, x, mx, tile_i=128, tile_j=128))
    ref = spaceformer_reference(params, adj, x, mx)
    assert out.shape == ref.shape
    err = float(jnp.max(jnp.abs(out - ref)))
    assert err < 1e-4, f"config 2 mismatch: max abs err = {err}"

    print("KERNEL_OK")
</pallas_src>

<mosaic_0001>
module attributes {stable_mosaic.version = 11 : i64} {
  func.func @_bilinear_attn_kernel(%arg0: i32, %arg1: i32, %arg2: memref<128x256xi8, #tpu.memory_space<vmem>>, %arg3: memref<128x128xf32, #tpu.memory_space<vmem>>, %arg4: memref<8x256xf32, #tpu.memory_space<vmem>>, %arg5: memref<128x20xf32, #tpu.memory_space<vmem>>, %arg6: memref<20x128xf32, #tpu.memory_space<vmem>>, %arg7: memref<1x128xf32, #tpu.memory_space<vmem>>, %arg8: memref<128x128xf32, #tpu.memory_space<vmem>>, %arg9: memref<128x20xf32, #tpu.memory_space<vmem>>, %arg10: memref<128x1xf32, #tpu.memory_space<vmem>>, %arg11: memref<128x8xf32, #tpu.memory_space<vmem>>) attributes {dimension_semantics = [#tpu.dimension_semantics<parallel>, #tpu.dimension_semantics<arbitrary>], iteration_bounds = array<i64: 4, 2>, scalar_prefetch = 0 : i64, scratch_operands = 3 : i64, tpu.core_type = #tpu.core_type<tc>, window_params = [{transform_indices = @transform_0, window_bounds = array<i64: 128, 256>}, {transform_indices = @transform_1, window_bounds = array<i64: 128, 128>}, {transform_indices = @transform_2, window_bounds = array<i64: 8, 256>}, {pipeline_mode = #tpu.pipeline_mode<synchronous>, transform_indices = @transform_3, window_bounds = array<i64: 128, 20>}, {pipeline_mode = #tpu.pipeline_mode<synchronous>, transform_indices = @transform_4, window_bounds = array<i64: 20, 128>}, {pipeline_mode = #tpu.pipeline_mode<synchronous>, transform_indices = @transform_5, window_bounds = array<i64: 1, 128>}, {transform_indices = @transform_6, window_bounds = array<i64: 128, 128>}]} {
    %c0_i32 = arith.constant 0 : i32
    %0 = arith.cmpi eq, %arg1, %c0_i32 : i32
    %1 = arith.extui %0 : i1 to i32
    %c0_i32_0 = arith.constant 0 : i32
    %2 = arith.cmpi ne, %1, %c0_i32_0 : i32
    scf.if %2 {
      %c0_17 = arith.constant 0 : index
      %c0_18 = arith.constant 0 : index
      %37 = vector.load %arg3[%c0_17, %c0_18] : memref<128x128xf32, #tpu.memory_space<vmem>>, vector<128x128xf32>
      %c0_19 = arith.constant 0 : index
      %c0_20 = arith.constant 0 : index
      %38 = vector.load %arg5[%c0_19, %c0_20] : memref<128x20xf32, #tpu.memory_space<vmem>>, vector<128x20xf32>
      %cst_21 = arith.constant dense<0.000000e+00> : vector<128x20xf32>
      %39 = tpu.matmul %37, %38, %cst_21 {dimension_numbers = #tpu.dot_dimension_numbers<[1], [0], [0], [1], [0, 0, 1, 1], [], []>} : vector<128x128xf32>, vector<128x20xf32>, vector<128x20xf32> -> vector<128x20xf32>
      %c0_22 = arith.constant 0 : index
      %c0_23 = arith.constant 0 : index
      %40 = vector.load %arg9[%c0_22, %c0_23] : memref<128x20xf32, #tpu.memory_space<vmem>>, vector<128x20xf32>
      tpu.vector_store %arg9[%c0_22, %c0_23], %39 {strides = array<i32>} : memref<128x20xf32, #tpu.memory_space<vmem>>, vector<128x20xf32>,
      %41 = vector.extract_strided_slice %39 {offsets = [0, 0], sizes = [128, 8], strides = [1, 1]} : vector<128x20xf32> to vector<128x8xf32>
      %cst_24 = arith.constant dense<0xFF800000> : vector<128xf32>
      %42 = vector.multi_reduction <maximumf>, %41, %cst_24 [1] : vector<128x8xf32> to vector<128xf32>
      %43 = vector.shape_cast %42 : vector<128xf32> to vector<128x1xf32>
      %44 = vector.extract_strided_slice %39 {offsets = [0, 16], sizes = [128, 4], strides = [1, 1]} : vector<128x20xf32> to vector<128x4xf32>
      %cst_25 = arith.constant dense<0xFF800000> : vector<128xf32>
      %45 = vector.multi_reduction <maximumf>, %44, %cst_25 [1] : vector<128x4xf32> to vector<128xf32>
      %46 = vector.shape_cast %45 : vector<128xf32> to vector<128x1xf32>
      %47 = arith.maximumf %43, %46 : vector<128x1xf32>
      %c0_26 = arith.constant 0 : index
      %c0_27 = arith.constant 0 : index
      %48 = vector.load %arg10[%c0_26, %c0_27] : memref<128x1xf32, #tpu.memory_space<vmem>>, vector<128x1xf32>
      tpu.vector_store %arg10[%c0_26, %c0_27], %47 {strides = array<i32>} : memref<128x1xf32, #tpu.memory_space<vmem>>, vector<128x1xf32>,
      %cst_28 = arith.constant 0.000000e+00 : f32
      %49 = vector.broadcast %cst_28 : f32 to vector<128x8xf32>
      %c0_29 = arith.constant 0 : index
      %c0_30 = arith.constant 0 : index
      %50 = vector.load %arg11[%c0_29, %c0_30] : memref<128x8xf32, #tpu.memory_space<vmem>>, vector<128x8xf32>
      tpu.vector_store %arg11[%c0_29, %c0_30], %49 {strides = array<i32>} : memref<128x8xf32, #tpu.memory_space<vmem>>, vector<128x8xf32>,
    } else {
    }
    %c0 = arith.constant 0 : index
    %c0_1 = arith.constant 0 : index
    %3 = vector.load %arg9[%c0, %c0_1] : memref<128x20xf32, #tpu.memory_space<vmem>>, vector<128x20xf32>
    %4 = vector.extract_strided_slice %3 {offsets = [0, 8], sizes = [128, 8], strides = [1, 1]} : vector<128x20xf32> to vector<128x8xf32>
    %c0_2 = arith.constant 0 : index
    %c0_3 = arith.constant 0 : index
    %5 = vector.load %arg4[%c0_2, %c0_3] : memref<8x256xf32, #tpu.memory_space<vmem>>, vector<8x256xf32>
    %6 = vector.shape_cast %4 : vector<128x8xf32> to vector<128x8x1xf32>
    %7 = vector.shape_cast %5 : vector<8x256xf32> to vector<1x8x256xf32>
    %8 = vector.broadcast %6 : vector<128x8x1xf32> to vector<128x8x256xf32>
    %9 = vector.broadcast %7 : vector<1x8x256xf32> to vector<128x8x256xf32>
    %10 = arith.mulf %8, %9 : vector<128x8x256xf32>
    %c0_4 = arith.constant 0 : index
    %c0_5 = arith.constant 0 : index
    %11 = vector.load %arg10[%c0_4, %c0_5] : memref<128x1xf32, #tpu.memory_space<vmem>>, vector<128x1xf32>
    %cst = arith.constant dense<0xFF800000> : vector<128x8xf32>
    %12 = vector.multi_reduction <maximumf>, %10, %cst [2] : vector<128x8x256xf32> to vector<128x8xf32>
    %cst_6 = arith.constant dense<0xFF800000> : vector<128xf32>
    %13 = vector.multi_reduction <maximumf>, %12, %cst_6 [1] : vector<128x8xf32> to vector<128xf32>
    %14 = vector.shape_cast %13 : vector<128xf32> to vector<128x1xf32>
    %15 = arith.maximumf %11, %14 : vector<128x1xf32>
    %16 = arith.subf %11, %15 : vector<128x1xf32>
    %17 = math.exp %16 : vector<128x1xf32>
    %18 = vector.shape_cast %15 : vector<128x1xf32> to vector<128x1x1xf32>
    %19 = vector.broadcast %18 : vector<128x1x1xf32> to vector<128x8x256xf32>
    %20 = arith.subf %10, %19 : vector<128x8x256xf32>
    %21 = math.exp %20 : vector<128x8x256xf32>
    %c0_7 = arith.constant 0 : index
    %c0_8 = arith.constant 0 : index
    %22 = vector.load %arg2[%c0_7, %c0_8] : memref<128x256xi8, #tpu.memory_space<vmem>>, vector<128x256xi8>
    %23 = arith.sitofp %22 : vector<128x256xi8> to vector<128x256xf32>
    %24 = vector.shape_cast %23 : vector<128x256xf32> to vector<128x1x256xf32>
    %25 = vector.broadcast %24 : vector<128x1x256xf32> to vector<128x8x256xf32>
    %26 = arith.mulf %21, %25 : vector<128x8x256xf32>
    %c0_9 = arith.constant 0 : index
    %c0_10 = arith.constant 0 : index
    %27 = vector.load %arg11[%c0_9, %c0_10] : memref<128x8xf32, #tpu.memory_space<vmem>>, vector<128x8xf32>
    %28 = vector.broadcast %17 : vector<128x1xf32> to vector<128x8xf32>
    %29 = arith.mulf %27, %28 : vector<128x8xf32>
    %cst_11 = arith.constant dense<0.000000e+00> : vector<128x8xf32>
    %30 = vector.multi_reduction <add>, %26, %cst_11 [2] : vector<128x8x256xf32> to vector<128x8xf32>
    %31 = arith.addf %29, %30 : vector<128x8xf32>
    %c0_12 = arith.constant 0 : index
    %c0_13 = arith.constant 0 : index
    %32 = vector.load %arg11[%c0_12, %c0_13] : memref<128x8xf32, #tpu.memory_space<vmem>>, vector<128x8xf32>
    tpu.vector_store %arg11[%c0_12, %c0_13], %31 {strides = array<i32>} : memref<128x8xf32, #tpu.memory_space<vmem>>, vector<128x8xf32>,
    %c0_14 = arith.constant 0 : index
    %c0_15 = arith.constant 0 : index
    %33 = vector.load %arg10[%c0_14, %c0_15] : memref<128x1xf32, #tpu.memory_space<vmem>>, vector<128x1xf32>
    tpu.vector_store %arg10[%c0_14, %c0_15], %15 {strides = array<i32>} : memref<128x1xf32, #tpu.memory_space<vmem>>, vector<128x1xf32>,
    %c1_i32 = arith.constant 1 : i32
    %34 = arith.cmpi eq, %arg1, %c1_i32 : i32
    %35 = arith.extui %34 : i1 to i32
    %c0_i32_16 = arith.constant 0 : i32
    %36 = arith.cmpi ne, %35, %c0_i32_16 : i32
    scf.if %36 {
      %c0_17 = arith.constant 0 : index
      %c0_18 = arith.constant 0 : index
      %37 = vector.load %arg9[%c0_17, %c0_18] : memref<128x20xf32, #tpu.memory_space<vmem>>, vector<128x20xf32>
      %c0_19 = arith.constant 0 : index
      %c0_20 = arith.constant 0 : index
      %38 = vector.load %arg10[%c0_19, %c0_20] : memref<128x1xf32, #tpu.memory_space<vmem>>, vector<128x1xf32>
      %39 = vector.extract_strided_slice %37 {offsets = [0, 0], sizes = [128, 8], strides = [1, 1]} : vector<128x20xf32> to vector<128x8xf32>
      %40 = vector.broadcast %38 : vector<128x1xf32> to vector<128x8xf32>
      %41 = arith.subf %39, %40 : vector<128x8xf32>
      %42 = math.exp %41 : vector<128x8xf32>
      %43 = vector.extract_strided_slice %37 {offsets = [0, 16], sizes = [128, 4], strides = [1, 1]} : vector<128x20xf32> to vector<128x4xf32>
      %44 = vector.broadcast %38 : vector<128x1xf32> to vector<128x4xf32>
      %45 = arith.subf %43, %44 : vector<128x4xf32>
      %46 = math.exp %45 : vector<128x4xf32>
      %c0_21 = arith.constant 0 : index
      %c0_22 = arith.constant 0 : index
      %47 = vector.load %arg11[%c0_21, %c0_22] : memref<128x8xf32, #tpu.memory_space<vmem>>, vector<128x8xf32>
      %48 = tpu.concatenate %42, %47, %46 in 1 : vector<128x8xf32>, vector<128x8xf32>, vector<128x4xf32> -> vector<128x20xf32>
      %cst_23 = arith.constant dense<0.000000e+00> : vector<128xf32>
      %49 = vector.multi_reduction <add>, %48, %cst_23 [1] : vector<128x20xf32> to vector<128xf32>
      %50 = vector.shape_cast %49 : vector<128xf32> to vector<128x1xf32>
      %51 = tpu.reciprocal %50 : vector<128x1xf32> -> vector<128x1xf32>
      %52 = vector.broadcast %51 : vector<128x1xf32> to vector<128x20xf32>
      %53 = arith.mulf %48, %52 : vector<128x20xf32>
      %c0_24 = arith.constant 0 : index
      %c0_25 = arith.constant 0 : index
      %54 = vector.load %arg6[%c0_24, %c0_25] : memref<20x128xf32, #tpu.memory_space<vmem>>, vector<20x128xf32>
      %cst_26 = arith.constant dense<0.000000e+00> : vector<128x128xf32>
      %55 = tpu.matmul %53, %54, %cst_26 {dimension_numbers = #tpu.dot_dimension_numbers<[1], [0], [0], [1], [0, 0, 1, 1], [], []>} : vector<128x20xf32>, vector<20x128xf32>, vector<128x128xf32> -> vector<128x128xf32>
      %c0_27 = arith.constant 0 : index
      %c0_28 = arith.constant 0 : index
      %56 = vector.load %arg7[%c0_27, %c0_28] : memref<1x128xf32, #tpu.memory_space<vmem>>, vector<1x128xf32>
      %57 = vector.broadcast %56 : vector<1x128xf32> to vector<128x128xf32>
      %58 = arith.addf %55, %57 : vector<128x128xf32>
      %c0_29 = arith.constant 0 : index
      %c0_30 = arith.constant 0 : index
      %59 = vector.load %arg8[%c0_29, %c0_30] : memref<128x128xf32, #tpu.memory_space<vmem>>, vector<128x128xf32>
      tpu.vector_store %arg8[%c0_29, %c0_30], %58 {strides = array<i32>} : memref<128x128xf32, #tpu.memory_space<vmem>>, vector<128x128xf32>,
    } else {
    }
    return
  }
  func.func @transform_0(%arg0: i32, %arg1: i32) -> (i32, i32) {
    %c0_i32 = arith.constant 0 : i32
    return %arg0, %arg1 : i32, i32
  }
  func.func @transform_1(%arg0: i32, %arg1: i32) -> (i32, i32) {
    %c0_i32 = arith.constant 0 : i32
    %c0_i32_0 = arith.constant 0 : i32
    return %arg0, %c0_i32 : i32, i32
  }
  func.func @transform_2(%arg0: i32, %arg1: i32) -> (i32, i32) {
    %c0_i32 = arith.constant 0 : i32
    %c0_i32_0 = arith.constant 0 : i32
    return %c0_i32, %arg1 : i32, i32
  }
  func.func @transform_3(%arg0: i32, %arg1: i32) -> (i32, i32) {
    %c0_i32 = arith.constant 0 : i32
    %c0_i32_0 = arith.constant 0 : i32
    %c0_i32_1 = arith.constant 0 : i32
    return %c0_i32, %c0_i32_0 : i32, i32
  }
  func.func @transform_4(%arg0: i32, %arg1: i32) -> (i32, i32) {
    %c0_i32 = arith.constant 0 : i32
    %c0_i32_0 = arith.constant 0 : i32
    %c0_i32_1 = arith.constant 0 : i32
    return %c0_i32, %c0_i32_0 : i32, i32
  }
  func.func @transform_5(%arg0: i32, %arg1: i32) -> (i32, i32) {
    %c0_i32 = arith.constant 0 : i32
    %c0_i32_0 = arith.constant 0 : i32
    %c0_i32_1 = arith.constant 0 : i32
    return %c0_i32, %c0_i32_0 : i32, i32
  }
  func.func @transform_6(%arg0: i32, %arg1: i32) -> (i32, i32) {
    %c0_i32 = arith.constant 0 : i32
    %c0_i32_0 = arith.constant 0 : i32
    return %arg0, %c0_i32 : i32, i32
  }
}

</mosaic_0001>

<llo_original>
// kernel: tpu_custom_call.1
$region0: #{tpu_custom_call.1}
  #allocation0 [shape = 'u32[]', space=smem, size = 0x4, offset = 0x4, fixed_abs, tag = 'smem constant byte address 0x4 - core index']
  #allocation1 [shape = 'u32[144,128]{1,0:T(1,128)}', space=vmem, size = 0x12000, scoped, tag = 'internal scratch']
  #allocation2 [shape = 'f32[128,20]{1,0:T(8,128)}', space=vmem, size = 0x10000, scoped, tag = 'scratch operand']
  #allocation3 [shape = 'f32[128,1]{1,0:T(8,128)}', space=vmem, size = 0x10000, scoped, tag = 'scratch operand']
  #allocation4 [shape = 'f32[128,8]{1,0:T(8,128)}', space=vmem, size = 0x10000, scoped, tag = 'scratch operand']
  %s0 = inlined_call_operand.hbm [shape: s8[512,512], index: 0, kind: input, shape index: {}]
  %s1 = inlined_call_operand.hbm [shape: f32[512,128], index: 1, kind: input, shape index: {}]
  %s2 = inlined_call_operand.vmem [shape: f32[8,512], index: 2, kind: input, shape index: {}]
  %s3 = inlined_call_operand.vmem [shape: f32[128,20], index: 3, kind: input, shape index: {}]
  %s4 = inlined_call_operand.vmem [shape: f32[20,128], index: 4, kind: input, shape index: {}]
  %s5 = inlined_call_operand.vmem [shape: f32[1,128], index: 5, kind: input, shape index: {}]
  %s6 = inlined_call_operand.hbm [shape: f32[512,128], index: 6, kind: output, shape index: {}]
  %s7 = sld [smem:[#allocation0]]
  $region73: #{tpu_custom_call.1} parent=0
    _
  %s9 = ssub.s32 1, %s7
  %s10 = scalar_select 0, %s9, %s7
  $region1: #{tpu_custom_call.1} parent=0
    #allocation5 [shape = 'u8[65536]{0}', space=vmem, size = 0x10000, scoped, tag = 'input window, operand 0']
    #allocation6 [shape = 's32[2]{0}', space=sflag, size = 0x8, scoped, tag = 'scoped memory for tpu_custom_call.1']
    #allocation7 [shape = 's32[2]{0}', space=sflag, size = 0x8, scoped, tag = 'scoped memory for tpu_custom_call.1']
    #allocation8 [shape = 'u8[131072]{0}', space=vmem, size = 0x20000, scoped, tag = 'input window, operand 1']
    #allocation9 [shape = 's32[2]{0}', space=sflag, size = 0x8, scoped, tag = 'scoped memory for tpu_custom_call.1']
    #allocation10 [shape = 'u8[131072]{0}', space=vmem, size = 0x20000, scoped, tag = 'output window, operand 0']
    %11 = vsyncpa [#allocation6], 0
    %s12 = scalar_lea.sflag [#allocation6], 1
    %13 = vsyncpa %s12, 0
    %14 = vsyncpa [#allocation9], 0
    %s15 = scalar_lea.sflag [#allocation9], 1
    %16 = vsyncpa %s15, 0
    %17 = vsyncpa [#allocation7], 0
    %s18 = scalar_lea.sflag [#allocation7], 1
    %19 = vsyncpa %s18, 0
    loop: start=0, step=1, limit=10
    $region2: #{tpu_custom_call.1} parent=1 // loop_pre_header
      _
    $region3: #{tpu_custom_call.1} parent=1 // loop_header
      %s21 = sphi 0, %s25
      %p22 = scmp.ge.s32.totalorder %s21, 10
      %s28 = sphi 0, %s40
      %s29 = sphi 0, %s36
      %s30 = sphi 0, %s28
      %s31 = sphi 0, %s29
      %s32 = sphi 0, %s30
      %s33 = sphi 0, %s31
      %s45 = sphi 0, %s47
      %s48 = sphi 0, %s45
      %s49 = sphi 0, %s48
      %s65 = sphi 0, %s49
      %s71 = sphi 0, %s73
      %s74 = sphi 0, %s71
      %s75 = sphi 0, %s74
      %s91 = sphi 0, %s75
      %s97 = sphi 0, %s99
      %s100 = sphi 0, %s97
      %s101 = sphi 0, %s100
      %s117 = sphi 0, %s101
      %s121 = sphi 0, %s121
      %s123 = sphi 0, %s121
      %s124 = sphi 0, %s123
      %s138 = sphi 0, %s124
      %s142 = sphi 0, %s142
      %s144 = sphi 0, %s142
      %s145 = sphi 0, %s144
      %s159 = sphi 0, %s145
      %s163 = sphi 0, %s163
      %s165 = sphi 0, %s163
      %s166 = sphi 0, %s165
      %s180 = sphi 0, %s166
      %s186 = sphi 0, %s188
      %s189 = sphi 0, %s186
      %s190 = sphi 0, %s189
      %s206 = sphi 0, %s190
    $region4: #{tpu_custom_call.1} parent=1 // loop_header_branch
      %24 = sbr.rel (%p22) target = $region8
    $region5: #{tpu_custom_call.1} parent=1 // loop_body
      %s26 = ssub.s32 %s21, 1
      %s27 = ssub.s32 %s21, 2
      %s34 = sadd.s32 1, %s29
      %p35 = scmp.ge.s32.totalorder %s34, 2
      %s36 = scalar_select %p35, 0, %s34
      %s37 = sadd.s32 1, %s28
      %s38 = scalar_select %p35, %s37, %s28
      %p39 = scmp.ge.s32.totalorder %s38, 4
      %s40 = scalar_select %p39, 0, %s38
      %s41 = ssub.s32 %s28, %s40
      %s42 = ssub.s32 %s29, %s36
      %s43 = sor.u32 %s41, %s42
      %p44 = scmp.eq.s32.totalorder %s43, 0
      %s46 = sadd.s32 %s45, 1
      %s47 = scalar_select %p44, %s45, %s46
      %p50 = pneg %p44
      %p51 = scmp.eq.s32.totalorder %s21, 7
      %p52 = por %p50, %p51
      %p53 = scmp.ne.s32.totalorder %s45, %s48
      %p54 = scmp.eq.s32.totalorder %s21, 0
      %p55 = por %p53, %p54
      %p56 = scmp.ne.s32.totalorder %s45, %s48
      %p57 = scmp.eq.s32.totalorder %s26, 7
      %p58 = por %p56, %p57
      %p59 = scmp.ne.s32.totalorder %s48, %s49
      %p60 = scmp.eq.s32.totalorder %s26, 0
      %p61 = por %p59, %p60
      %p62 = scmp.ne.s32.totalorder %s48, %s49
      %p63 = scmp.eq.s32.totalorder %s27, 7
      %p64 = por %p62, %p63
      %p66 = scmp.ne.s32.totalorder %s49, %s65
      %p67 = scmp.eq.s32.totalorder %s27, 0
      %p68 = por %p66, %p67
      %s69 = ssub.s32 %s28, %s40
      %p70 = scmp.eq.s32.totalorder %s69, 0
      %s72 = sadd.s32 %s71, 1
      %s73 = scalar_select %p70, %s71, %s72
      %p76 = pneg %p70
      %p77 = scmp.eq.s32.totalorder %s21, 7
      %p78 = por %p76, %p77
      %p79 = scmp.ne.s32.totalorder %s71, %s74
      %p80 = scmp.eq.s32.totalorder %s21, 0
      %p81 = por %p79, %p80
      %p82 = scmp.ne.s32.totalorder %s71, %s74
      %p83 = scmp.eq.s32.totalorder %s26, 7
      %p84 = por %p82, %p83
      %p85 = scmp.ne.s32.totalorder %s74, %s75
      %p86 = scmp.eq.s32.totalorder %s26, 0
      %p87 = por %p85, %p86
      %p88 = scmp.ne.s32.totalorder %s74, %s75
      %p89 = scmp.eq.s32.totalorder %s27, 7
      %p90 = por %p88, %p89
      %p92 = scmp.ne.s32.totalorder %s75, %s91
      %p93 = scmp.eq.s32.totalorder %s27, 0
      %p94 = por %p92, %p93
      %s95 = ssub.s32 %s29, %s36
      %p96 = scmp.eq.s32.totalorder %s95, 0
      %s98 = sadd.s32 %s97, 1
      %s99 = scalar_select %p96, %s97, %s98
      %p102 = pneg %p96
      %p103 = scmp.eq.s32.totalorder %s21, 7
      %p104 = por %p102, %p103
      %p105 = scmp.ne.s32.totalorder %s97, %s100
      %p106 = scmp.eq.s32.totalorder %s21, 0
      %p107 = por %p105, %p106
      %p108 = scmp.ne.s32.totalorder %s97, %s100
      %p109 = scmp.eq.s32.totalorder %s26, 7
      %p110 = por %p108, %p109
      %p111 = scmp.ne.s32.totalorder %s100, %s101
      %p112 = scmp.eq.s32.totalorder %s26, 0
      %p113 = por %p111, %p112
      %p114 = scmp.ne.s32.totalorder %s100, %s101
      %p115 = scmp.eq.s32.totalorder %s27, 7
      %p116 = por %p114, %p115
      %p118 = scmp.ne.s32.totalorder %s101, %s117
      %p119 = scmp.eq.s32.totalorder %s27, 0
      %p120 = por %p118, %p119
      %s122 = sadd.s32 %s121, 1
      %p125 = scmp.eq.s32.totalorder %s21, 7
      %p126 = scmp.ne.s32.totalorder %s121, %s123
      %p127 = scmp.eq.s32.totalorder %s21, 0
      %p128 = por %p126, %p127
      %p129 = scmp.ne.s32.totalorder %s121, %s123
      %p130 = scmp.eq.s32.totalorder %s26, 7
      %p131 = por %p129, %p130
      %p132 = scmp.ne.s32.totalorder %s123, %s124
      %p133 = scmp.eq.s32.totalorder %s26, 0
      %p134 = por %p132, %p133
      %p135 = scmp.ne.s32.totalorder %s123, %s124
      %p136 = scmp.eq.s32.totalorder %s27, 7
      %p137 = por %p135, %p136
      %p139 = scmp.ne.s32.totalorder %s124, %s138
      %p140 = scmp.eq.s32.totalorder %s27, 0
      %p141 = por %p139, %p140
      %s143 = sadd.s32 %s142, 1
      %p146 = scmp.eq.s32.totalorder %s21, 7
      %p147 = scmp.ne.s32.totalorder %s142, %s144
      %p148 = scmp.eq.s32.totalorder %s21, 0
      %p149 = por %p147, %p148
      %p150 = scmp.ne.s32.totalorder %s142, %s144
      %p151 = scmp.eq.s32.totalorder %s26, 7
      %p152 = por %p150, %p151
      %p153 = scmp.ne.s32.totalorder %s144, %s145
      %p154 = scmp.eq.s32.totalorder %s26, 0
      %p155 = por %p153, %p154
      %p156 = scmp.ne.s32.totalorder %s144, %s145
      %p157 = scmp.eq.s32.totalorder %s27, 7
      %p158 = por %p156, %p157
      %p160 = scmp.ne.s32.totalorder %s145, %s159
      %p161 = scmp.eq.s32.totalorder %s27, 0
      %p162 = por %p160, %p161
      %s164 = sadd.s32 %s163, 1
      %p167 = scmp.eq.s32.totalorder %s21, 7
      %p168 = scmp.ne.s32.totalorder %s163, %s165
      %p169 = scmp.eq.s32.totalorder %s21, 0
      %p170 = por %p168, %p169
      %p171 = scmp.ne.s32.totalorder %s163, %s165
      %p172 = scmp.eq.s32.totalorder %s26, 7
      %p173 = por %p171, %p172
      %p174 = scmp.ne.s32.totalorder %s165, %s166
      %p175 = scmp.eq.s32.totalorder %s26, 0
      %p176 = por %p174, %p175
      %p177 = scmp.ne.s32.totalorder %s165, %s166
      %p178 = scmp.eq.s32.totalorder %s27, 7
      %p179 = por %p177, %p178
      %p181 = scmp.ne.s32.totalorder %s166, %s180
      %p182 = scmp.eq.s32.totalorder %s27, 0
      %p183 = por %p181, %p182
      %s184 = ssub.s32 %s28, %s40
      %p185 = scmp.eq.s32.totalorder %s184, 0
      %s187 = sadd.s32 %s186, 1
      %s188 = scalar_select %p185, %s186, %s187
      %p191 = pneg %p185
      %p192 = scmp.eq.s32.totalorder %s21, 7
      %p193 = por %p191, %p192
      %p194 = scmp.ne.s32.totalorder %s186, %s189
      %p195 = scmp.eq.s32.totalorder %s21, 0
      %p196 = por %p194, %p195
      %p197 = scmp.ne.s32.totalorder %s186, %s189
      %p198 = scmp.eq.s32.totalorder %s26, 7
      %p199 = por %p197, %p198
      %p200 = scmp.ne.s32.totalorder %s189, %s190
      %p201 = scmp.eq.s32.totalorder %s26, 0
      %p202 = por %p200, %p201
      %p203 = scmp.ne.s32.totalorder %s189, %s190
      %p204 = scmp.eq.s32.totalorder %s27, 7
      %p205 = por %p203, %p204
      %p207 = scmp.ne.s32.totalorder %s190, %s206
      %p208 = scmp.eq.s32.totalorder %s27, 0
      %p209 = por %p207, %p208
      %p210 = scmp.le.s32.totalorder 1, %s21
      %p211 = scmp.lt.s32.totalorder %s21, 9
      %p212 = pnand %p210, %p211
      %p213 = pneg %p212
      // Predicated region
      $region9: #{tpu_custom_call.1} parent=5 // pred_check
        _
      $region10: #{tpu_custom_call.1} parent=5 // pred_check_branch
        %215 = sbr.rel (%p212) target = $region12
      $region11: #{tpu_custom_call.1} parent=5 // pred_region
        %s216 = ssub.s32 %s21, 1
        // Predicated region
        $region13: #{tpu_custom_call.1} parent=11 // pred_check
          %p217 = pneg %p134
        $region14: #{tpu_custom_call.1} parent=11 // pred_check_branch
          %219 = sbr.rel (%p217) target = $region16
        $region15: #{tpu_custom_call.1} parent=11 // pred_region
          _
        $region16: #{tpu_custom_call.1} parent=11 // pred_fallthru
          _
        // Predicated region
        $region17: #{tpu_custom_call.1} parent=11 // pred_check
          %p220 = pneg %p155
        $region18: #{tpu_custom_call.1} parent=11 // pred_check_branch
          %222 = sbr.rel (%p220) target = $region20
        $region19: #{tpu_custom_call.1} parent=11 // pred_region
          _
        $region20: #{tpu_custom_call.1} parent=11 // pred_fallthru
          _
        // Predicated region
        $region21: #{tpu_custom_call.1} parent=11 // pred_check
          %p223 = pneg %p176
        $region22: #{tpu_custom_call.1} parent=11 // pred_check_branch
          %225 = sbr.rel (%p223) target = $region24
        $region23: #{tpu_custom_call.1} parent=11 // pred_region
          _
        $region24: #{tpu_custom_call.1} parent=11 // pred_fallthru
          _
      $region12: #{tpu_custom_call.1} parent=5 // pred_fallthru
        _
      %p226 = scmp.lt.s32.totalorder %s21, 8
      // Predicated region
      $region25: #{tpu_custom_call.1} parent=5 // pred_check
        %p227 = pneg %p226
      $region26: #{tpu_custom_call.1} parent=5 // pred_check_branch
        %229 = sbr.rel (%p227) target = $region28
      $region27: #{tpu_custom_call.1} parent=5 // pred_region
        // Predicated region
        $region29: #{tpu_custom_call.1} parent=27 // pred_check
          %p230 = pneg %p55
        $region30: #{tpu_custom_call.1} parent=27 // pred_check_branch
          %232 = sbr.rel (%p230) target = $region32
        $region31: #{tpu_custom_call.1} parent=27 // pred_region
          %s233 = sand.u32 %s45, 1
          %s234 = scalar_lea.sflag [#allocation6], %s233
          %s235 = sand.u32 %s45, 1
          %s236 = smul.addr %s235, 64
          %s237 = scalar_lea.vmem [#allocation5], %s236
          %s238 = smul.u32 4, %s28
          %s239 = smul.u32 2, %s29
          %s241 = ssub.s32 1024, 1024
          %242 = vsyncadd %s234, %s241
          %s243 = smul.addr %s238, 4
          %s244 = sadd.s32 %s239, %s243
          %s245 = smul.addr %s244, 128
          %s246 = scalar_lea.hbm %s0, %s245
          %s247 = sshll.u32 %s237, 4
          %s248 = int_to_ptr.vmem [resolvable:$true] %s247
          %253 = dma.hbm_to_vmem [thread:$0]  %s246, 1024, %s248, %s234, 512, 256, 16
        $region32: #{tpu_custom_call.1} parent=27 // pred_fallthru
          _
        // Predicated region
        $region33: #{tpu_custom_call.1} parent=27 // pred_check
          %p254 = pneg %p81
        $region34: #{tpu_custom_call.1} parent=27 // pred_check_branch
          %256 = sbr.rel (%p254) target = $region36
        $region35: #{tpu_custom_call.1} parent=27 // pred_region
          %s257 = sand.u32 %s71, 1
          %s258 = scalar_lea.sflag [#allocation9], %s257
          %s259 = sand.u32 %s71, 1
          %s260 = smul.addr %s259, 128
          %s261 = scalar_lea.vmem [#allocation8], %s260
          %s262 = smul.u32 16, %s28
          %s264 = ssub.s32 2048, 2048
          %265 = vsyncadd %s258, %s264
          %s266 = smul.addr %s262, 128
          %s267 = scalar_lea.hbm %s1, %s266
          %s268 = sshll.u32 %s261, 4
          %s269 = int_to_ptr.vmem [resolvable:$true] %s268
          %274 = dma.hbm_to_vmem [thread:$0]  %s267, 2048, %s269, %s258, 128, 128, 8
        $region36: #{tpu_custom_call.1} parent=27 // pred_fallthru
          _
        // Predicated region
        $region37: #{tpu_custom_call.1} parent=27 // pred_check
          %p275 = pneg %p107
        $region38: #{tpu_custom_call.1} parent=27 // pred_check_branch
          %277 = sbr.rel (%p275) target = $region40
        $region39: #{tpu_custom_call.1} parent=27 // pred_region
          %s278 = smul.u32 2, %s29
          %p279 = scmp.lt.s32.totalorder %s278, 3
          %s280 = scalar_select %p279, %s278, 3
          %s281 = smul.addr %s280, 8
          %s282 = scalar_lea.vmem %s2, %s281
          %s283 = smul.u32 2, %s29
        $region40: #{tpu_custom_call.1} parent=27 // pred_fallthru
          _
      $region28: #{tpu_custom_call.1} parent=5 // pred_fallthru
        _
      %p284 = scmp.le.s32.totalorder 1, %s21
      %p285 = scmp.lt.s32.totalorder %s21, 9
      %p286 = pnand %p284, %p285
      %p287 = pneg %p286
      // Predicated region
      $region41: #{tpu_custom_call.1} parent=5 // pred_check
        _
      $region42: #{tpu_custom_call.1} parent=5 // pred_check_branch
        %289 = sbr.rel (%p286) target = $region44
      $region43: #{tpu_custom_call.1} parent=5 // pred_region
        %s290 = ssub.s32 %s21, 1
        %s291 = sand.u32 %s48, 1
        %s292 = scalar_lea.sflag [#allocation6], %s291
        %s293 = sand.u32 %s48, 1
        %s294 = smul.addr %s293, 64
        %s295 = scalar_lea.vmem [#allocation5], %s294
        // Predicated region
        $region45: #{tpu_custom_call.1} parent=43 // pred_check
          %p296 = pneg %p61
        $region46: #{tpu_custom_call.1} parent=43 // pred_check_branch
          %298 = sbr.rel (%p296) target = $region48
        $region47: #{tpu_custom_call.1} parent=43 // pred_region
          %299 = dma.done %s292, 1024
        $region48: #{tpu_custom_call.1} parent=43 // pred_fallthru
          _
        %s300 = sand.u32 %s74, 1
        %s301 = scalar_lea.sflag [#allocation9], %s300
        %s302 = sand.u32 %s74, 1
        %s303 = smul.addr %s302, 128
        %s304 = scalar_lea.vmem [#allocation8], %s303
        // Predicated region
        $region49: #{tpu_custom_call.1} parent=43 // pred_check
          %p305 = pneg %p87
        $region50: #{tpu_custom_call.1} parent=43 // pred_check_branch
          %307 = sbr.rel (%p305) target = $region52
        $region51: #{tpu_custom_call.1} parent=43 // pred_region
          %308 = dma.done %s301, 2048
        $region52: #{tpu_custom_call.1} parent=43 // pred_fallthru
          _
        %s309 = sand.u32 %s48, 1
        %s310 = scalar_lea.sflag [#allocation6], %s309
        %s311 = sand.u32 %s48, 1
        %s312 = smul.addr %s311, 64
        %s313 = scalar_lea.vmem [#allocation5], %s312
        %p314 = pneg %p61
        %p315 = pneg %p58
        %s316 = sand.u32 %s74, 1
        %s317 = scalar_lea.sflag [#allocation9], %s316
        %s318 = sand.u32 %s74, 1
        %s319 = smul.addr %s318, 128
        %s320 = scalar_lea.vmem [#allocation8], %s319
        %p321 = pneg %p87
        %p322 = pneg %p84
        %s323 = smul.u32 2, %s31
        %p324 = scmp.lt.s32.totalorder %s323, 3
        %s325 = scalar_select %p324, %s323, 3
        %s326 = smul.addr %s325, 8
        %s327 = scalar_lea.vmem %s2, %s326
        %p328 = pneg %p113
        %p329 = pneg %p110
        %p330 = pneg %p134
        %p331 = pneg %p131
        %p332 = pneg %p155
        %p333 = pneg %p152
        %p334 = pneg %p176
        %p335 = pneg %p173
        %p336 = pneg %p202
        %p337 = pneg %p199
        %s338 = sand.u32 %s189, 1
        %s339 = scalar_lea.sflag [#allocation7], %s338
        %s340 = sand.u32 %s189, 1
        %s341 = smul.addr %s340, 128
        %s342 = scalar_lea.vmem [#allocation10], %s341
        %s343 = smul.u32 4, %s30
        %s344 = smul.u32 2, %s31
        %s345 = smul.u32 16, %s30
        %s346 = smul.u32 2, %s31
        %p347 = scmp.lt.s32.totalorder %s346, 3
        %s348 = scalar_select %p347, %s346, 3
        %s349 = smul.addr %s348, 8
        %s350 = scalar_lea.vmem %s2, %s349
        %s351 = smul.u32 2, %s31
        %s352 = smul.u32 16, %s30
        %p353 = scmp.eq.s32.totalorder %s31, 0
        // Predicated region
        $region53: #{tpu_custom_call.1} parent=43 // pred_check
          %p354 = pneg %p353
        $region54: #{tpu_custom_call.1} parent=43 // pred_check_branch
          %356 = sbr.rel (%p354) target = $region56
        $region55: #{tpu_custom_call.1} parent=43 // pred_region
          %v357 = vld [vmem:[%s304] sm:$0xff]
          %v358 = vld [vmem:[%s304 + $0x8] sm:$0xff]
          %v359 = vld [vmem:[%s304 + $0x10] sm:$0xff]
          %v360 = vld [vmem:[%s304 + $0x18] sm:$0xff]
          %v361 = vld [vmem:[%s304 + $0x20] sm:$0xff]
          %v362 = vld [vmem:[%s304 + $0x28] sm:$0xff]
          %v363 = vld [vmem:[%s304 + $0x30] sm:$0xff]
          %v364 = vld [vmem:[%s304 + $0x38] sm:$0xff]
          %v365 = vld [vmem:[%s304 + $0x40] sm:$0xff]
          %v366 = vld [vmem:[%s304 + $0x48] sm:$0xff]
          %v367 = vld [vmem:[%s304 + $0x50] sm:$0xff]
          %v368 = vld [vmem:[%s304 + $0x58] sm:$0xff]
          %v369 = vld [vmem:[%s304 + $0x60] sm:$0xff]
          %v370 = vld [vmem:[%s304 + $0x68] sm:$0xff]
          %v371 = vld [vmem:[%s304 + $0x70] sm:$0xff]
          %v372 = vld [vmem:[%s304 + $0x78] sm:$0xff]
          %v373 = vld [vmem:[%s3] sm:$0xff]
          %v374 = vld [vmem:[%s3 + $0x8] sm:$0xff]
          %v375 = vld [vmem:[%s3 + $0x10] sm:$0xff]
          %v376 = vld [vmem:[%s3 + $0x18] sm:$0xff]
          %v377 = vld [vmem:[%s3 + $0x20] sm:$0xff]
          %v378 = vld [vmem:[%s3 + $0x28] sm:$0xff]
          %v379 = vld [vmem:[%s3 + $0x30] sm:$0xff]
          %v380 = vld [vmem:[%s3 + $0x38] sm:$0xff]
          %v381 = vld [vmem:[%s3 + $0x40] sm:$0xff]
          %v382 = vld [vmem:[%s3 + $0x48] sm:$0xff]
          %v383 = vld [vmem:[%s3 + $0x50] sm:$0xff]
          %v384 = vld [vmem:[%s3 + $0x58] sm:$0xff]
          %v385 = vld [vmem:[%s3 + $0x60] sm:$0xff]
          %v386 = vld [vmem:[%s3 + $0x68] sm:$0xff]
          %v387 = vld [vmem:[%s3 + $0x70] sm:$0xff]
          %v388 = vld [vmem:[%s3 + $0x78] sm:$0xff]
          %389 = vmatprep.subr.mxu0 0.0
          %390 = vmatpush1.msra.mxu0 %v373
          %391 = vmatprep.subr.mxu0 0.0
          %392 = vmatpush1.msra.mxu0 %v374
          %393 = vmatprep.subr.mxu0 0.0
          %394 = vmatpush1.msra.mxu0 %v375
          %395 = vmatprep.subr.mxu0 0.0
          %396 = vmatpush1.msra.mxu0 %v376
          %397 = vmatprep.subr.mxu0 0.0
          %398 = vmatpush1.msra.mxu0 %v377
          %399 = vmatprep.subr.mxu0 0.0
          %400 = vmatpush1.msra.mxu0 %v378
          %401 = vmatprep.subr.mxu0 0.0
          %402 = vmatpush1.msra.mxu0 %v379
          %403 = vmatprep.subr.mxu0 0.0
          %404 = vmatpush1.msra.mxu0 %v380
          %405 = vmatprep.subr.mxu0 0.0
          %406 = vmatpush1.msra.mxu0 %v381
          %407 = vmatprep.subr.mxu0 0.0
          %408 = vmatpush1.msra.mxu0 %v382
          %409 = vmatprep.subr.mxu0 0.0
          %410 = vmatpush1.msra.mxu0 %v383
          %411 = vmatprep.subr.mxu0 0.0
          %412 = vmatpush1.msra.mxu0 %v384
          %413 = vmatprep.subr.mxu0 0.0
          %414 = vmatpush1.msra.mxu0 %v385
          %415 = vmatprep.subr.mxu0 0.0
          %416 = vmatpush1.msra.mxu0 %v386
          %417 = vmatprep.subr.mxu0 0.0
          %418 = vmatpush1.msra.mxu0 %v387
          %419 = vmatprep.subr.mxu0 0.0
          %420 = vmatpush1.msra.mxu0 %v388
          %421 = vmatprep.subr.mxu0 0.0
          %422 = vmatpush1.msra.mxu0 0.0
          %423 = vmatprep.subr.mxu0 0.0
          %424 = vmatpush1.msra.mxu0 0.0
          %425 = vmatprep.subr.mxu0 0.0
          %426 = vmatpush1.msra.mxu0 0.0
          %427 = vmatprep.subr.mxu0 0.0
          %428 = vmatpush1.msra.mxu0 0.0
          %429 = vmatprep.subr.mxu0 0.0
          %430 = vmatpush1.msra.mxu0 0.0
          %431 = vmatprep.subr.mxu0 0.0
          %432 = vmatpush1.msra.mxu0 0.0
          %433 = vmatprep.subr.mxu0 0.0
          %434 = vmatpush1.msra.mxu0 0.0
          %435 = vmatprep.subr.mxu0 0.0
          %436 = vmatpush1.msra.mxu0 0.0
          %437 = vmatprep.subr.mxu0 0.0
          %438 = vmatpush1.msra.mxu0 0.0
          %439 = vmatprep.subr.mxu0 0.0
          %440 = vmatpush1.msra.mxu0 0.0
          %441 = vmatprep.subr.mxu0 0.0
          %442 = vmatpush1.msra.mxu0 0.0
          %443 = vmatprep.subr.mxu0 0.0
          %444 = vmatpush1.msra.mxu0 0.0
          %445 = vmatprep.subr.mxu0 0.0
          %446 = vmatpush1.msra.mxu0 0.0
          %447 = vmatprep.subr.mxu0 0.0
          %448 = vmatpush1.msra.mxu0 0.0
          %449 = vmatprep.subr.mxu0 0.0
          %450 = vmatpush1.msra.mxu0 0.0
          %451 = vmatprep.subr.mxu0 0.0
          %452 = vmatpush1.msra.mxu0 0.0
          %453 = vmatprep.mubr.f32.mxu0 0.0
          %454 = vmatmul.mubr.f32.gmra.mrb[0].mxu0 %v357
          %v455 = vpop.f32.mrb[0].mxu0
          %v456 = vadd.f32 0.0, %v455
          %v457 = vpop.f32.mrb[0].mxu0
          %458 = vmatprep.mubr.f32.mxu0 0.0
          %459 = vmatmul.mubr.f32.gmra.mrb[0].mxu0 %v358
          %v460 = vpop.f32.mrb[0].mxu0
          %v461 = vadd.f32 0.0, %v460
          %v462 = vpop.f32.mrb[0].mxu0
          %463 = vmatprep.mubr.f32.mxu0 0.0
          %464 = vmatmul.mubr.f32.gmra.mrb[0].mxu0 %v359
          %v465 = vpop.f32.mrb[0].mxu0
          %v466 = vadd.f32 0.0, %v465
          %v467 = vpop.f32.mrb[0].mxu0
          %468 = vmatprep.mubr.f32.mxu0 0.0
          %469 = vmatmul.mubr.f32.gmra.mrb[0].mxu0 %v360
          %v470 = vpop.f32.mrb[0].mxu0
          %v471 = vadd.f32 0.0, %v470
          %v472 = vpop.f32.mrb[0].mxu0
          %473 = vmatprep.mubr.f32.mxu0 0.0
          %474 = vmatmul.mubr.f32.gmra.mrb[0].mxu0 %v361
          %v475 = vpop.f32.mrb[0].mxu0
          %v476 = vadd.f32 0.0, %v475
          %v477 = vpop.f32.mrb[0].mxu0
          %478 = vmatprep.mubr.f32.mxu0 0.0
          %479 = vmatmul.mubr.f32.gmra.mrb[0].mxu0 %v362
          %v480 = vpop.f32.mrb[0].mxu0
          %v481 = vadd.f32 0.0, %v480
          %v482 = vpop.f32.mrb[0].mxu0
          %483 = vmatprep.mubr.f32.mxu0 0.0
          %484 = vmatmul.mubr.f32.gmra.mrb[0].mxu0 %v363
          %v485 = vpop.f32.mrb[0].mxu0
          %v486 = vadd.f32 0.0, %v485
          %v487 = vpop.f32.mrb[0].mxu0
          %488 = vmatprep.mubr.f32.mxu0 0.0
          %489 = vmatmul.mubr.f32.gmra.mrb[0].mxu0 %v364
          %v490 = vpop.f32.mrb[0].mxu0
          %v491 = vadd.f32 0.0, %v490
          %v492 = vpop.f32.mrb[0].mxu0
          %493 = vmatprep.mubr.f32.mxu0 0.0
          %494 = vmatmul.mubr.f32.gmra.mrb[0].mxu0 %v365
          %v495 = vpop.f32.mrb[0].mxu0
          %v496 = vadd.f32 0.0, %v495
          %v497 = vpop.f32.mrb[0].mxu0
          %498 = vmatprep.mubr.f32.mxu0 0.0
          %499 = vmatmul.mubr.f32.gmra.mrb[0].mxu0 %v366
          %v500 = vpop.f32.mrb[0].mxu0
          %v501 = vadd.f32 0.0, %v500
          %v502 = vpop.f32.mrb[0].mxu0
          %503 = vmatprep.mubr.f32.mxu0 0.0
          %504 = vmatmul.mubr.f32.gmra.mrb[0].mxu0 %v367
          %v505 = vpop.f32.mrb[0].mxu0
          %v506 = vadd.f32 0.0, %v505
          %v507 = vpop.f32.mrb[0].mxu0
          %508 = vmatprep.mubr.f32.mxu0 0.0
          %509 = vmatmul.mubr.f32.gmra.mrb[0].mxu0 %v368
          %v510 = vpop.f32.mrb[0].mxu0
          %v511 = vadd.f32 0.0, %v510
          %v512 = vpop.f32.mrb[0].mxu0
          %513 = vmatprep.mubr.f32.mxu0 0.0
          %514 = vmatmul.mubr.f32.gmra.mrb[0].mxu0 %v369
          %v515 = vpop.f32.mrb[0].mxu0
          %v516 = vadd.f32 0.0, %v515
          %v517 = vpop.f32.mrb[0].mxu0
          %518 = vmatprep.mubr.f32.mxu0 0.0
          %519 = vmatmul.mubr.f32.gmra.mrb[0].mxu0 %v370
          %v520 = vpop.f32.mrb[0].mxu0
          %v521 = vadd.f32 0.0, %v520
          %v522 = vpop.f32.mrb[0].mxu0
          %523 = vmatprep.mubr.f32.mxu0 0.0
          %524 = vmatmul.mubr.f32.gmra.mrb[0].mxu0 %v371
          %v525 = vpop.f32.mrb[0].mxu0
          %v526 = vadd.f32 0.0, %v525
          %v527 = vpop.f32.mrb[0].mxu0
          %528 = vmatprep.mubr.f32.mxu0 0.0
          %529 = vmatmul.mubr.f32.gmra.mrb[0].mxu0 %v372
          %v530 = vpop.f32.mrb[0].mxu0
          %v531 = vadd.f32 0.0, %v530
          %v532 = vpop.f32.mrb[0].mxu0
          %533 = vdwg.mxu0
          %vm534 = vcmask 162816
          %535 = vst.msk [vmem:[#allocation2] sm:$0xff] %vm534, %v456
          %536 = vst.msk [vmem:[#allocation2 + $0x8] sm:$0xff] %vm534, %v461
          %537 = vst.msk [vmem:[#allocation2 + $0x10] sm:$0xff] %vm534, %v466
          %538 = vst.msk [vmem:[#allocation2 + $0x18] sm:$0xff] %vm534, %v471
          %539 = vst.msk [vmem:[#allocation2 + $0x20] sm:$0xff] %vm534, %v476
          %540 = vst.msk [vmem:[#allocation2 + $0x28] sm:$0xff] %vm534, %v481
          %541 = vst.msk [vmem:[#allocation2 + $0x30] sm:$0xff] %vm534, %v486
          %542 = vst.msk [vmem:[#allocation2 + $0x38] sm:$0xff] %vm534, %v491
          %543 = vst.msk [vmem:[#allocation2 + $0x40] sm:$0xff] %vm534, %v496
          %544 = vst.msk [vmem:[#allocation2 + $0x48] sm:$0xff] %vm534, %v501
          %545 = vst.msk [vmem:[#allocation2 + $0x50] sm:$0xff] %vm534, %v506
          %546 = vst.msk [vmem:[#allocation2 + $0x58] sm:$0xff] %vm534, %v511
          %547 = vst.msk [vmem:[#allocation2 + $0x60] sm:$0xff] %vm534, %v516
          %548 = vst.msk [vmem:[#allocation2 + $0x68] sm:$0xff] %vm534, %v521
          %549 = vst.msk [vmem:[#allocation2 + $0x70] sm:$0xff] %vm534, %v526
          %550 = vst.msk [vmem:[#allocation2 + $0x78] sm:$0xff] %vm534, %v531
          %vm551 = vcmask 64512
          %v552 = vsel %vm551, %v456, -inf
          %553 = vmax.xlane.f32.xlu0 %v552
          %v554 = vpop.xlane.xlu0 %553
          %v555 = vsel %vm551, %v461, -inf
          %556 = vmax.xlane.f32.xlu0 %v555
          %v557 = vpop.xlane.xlu0 %556
          %v558 = vsel %vm551, %v466, -inf
          %559 = vmax.xlane.f32.xlu0 %v558
          %v560 = vpop.xlane.xlu0 %559
          %v561 = vsel %vm551, %v471, -inf
          %562 = vmax.xlane.f32.xlu0 %v561
          %v563 = vpop.xlane.xlu0 %562
          %v564 = vsel %vm551, %v476, -inf
          %565 = vmax.xlane.f32.xlu0 %v564
          %v566 = vpop.xlane.xlu0 %565
          %v567 = vsel %vm551, %v481, -inf
          %568 = vmax.xlane.f32.xlu0 %v567
          %v569 = vpop.xlane.xlu0 %568
          %v570 = vsel %vm551, %v486, -inf
          %571 = vmax.xlane.f32.xlu0 %v570
          %v572 = vpop.xlane.xlu0 %571
          %v573 = vsel %vm551, %v491, -inf
          %574 = vmax.xlane.f32.xlu0 %v573
          %v575 = vpop.xlane.xlu0 %574
          %v576 = vsel %vm551, %v496, -inf
          %577 = vmax.xlane.f32.xlu0 %v576
          %v578 = vpop.xlane.xlu0 %577
          %v579 = vsel %vm551, %v501, -inf
          %580 = vmax.xlane.f32.xlu0 %v579
          %v581 = vpop.xlane.xlu0 %580
          %v582 = vsel %vm551, %v506, -inf
          %583 = vmax.xlane.f32.xlu0 %v582
          %v584 = vpop.xlane.xlu0 %583
          %v585 = vsel %vm551, %v511, -inf
          %586 = vmax.xlane.f32.xlu0 %v585
          %v587 = vpop.xlane.xlu0 %586
          %v588 = vsel %vm551, %v516, -inf
          %589 = vmax.xlane.f32.xlu0 %v588
          %v590 = vpop.xlane.xlu0 %589
          %v591 = vsel %vm551, %v521, -inf
          %592 = vmax.xlane.f32.xlu0 %v591
          %v593 = vpop.xlane.xlu0 %592
          %v594 = vsel %vm551, %v526, -inf
          %595 = vmax.xlane.f32.xlu0 %v594
          %v596 = vpop.xlane.xlu0 %595
          %v597 = vsel %vm551, %v531, -inf
          %598 = vmax.xlane.f32.xlu0 %v597
          %v599 = vpop.xlane.xlu0 %598
          %vm600 = vcmask 162944
          %v601 = vsel %vm600, %v456, -inf
          %602 = vmax.xlane.f32.xlu0 %v601
          %v603 = vpop.xlane.xlu0 %602
          %v604 = vsel %vm600, %v461, -inf
          %605 = vmax.xlane.f32.xlu0 %v604
          %v606 = vpop.xlane.xlu0 %605
          %v607 = vsel %vm600, %v466, -inf
          %608 = vmax.xlane.f32.xlu0 %v607
          %v609 = vpop.xlane.xlu0 %608
          %v610 = vsel %vm600, %v471, -inf
          %611 = vmax.xlane.f32.xlu0 %v610
          %v612 = vpop.xlane.xlu0 %611
          %v613 = vsel %vm600, %v476, -inf
          %614 = vmax.xlane.f32.xlu0 %v613
          %v615 = vpop.xlane.xlu0 %614
          %v616 = vsel %vm600, %v481, -inf
          %617 = vmax.xlane.f32.xlu0 %v616
          %v618 = vpop.xlane.xlu0 %617
          %v619 = vsel %vm600, %v486, -inf
          %620 = vmax.xlane.f32.xlu0 %v619
          %v621 = vpop.xlane.xlu0 %620
          %v622 = vsel %vm600, %v491, -inf
          %623 = vmax.xlane.f32.xlu0 %v622
          %v624 = vpop.xlane.xlu0 %623
          %v625 = vsel %vm600, %v496, -inf
          %626 = vmax.xlane.f32.xlu0 %v625
          %v627 = vpop.xlane.xlu0 %626
          %v628 = vsel %vm600, %v501, -inf
          %629 = vmax.xlane.f32.xlu0 %v628
          %v630 = vpop.xlane.xlu0 %629
          %v631 = vsel %vm600, %v506, -inf
          %632 = vmax.xlane.f32.xlu0 %v631
          %v633 = vpop.xlane.xlu0 %632
          %v634 = vsel %vm600, %v511, -inf
          %635 = vmax.xlane.f32.xlu0 %v634
          %v636 = vpop.xlane.xlu0 %635
          %v637 = vsel %vm600, %v516, -inf
          %638 = vmax.xlane.f32.xlu0 %v637
          %v639 = vpop.xlane.xlu0 %638
          %v640 = vsel %vm600, %v521, -inf
          %641 = vmax.xlane.f32.xlu0 %v640
          %v642 = vpop.xlane.xlu0 %641
          %v643 = vsel %vm600, %v526, -inf
          %644 = vmax.xlane.f32.xlu0 %v643
          %v645 = vpop.xlane.xlu0 %644
          %v646 = vsel %vm600, %v531, -inf
          %647 = vmax.xlane.f32.xlu0 %v646
          %v648 = vpop.xlane.xlu0 %647
          %v649 = vmax.f32 %v554, %v603
          %v650 = vmax.f32 %v557, %v606
          %v651 = vmax.f32 %v560, %v609
          %v652 = vmax.f32 %v563, %v612
          %v653 = vmax.f32 %v566, %v615
          %v654 = vmax.f32 %v569, %v618
          %v655 = vmax.f32 %v572, %v621
          %v656 = vmax.f32 %v575, %v624
          %v657 = vmax.f32 %v578, %v627
          %v658 = vmax.f32 %v581, %v630
          %v659 = vmax.f32 %v584, %v633
          %v660 = vmax.f32 %v587, %v636
          %v661 = vmax.f32 %v590, %v639
          %v662 = vmax.f32 %v593, %v642
          %v663 = vmax.f32 %v596, %v645
          %v664 = vmax.f32 %v599, %v648
          %vm665 = vcmask 7168
          %666 = vst.msk [vmem:[#allocation3] sm:$0xff] %vm665, %v649
          %667 = vst.msk [vmem:[#allocation3 + $0x8] sm:$0xff] %vm665, %v650
          %668 = vst.msk [vmem:[#allocation3 + $0x10] sm:$0xff] %vm665, %v651
          %669 = vst.msk [vmem:[#allocation3 + $0x18] sm:$0xff] %vm665, %v652
          %670 = vst.msk [vmem:[#allocation3 + $0x20] sm:$0xff] %vm665, %v653
          %671 = vst.msk [vmem:[#allocation3 + $0x28] sm:$0xff] %vm665, %v654
          %672 = vst.msk [vmem:[#allocation3 + $0x30] sm:$0xff] %vm665, %v655
          %673 = vst.msk [vmem:[#allocation3 + $0x38] sm:$0xff] %vm665, %v656
          %674 = vst.msk [vmem:[#allocation3 + $0x40] sm:$0xff] %vm665, %v657
          %675 = vst.msk [vmem:[#allocation3 + $0x48] sm:$0xff] %vm665, %v658
          %676 = vst.msk [vmem:[#allocation3 + $0x50] sm:$0xff] %vm665, %v659
          %677 = vst.msk [vmem:[#allocation3 + $0x58] sm:$0xff] %vm665, %v660
          %678 = vst.msk [vmem:[#allocation3 + $0x60] sm:$0xff] %vm665, %v661
          %679 = vst.msk [vmem:[#allocation3 + $0x68] sm:$0xff] %vm665, %v662
          %680 = vst.msk [vmem:[#allocation3 + $0x70] sm:$0xff] %vm665, %v663
          %681 = vst.msk [vmem:[#allocation3 + $0x78] sm:$0xff] %vm665, %v664
          %682 = vst.msk [vmem:[#allocation4] sm:$0xff] %vm551, 0.0
          %683 = vst.msk [vmem:[#allocation4 + $0x8] sm:$0xff] %vm551, 0.0
          %684 = vst.msk [vmem:[#allocation4 + $0x10] sm:$0xff] %vm551, 0.0
          %685 = vst.msk [vmem:[#allocation4 + $0x18] sm:$0xff] %vm551, 0.0
          %686 = vst.msk [vmem:[#allocation4 + $0x20] sm:$0xff] %vm551, 0.0
          %687 = vst.msk [vmem:[#allocation4 + $0x28] sm:$0xff] %vm551, 0.0
          %688 = vst.msk [vmem:[#allocation4 + $0x30] sm:$0xff] %vm551, 0.0
          %689 = vst.msk [vmem:[#allocation4 + $0x38] sm:$0xff] %vm551, 0.0
          %690 = vst.msk [vmem:[#allocation4 + $0x40] sm:$0xff] %vm551, 0.0
          %691 = vst.msk [vmem:[#allocation4 + $0x48] sm:$0xff] %vm551, 0.0
          %692 = vst.msk [vmem:[#allocation4 + $0x50] sm:$0xff] %vm551, 0.0
          %693 = vst.msk [vmem:[#allocation4 + $0x58] sm:$0xff] %vm551, 0.0
          %694 = vst.msk [vmem:[#allocation4 + $0x60] sm:$0xff] %vm551, 0.0
          %695 = vst.msk [vmem:[#allocation4 + $0x68] sm:$0xff] %vm551, 0.0
          %696 = vst.msk [vmem:[#allocation4 + $0x70] sm:$0xff] %vm551, 0.0
          %697 = vst.msk [vmem:[#allocation4 + $0x78] sm:$0xff] %vm551, 0.0
        $region56: #{tpu_custom_call.1} parent=43 // pred_fallthru
          _
        %v698 = vld [vmem:[#allocation2] sm:$0xff]
        %v699 = vld [vmem:[#allocation2 + $0x8] sm:$0xff]
        %v700 = vld [vmem:[#allocation2 + $0x10] sm:$0xff]
        %v701 = vld [vmem:[#allocation2 + $0x18] sm:$0xff]
        %v702 = vld [vmem:[#allocation2 + $0x20] sm:$0xff]
        %v703 = vld [vmem:[#allocation2 + $0x28] sm:$0xff]
        %v704 = vld [vmem:[#allocation2 + $0x30] sm:$0xff]
        %v705 = vld [vmem:[#allocation2 + $0x38] sm:$0xff]
        %v706 = vld [vmem:[#allocation2 + $0x40] sm:$0xff]
        %v707 = vld [vmem:[#allocation2 + $0x48] sm:$0xff]
        %v708 = vld [vmem:[#allocation2 + $0x50] sm:$0xff]
        %v709 = vld [vmem:[#allocation2 + $0x58] sm:$0xff]
        %v710 = vld [vmem:[#allocation2 + $0x60] sm:$0xff]
        %v711 = vld [vmem:[#allocation2 + $0x68] sm:$0xff]
        %v712 = vld [vmem:[#allocation2 + $0x70] sm:$0xff]
        %v713 = vld [vmem:[#allocation2 + $0x78] sm:$0xff]
        %v714 = vld [vmem:[%s350] sm:$0xff]
        %v715 = vld [vmem:[%s350 + $0x8] sm:$0xff]
        %v716 = vlaneseq
        %v717 = vshrl.u32 %v716, 7
        %v718 = vsub.s32 0, %v717
        %v719 = vrot.slane %v698, %v718
        %s721 = sor.u32 256, 8
        %722 = vbcast.lane.b32.xlu0 %v719, %s721
        %v723 = vpop.permute.xlu0 %722
        %v724 = vlaneseq
        %v725 = vshrl.u32 %v724, 7
        %v726 = vsub.s32 1, %v725
        %v727 = vrot.slane %v698, %v726
        %s729 = sor.u32 256, 8
        %730 = vbcast.lane.b32.xlu0 %v727, %s729
        %v731 = vpop.permute.xlu0 %730
        %v732 = vlaneseq
        %v733 = vshrl.u32 %v732, 7
        %v734 = vsub.s32 2, %v733
        %v735 = vrot.slane %v698, %v734
        %s737 = sor.u32 256, 8
        %738 = vbcast.lane.b32.xlu0 %v735, %s737
        %v739 = vpop.permute.xlu0 %738
        %v740 = vlaneseq
        %v741 = vshrl.u32 %v740, 7
        %v742 = vsub.s32 3, %v741
        %v743 = vrot.slane %v698, %v742
        %s745 = sor.u32 256, 8
        %746 = vbcast.lane.b32.xlu0 %v743, %s745
        %v747 = vpop.permute.xlu0 %746
        %v748 = vlaneseq
        %v749 = vshrl.u32 %v748, 7
        %v750 = vsub.s32 4, %v749
        %v751 = vrot.slane %v698, %v750
        %s753 = sor.u32 256, 8
        %754 = vbcast.lane.b32.xlu0 %v751, %s753
        %v755 = vpop.permute.xlu0 %754
        %v756 = vlaneseq
        %v757 = vshrl.u32 %v756, 7
        %v758 = vsub.s32 5, %v757
        %v759 = vrot.slane %v698, %v758
        %s761 = sor.u32 256, 8
        %762 = vbcast.lane.b32.xlu0 %v759, %s761
        %v763 = vpop.permute.xlu0 %762
        %v764 = vlaneseq
        %v765 = vshrl.u32 %v764, 7
        %v766 = vsub.s32 6, %v765
        %v767 = vrot.slane %v698, %v766
        %s769 = sor.u32 256, 8
        %770 = vbcast.lane.b32.xlu0 %v767, %s769
        %v771 = vpop.permute.xlu0 %770
        %v772 = vlaneseq
        %v773 = vshrl.u32 %v772, 7
        %v774 = vsub.s32 7, %v773
        %v775 = vrot.slane %v698, %v774
        %s777 = sor.u32 256, 8
        %778 = vbcast.lane.b32.xlu0 %v775, %s777
        %v779 = vpop.permute.xlu0 %778
        %v780 = vlaneseq
        %v781 = vshrl.u32 %v780, 7
        %v782 = vsub.s32 0, %v781
        %v783 = vrot.slane %v699, %v782
        %s785 = sor.u32 256, 8
        %786 = vbcast.lane.b32.xlu0 %v783, %s785
        %v787 = vpop.permute.xlu0 %786
        %v788 = vlaneseq
        %v789 = vshrl.u32 %v788, 7
        %v790 = vsub.s32 1, %v789
        %v791 = vrot.slane %v699, %v790
        %s793 = sor.u32 256, 8
        %794 = vbcast.lane.b32.xlu0 %v791, %s793
        %v795 = vpop.permute.xlu0 %794
        %v796 = vlaneseq
        %v797 = vshrl.u32 %v796, 7
        %v798 = vsub.s32 2, %v797
        %v799 = vrot.slane %v699, %v798
        %s801 = sor.u32 256, 8
        %802 = vbcast.lane.b32.xlu0 %v799, %s801
        %v803 = vpop.permute.xlu0 %802
        %v804 = vlaneseq
        %v805 = vshrl.u32 %v804, 7
        %v806 = vsub.s32 3, %v805
        %v807 = vrot.slane %v699, %v806
        %s809 = sor.u32 256, 8
        %810 = vbcast.lane.b32.xlu0 %v807, %s809
        %v811 = vpop.permute.xlu0 %810
        %v812 = vlaneseq
        %v813 = vshrl.u32 %v812, 7
        %v814 = vsub.s32 4, %v813
        %v815 = vrot.slane %v699, %v814
        %s817 = sor.u32 256, 8
        %818 = vbcast.lane.b32.xlu0 %v815, %s817
        %v819 = vpop.permute.xlu0 %818
        %v820 = vlaneseq
        %v821 = vshrl.u32 %v820, 7
        %v822 = vsub.s32 5, %v821
        %v823 = vrot.slane %v699, %v822
        %s825 = sor.u32 256, 8
        %826 = vbcast.lane.b32.xlu0 %v823, %s825
        %v827 = vpop.permute.xlu0 %826
        %v828 = vlaneseq
        %v829 = vshrl.u32 %v828, 7
        %v830 = vsub.s32 6, %v829
        %v831 = vrot.slane %v699, %v830
        %s833 = sor.u32 256, 8
        %834 = vbcast.lane.b32.xlu0 %v831, %s833
        %v835 = vpop.permute.xlu0 %834
        %v836 = vlaneseq
        %v837 = vshrl.u32 %v836, 7
        %v838 = vsub.s32 7, %v837
        %v839 = vrot.slane %v699, %v838
        %s841 = sor.u32 256, 8
        %842 = vbcast.lane.b32.xlu0 %v839, %s841
        %v843 = vpop.permute.xlu0 %842
        %v844 = vlaneseq
        %v845 = vshrl.u32 %v844, 7
        %v846 = vsub.s32 0, %v845
        %v847 = vrot.slane %v700, %v846
        %s849 = sor.u32 256, 8
        %850 = vbcast.lane.b32.xlu0 %v847, %s849
        %v851 = vpop.permute.xlu0 %850
        %v852 = vlaneseq
        %v853 = vshrl.u32 %v852, 7
        %v854 = vsub.s32 1, %v853
        %v855 = vrot.slane %v700, %v854
        %s857 = sor.u32 256, 8
        %858 = vbcast.lane.b32.xlu0 %v855, %s857
        %v859 = vpop.permute.xlu0 %858
        %v860 = vlaneseq
        %v861 = vshrl.u32 %v860, 7
        %v862 = vsub.s32 2, %v861
        %v863 = vrot.slane %v700, %v862
        %s865 = sor.u32 256, 8
        %866 = vbcast.lane.b32.xlu0 %v863, %s865
        %v867 = vpop.permute.xlu0 %866
        %v868 = vlaneseq
        %v869 = vshrl.u32 %v868, 7
        %v870 = vsub.s32 3, %v869
        %v871 = vrot.slane %v700, %v870
        %s873 = sor.u32 256, 8
        %874 = vbcast.lane.b32.xlu0 %v871, %s873
        %v875 = vpop.permute.xlu0 %874
        %v876 = vlaneseq
        %v877 = vshrl.u32 %v876, 7
        %v878 = vsub.s32 4, %v877
        %v879 = vrot.slane %v700, %v878
        %s881 = sor.u32 256, 8
        %882 = vbcast.lane.b32.xlu0 %v879, %s881
        %v883 = vpop.permute.xlu0 %882
        %v884 = vlaneseq
        %v885 = vshrl.u32 %v884, 7
        %v886 = vsub.s32 5, %v885
        %v887 = vrot.slane %v700, %v886
        %s889 = sor.u32 256, 8
        %890 = vbcast.lane.b32.xlu0 %v887, %s889
        %v891 = vpop.permute.xlu0 %890
        %v892 = vlaneseq
        %v893 = vshrl.u32 %v892, 7
        %v894 = vsub.s32 6, %v893
        %v895 = vrot.slane %v700, %v894
        %s897 = sor.u32 256, 8
        %898 = vbcast.lane.b32.xlu0 %v895, %s897
        %v899 = vpop.permute.xlu0 %898
        %v900 = vlaneseq
        %v901 = vshrl.u32 %v900, 7
        %v902 = vsub.s32 7, %v901
        %v903 = vrot.slane %v700, %v902
        %s905 = sor.u32 256, 8
        %906 = vbcast.lane.b32.xlu0 %v903, %s905
        %v907 = vpop.permute.xlu0 %906
        %v908 = vlaneseq
        %v909 = vshrl.u32 %v908, 7
        %v910 = vsub.s32 0, %v909
        %v911 = vrot.slane %v701, %v910
        %s913 = sor.u32 256, 8
        %914 = vbcast.lane.b32.xlu0 %v911, %s913
        %v915 = vpop.permute.xlu0 %914
        %v916 = vlaneseq
        %v917 = vshrl.u32 %v916, 7
        %v918 = vsub.s32 1, %v917
        %v919 = vrot.slane %v701, %v918
        %s921 = sor.u32 256, 8
        %922 = vbcast.lane.b32.xlu0 %v919, %s921
        %v923 = vpop.permute.xlu0 %922
        %v924 = vlaneseq
        %v925 = vshrl.u32 %v924, 7
        %v926 = vsub.s32 2, %v925
        %v927 = vrot.slane %v701, %v926
        %s929 = sor.u32 256, 8
        %930 = vbcast.lane.b32.xlu0 %v927, %s929
        %v931 = vpop.permute.xlu0 %930
        %v932 = vlaneseq
        %v933 = vshrl.u32 %v932, 7
        %v934 = vsub.s32 3, %v933
        %v935 = vrot.slane %v701, %v934
        %s937 = sor.u32 256, 8
        %938 = vbcast.lane.b32.xlu0 %v935, %s937
        %v939 = vpop.permute.xlu0 %938
        %v940 = vlaneseq
        %v941 = vshrl.u32 %v940, 7
        %v942 = vsub.s32 4, %v941
        %v943 = vrot.slane %v701, %v942
        %s945 = sor.u32 256, 8
        %946 = vbcast.lane.b32.xlu0 %v943, %s945
        %v947 = vpop.permute.xlu0 %946
        %v948 = vlaneseq
        %v949 = vshrl.u32 %v948, 7
        %v950 = vsub.s32 5, %v949
        %v951 = vrot.slane %v701, %v950
        %s953 = sor.u32 256, 8
        %954 = vbcast.lane.b32.xlu0 %v951, %s953
        %v955 = vpop.permute.xlu0 %954
        %v956 = vlaneseq
        %v957 = vshrl.u32 %v956, 7
        %v958 = vsub.s32 6, %v957
        %v959 = vrot.slane %v701, %v958
        %s961 = sor.u32 256, 8
        %962 = vbcast.lane.b32.xlu0 %v959, %s961
        %v963 = vpop.permute.xlu0 %962
        %v964 = vlaneseq
        %v965 = vshrl.u32 %v964, 7
        %v966 = vsub.s32 7, %v965
        %v967 = vrot.slane %v701, %v966
        %s969 = sor.u32 256, 8
        %970 = vbcast.lane.b32.xlu0 %v967, %s969
        %v971 = vpop.permute.xlu0 %970
        %v972 = vlaneseq
        %v973 = vshrl.u32 %v972, 7
        %v974 = vsub.s32 0, %v973
        %v975 = vrot.slane %v702, %v974
        %s977 = sor.u32 256, 8
        %978 = vbcast.lane.b32.xlu0 %v975, %s977
        %v979 = vpop.permute.xlu0 %978
        %v980 = vlaneseq
        %v981 = vshrl.u32 %v980, 7
        %v982 = vsub.s32 1, %v981
        %v983 = vrot.slane %v702, %v982
        %s985 = sor.u32 256, 8
        %986 = vbcast.lane.b32.xlu0 %v983, %s985
        %v987 = vpop.permute.xlu0 %986
        %v988 = vlaneseq
        %v989 = vshrl.u32 %v988, 7
        %v990 = vsub.s32 2, %v989
        %v991 = vrot.slane %v702, %v990
        %s993 = sor.u32 256, 8
        %994 = vbcast.lane.b32.xlu0 %v991, %s993
        %v995 = vpop.permute.xlu0 %994
        %v996 = vlaneseq
        %v997 = vshrl.u32 %v996, 7
        %v998 = vsub.s32 3, %v997
        %v999 = vrot.slane %v702, %v998
        %s1001 = sor.u32 256, 8
        %1002 = vbcast.lane.b32.xlu0 %v999, %s1001
        %v1003 = vpop.permute.xlu0 %1002
        %v1004 = vlaneseq
        %v1005 = vshrl.u32 %v1004, 7
        %v1006 = vsub.s32 4, %v1005
        %v1007 = vrot.slane %v702, %v1006
        %s1009 = sor.u32 256, 8
        %1010 = vbcast.lane.b32.xlu0 %v1007, %s1009
        %v1011 = vpop.permute.xlu0 %1010
        %v1012 = vlaneseq
        %v1013 = vshrl.u32 %v1012, 7
        %v1014 = vsub.s32 5, %v1013
        %v1015 = vrot.slane %v702, %v1014
        %s1017 = sor.u32 256, 8
        %1018 = vbcast.lane.b32.xlu0 %v1015, %s1017
        %v1019 = vpop.permute.xlu0 %1018
        %v1020 = vlaneseq
        %v1021 = vshrl.u32 %v1020, 7
        %v1022 = vsub.s32 6, %v1021
        %v1023 = vrot.slane %v702, %v1022
        %s1025 = sor.u32 256, 8
        %1026 = vbcast.lane.b32.xlu0 %v1023, %s1025
        %v1027 = vpop.permute.xlu0 %1026
        %v1028 = vlaneseq
        %v1029 = vshrl.u32 %v1028, 7
        %v1030 = vsub.s32 7, %v1029
        %v1031 = vrot.slane %v702, %v1030
        %s1033 = sor.u32 256, 8
        %1034 = vbcast.lane.b32.xlu0 %v1031, %s1033
        %v1035 = vpop.permute.xlu0 %1034
        %v1036 = vlaneseq
        %v1037 = vshrl.u32 %v1036, 7
        %v1038 = vsub.s32 0, %v1037
        %v1039 = vrot.slane %v703, %v1038
        %s1041 = sor.u32 256, 8
        %1042 = vbcast.lane.b32.xlu0 %v1039, %s1041
        %v1043 = vpop.permute.xlu0 %1042
        %v1044 = vlaneseq
        %v1045 = vshrl.u32 %v1044, 7
        %v1046 = vsub.s32 1, %v1045
        %v1047 = vrot.slane %v703, %v1046
        %s1049 = sor.u32 256, 8
        %1050 = vbcast.lane.b32.xlu0 %v1047, %s1049
        %v1051 = vpop.permute.xlu0 %1050
        %v1052 = vlaneseq
        %v1053 = vshrl.u32 %v1052, 7
        %v1054 = vsub.s32 2, %v1053
        %v1055 = vrot.slane %v703, %v1054
        %s1057 = sor.u32 256, 8
        %1058 = vbcast.lane.b32.xlu0 %v1055, %s1057
        %v1059 = vpop.permute.xlu0 %1058
        %v1060 = vlaneseq
        %v1061 = vshrl.u32 %v1060, 7
        %v1062 = vsub.s32 3, %v1061
        %v1063 = vrot.slane %v703, %v1062
        %s1065 = sor.u32 256, 8
        %1066 = vbcast.lane.b32.xlu0 %v1063, %s1065
        %v1067 = vpop.permute.xlu0 %1066
        %v1068 = vlaneseq
        %v1069 = vshrl.u32 %v1068, 7
        %v1070 = vsub.s32 4, %v1069
        %v1071 = vrot.slane %v703, %v1070
        %s1073 = sor.u32 256, 8
        %1074 = vbcast.lane.b32.xlu0 %v1071, %s1073
        %v1075 = vpop.permute.xlu0 %1074
        %v1076 = vlaneseq
        %v1077 = vshrl.u32 %v1076, 7
        %v1078 = vsub.s32 5, %v1077
        %v1079 = vrot.slane %v703, %v1078
        %s1081 = sor.u32 256, 8
        %1082 = vbcast.lane.b32.xlu0 %v1079, %s1081
        %v1083 = vpop.permute.xlu0 %1082
        %v1084 = vlaneseq
        %v1085 = vshrl.u32 %v1084, 7
        %v1086 = vsub.s32 6, %v1085
        %v1087 = vrot.slane %v703, %v1086
        %s1089 = sor.u32 256, 8
        %1090 = vbcast.lane.b32.xlu0 %v1087, %s1089
        %v1091 = vpop.permute.xlu0 %1090
        %v1092 = vlaneseq
        %v1093 = vshrl.u32 %v1092, 7
        %v1094 = vsub.s32 7, %v1093
        %v1095 = vrot.slane %v703, %v1094
        %s1097 = sor.u32 256, 8
        %1098 = vbcast.lane.b32.xlu0 %v1095, %s1097
        %v1099 = vpop.permute.xlu0 %1098
        %v1100 = vlaneseq
        %v1101 = vshrl.u32 %v1100, 7
        %v1102 = vsub.s32 0, %v1101
        %v1103 = vrot.slane %v704, %v1102
        %s1105 = sor.u32 256, 8
        %1106 = vbcast.lane.b32.xlu0 %v1103, %s1105
        %v1107 = vpop.permute.xlu0 %1106
        %v1108 = vlaneseq
        %v1109 = vshrl.u32 %v1108, 7
        %v1110 = vsub.s32 1, %v1109
        %v1111 = vrot.slane %v704, %v1110
        %s1113 = sor.u32 256, 8
        %1114 = vbcast.lane.b32.xlu0 %v1111, %s1113
        %v1115 = vpop.permute.xlu0 %1114
        %v1116 = vlaneseq
        %v1117 = vshrl.u32 %v1116, 7
        %v1118 = vsub.s32 2, %v1117
        %v1119 = vrot.slane %v704, %v1118
        %s1121 = sor.u32 256, 8
        %1122 = vbcast.lane.b32.xlu0 %v1119, %s1121
        %v1123 = vpop.permute.xlu0 %1122
        %v1124 = vlaneseq
        %v1125 = vshrl.u32 %v1124, 7
        %v1126 = vsub.s32 3, %v1125
        %v1127 = vrot.slane %v704, %v1126
        %s1129 = sor.u32 256, 8
        %1130 = vbcast.lane.b32.xlu0 %v1127, %s1129
        %v1131 = vpop.permute.xlu0 %1130
        %v1132 = vlaneseq
        %v1133 = vshrl.u32 %v1132, 7
        %v1134 = vsub.s32 4, %v1133
        %v1135 = vrot.slane %v704, %v1134
        %s1137 = sor.u32 256, 8
        %1138 = vbcast.lane.b32.xlu0 %v1135, %s1137
        %v1139 = vpop.permute.xlu0 %1138
        %v1140 = vlaneseq
        %v1141 = vshrl.u32 %v1140, 7
        %v1142 = vsub.s32 5, %v1141
        %v1143 = vrot.slane %v704, %v1142
        %s1145 = sor.u32 256, 8
        %1146 = vbcast.lane.b32.xlu0 %v1143, %s1145
        %v1147 = vpop.permute.xlu0 %1146
        %v1148 = vlaneseq
        %v1149 = vshrl.u32 %v1148, 7
        %v1150 = vsub.s32 6, %v1149
        %v1151 = vrot.slane %v704, %v1150
        %s1153 = sor.u32 256, 8
        %1154 = vbcast.lane.b32.xlu0 %v1151, %s1153
        %v1155 = vpop.permute.xlu0 %1154
        %v1156 = vlaneseq
        %v1157 = vshrl.u32 %v1156, 7
        %v1158 = vsub.s32 7, %v1157
        %v1159 = vrot.slane %v704, %v1158
        %s1161 = sor.u32 256, 8
        %1162 = vbcast.lane.b32.xlu0 %v1159, %s1161
        %v1163 = vpop.permute.xlu0 %1162
        %v1164 = vlaneseq
        %v1165 = vshrl.u32 %v1164, 7
        %v1166 = vsub.s32 0, %v1165
        %v1167 = vrot.slane %v705, %v1166
        %s1169 = sor.u32 256, 8
        %1170 = vbcast.lane.b32.xlu0 %v1167, %s1169
        %v1171 = vpop.permute.xlu0 %1170
        %v1172 = vlaneseq
        %v1173 = vshrl.u32 %v1172, 7
        %v1174 = vsub.s32 1, %v1173
        %v1175 = vrot.slane %v705, %v1174
        %s1177 = sor.u32 256, 8
        %1178 = vbcast.lane.b32.xlu0 %v1175, %s1177
        %v1179 = vpop.permute.xlu0 %1178
        %v1180 = vlaneseq
        %v1181 = vshrl.u32 %v1180, 7
        %v1182 = vsub.s32 2, %v1181
        %v1183 = vrot.slane %v705, %v1182
        %s1185 = sor.u32 256, 8
        %1186 = vbcast.lane.b32.xlu0 %v1183, %s1185
        %v1187 = vpop.permute.xlu0 %1186
        %v1188 = vlaneseq
        %v1189 = vshrl.u32 %v1188, 7
        %v1190 = vsub.s32 3, %v1189
        %v1191 = vrot.slane %v705, %v1190
        %s1193 = sor.u32 256, 8
        %1194 = vbcast.lane.b32.xlu0 %v1191, %s1193
        %v1195 = vpop.permute.xlu0 %1194
        %v1196 = vlaneseq
        %v1197 = vshrl.u32 %v1196, 7
        %v1198 = vsub.s32 4, %v1197
        %v1199 = vrot.slane %v705, %v1198
        %s1201 = sor.u32 256, 8
        %1202 = vbcast.lane.b32.xlu0 %v1199, %s1201
        %v1203 = vpop.permute.xlu0 %1202
        %v1204 = vlaneseq
        %v1205 = vshrl.u32 %v1204, 7
        %v1206 = vsub.s32 5, %v1205
        %v1207 = vrot.slane %v705, %v1206
        %s1209 = sor.u32 256, 8
        %1210 = vbcast.lane.b32.xlu0 %v1207, %s1209
        %v1211 = vpop.permute.xlu0 %1210
        %v1212 = vlaneseq
        %v1213 = vshrl.u32 %v1212, 7
        %v1214 = vsub.s32 6, %v1213
        %v1215 = vrot.slane %v705, %v1214
        %s1217 = sor.u32 256, 8
        %1218 = vbcast.lane.b32.xlu0 %v1215, %s1217
        %v1219 = vpop.permute.xlu0 %1218
        %v1220 = vlaneseq
        %v1221 = vshrl.u32 %v1220, 7
        %v1222 = vsub.s32 7, %v1221
        %v1223 = vrot.slane %v705, %v1222
        %s1225 = sor.u32 256, 8
        %1226 = vbcast.lane.b32.xlu0 %v1223, %s1225
        %v1227 = vpop.permute.xlu0 %1226
        %v1228 = vlaneseq
        %v1229 = vshrl.u32 %v1228, 7
        %v1230 = vsub.s32 0, %v1229
        %v1231 = vrot.slane %v706, %v1230
        %s1233 = sor.u32 256, 8
        %1234 = vbcast.lane.b32.xlu0 %v1231, %s1233
        %v1235 = vpop.permute.xlu0 %1234
        %v1236 = vlaneseq
        %v1237 = vshrl.u32 %v1236, 7
        %v1238 = vsub.s32 1, %v1237
        %v1239 = vrot.slane %v706, %v1238
        %s1241 = sor.u32 256, 8
        %1242 = vbcast.lane.b32.xlu0 %v1239, %s1241
        %v1243 = vpop.permute.xlu0 %1242
        %v1244 = vlaneseq
        %v1245 = vshrl.u32 %v1244, 7
        %v1246 = vsub.s32 2, %v1245
        %v1247 = vrot.slane %v706, %v1246
        %s1249 = sor.u32 256, 8
        %1250 = vbcast.lane.b32.xlu0 %v1247, %s1249
        %v1251 = vpop.permute.xlu0 %1250
        %v1252 = vlaneseq
        %v1253 = vshrl.u32 %v1252, 7
        %v1254 = vsub.s32 3, %v1253
        %v1255 = vrot.slane %v706, %v1254
        %s1257 = sor.u32 256, 8
        %1258 = vbcast.lane.b32.xlu0 %v1255, %s1257
        %v1259 = vpop.permute.xlu0 %1258
        %v1260 = vlaneseq
        %v1261 = vshrl.u32 %v1260, 7
        %v1262 = vsub.s32 4, %v1261
        %v1263 = vrot.slane %v706, %v1262
        %s1265 = sor.u32 256, 8
        %1266 = vbcast.lane.b32.xlu0 %v1263, %s1265
        %v1267 = vpop.permute.xlu0 %1266
        %v1268 = vlaneseq
        %v1269 = vshrl.u32 %v1268, 7
        %v1270 = vsub.s32 5, %v1269
        %v1271 = vrot.slane %v706, %v1270
        %s1273 = sor.u32 256, 8
        %1274 = vbcast.lane.b32.xlu0 %v1271, %s1273
        %v1275 = vpop.permute.xlu0 %1274
        %v1276 = vlaneseq
        %v1277 = vshrl.u32 %v1276, 7
        %v1278 = vsub.s32 6, %v1277
        %v1279 = vrot.slane %v706, %v1278
        %s1281 = sor.u32 256, 8
        %1282 = vbcast.lane.b32.xlu0 %v1279, %s1281
        %v1283 = vpop.permute.xlu0 %1282
        %v1284 = vlaneseq
        %v1285 = vshrl.u32 %v1284, 7
        %v1286 = vsub.s32 7, %v1285
        %v1287 = vrot.slane %v706, %v1286
        %s1289 = sor.u32 256, 8
        %1290 = vbcast.lane.b32.xlu0 %v1287, %s1289
        %v1291 = vpop.permute.xlu0 %1290
        %v1292 = vlaneseq
        %v1293 = vshrl.u32 %v1292, 7
        %v1294 = vsub.s32 0, %v1293
        %v1295 = vrot.slane %v707, %v1294
        %s1297 = sor.u32 256, 8
        %1298 = vbcast.lane.b32.xlu0 %v1295, %s1297
        %v1299 = vpop.permute.xlu0 %1298
        %v1300 = vlaneseq
        %v1301 = vshrl.u32 %v1300, 7
        %v1302 = vsub.s32 1, %v1301
        %v1303 = vrot.slane %v707, %v1302
        %s1305 = sor.u32 256, 8
        %1306 = vbcast.lane.b32.xlu0 %v1303, %s1305
        %v1307 = vpop.permute.xlu0 %1306
        %v1308 = vlaneseq
        %v1309 = vshrl.u32 %v1308, 7
        %v1310 = vsub.s32 2, %v1309
        %v1311 = vrot.slane %v707, %v1310
        %s1313 = sor.u32 256, 8
        %1314 = vbcast.lane.b32.xlu0 %v1311, %s1313
        %v1315 = vpop.permute.xlu0 %1314
        %v1316 = vlaneseq
        %v1317 = vshrl.u32 %v1316, 7
        %v1318 = vsub.s32 3, %v1317
        %v1319 = vrot.slane %v707, %v1318
        %s1321 = sor.u32 256, 8
        %1322 = vbcast.lane.b32.xlu0 %v1319, %s1321
        %v1323 = vpop.permute.xlu0 %1322
        %v1324 = vlaneseq
        %v1325 = vshrl.u32 %v1324, 7
        %v1326 = vsub.s32 4, %v1325
        %v1327 = vrot.slane %v707, %v1326
        %s1329 = sor.u32 256, 8
        %1330 = vbcast.lane.b32.xlu0 %v1327, %s1329
        %v1331 = vpop.permute.xlu0 %1330
        %v1332 = vlaneseq
        %v1333 = vshrl.u32 %v1332, 7
        %v1334 = vsub.s32 5, %v1333
        %v1335 = vrot.slane %v707, %v1334
        %s1337 = sor.u32 256, 8
        %1338 = vbcast.lane.b32.xlu0 %v1335, %s1337
        %v1339 = vpop.permute.xlu0 %1338
        %v1340 = vlaneseq
        %v1341 = vshrl.u32 %v1340, 7
        %v1342 = vsub.s32 6, %v1341
        %v1343 = vrot.slane %v707, %v1342
        %s1345 = sor.u32 256, 8
        %1346 = vbcast.lane.b32.xlu0 %v1343, %s1345
        %v1347 = vpop.permute.xlu0 %1346
        %v1348 = vlaneseq
        %v1349 = vshrl.u32 %v1348, 7
        %v1350 = vsub.s32 7, %v1349
        %v1351 = vrot.slane %v707, %v1350
        %s1353 = sor.u32 256, 8
        %1354 = vbcast.lane.b32.xlu0 %v1351, %s1353
        %v1355 = vpop.permute.xlu0 %1354
        %v1356 = vlaneseq
        %v1357 = vshrl.u32 %v1356, 7
        %v1358 = vsub.s32 0, %v1357
        %v1359 = vrot.slane %v708, %v1358
        %s1361 = sor.u32 256, 8
        %1362 = vbcast.lane.b32.xlu0 %v1359, %s1361
        %v1363 = vpop.permute.xlu0 %1362
        %v1364 = vlaneseq
        %v1365 = vshrl.u32 %v1364, 7
        %v1366 = vsub.s32 1, %v1365
        %v1367 = vrot.slane %v708, %v1366
        %s1369 = sor.u32 256, 8
        %1370 = vbcast.lane.b32.xlu0 %v1367, %s1369
        %v1371 = vpop.permute.xlu0 %1370
        %v1372 = vlaneseq
        %v1373 = vshrl.u32 %v1372, 7
        %v1374 = vsub.s32 2, %v1373
        %v1375 = vrot.slane %v708, %v1374
        %s1377 = sor.u32 256, 8
        %1378 = vbcast.lane.b32.xlu0 %v1375, %s1377
        %v1379 = vpop.permute.xlu0 %1378
        %v1380 = vlaneseq
        %v1381 = vshrl.u32 %v1380, 7
        %v1382 = vsub.s32 3, %v1381
        %v1383 = vrot.slane %v708, %v1382
        %s1385 = sor.u32 256, 8
        %1386 = vbcast.lane.b32.xlu0 %v1383, %s1385
        %v1387 = vpop.permute.xlu0 %1386
        %v1388 = vlaneseq
        %v1389 = vshrl.u32 %v1388, 7
        %v1390 = vsub.s32 4, %v1389
        %v1391 = vrot.slane %v708, %v1390
        %s1393 = sor.u32 256, 8
        %1394 = vbcast.lane.b32.xlu0 %v1391, %s1393
        %v1395 = vpop.permute.xlu0 %1394
        %v1396 = vlaneseq
        %v1397 = vshrl.u32 %v1396, 7
        %v1398 = vsub.s32 5, %v1397
        %v1399 = vrot.slane %v708, %v1398
        %s1401 = sor.u32 256, 8
        %1402 = vbcast.lane.b32.xlu0 %v1399, %s1401
        %v1403 = vpop.permute.xlu0 %1402
        %v1404 = vlaneseq
        %v1405 = vshrl.u32 %v1404, 7
        %v1406 = vsub.s32 6, %v1405
        %v1407 = vrot.slane %v708, %v1406
        %s1409 = sor.u32 256, 8
        %1410 = vbcast.lane.b32.xlu0 %v1407, %s1409
        %v1411 = vpop.permute.xlu0 %1410
        %v1412 = vlaneseq
        %v1413 = vshrl.u32 %v1412, 7
        %v1414 = vsub.s32 7, %v1413
        %v1415 = vrot.slane %v708, %v1414
        %s1417 = sor.u32 256, 8
        %1418 = vbcast.lane.b32.xlu0 %v1415, %s1417
        %v1419 = vpop.permute.xlu0 %1418
        %v1420 = vlaneseq
        %v1421 = vshrl.u32 %v1420, 7
        %v1422 = vsub.s32 0, %v1421
        %v1423 = vrot.slane %v709, %v1422
        %s1425 = sor.u32 256, 8
        %1426 = vbcast.lane.b32.xlu0 %v1423, %s1425
        %v1427 = vpop.permute.xlu0 %1426
        %v1428 = vlaneseq
        %v1429 = vshrl.u32 %v1428, 7
        %v1430 = vsub.s32 1, %v1429
        %v1431 = vrot.slane %v709, %v1430
        %s1433 = sor.u32 256, 8
        %1434 = vbcast.lane.b32.xlu0 %v1431, %s1433
        %v1435 = vpop.permute.xlu0 %1434
        %v1436 = vlaneseq
        %v1437 = vshrl.u32 %v1436, 7
        %v1438 = vsub.s32 2, %v1437
        %v1439 = vrot.slane %v709, %v1438
        %s1441 = sor.u32 256, 8
        %1442 = vbcast.lane.b32.xlu0 %v1439, %s1441
        %v1443 = vpop.permute.xlu0 %1442
        %v1444 = vlaneseq
        %v1445 = vshrl.u32 %v1444, 7
        %v1446 = vsub.s32 3, %v1445
        %v1447 = vrot.slane %v709, %v1446
        %s1449 = sor.u32 256, 8
        %1450 = vbcast.lane.b32.xlu0 %v1447, %s1449
        %v1451 = vpop.permute.xlu0 %1450
        %v1452 = vlaneseq
        %v1453 = vshrl.u32 %v1452, 7
        %v1454 = vsub.s32 4, %v1453
        %v1455 = vrot.slane %v709, %v1454
        %s1457 = sor.u32 256, 8
        %1458 = vbcast.lane.b32.xlu0 %v1455, %s1457
        %v1459 = vpop.permute.xlu0 %1458
        %v1460 = vlaneseq
        %v1461 = vshrl.u32 %v1460, 7
        %v1462 = vsub.s32 5, %v1461
        %v1463 = vrot.slane %v709, %v1462
        %s1465 = sor.u32 256, 8
        %1466 = vbcast.lane.b32.xlu0 %v1463, %s1465
        %v1467 = vpop.permute.xlu0 %1466
        %v1468 = vlaneseq
        %v1469 = vshrl.u32 %v1468, 7
        %v1470 = vsub.s32 6, %v1469
        %v1471 = vrot.slane %v709, %v1470
        %s1473 = sor.u32 256, 8
        %1474 = vbcast.lane.b32.xlu0 %v1471, %s1473
        %v1475 = vpop.permute.xlu0 %1474
        %v1476 = vlaneseq
        %v1477 = vshrl.u32 %v1476, 7
        %v1478 = vsub.s32 7, %v1477
        %v1479 = vrot.slane %v709, %v1478
        %s1481 = sor.u32 256, 8
        %1482 = vbcast.lane.b32.xlu0 %v1479, %s1481
        %v1483 = vpop.permute.xlu0 %1482
        %v1484 = vlaneseq
        %v1485 = vshrl.u32 %v1484, 7
        %v1486 = vsub.s32 0, %v1485
        %v1487 = vrot.slane %v710, %v1486
        %s1489 = sor.u32 256, 8
        %1490 = vbcast.lane.b32.xlu0 %v1487, %s1489
        %v1491 = vpop.permute.xlu0 %1490
        %v1492 = vlaneseq
        %v1493 = vshrl.u32 %v1492, 7
        %v1494 = vsub.s32 1, %v1493
        %v1495 = vrot.slane %v710, %v1494
        %s1497 = sor.u32 256, 8
        %1498 = vbcast.lane.b32.xlu0 %v1495, %s1497
        %v1499 = vpop.permute.xlu0 %1498
        %v1500 = vlaneseq
        %v1501 = vshrl.u32 %v1500, 7
        %v1502 = vsub.s32 2, %v1501
        %v1503 = vrot.slane %v710, %v1502
        %s1505 = sor.u32 256, 8
        %1506 = vbcast.lane.b32.xlu0 %v1503, %s1505
        %v1507 = vpop.permute.xlu0 %1506
        %v1508 = vlaneseq
        %v1509 = vshrl.u32 %v1508, 7
        %v1510 = vsub.s32 3, %v1509
        %v1511 = vrot.slane %v710, %v1510
        %s1513 = sor.u32 256, 8
        %1514 = vbcast.lane.b32.xlu0 %v1511, %s1513
        %v1515 = vpop.permute.xlu0 %1514
        %v1516 = vlaneseq
        %v1517 = vshrl.u32 %v1516, 7
        %v1518 = vsub.s32 4, %v1517
        %v1519 = vrot.slane %v710, %v1518
        %s1521 = sor.u32 256, 8
        %1522 = vbcast.lane.b32.xlu0 %v1519, %s1521
        %v1523 = vpop.permute.xlu0 %1522
        %v1524 = vlaneseq
        %v1525 = vshrl.u32 %v1524, 7
        %v1526 = vsub.s32 5, %v1525
        %v1527 = vrot.slane %v710, %v1526
        %s1529 = sor.u32 256, 8
        %1530 = vbcast.lane.b32.xlu0 %v1527, %s1529
        %v1531 = vpop.permute.xlu0 %1530
        %v1532 = vlaneseq
        %v1533 = vshrl.u32 %v1532, 7
        %v1534 = vsub.s32 6, %v1533
        %v1535 = vrot.slane %v710, %v1534
        %s1537 = sor.u32 256, 8
        %1538 = vbcast.lane.b32.xlu0 %v1535, %s1537
        %v1539 = vpop.permute.xlu0 %1538
        %v1540 = vlaneseq
        %v1541 = vshrl.u32 %v1540, 7
        %v1542 = vsub.s32 7, %v1541
        %v1543 = vrot.slane %v710, %v1542
        %s1545 = sor.u32 256, 8
        %1546 = vbcast.lane.b32.xlu0 %v1543, %s1545
        %v1547 = vpop.permute.xlu0 %1546
        %v1548 = vlaneseq
        %v1549 = vshrl.u32 %v1548, 7
        %v1550 = vsub.s32 0, %v1549
        %v1551 = vrot.slane %v711, %v1550
        %s1553 = sor.u32 256, 8
        %1554 = vbcast.lane.b32.xlu0 %v1551, %s1553
        %v1555 = vpop.permute.xlu0 %1554
        %v1556 = vlaneseq
        %v1557 = vshrl.u32 %v1556, 7
        %v1558 = vsub.s32 1, %v1557
        %v1559 = vrot.slane %v711, %v1558
        %s1561 = sor.u32 256, 8
        %1562 = vbcast.lane.b32.xlu0 %v1559, %s1561
        %v1563 = vpop.permute.xlu0 %1562
        %v1564 = vlaneseq
        %v1565 = vshrl.u32 %v1564, 7
        %v1566 = vsub.s32 2, %v1565
        %v1567 = vrot.slane %v711, %v1566
        %s1569 = sor.u32 256, 8
        %1570 = vbcast.lane.b32.xlu0 %v1567, %s1569
        %v1571 = vpop.permute.xlu0 %1570
        %v1572 = vlaneseq
        %v1573 = vshrl.u32 %v1572, 7
        %v1574 = vsub.s32 3, %v1573
        %v1575 = vrot.slane %v711, %v1574
        %s1577 = sor.u32 256, 8
        %1578 = vbcast.lane.b32.xlu0 %v1575, %s1577
        %v1579 = vpop.permute.xlu0 %1578
        %v1580 = vlaneseq
        %v1581 = vshrl.u32 %v1580, 7
        %v1582 = vsub.s32 4, %v1581
        %v1583 = vrot.slane %v711, %v1582
        %s1585 = sor.u32 256, 8
        %1586 = vbcast.lane.b32.xlu0 %v1583, %s1585
        %v1587 = vpop.permute.xlu0 %1586
        %v1588 = vlaneseq
        %v1589 = vshrl.u32 %v1588, 7
        %v1590 = vsub.s32 5, %v1589
        %v1591 = vrot.slane %v711, %v1590
        %s1593 = sor.u32 256, 8
        %1594 = vbcast.lane.b32.xlu0 %v1591, %s1593
        %v1595 = vpop.permute.xlu0 %1594
        %v1596 = vlaneseq
        %v1597 = vshrl.u32 %v1596, 7
        %v1598 = vsub.s32 6, %v1597
        %v1599 = vrot.slane %v711, %v1598
        %s1601 = sor.u32 256, 8
        %1602 = vbcast.lane.b32.xlu0 %v1599, %s1601
        %v1603 = vpop.permute.xlu0 %1602
        %v1604 = vlaneseq
        %v1605 = vshrl.u32 %v1604, 7
        %v1606 = vsub.s32 7, %v1605
        %v1607 = vrot.slane %v711, %v1606
        %s1609 = sor.u32 256, 8
        %1610 = vbcast.lane.b32.xlu0 %v1607, %s1609
        %v1611 = vpop.permute.xlu0 %1610
        %v1612 = vlaneseq
        %v1613 = vshrl.u32 %v1612, 7
        %v1614 = vsub.s32 0, %v1613
        %v1615 = vrot.slane %v712, %v1614
        %s1617 = sor.u32 256, 8
        %1618 = vbcast.lane.b32.xlu0 %v1615, %s1617
        %v1619 = vpop.permute.xlu0 %1618
        %v1620 = vlaneseq
        %v1621 = vshrl.u32 %v1620, 7
        %v1622 = vsub.s32 1, %v1621
        %v1623 = vrot.slane %v712, %v1622
        %s1625 = sor.u32 256, 8
        %1626 = vbcast.lane.b32.xlu0 %v1623, %s1625
        %v1627 = vpop.permute.xlu0 %1626
        %v1628 = vlaneseq
        %v1629 = vshrl.u32 %v1628, 7
        %v1630 = vsub.s32 2, %v1629
        %v1631 = vrot.slane %v712, %v1630
        %s1633 = sor.u32 256, 8
        %1634 = vbcast.lane.b32.xlu0 %v1631, %s1633
        %v1635 = vpop.permute.xlu0 %1634
        %v1636 = vlaneseq
        %v1637 = vshrl.u32 %v1636, 7
        %v1638 = vsub.s32 3, %v1637
        %v1639 = vrot.slane %v712, %v1638
        %s1641 = sor.u32 256, 8
        %1642 = vbcast.lane.b32.xlu0 %v1639, %s1641
        %v1643 = vpop.permute.xlu0 %1642
        %v1644 = vlaneseq
        %v1645 = vshrl.u32 %v1644, 7
        %v1646 = vsub.s32 4, %v1645
        %v1647 = vrot.slane %v712, %v1646
        %s1649 = sor.u32 256, 8
        %1650 = vbcast.lane.b32.xlu0 %v1647, %s1649
        %v1651 = vpop.permute.xlu0 %1650
        %v1652 = vlaneseq
        %v1653 = vshrl.u32 %v1652, 7
        %v1654 = vsub.s32 5, %v1653
        %v1655 = vrot.slane %v712, %v1654
        %s1657 = sor.u32 256, 8
        %1658 = vbcast.lane.b32.xlu0 %v1655, %s1657
        %v1659 = vpop.permute.xlu0 %1658
        %v1660 = vlaneseq
        %v1661 = vshrl.u32 %v1660, 7
        %v1662 = vsub.s32 6, %v1661
        %v1663 = vrot.slane %v712, %v1662
        %s1665 = sor.u32 256, 8
        %1666 = vbcast.lane.b32.xlu0 %v1663, %s1665
        %v1667 = vpop.permute.xlu0 %1666
        %v1668 = vlaneseq
        %v1669 = vshrl.u32 %v1668, 7
        %v1670 = vsub.s32 7, %v1669
        %v1671 = vrot.slane %v712, %v1670
        %s1673 = sor.u32 256, 8
        %1674 = vbcast.lane.b32.xlu0 %v1671, %s1673
        %v1675 = vpop.permute.xlu0 %1674
        %v1676 = vlaneseq
        %v1677 = vshrl.u32 %v1676, 7
        %v1678 = vsub.s32 0, %v1677
        %v1679 = vrot.slane %v713, %v1678
        %s1681 = sor.u32 256, 8
        %1682 = vbcast.lane.b32.xlu0 %v1679, %s1681
        %v1683 = vpop.permute.xlu0 %1682
        %v1684 = vlaneseq
        %v1685 = vshrl.u32 %v1684, 7
        %v1686 = vsub.s32 1, %v1685
        %v1687 = vrot.slane %v713, %v1686
        %s1689 = sor.u32 256, 8
        %1690 = vbcast.lane.b32.xlu0 %v1687, %s1689
        %v1691 = vpop.permute.xlu0 %1690
        %v1692 = vlaneseq
        %v1693 = vshrl.u32 %v1692, 7
        %v1694 = vsub.s32 2, %v1693
        %v1695 = vrot.slane %v713, %v1694
        %s1697 = sor.u32 256, 8
        %1698 = vbcast.lane.b32.xlu0 %v1695, %s1697
        %v1699 = vpop.permute.xlu0 %1698
        %v1700 = vlaneseq
        %v1701 = vshrl.u32 %v1700, 7
        %v1702 = vsub.s32 3, %v1701
        %v1703 = vrot.slane %v713, %v1702
        %s1705 = sor.u32 256, 8
        %1706 = vbcast.lane.b32.xlu0 %v1703, %s1705
        %v1707 = vpop.permute.xlu0 %1706
        %v1708 = vlaneseq
        %v1709 = vshrl.u32 %v1708, 7
        %v1710 = vsub.s32 4, %v1709
        %v1711 = vrot.slane %v713, %v1710
        %s1713 = sor.u32 256, 8
        %1714 = vbcast.lane.b32.xlu0 %v1711, %s1713
        %v1715 = vpop.permute.xlu0 %1714
        %v1716 = vlaneseq
        %v1717 = vshrl.u32 %v1716, 7
        %v1718 = vsub.s32 5, %v1717
        %v1719 = vrot.slane %v713, %v1718
        %s1721 = sor.u32 256, 8
        %1722 = vbcast.lane.b32.xlu0 %v1719, %s1721
        %v1723 = vpop.permute.xlu0 %1722
        %v1724 = vlaneseq
        %v1725 = vshrl.u32 %v1724, 7
        %v1726 = vsub.s32 6, %v1725
        %v1727 = vrot.slane %v713, %v1726
        %s1729 = sor.u32 256, 8
        %1730 = vbcast.lane.b32.xlu0 %v1727, %s1729
        %v1731 = vpop.permute.xlu0 %1730
        %v1732 = vlaneseq
        %v1733 = vshrl.u32 %v1732, 7
        %v1734 = vsub.s32 7, %v1733
        %v1735 = vrot.slane %v713, %v1734
        %s1737 = sor.u32 256, 8
        %1738 = vbcast.lane.b32.xlu0 %v1735, %s1737
        %v1739 = vpop.permute.xlu0 %1738
        %v1740 = vmul.f32 %v723, %v714
        %v1741 = vmul.f32 %v723, %v715
        %v1742 = vmul.f32 %v731, %v714
        %v1743 = vmul.f32 %v731, %v715
        %v1744 = vmul.f32 %v739, %v714
        %v1745 = vmul.f32 %v739, %v715
        %v1746 = vmul.f32 %v747, %v714
        %v1747 = vmul.f32 %v747, %v715
        %v1748 = vmul.f32 %v755, %v714
        %v1749 = vmul.f32 %v755, %v715
        %v1750 = vmul.f32 %v763, %v714
        %v1751 = vmul.f32 %v763, %v715
        %v1752 = vmul.f32 %v771, %v714
        %v1753 = vmul.f32 %v771, %v715
        %v1754 = vmul.f32 %v779, %v714
        %v1755 = vmul.f32 %v779, %v715
        %v1756 = vmul.f32 %v787, %v714
        %v1757 = vmul.f32 %v787, %v715
        %v1758 = vmul.f32 %v795, %v714
        %v1759 = vmul.f32 %v795, %v715
        %v1760 = vmul.f32 %v803, %v714
        %v1761 = vmul.f32 %v803, %v715
        %v1762 = vmul.f32 %v811, %v714
        %v1763 = vmul.f32 %v811, %v715
        %v1764 = vmul.f32 %v819, %v714
        %v1765 = vmul.f32 %v819, %v715
        %v1766 = vmul.f32 %v827, %v714
        %v1767 = vmul.f32 %v827, %v715
        %v1768 = vmul.f32 %v835, %v714
        %v1769 = vmul.f32 %v835, %v715
        %v1770 = vmul.f32 %v843, %v714
        %v1771 = vmul.f32 %v843, %v715
        %v1772 = vmul.f32 %v851, %v714
        %v1773 = vmul.f32 %v851, %v715
        %v1774 = vmul.f32 %v859, %v714
        %v1775 = vmul.f32 %v859, %v715
        %v1776 = vmul.f32 %v867, %v714
        %v1777 = vmul.f32 %v867, %v715
        %v1778 = vmul.f32 %v875, %v714
        %v1779 = vmul.f32 %v875, %v715
        %v1780 = vmul.f32 %v883, %v714
        %v1781 = vmul.f32 %v883, %v715
        %v1782 = vmul.f32 %v891, %v714
        %v1783 = vmul.f32 %v891, %v715
        %v1784 = vmul.f32 %v899, %v714
        %v1785 = vmul.f32 %v899, %v715
        %v1786 = vmul.f32 %v907, %v714
        %v1787 = vmul.f32 %v907, %v715
        %v1788 = vmul.f32 %v915, %v714
        %v1789 = vmul.f32 %v915, %v715
        %v1790 = vmul.f32 %v923, %v714
        %v1791 = vmul.f32 %v923, %v715
        %v1792 = vmul.f32 %v931, %v714
        %v1793 = vmul.f32 %v931, %v715
        %v1794 = vmul.f32 %v939, %v714
        %v1795 = vmul.f32 %v939, %v715
        %v1796 = vmul.f32 %v947, %v714
        %v1797 = vmul.f32 %v947, %v715
        %v1798 = vmul.f32 %v955, %v714
        %v1799 = vmul.f32 %v955, %v715
        %v1800 = vmul.f32 %v963, %v714
        %v1801 = vmul.f32 %v963, %v715
        %v1802 = vmul.f32 %v971, %v714
        %v1803 = vmul.f32 %v971, %v715
        %v1804 = vmul.f32 %v979, %v714
        %v1805 = vmul.f32 %v979, %v715
        %v1806 = vmul.f32 %v987, %v714
        %v1807 = vmul.f32 %v987, %v715
        %v1808 = vmul.f32 %v995, %v714
        %v1809 = vmul.f32 %v995, %v715
        %v1810 = vmul.f32 %v1003, %v714
        %v1811 = vmul.f32 %v1003, %v715
        %v1812 = vmul.f32 %v1011, %v714
        %v1813 = vmul.f32 %v1011, %v715
        %v1814 = vmul.f32 %v1019, %v714
        %v1815 = vmul.f32 %v1019, %v715
        %v1816 = vmul.f32 %v1027, %v714
        %v1817 = vmul.f32 %v1027, %v715
        %v1818 = vmul.f32 %v1035, %v714
        %v1819 = vmul.f32 %v1035, %v715
        %v1820 = vmul.f32 %v1043, %v714
        %v1821 = vmul.f32 %v1043, %v715
        %v1822 = vmul.f32 %v1051, %v714
        %v1823 = vmul.f32 %v1051, %v715
        %v1824 = vmul.f32 %v1059, %v714
        %v1825 = vmul.f32 %v1059, %v715
        %v1826 = vmul.f32 %v1067, %v714
        %v1827 = vmul.f32 %v1067, %v715
        %v1828 = vmul.f32 %v1075, %v714
        %v1829 = vmul.f32 %v1075, %v715
        %v1830 = vmul.f32 %v1083, %v714
        %v1831 = vmul.f32 %v1083, %v715
        %v1832 = vmul.f32 %v1091, %v714
        %v1833 = vmul.f32 %v1091, %v715
        %v1834 = vmul.f32 %v1099, %v714
        %v1835 = vmul.f32 %v1099, %v715
        %v1836 = vmul.f32 %v1107, %v714
        %v1837 = vmul.f32 %v1107, %v715
        %v1838 = vmul.f32 %v1115, %v714
        %v1839 = vmul.f32 %v1115, %v715
        %v1840 = vmul.f32 %v1123, %v714
        %v1841 = vmul.f32 %v1123, %v715
        %v1842 = vmul.f32 %v1131, %v714
        %v1843 = vmul.f32 %v1131, %v715
        %v1844 = vmul.f32 %v1139, %v714
        %v1845 = vmul.f32 %v1139, %v715
        %v1846 = vmul.f32 %v1147, %v714
        %v1847 = vmul.f32 %v1147, %v715
        %v1848 = vmul.f32 %v1155, %v714
        %v1849 = vmul.f32 %v1155, %v715
        %v1850 = vmul.f32 %v1163, %v714
        %v1851 = vmul.f32 %v1163, %v715
        %v1852 = vmul.f32 %v1171, %v714
        %v1853 = vmul.f32 %v1171, %v715
        %v1854 = vmul.f32 %v1179, %v714
        %v1855 = vmul.f32 %v1179, %v715
        %v1856 = vmul.f32 %v1187, %v714
        %v1857 = vmul.f32 %v1187, %v715
        %v1858 = vmul.f32 %v1195, %v714
        %v1859 = vmul.f32 %v1195, %v715
        %v1860 = vmul.f32 %v1203, %v714
        %v1861 = vmul.f32 %v1203, %v715
        %v1862 = vmul.f32 %v1211, %v714
        %v1863 = vmul.f32 %v1211, %v715
        %v1864 = vmul.f32 %v1219, %v714
        %v1865 = vmul.f32 %v1219, %v715
        %v1866 = vmul.f32 %v1227, %v714
        %v1867 = vmul.f32 %v1227, %v715
        %v1868 = vmul.f32 %v1235, %v714
        %v1869 = vmul.f32 %v1235, %v715
        %v1870 = vmul.f32 %v1243, %v714
        %v1871 = vmul.f32 %v1243, %v715
        %v1872 = vmul.f32 %v1251, %v714
        %v1873 = vmul.f32 %v1251, %v715
        %v1874 = vmul.f32 %v1259, %v714
        %v1875 = vmul.f32 %v1259, %v715
        %v1876 = vmul.f32 %v1267, %v714
        %v1877 = vmul.f32 %v1267, %v715
        %v1878 = vmul.f32 %v1275, %v714
        %v1879 = vmul.f32 %v1275, %v715
        %v1880 = vmul.f32 %v1283, %v714
        %v1881 = vmul.f32 %v1283, %v715
        %v1882 = vmul.f32 %v1291, %v714
        %v1883 = vmul.f32 %v1291, %v715
        %v1884 = vmul.f32 %v1299, %v714
        %v1885 = vmul.f32 %v1299, %v715
        %v1886 = vmul.f32 %v1307, %v714
        %v1887 = vmul.f32 %v1307, %v715
        %v1888 = vmul.f32 %v1315, %v714
        %v1889 = vmul.f32 %v1315, %v715
        %v1890 = vmul.f32 %v1323, %v714
        %v1891 = vmul.f32 %v1323, %v715
        %v1892 = vmul.f32 %v1331, %v714
        %v1893 = vmul.f32 %v1331, %v715
        %v1894 = vmul.f32 %v1339, %v714
        %v1895 = vmul.f32 %v1339, %v715
        %v1896 = vmul.f32 %v1347, %v714
        %v1897 = vmul.f32 %v1347, %v715
        %v1898 = vmul.f32 %v1355, %v714
        %v1899 = vmul.f32 %v1355, %v715
        %v1900 = vmul.f32 %v1363, %v714
        %v1901 = vmul.f32 %v1363, %v715
        %v1902 = vmul.f32 %v1371, %v714
        %v1903 = vmul.f32 %v1371, %v715
        %v1904 = vmul.f32 %v1379, %v714
        %v1905 = vmul.f32 %v1379, %v715
        %v1906 = vmul.f32 %v1387, %v714
        %v1907 = vmul.f32 %v1387, %v715
        %v1908 = vmul.f32 %v1395, %v714
        %v1909 = vmul.f32 %v1395, %v715
        %v1910 = vmul.f32 %v1403, %v714
        %v1911 = vmul.f32 %v1403, %v715
        %v1912 = vmul.f32 %v1411, %v714
        %v1913 = vmul.f32 %v1411, %v715
        %v1914 = vmul.f32 %v1419, %v714
        %v1915 = vmul.f32 %v1419, %v715
        %v1916 = vmul.f32 %v1427, %v714
        %v1917 = vmul.f32 %v1427, %v715
        %v1918 = vmul.f32 %v1435, %v714
        %v1919 = vmul.f32 %v1435, %v715
        %v1920 = vmul.f32 %v1443, %v714
        %v1921 = vmul.f32 %v1443, %v715
        %v1922 = vmul.f32 %v1451, %v714
        %v1923 = vmul.f32 %v1451, %v715
        %v1924 = vmul.f32 %v1459, %v714
        %v1925 = vmul.f32 %v1459, %v715
        %v1926 = vmul.f32 %v1467, %v714
        %v1927 = vmul.f32 %v1467, %v715
        %v1928 = vmul.f32 %v1475, %v714
        %v1929 = vmul.f32 %v1475, %v715
        %v1930 = vmul.f32 %v1483, %v714
        %v1931 = vmul.f32 %v1483, %v715
        %v1932 = vmul.f32 %v1491, %v714
        %v1933 = vmul.f32 %v1491, %v715
        %v1934 = vmul.f32 %v1499, %v714
        %v1935 = vmul.f32 %v1499, %v715
        %v1936 = vmul.f32 %v1507, %v714
        %v1937 = vmul.f32 %v1507, %v715
        %v1938 = vmul.f32 %v1515, %v714
        %v1939 = vmul.f32 %v1515, %v715
        %v1940 = vmul.f32 %v1523, %v714
        %v1941 = vmul.f32 %v1523, %v715
        %v1942 = vmul.f32 %v1531, %v714
        %v1943 = vmul.f32 %v1531, %v715
        %v1944 = vmul.f32 %v1539, %v714
        %v1945 = vmul.f32 %v1539, %v715
        %v1946 = vmul.f32 %v1547, %v714
        %v1947 = vmul.f32 %v1547, %v715
        %v1948 = vmul.f32 %v1555, %v714
        %v1949 = vmul.f32 %v1555, %v715
        %v1950 = vmul.f32 %v1563, %v714
        %v1951 = vmul.f32 %v1563, %v715
        %v1952 = vmul.f32 %v1571, %v714
        %v1953 = vmul.f32 %v1571, %v715
        %v1954 = vmul.f32 %v1579, %v714
        %v1955 = vmul.f32 %v1579, %v715
        %v1956 = vmul.f32 %v1587, %v714
        %v1957 = vmul.f32 %v1587, %v715
        %v1958 = vmul.f32 %v1595, %v714
        %v1959 = vmul.f32 %v1595, %v715
        %v1960 = vmul.f32 %v1603, %v714
        %v1961 = vmul.f32 %v1603, %v715
        %v1962 = vmul.f32 %v1611, %v714
        %v1963 = vmul.f32 %v1611, %v715
        %v1964 = vmul.f32 %v1619, %v714
        %v1965 = vmul.f32 %v1619, %v715
        %v1966 = vmul.f32 %v1627, %v714
        %v1967 = vmul.f32 %v1627, %v715
        %v1968 = vmul.f32 %v1635, %v714
        %v1969 = vmul.f32 %v1635, %v715
        %v1970 = vmul.f32 %v1643, %v714
        %v1971 = vmul.f32 %v1643, %v715
        %v1972 = vmul.f32 %v1651, %v714
        %v1973 = vmul.f32 %v1651, %v715
        %v1974 = vmul.f32 %v1659, %v714
        %v1975 = vmul.f32 %v1659, %v715
        %v1976 = vmul.f32 %v1667, %v714
        %v1977 = vmul.f32 %v1667, %v715
        %v1978 = vmul.f32 %v1675, %v714
        %v1979 = vmul.f32 %v1675, %v715
        %v1980 = vmul.f32 %v1683, %v714
        %v1981 = vmul.f32 %v1683, %v715
        %v1982 = vmul.f32 %v1691, %v714
        %v1983 = vmul.f32 %v1691, %v715
        %v1984 = vmul.f32 %v1699, %v714
        %v1985 = vmul.f32 %v1699, %v715
        %v1986 = vmul.f32 %v1707, %v714
        %v1987 = vmul.f32 %v1707, %v715
        %v1988 = vmul.f32 %v1715, %v714
        %v1989 = vmul.f32 %v1715, %v715
        %v1990 = vmul.f32 %v1723, %v714
        %v1991 = vmul.f32 %v1723, %v715
        %v1992 = vmul.f32 %v1731, %v714
        %v1993 = vmul.f32 %v1731, %v715
        %v1994 = vmul.f32 %v1739, %v714
        %v1995 = vmul.f32 %v1739, %v715
        %v1996 = vld [vmem:[#allocation3] sm:$0xff]
        %v1997 = vld [vmem:[#allocation3 + $0x8] sm:$0xff]
        %v1998 = vld [vmem:[#allocation3 + $0x10] sm:$0xff]
        %v1999 = vld [vmem:[#allocation3 + $0x18] sm:$0xff]
        %v2000 = vld [vmem:[#allocation3 + $0x20] sm:$0xff]
        %v2001 = vld [vmem:[#allocation3 + $0x28] sm:$0xff]
        %v2002 = vld [vmem:[#allocation3 + $0x30] sm:$0xff]
        %v2003 = vld [vmem:[#allocation3 + $0x38] sm:$0xff]
        %v2004 = vld [vmem:[#allocation3 + $0x40] sm:$0xff]
        %v2005 = vld [vmem:[#allocation3 + $0x48] sm:$0xff]
        %v2006 = vld [vmem:[#allocation3 + $0x50] sm:$0xff]
        %v2007 = vld [vmem:[#allocation3 + $0x58] sm:$0xff]
        %v2008 = vld [vmem:[#allocation3 + $0x60] sm:$0xff]
        %v2009 = vld [vmem:[#allocation3 + $0x68] sm:$0xff]
        %v2010 = vld [vmem:[#allocation3 + $0x70] sm:$0xff]
        %v2011 = vld [vmem:[#allocation3 + $0x78] sm:$0xff]
        %v2012 = vmax.f32 %v1740, %v1741
        %2013 = vmax.xlane.f32.xlu0 %v2012
        %v2014 = vpop.xlane.xlu0 %2013
        %v2015 = vmax.f32 %v1742, %v1743
        %2016 = vmax.xlane.f32.xlu0 %v2015
        %v2017 = vpop.xlane.xlu0 %2016
        %v2018 = vmax.f32 %v1744, %v1745
        %2019 = vmax.xlane.f32.xlu0 %v2018
        %v2020 = vpop.xlane.xlu0 %2019
        %v2021 = vmax.f32 %v1746, %v1747
        %2022 = vmax.xlane.f32.xlu0 %v2021
        %v2023 = vpop.xlane.xlu0 %2022
        %v2024 = vmax.f32 %v1748, %v1749
        %2025 = vmax.xlane.f32.xlu0 %v2024
        %v2026 = vpop.xlane.xlu0 %2025
        %v2027 = vmax.f32 %v1750, %v1751
        %2028 = vmax.xlane.f32.xlu0 %v2027
        %v2029 = vpop.xlane.xlu0 %2028
        %v2030 = vmax.f32 %v1752, %v1753
        %2031 = vmax.xlane.f32.xlu0 %v2030
        %v2032 = vpop.xlane.xlu0 %2031
        %v2033 = vmax.f32 %v1754, %v1755
        %2034 = vmax.xlane.f32.xlu0 %v2033
        %v2035 = vpop.xlane.xlu0 %2034
        %v2036 = vmax.f32 %v1756, %v1757
        %2037 = vmax.xlane.f32.xlu0 %v2036
        %v2038 = vpop.xlane.xlu0 %2037
        %v2039 = vmax.f32 %v1758, %v1759
        %2040 = vmax.xlane.f32.xlu0 %v2039
        %v2041 = vpop.xlane.xlu0 %2040
        %v2042 = vmax.f32 %v1760, %v1761
        %2043 = vmax.xlane.f32.xlu0 %v2042
        %v2044 = vpop.xlane.xlu0 %2043
        %v2045 = vmax.f32 %v1762, %v1763
        %2046 = vmax.xlane.f32.xlu0 %v2045
        %v2047 = vpop.xlane.xlu0 %2046
        %v2048 = vmax.f32 %v1764, %v1765
        %2049 = vmax.xlane.f32.xlu0 %v2048
        %v2050 = vpop.xlane.xlu0 %2049
        %v2051 = vmax.f32 %v1766, %v1767
        %2052 = vmax.xlane.f32.xlu0 %v2051
        %v2053 = vpop.xlane.xlu0 %2052
        %v2054 = vmax.f32 %v1768, %v1769
        %2055 = vmax.xlane.f32.xlu0 %v2054
        %v2056 = vpop.xlane.xlu0 %2055
        %v2057 = vmax.f32 %v1770, %v1771
        %2058 = vmax.xlane.f32.xlu0 %v2057
        %v2059 = vpop.xlane.xlu0 %2058
        %v2060 = vmax.f32 %v1772, %v1773
        %2061 = vmax.xlane.f32.xlu0 %v2060
        %v2062 = vpop.xlane.xlu0 %2061
        %v2063 = vmax.f32 %v1774, %v1775
        %2064 = vmax.xlane.f32.xlu0 %v2063
        %v2065 = vpop.xlane.xlu0 %2064
        %v2066 = vmax.f32 %v1776, %v1777
        %2067 = vmax.xlane.f32.xlu0 %v2066
        %v2068 = vpop.xlane.xlu0 %2067
        %v2069 = vmax.f32 %v1778, %v1779
        %2070 = vmax.xlane.f32.xlu0 %v2069
        %v2071 = vpop.xlane.xlu0 %2070
        %v2072 = vmax.f32 %v1780, %v1781
        %2073 = vmax.xlane.f32.xlu0 %v2072
        %v2074 = vpop.xlane.xlu0 %2073
        %v2075 = vmax.f32 %v1782, %v1783
        %2076 = vmax.xlane.f32.xlu0 %v2075
        %v2077 = vpop.xlane.xlu0 %2076
        %v2078 = vmax.f32 %v1784, %v1785
        %2079 = vmax.xlane.f32.xlu0 %v2078
        %v2080 = vpop.xlane.xlu0 %2079
        %v2081 = vmax.f32 %v1786, %v1787
        %2082 = vmax.xlane.f32.xlu0 %v2081
        %v2083 = vpop.xlane.xlu0 %2082
        %v2084 = vmax.f32 %v1788, %v1789
        %2085 = vmax.xlane.f32.xlu0 %v2084
        %v2086 = vpop.xlane.xlu0 %2085
        %v2087 = vmax.f32 %v1790, %v1791
        %2088 = vmax.xlane.f32.xlu0 %v2087
        %v2089 = vpop.xlane.xlu0 %2088
        %v2090 = vmax.f32 %v1792, %v1793
        %2091 = vmax.xlane.f32.xlu0 %v2090
        %v2092 = vpop.xlane.xlu0 %2091
        %v2093 = vmax.f32 %v1794, %v1795
        %2094 = vmax.xlane.f32.xlu0 %v2093
        %v2095 = vpop.xlane.xlu0 %2094
        %v2096 = vmax.f32 %v1796, %v1797
        %2097 = vmax.xlane.f32.xlu0 %v2096
        %v2098 = vpop.xlane.xlu0 %2097
        %v2099 = vmax.f32 %v1798, %v1799
        %2100 = vmax.xlane.f32.xlu0 %v2099
        %v2101 = vpop.xlane.xlu0 %2100
        %v2102 = vmax.f32 %v1800, %v1801
        %2103 = vmax.xlane.f32.xlu0 %v2102
        %v2104 = vpop.xlane.xlu0 %2103
        %v2105 = vmax.f32 %v1802, %v1803
        %2106 = vmax.xlane.f32.xlu0 %v2105
        %v2107 = vpop.xlane.xlu0 %2106
        %v2108 = vmax.f32 %v1804, %v1805
        %2109 = vmax.xlane.f32.xlu0 %v2108
        %v2110 = vpop.xlane.xlu0 %2109
        %v2111 = vmax.f32 %v1806, %v1807
        %2112 = vmax.xlane.f32.xlu0 %v2111
        %v2113 = vpop.xlane.xlu0 %2112
        %v2114 = vmax.f32 %v1808, %v1809
        %2115 = vmax.xlane.f32.xlu0 %v2114
        %v2116 = vpop.xlane.xlu0 %2115
        %v2117 = vmax.f32 %v1810, %v1811
        %2118 = vmax.xlane.f32.xlu0 %v2117
        %v2119 = vpop.xlane.xlu0 %2118
        %v2120 = vmax.f32 %v1812, %v1813
        %2121 = vmax.xlane.f32.xlu0 %v2120
        %v2122 = vpop.xlane.xlu0 %2121
        %v2123 = vmax.f32 %v1814, %v1815
        %2124 = vmax.xlane.f32.xlu0 %v2123
        %v2125 = vpop.xlane.xlu0 %2124
        %v2126 = vmax.f32 %v1816, %v1817
        %2127 = vmax.xlane.f32.xlu0 %v2126
        %v2128 = vpop.xlane.xlu0 %2127
        %v2129 = vmax.f32 %v1818, %v1819
        %2130 = vmax.xlane.f32.xlu0 %v2129
        %v2131 = vpop.xlane.xlu0 %2130
        %v2132 = vmax.f32 %v1820, %v1821
        %2133 = vmax.xlane.f32.xlu0 %v2132
        %v2134 = vpop.xlane.xlu0 %2133
        %v2135 = vmax.f32 %v1822, %v1823
        %2136 = vmax.xlane.f32.xlu0 %v2135
        %v2137 = vpop.xlane.xlu0 %2136
        %v2138 = vmax.f32 %v1824, %v1825
        %2139 = vmax.xlane.f32.xlu0 %v2138
        %v2140 = vpop.xlane.xlu0 %2139
        %v2141 = vmax.f32 %v1826, %v1827
        %2142 = vmax.xlane.f32.xlu0 %v2141
        %v2143 = vpop.xlane.xlu0 %2142
        %v2144 = vmax.f32 %v1828, %v1829
        %2145 = vmax.xlane.f32.xlu0 %v2144
        %v2146 = vpop.xlane.xlu0 %2145
        %v2147 = vmax.f32 %v1830, %v1831
        %2148 = vmax.xlane.f32.xlu0 %v2147
        %v2149 = vpop.xlane.xlu0 %2148
        %v2150 = vmax.f32 %v1832, %v1833
        %2151 = vmax.xlane.f32.xlu0 %v2150
        %v2152 = vpop.xlane.xlu0 %2151
        %v2153 = vmax.f32 %v1834, %v1835
        %2154 = vmax.xlane.f32.xlu0 %v2153
        %v2155 = vpop.xlane.xlu0 %2154
        %v2156 = vmax.f32 %v1836, %v1837
        %2157 = vmax.xlane.f32.xlu0 %v2156
        %v2158 = vpop.xlane.xlu0 %2157
        %v2159 = vmax.f32 %v1838, %v1839
        %2160 = vmax.xlane.f32.xlu0 %v2159
        %v2161 = vpop.xlane.xlu0 %2160
        %v2162 = vmax.f32 %v1840, %v1841
        %2163 = vmax.xlane.f32.xlu0 %v2162
        %v2164 = vpop.xlane.xlu0 %2163
        %v2165 = vmax.f32 %v1842, %v1843
        %2166 = vmax.xlane.f32.xlu0 %v2165
        %v2167 = vpop.xlane.xlu0 %2166
        %v2168 = vmax.f32 %v1844, %v1845
        %2169 = vmax.xlane.f32.xlu0 %v2168
        %v2170 = vpop.xlane.xlu0 %2169
        %v2171 = vmax.f32 %v1846, %v1847
        %2172 = vmax.xlane.f32.xlu0 %v2171
        %v2173 = vpop.xlane.xlu0 %2172
        %v2174 = vmax.f32 %v1848, %v1849
        %2175 = vmax.xlane.f32.xlu0 %v2174
        %v2176 = vpop.xlane.xlu0 %2175
        %v2177 = vmax.f32 %v1850, %v1851
        %2178 = vmax.xlane.f32.xlu0 %v2177
        %v2179 = vpop.xlane.xlu0 %2178
        %v2180 = vmax.f32 %v1852, %v1853
        %2181 = vmax.xlane.f32.xlu0 %v2180
        %v2182 = vpop.xlane.xlu0 %2181
        %v2183 = vmax.f32 %v1854, %v1855
        %2184 = vmax.xlane.f32.xlu0 %v2183
        %v2185 = vpop.xlane.xlu0 %2184
        %v2186 = vmax.f32 %v1856, %v1857
        %2187 = vmax.xlane.f32.xlu0 %v2186
        %v2188 = vpop.xlane.xlu0 %2187
        %v2189 = vmax.f32 %v1858, %v1859
        %2190 = vmax.xlane.f32.xlu0 %v2189
        %v2191 = vpop.xlane.xlu0 %2190
        %v2192 = vmax.f32 %v1860, %v1861
        %2193 = vmax.xlane.f32.xlu0 %v2192
        %v2194 = vpop.xlane.xlu0 %2193
        %v2195 = vmax.f32 %v1862, %v1863
        %2196 = vmax.xlane.f32.xlu0 %v2195
        %v2197 = vpop.xlane.xlu0 %2196
        %v2198 = vmax.f32 %v1864, %v1865
        %2199 = vmax.xlane.f32.xlu0 %v2198
        %v2200 = vpop.xlane.xlu0 %2199
        %v2201 = vmax.f32 %v1866, %v1867
        %2202 = vmax.xlane.f32.xlu0 %v2201
        %v2203 = vpop.xlane.xlu0 %2202
        %v2204 = vmax.f32 %v1868, %v1869
        %2205 = vmax.xlane.f32.xlu0 %v2204
        %v2206 = vpop.xlane.xlu0 %2205
        %v2207 = vmax.f32 %v1870, %v1871
        %2208 = vmax.xlane.f32.xlu0 %v2207
        %v2209 = vpop.xlane.xlu0 %2208
        %v2210 = vmax.f32 %v1872, %v1873
        %2211 = vmax.xlane.f32.xlu0 %v2210
        %v2212 = vpop.xlane.xlu0 %2211
        %v2213 = vmax.f32 %v1874, %v1875
        %2214 = vmax.xlane.f32.xlu0 %v2213
        %v2215 = vpop.xlane.xlu0 %2214
        %v2216 = vmax.f32 %v1876, %v1877
        %2217 = vmax.xlane.f32.xlu0 %v2216
        %v2218 = vpop.xlane.xlu0 %2217
        %v2219 = vmax.f32 %v1878, %v1879
        %2220 = vmax.xlane.f32.xlu0 %v2219
        %v2221 = vpop.xlane.xlu0 %2220
        %v2222 = vmax.f32 %v1880, %v1881
        %2223 = vmax.xlane.f32.xlu0 %v2222
        %v2224 = vpop.xlane.xlu0 %2223
        %v2225 = vmax.f32 %v1882, %v1883
        %2226 = vmax.xlane.f32.xlu0 %v2225
        %v2227 = vpop.xlane.xlu0 %2226
        %v2228 = vmax.f32 %v1884, %v1885
        %2229 = vmax.xlane.f32.xlu0 %v2228
        %v2230 = vpop.xlane.xlu0 %2229
        %v2231 = vmax.f32 %v1886, %v1887
        %2232 = vmax.xlane.f32.xlu0 %v2231
        %v2233 = vpop.xlane.xlu0 %2232
        %v2234 = vmax.f32 %v1888, %v1889
        %2235 = vmax.xlane.f32.xlu0 %v2234
        %v2236 = vpop.xlane.xlu0 %2235
        %v2237 = vmax.f32 %v1890, %v1891
        %2238 = vmax.xlane.f32.xlu0 %v2237
        %v2239 = vpop.xlane.xlu0 %2238
        %v2240 = vmax.f32 %v1892, %v1893
        %2241 = vmax.xlane.f32.xlu0 %v2240
        %v2242 = vpop.xlane.xlu0 %2241
        %v2243 = vmax.f32 %v1894, %v1895
        %2244 = vmax.xlane.f32.xlu0 %v2243
        %v2245 = vpop.xlane.xlu0 %2244
        %v2246 = vmax.f32 %v1896, %v1897
        %2247 = vmax.xlane.f32.xlu0 %v2246
        %v2248 = vpop.xlane.xlu0 %2247
        %v2249 = vmax.f32 %v1898, %v1899
        %2250 = vmax.xlane.f32.xlu0 %v2249
        %v2251 = vpop.xlane.xlu0 %2250
        %v2252 = vmax.f32 %v1900, %v1901
        %2253 = vmax.xlane.f32.xlu0 %v2252
        %v2254 = vpop.xlane.xlu0 %2253
        %v2255 = vmax.f32 %v1902, %v1903
        %2256 = vmax.xlane.f32.xlu0 %v2255
        %v2257 = vpop.xlane.xlu0 %2256
        %v2258 = vmax.f32 %v1904, %v1905
        %2259 = vmax.xlane.f32.xlu0 %v2258
        %v2260 = vpop.xlane.xlu0 %2259
        %v2261 = vmax.f32 %v1906, %v1907
        %2262 = vmax.xlane.f32.xlu0 %v2261
        %v2263 = vpop.xlane.xlu0 %2262
        %v2264 = vmax.f32 %v1908, %v1909
        %2265 = vmax.xlane.f32.xlu0 %v2264
        %v2266 = vpop.xlane.xlu0 %2265
        %v2267 = vmax.f32 %v1910, %v1911
        %2268 = vmax.xlane.f32.xlu0 %v2267
        %v2269 = vpop.xlane.xlu0 %2268
        %v2270 = vmax.f32 %v1912, %v1913
        %2271 = vmax.xlane.f32.xlu0 %v2270
        %v2272 = vpop.xlane.xlu0 %2271
        %v2273 = vmax.f32 %v1914, %v1915
        %2274 = vmax.xlane.f32.xlu0 %v2273
        %v2275 = vpop.xlane.xlu0 %2274
        %v2276 = vmax.f32 %v1916, %v1917
        %2277 = vmax.xlane.f32.xlu0 %v2276
        %v2278 = vpop.xlane.xlu0 %2277
        %v2279 = vmax.f32 %v1918, %v1919
        %2280 = vmax.xlane.f32.xlu0 %v2279
        %v2281 = vpop.xlane.xlu0 %2280
        %v2282 = vmax.f32 %v1920, %v1921
        %2283 = vmax.xlane.f32.xlu0 %v2282
        %v2284 = vpop.xlane.xlu0 %2283
        %v2285 = vmax.f32 %v1922, %v1923
        %2286 = vmax.xlane.f32.xlu0 %v2285
        %v2287 = vpop.xlane.xlu0 %2286
        %v2288 = vmax.f32 %v1924, %v1925
        %2289 = vmax.xlane.f32.xlu0 %v2288
        %v2290 = vpop.xlane.xlu0 %2289
        %v2291 = vmax.f32 %v1926, %v1927
        %2292 = vmax.xlane.f32.xlu0 %v2291
        %v2293 = vpop.xlane.xlu0 %2292
        %v2294 = vmax.f32 %v1928, %v1929
        %2295 = vmax.xlane.f32.xlu0 %v2294
        %v2296 = vpop.xlane.xlu0 %2295
        %v2297 = vmax.f32 %v1930, %v1931
        %2298 = vmax.xlane.f32.xlu0 %v2297
        %v2299 = vpop.xlane.xlu0 %2298
        %v2300 = vmax.f32 %v1932, %v1933
        %2301 = vmax.xlane.f32.xlu0 %v2300
        %v2302 = vpop.xlane.xlu0 %2301
        %v2303 = vmax.f32 %v1934, %v1935
        %2304 = vmax.xlane.f32.xlu0 %v2303
        %v2305 = vpop.xlane.xlu0 %2304
        %v2306 = vmax.f32 %v1936, %v1937
        %2307 = vmax.xlane.f32.xlu0 %v2306
        %v2308 = vpop.xlane.xlu0 %2307
        %v2309 = vmax.f32 %v1938, %v1939
        %2310 = vmax.xlane.f32.xlu0 %v2309
        %v2311 = vpop.xlane.xlu0 %2310
        %v2312 = vmax.f32 %v1940, %v1941
        %2313 = vmax.xlane.f32.xlu0 %v2312
        %v2314 = vpop.xlane.xlu0 %2313
        %v2315 = vmax.f32 %v1942, %v1943
        %2316 = vmax.xlane.f32.xlu0 %v2315
        %v2317 = vpop.xlane.xlu0 %2316
        %v2318 = vmax.f32 %v1944, %v1945
        %2319 = vmax.xlane.f32.xlu0 %v2318
        %v2320 = vpop.xlane.xlu0 %2319
        %v2321 = vmax.f32 %v1946, %v1947
        %2322 = vmax.xlane.f32.xlu0 %v2321
        %v2323 = vpop.xlane.xlu0 %2322
        %v2324 = vmax.f32 %v1948, %v1949
        %2325 = vmax.xlane.f32.xlu0 %v2324
        %v2326 = vpop.xlane.xlu0 %2325
        %v2327 = vmax.f32 %v1950, %v1951
        %2328 = vmax.xlane.f32.xlu0 %v2327
        %v2329 = vpop.xlane.xlu0 %2328
        %v2330 = vmax.f32 %v1952, %v1953
        %2331 = vmax.xlane.f32.xlu0 %v2330
        %v2332 = vpop.xlane.xlu0 %2331
        %v2333 = vmax.f32 %v1954, %v1955
        %2334 = vmax.xlane.f32.xlu0 %v2333
        %v2335 = vpop.xlane.xlu0 %2334
        %v2336 = vmax.f32 %v1956, %v1957
        %2337 = vmax.xlane.f32.xlu0 %v2336
        %v2338 = vpop.xlane.xlu0 %2337
        %v2339 = vmax.f32 %v1958, %v1959
        %2340 = vmax.xlane.f32.xlu0 %v2339
        %v2341 = vpop.xlane.xlu0 %2340
        %v2342 = vmax.f32 %v1960, %v1961
        %2343 = vmax.xlane.f32.xlu0 %v2342
        %v2344 = vpop.xlane.xlu0 %2343
        %v2345 = vmax.f32 %v1962, %v1963
        %2346 = vmax.xlane.f32.xlu0 %v2345
        %v2347 = vpop.xlane.xlu0 %2346
        %v2348 = vmax.f32 %v1964, %v1965
        %2349 = vmax.xlane.f32.xlu0 %v2348
        %v2350 = vpop.xlane.xlu0 %2349
        %v2351 = vmax.f32 %v1966, %v1967
        %2352 = vmax.xlane.f32.xlu0 %v2351
        %v2353 = vpop.xlane.xlu0 %2352
        %v2354 = vmax.f32 %v1968, %v1969
        %2355 = vmax.xlane.f32.xlu0 %v2354
        %v2356 = vpop.xlane.xlu0 %2355
        %v2357 = vmax.f32 %v1970, %v1971
        %2358 = vmax.xlane.f32.xlu0 %v2357
        %v2359 = vpop.xlane.xlu0 %2358
        %v2360 = vmax.f32 %v1972, %v1973
        %2361 = vmax.xlane.f32.xlu0 %v2360
        %v2362 = vpop.xlane.xlu0 %2361
        %v2363 = vmax.f32 %v1974, %v1975
        %2364 = vmax.xlane.f32.xlu0 %v2363
        %v2365 = vpop.xlane.xlu0 %2364
        %v2366 = vmax.f32 %v1976, %v1977
        %2367 = vmax.xlane.f32.xlu0 %v2366
        %v2368 = vpop.xlane.xlu0 %2367
        %v2369 = vmax.f32 %v1978, %v1979
        %2370 = vmax.xlane.f32.xlu0 %v2369
        %v2371 = vpop.xlane.xlu0 %2370
        %v2372 = vmax.f32 %v1980, %v1981
        %2373 = vmax.xlane.f32.xlu0 %v2372
        %v2374 = vpop.xlane.xlu0 %2373
        %v2375 = vmax.f32 %v1982, %v1983
        %2376 = vmax.xlane.f32.xlu0 %v2375
        %v2377 = vpop.xlane.xlu0 %2376
        %v2378 = vmax.f32 %v1984, %v1985
        %2379 = vmax.xlane.f32.xlu0 %v2378
        %v2380 = vpop.xlane.xlu0 %2379
        %v2381 = vmax.f32 %v1986, %v1987
        %2382 = vmax.xlane.f32.xlu0 %v2381
        %v2383 = vpop.xlane.xlu0 %2382
        %v2384 = vmax.f32 %v1988, %v1989
        %2385 = vmax.xlane.f32.xlu0 %v2384
        %v2386 = vpop.xlane.xlu0 %2385
        %v2387 = vmax.f32 %v1990, %v1991
        %2388 = vmax.xlane.f32.xlu0 %v2387
        %v2389 = vpop.xlane.xlu0 %2388
        %v2390 = vmax.f32 %v1992, %v1993
        %2391 = vmax.xlane.f32.xlu0 %v2390
        %v2392 = vpop.xlane.xlu0 %2391
        %v2393 = vmax.f32 %v1994, %v1995
        %2394 = vmax.xlane.f32.xlu0 %v2393
        %v2395 = vpop.xlane.xlu0 %2394
        %v2524 = vlaneseq
        %v2525 = vand.u32 %v2524, 127
        %v2526 = vlaneseq
        %v2527 = vshrl.u32 %v2526, 7
        %v2528 = vsub.s32 %v2525, %v2527
        %v2529 = vrot.slane %v2014, %v2528
        %v2530 = vlaneseq
        %v2531 = vshrl.u32 %v2530, 7
        %v2532 = vsub.s32 %v2525, %v2531
        %v2533 = vrot.slane %v2017, %v2532
        %v2534 = vlaneseq
        %v2535 = vshrl.u32 %v2534, 7
        %v2536 = vsub.s32 %v2525, %v2535
        %v2537 = vrot.slane %v2020, %v2536
        %v2538 = vlaneseq
        %v2539 = vshrl.u32 %v2538, 7
        %v2540 = vsub.s32 %v2525, %v2539
        %v2541 = vrot.slane %v2023, %v2540
        %v2542 = vlaneseq
        %v2543 = vshrl.u32 %v2542, 7
        %v2544 = vsub.s32 %v2525, %v2543
        %v2545 = vrot.slane %v2026, %v2544
        %v2546 = vlaneseq
        %v2547 = vshrl.u32 %v2546, 7
        %v2548 = vsub.s32 %v2525, %v2547
        %v2549 = vrot.slane %v2029, %v2548
        %v2550 = vlaneseq
        %v2551 = vshrl.u32 %v2550, 7
        %v2552 = vsub.s32 %v2525, %v2551
        %v2553 = vrot.slane %v2032, %v2552
        %v2554 = vlaneseq
        %v2555 = vshrl.u32 %v2554, 7
        %v2556 = vsub.s32 %v2525, %v2555
        %v2557 = vrot.slane %v2035, %v2556
        %v2558 = vlaneseq
        %v2559 = vshrl.u32 %v2558, 7
        %v2560 = vsub.s32 %v2525, %v2559
        %v2561 = vrot.slane %v2038, %v2560
        %v2562 = vlaneseq
        %v2563 = vshrl.u32 %v2562, 7
        %v2564 = vsub.s32 %v2525, %v2563
        %v2565 = vrot.slane %v2041, %v2564
        %v2566 = vlaneseq
        %v2567 = vshrl.u32 %v2566, 7
        %v2568 = vsub.s32 %v2525, %v2567
        %v2569 = vrot.slane %v2044, %v2568
        %v2570 = vlaneseq
        %v2571 = vshrl.u32 %v2570, 7
        %v2572 = vsub.s32 %v2525, %v2571
        %v2573 = vrot.slane %v2047, %v2572
        %v2574 = vlaneseq
        %v2575 = vshrl.u32 %v2574, 7
        %v2576 = vsub.s32 %v2525, %v2575
        %v2577 = vrot.slane %v2050, %v2576
        %v2578 = vlaneseq
        %v2579 = vshrl.u32 %v2578, 7
        %v2580 = vsub.s32 %v2525, %v2579
        %v2581 = vrot.slane %v2053, %v2580
        %v2582 = vlaneseq
        %v2583 = vshrl.u32 %v2582, 7
        %v2584 = vsub.s32 %v2525, %v2583
        %v2585 = vrot.slane %v2056, %v2584
        %v2586 = vlaneseq
        %v2587 = vshrl.u32 %v2586, 7
        %v2588 = vsub.s32 %v2525, %v2587
        %v2589 = vrot.slane %v2059, %v2588
        %v2590 = vlaneseq
        %v2591 = vshrl.u32 %v2590, 7
        %v2592 = vsub.s32 %v2525, %v2591
        %v2593 = vrot.slane %v2062, %v2592
        %v2594 = vlaneseq
        %v2595 = vshrl.u32 %v2594, 7
        %v2596 = vsub.s32 %v2525, %v2595
        %v2597 = vrot.slane %v2065, %v2596
        %v2598 = vlaneseq
        %v2599 = vshrl.u32 %v2598, 7
        %v2600 = vsub.s32 %v2525, %v2599
        %v2601 = vrot.slane %v2068, %v2600
        %v2602 = vlaneseq
        %v2603 = vshrl.u32 %v2602, 7
        %v2604 = vsub.s32 %v2525, %v2603
        %v2605 = vrot.slane %v2071, %v2604
        %v2606 = vlaneseq
        %v2607 = vshrl.u32 %v2606, 7
        %v2608 = vsub.s32 %v2525, %v2607
        %v2609 = vrot.slane %v2074, %v2608
        %v2610 = vlaneseq
        %v2611 = vshrl.u32 %v2610, 7
        %v2612 = vsub.s32 %v2525, %v2611
        %v2613 = vrot.slane %v2077, %v2612
        %v2614 = vlaneseq
        %v2615 = vshrl.u32 %v2614, 7
        %v2616 = vsub.s32 %v2525, %v2615
        %v2617 = vrot.slane %v2080, %v2616
        %v2618 = vlaneseq
        %v2619 = vshrl.u32 %v2618, 7
        %v2620 = vsub.s32 %v2525, %v2619
        %v2621 = vrot.slane %v2083, %v2620
        %v2622 = vlaneseq
        %v2623 = vshrl.u32 %v2622, 7
        %v2624 = vsub.s32 %v2525, %v2623
        %v2625 = vrot.slane %v2086, %v2624
        %v2626 = vlaneseq
        %v2627 = vshrl.u32 %v2626, 7
        %v2628 = vsub.s32 %v2525, %v2627
        %v2629 = vrot.slane %v2089, %v2628
        %v2630 = vlaneseq
        %v2631 = vshrl.u32 %v2630, 7
        %v2632 = vsub.s32 %v2525, %v2631
        %v2633 = vrot.slane %v2092, %v2632
        %v2634 = vlaneseq
        %v2635 = vshrl.u32 %v2634, 7
        %v2636 = vsub.s32 %v2525, %v2635
        %v2637 = vrot.slane %v2095, %v2636
        %v2638 = vlaneseq
        %v2639 = vshrl.u32 %v2638, 7
        %v2640 = vsub.s32 %v2525, %v2639
        %v2641 = vrot.slane %v2098, %v2640
        %v2642 = vlaneseq
        %v2643 = vshrl.u32 %v2642, 7
        %v2644 = vsub.s32 %v2525, %v2643
        %v2645 = vrot.slane %v2101, %v2644
        %v2646 = vlaneseq
        %v2647 = vshrl.u32 %v2646, 7
        %v2648 = vsub.s32 %v2525, %v2647
        %v2649 = vrot.slane %v2104, %v2648
        %v2650 = vlaneseq
        %v2651 = vshrl.u32 %v2650, 7
        %v2652 = vsub.s32 %v2525, %v2651
        %v2653 = vrot.slane %v2107, %v2652
        %v2654 = vlaneseq
        %v2655 = vshrl.u32 %v2654, 7
        %v2656 = vsub.s32 %v2525, %v2655
        %v2657 = vrot.slane %v2110, %v2656
        %v2658 = vlaneseq
        %v2659 = vshrl.u32 %v2658, 7
        %v2660 = vsub.s32 %v2525, %v2659
        %v2661 = vrot.slane %v2113, %v2660
        %v2662 = vlaneseq
        %v2663 = vshrl.u32 %v2662, 7
        %v2664 = vsub.s32 %v2525, %v2663
        %v2665 = vrot.slane %v2116, %v2664
        %v2666 = vlaneseq
        %v2667 = vshrl.u32 %v2666, 7
        %v2668 = vsub.s32 %v2525, %v2667
        %v2669 = vrot.slane %v2119, %v2668
        %v2670 = vlaneseq
        %v2671 = vshrl.u32 %v2670, 7
        %v2672 = vsub.s32 %v2525, %v2671
        %v2673 = vrot.slane %v2122, %v2672
        %v2674 = vlaneseq
        %v2675 = vshrl.u32 %v2674, 7
        %v2676 = vsub.s32 %v2525, %v2675
        %v2677 = vrot.slane %v2125, %v2676
        %v2678 = vlaneseq
        %v2679 = vshrl.u32 %v2678, 7
        %v2680 = vsub.s32 %v2525, %v2679
        %v2681 = vrot.slane %v2128, %v2680
        %v2682 = vlaneseq
        %v2683 = vshrl.u32 %v2682, 7
        %v2684 = vsub.s32 %v2525, %v2683
        %v2685 = vrot.slane %v2131, %v2684
        %v2686 = vlaneseq
        %v2687 = vshrl.u32 %v2686, 7
        %v2688 = vsub.s32 %v2525, %v2687
        %v2689 = vrot.slane %v2134, %v2688
        %v2690 = vlaneseq
        %v2691 = vshrl.u32 %v2690, 7
        %v2692 = vsub.s32 %v2525, %v2691
        %v2693 = vrot.slane %v2137, %v2692
        %v2694 = vlaneseq
        %v2695 = vshrl.u32 %v2694, 7
        %v2696 = vsub.s32 %v2525, %v2695
        %v2697 = vrot.slane %v2140, %v2696
        %v2698 = vlaneseq
        %v2699 = vshrl.u32 %v2698, 7
        %v2700 = vsub.s32 %v2525, %v2699
        %v2701 = vrot.slane %v2143, %v2700
        %v2702 = vlaneseq
        %v2703 = vshrl.u32 %v2702, 7
        %v2704 = vsub.s32 %v2525, %v2703
        %v2705 = vrot.slane %v2146, %v2704
        %v2706 = vlaneseq
        %v2707 = vshrl.u32 %v2706, 7
        %v2708 = vsub.s32 %v2525, %v2707
        %v2709 = vrot.slane %v2149, %v2708
        %v2710 = vlaneseq
        %v2711 = vshrl.u32 %v2710, 7
        %v2712 = vsub.s32 %v2525, %v2711
        %v2713 = vrot.slane %v2152, %v2712
        %v2714 = vlaneseq
        %v2715 = vshrl.u32 %v2714, 7
        %v2716 = vsub.s32 %v2525, %v2715
        %v2717 = vrot.slane %v2155, %v2716
        %v2718 = vlaneseq
        %v2719 = vshrl.u32 %v2718, 7
        %v2720 = vsub.s32 %v2525, %v2719
        %v2721 = vrot.slane %v2158, %v2720
        %v2722 = vlaneseq
        %v2723 = vshrl.u32 %v2722, 7
        %v2724 = vsub.s32 %v2525, %v2723
        %v2725 = vrot.slane %v2161, %v2724
        %v2726 = vlaneseq
        %v2727 = vshrl.u32 %v2726, 7
        %v2728 = vsub.s32 %v2525, %v2727
        %v2729 = vrot.slane %v2164, %v2728
        %v2730 = vlaneseq
        %v2731 = vshrl.u32 %v2730, 7
        %v2732 = vsub.s32 %v2525, %v2731
        %v2733 = vrot.slane %v2167, %v2732
        %v2734 = vlaneseq
        %v2735 = vshrl.u32 %v2734, 7
        %v2736 = vsub.s32 %v2525, %v2735
        %v2737 = vrot.slane %v2170, %v2736
        %v2738 = vlaneseq
        %v2739 = vshrl.u32 %v2738, 7
        %v2740 = vsub.s32 %v2525, %v2739
        %v2741 = vrot.slane %v2173, %v2740
        %v2742 = vlaneseq
        %v2743 = vshrl.u32 %v2742, 7
        %v2744 = vsub.s32 %v2525, %v2743
        %v2745 = vrot.slane %v2176, %v2744
        %v2746 = vlaneseq
        %v2747 = vshrl.u32 %v2746, 7
        %v2748 = vsub.s32 %v2525, %v2747
        %v2749 = vrot.slane %v2179, %v2748
        %v2750 = vlaneseq
        %v2751 = vshrl.u32 %v2750, 7
        %v2752 = vsub.s32 %v2525, %v2751
        %v2753 = vrot.slane %v2182, %v2752
        %v2754 = vlaneseq
        %v2755 = vshrl.u32 %v2754, 7
        %v2756 = vsub.s32 %v2525, %v2755
        %v2757 = vrot.slane %v2185, %v2756
        %v2758 = vlaneseq
        %v2759 = vshrl.u32 %v2758, 7
        %v2760 = vsub.s32 %v2525, %v2759
        %v2761 = vrot.slane %v2188, %v2760
        %v2762 = vlaneseq
        %v2763 = vshrl.u32 %v2762, 7
        %v2764 = vsub.s32 %v2525, %v2763
        %v2765 = vrot.slane %v2191, %v2764
        %v2766 = vlaneseq
        %v2767 = vshrl.u32 %v2766, 7
        %v2768 = vsub.s32 %v2525, %v2767
        %v2769 = vrot.slane %v2194, %v2768
        %v2770 = vlaneseq
        %v2771 = vshrl.u32 %v2770, 7
        %v2772 = vsub.s32 %v2525, %v2771
        %v2773 = vrot.slane %v2197, %v2772
        %v2774 = vlaneseq
        %v2775 = vshrl.u32 %v2774, 7
        %v2776 = vsub.s32 %v2525, %v2775
        %v2777 = vrot.slane %v2200, %v2776
        %v2778 = vlaneseq
        %v2779 = vshrl.u32 %v2778, 7
        %v2780 = vsub.s32 %v2525, %v2779
        %v2781 = vrot.slane %v2203, %v2780
        %v2782 = vlaneseq
        %v2783 = vshrl.u32 %v2782, 7
        %v2784 = vsub.s32 %v2525, %v2783
        %v2785 = vrot.slane %v2206, %v2784
        %v2786 = vlaneseq
        %v2787 = vshrl.u32 %v2786, 7
        %v2788 = vsub.s32 %v2525, %v2787
        %v2789 = vrot.slane %v2209, %v2788
        %v2790 = vlaneseq
        %v2791 = vshrl.u32 %v2790, 7
        %v2792 = vsub.s32 %v2525, %v2791
        %v2793 = vrot.slane %v2212, %v2792
        %v2794 = vlaneseq
        %v2795 = vshrl.u32 %v2794, 7
        %v2796 = vsub.s32 %v2525, %v2795
        %v2797 = vrot.slane %v2215, %v2796
        %v2798 = vlaneseq
        %v2799 = vshrl.u32 %v2798, 7
        %v2800 = vsub.s32 %v2525, %v2799
        %v2801 = vrot.slane %v2218, %v2800
        %v2802 = vlaneseq
        %v2803 = vshrl.u32 %v2802, 7
        %v2804 = vsub.s32 %v2525, %v2803
        %v2805 = vrot.slane %v2221, %v2804
        %v2806 = vlaneseq
        %v2807 = vshrl.u32 %v2806, 7
        %v2808 = vsub.s32 %v2525, %v2807
        %v2809 = vrot.slane %v2224, %v2808
        %v2810 = vlaneseq
        %v2811 = vshrl.u32 %v2810, 7
        %v2812 = vsub.s32 %v2525, %v2811
        %v2813 = vrot.slane %v2227, %v2812
        %v2814 = vlaneseq
        %v2815 = vshrl.u32 %v2814, 7
        %v2816 = vsub.s32 %v2525, %v2815
        %v2817 = vrot.slane %v2230, %v2816
        %v2818 = vlaneseq
        %v2819 = vshrl.u32 %v2818, 7
        %v2820 = vsub.s32 %v2525, %v2819
        %v2821 = vrot.slane %v2233, %v2820
        %v2822 = vlaneseq
        %v2823 = vshrl.u32 %v2822, 7
        %v2824 = vsub.s32 %v2525, %v2823
        %v2825 = vrot.slane %v2236, %v2824
        %v2826 = vlaneseq
        %v2827 = vshrl.u32 %v2826, 7
        %v2828 = vsub.s32 %v2525, %v2827
        %v2829 = vrot.slane %v2239, %v2828
        %v2830 = vlaneseq
        %v2831 = vshrl.u32 %v2830, 7
        %v2832 = vsub.s32 %v2525, %v2831
        %v2833 = vrot.slane %v2242, %v2832
        %v2834 = vlaneseq
        %v2835 = vshrl.u32 %v2834, 7
        %v2836 = vsub.s32 %v2525, %v2835
        %v2837 = vrot.slane %v2245, %v2836
        %v2838 = vlaneseq
        %v2839 = vshrl.u32 %v2838, 7
        %v2840 = vsub.s32 %v2525, %v2839
        %v2841 = vrot.slane %v2248, %v2840
        %v2842 = vlaneseq
        %v2843 = vshrl.u32 %v2842, 7
        %v2844 = vsub.s32 %v2525, %v2843
        %v2845 = vrot.slane %v2251, %v2844
        %v2846 = vlaneseq
        %v2847 = vshrl.u32 %v2846, 7
        %v2848 = vsub.s32 %v2525, %v2847
        %v2849 = vrot.slane %v2254, %v2848
        %v2850 = vlaneseq
        %v2851 = vshrl.u32 %v2850, 7
        %v2852 = vsub.s32 %v2525, %v2851
        %v2853 = vrot.slane %v2257, %v2852
        %v2854 = vlaneseq
        %v2855 = vshrl.u32 %v2854, 7
        %v2856 = vsub.s32 %v2525, %v2855
        %v2857 = vrot.slane %v2260, %v2856
        %v2858 = vlaneseq
        %v2859 = vshrl.u32 %v2858, 7
        %v2860 = vsub.s32 %v2525, %v2859
        %v2861 = vrot.slane %v2263, %v2860
        %v2862 = vlaneseq
        %v2863 = vshrl.u32 %v2862, 7
        %v2864 = vsub.s32 %v2525, %v2863
        %v2865 = vrot.slane %v2266, %v2864
        %v2866 = vlaneseq
        %v2867 = vshrl.u32 %v2866, 7
        %v2868 = vsub.s32 %v2525, %v2867
        %v2869 = vrot.slane %v2269, %v2868
        %v2870 = vlaneseq
        %v2871 = vshrl.u32 %v2870, 7
        %v2872 = vsub.s32 %v2525, %v2871
        %v2873 = vrot.slane %v2272, %v2872
        %v2874 = vlaneseq
        %v2875 = vshrl.u32 %v2874, 7
        %v2876 = vsub.s32 %v2525, %v2875
        %v2877 = vrot.slane %v2275, %v2876
        %v2878 = vlaneseq
        %v2879 = vshrl.u32 %v2878, 7
        %v2880 = vsub.s32 %v2525, %v2879
        %v2881 = vrot.slane %v2278, %v2880
        %v2882 = vlaneseq
        %v2883 = vshrl.u32 %v2882, 7
        %v2884 = vsub.s32 %v2525, %v2883
        %v2885 = vrot.slane %v2281, %v2884
        %v2886 = vlaneseq
        %v2887 = vshrl.u32 %v2886, 7
        %v2888 = vsub.s32 %v2525, %v2887
        %v2889 = vrot.slane %v2284, %v2888
        %v2890 = vlaneseq
        %v2891 = vshrl.u32 %v2890, 7
        %v2892 = vsub.s32 %v2525, %v2891
        %v2893 = vrot.slane %v2287, %v2892
        %v2894 = vlaneseq
        %v2895 = vshrl.u32 %v2894, 7
        %v2896 = vsub.s32 %v2525, %v2895
        %v2897 = vrot.slane %v2290, %v2896
        %v2898 = vlaneseq
        %v2899 = vshrl.u32 %v2898, 7
        %v2900 = vsub.s32 %v2525, %v2899
        %v2901 = vrot.slane %v2293, %v2900
        %v2902 = vlaneseq
        %v2903 = vshrl.u32 %v2902, 7
        %v2904 = vsub.s32 %v2525, %v2903
        %v2905 = vrot.slane %v2296, %v2904
        %v2906 = vlaneseq
        %v2907 = vshrl.u32 %v2906, 7
        %v2908 = vsub.s32 %v2525, %v2907
        %v2909 = vrot.slane %v2299, %v2908
        %v2910 = vlaneseq
        %v2911 = vshrl.u32 %v2910, 7
        %v2912 = vsub.s32 %v2525, %v2911
        %v2913 = vrot.slane %v2302, %v2912
        %v2914 = vlaneseq
        %v2915 = vshrl.u32 %v2914, 7
        %v2916 = vsub.s32 %v2525, %v2915
        %v2917 = vrot.slane %v2305, %v2916
        %v2918 = vlaneseq
        %v2919 = vshrl.u32 %v2918, 7
        %v2920 = vsub.s32 %v2525, %v2919
        %v2921 = vrot.slane %v2308, %v2920
        %v2922 = vlaneseq
        %v2923 = vshrl.u32 %v2922, 7
        %v2924 = vsub.s32 %v2525, %v2923
        %v2925 = vrot.slane %v2311, %v2924
        %v2926 = vlaneseq
        %v2927 = vshrl.u32 %v2926, 7
        %v2928 = vsub.s32 %v2525, %v2927
        %v2929 = vrot.slane %v2314, %v2928
        %v2930 = vlaneseq
        %v2931 = vshrl.u32 %v2930, 7
        %v2932 = vsub.s32 %v2525, %v2931
        %v2933 = vrot.slane %v2317, %v2932
        %v2934 = vlaneseq
        %v2935 = vshrl.u32 %v2934, 7
        %v2936 = vsub.s32 %v2525, %v2935
        %v2937 = vrot.slane %v2320, %v2936
        %v2938 = vlaneseq
        %v2939 = vshrl.u32 %v2938, 7
        %v2940 = vsub.s32 %v2525, %v2939
        %v2941 = vrot.slane %v2323, %v2940
        %v2942 = vlaneseq
        %v2943 = vshrl.u32 %v2942, 7
        %v2944 = vsub.s32 %v2525, %v2943
        %v2945 = vrot.slane %v2326, %v2944
        %v2946 = vlaneseq
        %v2947 = vshrl.u32 %v2946, 7
        %v2948 = vsub.s32 %v2525, %v2947
        %v2949 = vrot.slane %v2329, %v2948
        %v2950 = vlaneseq
        %v2951 = vshrl.u32 %v2950, 7
        %v2952 = vsub.s32 %v2525, %v2951
        %v2953 = vrot.slane %v2332, %v2952
        %v2954 = vlaneseq
        %v2955 = vshrl.u32 %v2954, 7
        %v2956 = vsub.s32 %v2525, %v2955
        %v2957 = vrot.slane %v2335, %v2956
        %v2958 = vlaneseq
        %v2959 = vshrl.u32 %v2958, 7
        %v2960 = vsub.s32 %v2525, %v2959
        %v2961 = vrot.slane %v2338, %v2960
        %v2962 = vlaneseq
        %v2963 = vshrl.u32 %v2962, 7
        %v2964 = vsub.s32 %v2525, %v2963
        %v2965 = vrot.slane %v2341, %v2964
        %v2966 = vlaneseq
        %v2967 = vshrl.u32 %v2966, 7
        %v2968 = vsub.s32 %v2525, %v2967
        %v2969 = vrot.slane %v2344, %v2968
        %v2970 = vlaneseq
        %v2971 = vshrl.u32 %v2970, 7
        %v2972 = vsub.s32 %v2525, %v2971
        %v2973 = vrot.slane %v2347, %v2972
        %v2974 = vlaneseq
        %v2975 = vshrl.u32 %v2974, 7
        %v2976 = vsub.s32 %v2525, %v2975
        %v2977 = vrot.slane %v2350, %v2976
        %v2978 = vlaneseq
        %v2979 = vshrl.u32 %v2978, 7
        %v2980 = vsub.s32 %v2525, %v2979
        %v2981 = vrot.slane %v2353, %v2980
        %v2982 = vlaneseq
        %v2983 = vshrl.u32 %v2982, 7
        %v2984 = vsub.s32 %v2525, %v2983
        %v2985 = vrot.slane %v2356, %v2984
        %v2986 = vlaneseq
        %v2987 = vshrl.u32 %v2986, 7
        %v2988 = vsub.s32 %v2525, %v2987
        %v2989 = vrot.slane %v2359, %v2988
        %v2990 = vlaneseq
        %v2991 = vshrl.u32 %v2990, 7
        %v2992 = vsub.s32 %v2525, %v2991
        %v2993 = vrot.slane %v2362, %v2992
        %v2994 = vlaneseq
        %v2995 = vshrl.u32 %v2994, 7
        %v2996 = vsub.s32 %v2525, %v2995
        %v2997 = vrot.slane %v2365, %v2996
        %v2998 = vlaneseq
        %v2999 = vshrl.u32 %v2998, 7
        %v3000 = vsub.s32 %v2525, %v2999
        %v3001 = vrot.slane %v2368, %v3000
        %v3002 = vlaneseq
        %v3003 = vshrl.u32 %v3002, 7
        %v3004 = vsub.s32 %v2525, %v3003
        %v3005 = vrot.slane %v2371, %v3004
        %v3006 = vlaneseq
        %v3007 = vshrl.u32 %v3006, 7
        %v3008 = vsub.s32 %v2525, %v3007
        %v3009 = vrot.slane %v2374, %v3008
        %v3010 = vlaneseq
        %v3011 = vshrl.u32 %v3010, 7
        %v3012 = vsub.s32 %v2525, %v3011
        %v3013 = vrot.slane %v2377, %v3012
        %v3014 = vlaneseq
        %v3015 = vshrl.u32 %v3014, 7
        %v3016 = vsub.s32 %v2525, %v3015
        %v3017 = vrot.slane %v2380, %v3016
        %v3018 = vlaneseq
        %v3019 = vshrl.u32 %v3018, 7
        %v3020 = vsub.s32 %v2525, %v3019
        %v3021 = vrot.slane %v2383, %v3020
        %v3022 = vlaneseq
        %v3023 = vshrl.u32 %v3022, 7
        %v3024 = vsub.s32 %v2525, %v3023
        %v3025 = vrot.slane %v2386, %v3024
        %v3026 = vlaneseq
        %v3027 = vshrl.u32 %v3026, 7
        %v3028 = vsub.s32 %v2525, %v3027
        %v3029 = vrot.slane %v2389, %v3028
        %v3030 = vlaneseq
        %v3031 = vshrl.u32 %v3030, 7
        %v3032 = vsub.s32 %v2525, %v3031
        %v3033 = vrot.slane %v2392, %v3032
        %v3034 = vlaneseq
        %v3035 = vshrl.u32 %v3034, 7
        %v3036 = vsub.s32 %v2525, %v3035
        %v3037 = vrot.slane %v2395, %v3036
        %vm3038 = vcmask 1041409
        %v3039 = vsel %vm3038, %v2533, %v2529
        %vm3040 = vcmask 1042434
        %v3041 = vsel %vm3040, %v2537, %v3039
        %vm3042 = vcmask 1043459
        %v3043 = vsel %vm3042, %v2541, %v3041
        %vm3044 = vcmask 1044484
        %v3045 = vsel %vm3044, %v2545, %v3043
        %vm3046 = vcmask 1045509
        %v3047 = vsel %vm3046, %v2549, %v3045
        %vm3048 = vcmask 1046534
        %v3049 = vsel %vm3048, %v2553, %v3047
        %vm3050 = vcmask 1047559
        %v3051 = vsel %vm3050, %v2557, %v3049
        %v3052 = vsel %vm3038, %v2565, %v2561
        %v3053 = vsel %vm3040, %v2569, %v3052
        %v3054 = vsel %vm3042, %v2573, %v3053
        %v3055 = vsel %vm3044, %v2577, %v3054
        %v3056 = vsel %vm3046, %v2581, %v3055
        %v3057 = vsel %vm3048, %v2585, %v3056
        %v3058 = vsel %vm3050, %v2589, %v3057
        %v3059 = vsel %vm3038, %v2597, %v2593
        %v3060 = vsel %vm3040, %v2601, %v3059
        %v3061 = vsel %vm3042, %v2605, %v3060
        %v3062 = vsel %vm3044, %v2609, %v3061
        %v3063 = vsel %vm3046, %v2613, %v3062
        %v3064 = vsel %vm3048, %v2617, %v3063
        %v3065 = vsel %vm3050, %v2621, %v3064
        %v3066 = vsel %vm3038, %v2629, %v2625
        %v3067 = vsel %vm3040, %v2633, %v3066
        %v3068 = vsel %vm3042, %v2637, %v3067
        %v3069 = vsel %vm3044, %v2641, %v3068
        %v3070 = vsel %vm3046, %v2645, %v3069
        %v3071 = vsel %vm3048, %v2649, %v3070
        %v3072 = vsel %vm3050, %v2653, %v3071
        %v3073 = vsel %vm3038, %v2661, %v2657
        %v3074 = vsel %vm3040, %v2665, %v3073
        %v3075 = vsel %vm3042, %v2669, %v3074
        %v3076 = vsel %vm3044, %v2673, %v3075
        %v3077 = vsel %vm3046, %v2677, %v3076
        %v3078 = vsel %vm3048, %v2681, %v3077
        %v3079 = vsel %vm3050, %v2685, %v3078
        %v3080 = vsel %vm3038, %v2693, %v2689
        %v3081 = vsel %vm3040, %v2697, %v3080
        %v3082 = vsel %vm3042, %v2701, %v3081
        %v3083 = vsel %vm3044, %v2705, %v3082
        %v3084 = vsel %vm3046, %v2709, %v3083
        %v3085 = vsel %vm3048, %v2713, %v3084
        %v3086 = vsel %vm3050, %v2717, %v3085
        %v3087 = vsel %vm3038, %v2725, %v2721
        %v3088 = vsel %vm3040, %v2729, %v3087
        %v3089 = vsel %vm3042, %v2733, %v3088
        %v3090 = vsel %vm3044, %v2737, %v3089
        %v3091 = vsel %vm3046, %v2741, %v3090
        %v3092 = vsel %vm3048, %v2745, %v3091
        %v3093 = vsel %vm3050, %v2749, %v3092
        %v3094 = vsel %vm3038, %v2757, %v2753
        %v3095 = vsel %vm3040, %v2761, %v3094
        %v3096 = vsel %vm3042, %v2765, %v3095
        %v3097 = vsel %vm3044, %v2769, %v3096
        %v3098 = vsel %vm3046, %v2773, %v3097
        %v3099 = vsel %vm3048, %v2777, %v3098
        %v3100 = vsel %vm3050, %v2781, %v3099
        %v3101 = vsel %vm3038, %v2789, %v2785
        %v3102 = vsel %vm3040, %v2793, %v3101
        %v3103 = vsel %vm3042, %v2797, %v3102
        %v3104 = vsel %vm3044, %v2801, %v3103
        %v3105 = vsel %vm3046, %v2805, %v3104
        %v3106 = vsel %vm3048, %v2809, %v3105
        %v3107 = vsel %vm3050, %v2813, %v3106
        %v3108 = vsel %vm3038, %v2821, %v2817
        %v3109 = vsel %vm3040, %v2825, %v3108
        %v3110 = vsel %vm3042, %v2829, %v3109
        %v3111 = vsel %vm3044, %v2833, %v3110
        %v3112 = vsel %vm3046, %v2837, %v3111
        %v3113 = vsel %vm3048, %v2841, %v3112
        %v3114 = vsel %vm3050, %v2845, %v3113
        %v3115 = vsel %vm3038, %v2853, %v2849
        %v3116 = vsel %vm3040, %v2857, %v3115
        %v3117 = vsel %vm3042, %v2861, %v3116
        %v3118 = vsel %vm3044, %v2865, %v3117
        %v3119 = vsel %vm3046, %v2869, %v3118
        %v3120 = vsel %vm3048, %v2873, %v3119
        %v3121 = vsel %vm3050, %v2877, %v3120
        %v3122 = vsel %vm3038, %v2885, %v2881
        %v3123 = vsel %vm3040, %v2889, %v3122
        %v3124 = vsel %vm3042, %v2893, %v3123
        %v3125 = vsel %vm3044, %v2897, %v3124
        %v3126 = vsel %vm3046, %v2901, %v3125
        %v3127 = vsel %vm3048, %v2905, %v3126
        %v3128 = vsel %vm3050, %v2909, %v3127
        %v3129 = vsel %vm3038, %v2917, %v2913
        %v3130 = vsel %vm3040, %v2921, %v3129
        %v3131 = vsel %vm3042, %v2925, %v3130
        %v3132 = vsel %vm3044, %v2929, %v3131
        %v3133 = vsel %vm3046, %v2933, %v3132
        %v3134 = vsel %vm3048, %v2937, %v3133
        %v3135 = vsel %vm3050, %v2941, %v3134
        %v3136 = vsel %vm3038, %v2949, %v2945
        %v3137 = vsel %vm3040, %v2953, %v3136
        %v3138 = vsel %vm3042, %v2957, %v3137
        %v3139 = vsel %vm3044, %v2961, %v3138
        %v3140 = vsel %vm3046, %v2965, %v3139
        %v3141 = vsel %vm3048, %v2969, %v3140
        %v3142 = vsel %vm3050, %v2973, %v3141
        %v3143 = vsel %vm3038, %v2981, %v2977
        %v3144 = vsel %vm3040, %v2985, %v3143
        %v3145 = vsel %vm3042, %v2989, %v3144
        %v3146 = vsel %vm3044, %v2993, %v3145
        %v3147 = vsel %vm3046, %v2997, %v3146
        %v3148 = vsel %vm3048, %v3001, %v3147
        %v3149 = vsel %vm3050, %v3005, %v3148
        %v3150 = vsel %vm3038, %v3013, %v3009
        %v3151 = vsel %vm3040, %v3017, %v3150
        %v3152 = vsel %vm3042, %v3021, %v3151
        %v3153 = vsel %vm3044, %v3025, %v3152
        %v3154 = vsel %vm3046, %v3029, %v3153
        %v3155 = vsel %vm3048, %v3033, %v3154
        %v3156 = vsel %vm3050, %v3037, %v3155
        %vm3173 = vcmask 64512
        %v3174 = vsel %vm3173, %v3051, -inf
        %3175 = vmax.xlane.f32.xlu0 %v3174
        %v3176 = vpop.xlane.xlu0 %3175
        %v3177 = vsel %vm3173, %v3058, -inf
        %3178 = vmax.xlane.f32.xlu0 %v3177
        %v3179 = vpop.xlane.xlu0 %3178
        %v3180 = vsel %vm3173, %v3065, -inf
        %3181 = vmax.xlane.f32.xlu0 %v3180
        %v3182 = vpop.xlane.xlu0 %3181
        %v3183 = vsel %vm3173, %v3072, -inf
        %3184 = vmax.xlane.f32.xlu0 %v3183
        %v3185 = vpop.xlane.xlu0 %3184
        %v3186 = vsel %vm3173, %v3079, -inf
        %3187 = vmax.xlane.f32.xlu0 %v3186
        %v3188 = vpop.xlane.xlu0 %3187
        %v3189 = vsel %vm3173, %v3086, -inf
        %3190 = vmax.xlane.f32.xlu0 %v3189
        %v3191 = vpop.xlane.xlu0 %3190
        %v3192 = vsel %vm3173, %v3093, -inf
        %3193 = vmax.xlane.f32.xlu0 %v3192
        %v3194 = vpop.xlane.xlu0 %3193
        %v3195 = vsel %vm3173, %v3100, -inf
        %3196 = vmax.xlane.f32.xlu0 %v3195
        %v3197 = vpop.xlane.xlu0 %3196
        %v3198 = vsel %vm3173, %v3107, -inf
        %3199 = vmax.xlane.f32.xlu0 %v3198
        %v3200 = vpop.xlane.xlu0 %3199
        %v3201 = vsel %vm3173, %v3114, -inf
        %3202 = vmax.xlane.f32.xlu0 %v3201
        %v3203 = vpop.xlane.xlu0 %3202
        %v3204 = vsel %vm3173, %v3121, -inf
        %3205 = vmax.xlane.f32.xlu0 %v3204
        %v3206 = vpop.xlane.xlu0 %3205
        %v3207 = vsel %vm3173, %v3128, -inf
        %3208 = vmax.xlane.f32.xlu0 %v3207
        %v3209 = vpop.xlane.xlu0 %3208
        %v3210 = vsel %vm3173, %v3135, -inf
        %3211 = vmax.xlane.f32.xlu0 %v3210
        %v3212 = vpop.xlane.xlu0 %3211
        %v3213 = vsel %vm3173, %v3142, -inf
        %3214 = vmax.xlane.f32.xlu0 %v3213
        %v3215 = vpop.xlane.xlu0 %3214
        %v3216 = vsel %vm3173, %v3149, -inf
        %3217 = vmax.xlane.f32.xlu0 %v3216
        %v3218 = vpop.xlane.xlu0 %3217
        %v3219 = vsel %vm3173, %v3156, -inf
        %3220 = vmax.xlane.f32.xlu0 %v3219
        %v3221 = vpop.xlane.xlu0 %3220
        %v3222 = vmax.f32 %v1996, %v3176
        %v3223 = vmax.f32 %v1997, %v3179
        %v3224 = vmax.f32 %v1998, %v3182
        %v3225 = vmax.f32 %v1999, %v3185
        %v3226 = vmax.f32 %v2000, %v3188
        %v3227 = vmax.f32 %v2001, %v3191
        %v3228 = vmax.f32 %v2002, %v3194
        %v3229 = vmax.f32 %v2003, %v3197
        %v3230 = vmax.f32 %v2004, %v3200
        %v3231 = vmax.f32 %v2005, %v3203
        %v3232 = vmax.f32 %v2006, %v3206
        %v3233 = vmax.f32 %v2007, %v3209
        %v3234 = vmax.f32 %v2008, %v3212
        %v3235 = vmax.f32 %v2009, %v3215
        %v3236 = vmax.f32 %v2010, %v3218
        %v3237 = vmax.f32 %v2011, %v3221
        %v3238 = vsub.f32 %v1996, %v3222
        %v3239 = vsub.f32 %v1997, %v3223
        %v3240 = vsub.f32 %v1998, %v3224
        %v3241 = vsub.f32 %v1999, %v3225
        %v3242 = vsub.f32 %v2000, %v3226
        %v3243 = vsub.f32 %v2001, %v3227
        %v3244 = vsub.f32 %v2002, %v3228
        %v3245 = vsub.f32 %v2003, %v3229
        %v3246 = vsub.f32 %v2004, %v3230
        %v3247 = vsub.f32 %v2005, %v3231
        %v3248 = vsub.f32 %v2006, %v3232
        %v3249 = vsub.f32 %v2007, %v3233
        %v3250 = vsub.f32 %v2008, %v3234
        %v3251 = vsub.f32 %v2009, %v3235
        %v3252 = vsub.f32 %v2010, %v3236
        %v3253 = vsub.f32 %v2011, %v3237
        %v3254 = vmul.f32 %v3238, 1.442695
        %v3255 = vpow.pop %v3254
        %v3256 = vmul.f32 %v3239, 1.442695
        %v3257 = vpow.pop %v3256
        %v3258 = vmul.f32 %v3240, 1.442695
        %v3259 = vpow.pop %v3258
        %v3260 = vmul.f32 %v3241, 1.442695
        %v3261 = vpow.pop %v3260
        %v3262 = vmul.f32 %v3242, 1.442695
        %v3263 = vpow.pop %v3262
        %v3264 = vmul.f32 %v3243, 1.442695
        %v3265 = vpow.pop %v3264
        %v3266 = vmul.f32 %v3244, 1.442695
        %v3267 = vpow.pop %v3266
        %v3268 = vmul.f32 %v3245, 1.442695
        %v3269 = vpow.pop %v3268
        %v3270 = vmul.f32 %v3246, 1.442695
        %v3271 = vpow.pop %v3270
        %v3272 = vmul.f32 %v3247, 1.442695
        %v3273 = vpow.pop %v3272
        %v3274 = vmul.f32 %v3248, 1.442695
        %v3275 = vpow.pop %v3274
        %v3276 = vmul.f32 %v3249, 1.442695
        %v3277 = vpow.pop %v3276
        %v3278 = vmul.f32 %v3250, 1.442695
        %v3279 = vpow.pop %v3278
        %v3280 = vmul.f32 %v3251, 1.442695
        %v3281 = vpow.pop %v3280
        %v3282 = vmul.f32 %v3252, 1.442695
        %v3283 = vpow.pop %v3282
        %v3284 = vmul.f32 %v3253, 1.442695
        %v3285 = vpow.pop %v3284
        %v3302 = vcombine.high %v3222, %v3222
        %v3304 = vunpack.c.l.s4 1966171168
        %v3305 = vunpack.c.0.s8 %v3304
        %v3306 = vlaneseq
        %v3307 = vshrl.u32 %v3306, 7
        %v3308 = vsub.s32 %v3305, %v3307
        %v3309 = vrot.slane %v3222, %v3308
        %v3311 = vunpack.c.l.s4 1966171168
        %v3312 = vunpack.c.0.s8 %v3311
        %v3313 = vlaneseq
        %v3314 = vshrl.u32 %v3313, 7
        %v3315 = vsub.s32 %v3312, %v3314
        %v3316 = vrot.slane %v3302, %v3315
        %v3317 = vcombine.high %v3309, %v3309
        %v3318 = vcombine.high %v3316, %v3316
        %v3320 = vunpack.c.l.s4 1966171168
        %v3321 = vunpack.c.0.s8 %v3320
        %v3322 = vlaneseq
        %v3323 = vshrl.u32 %v3322, 7
        %v3324 = vsub.s32 %v3321, %v3323
        %v3325 = vrot.slane %v3309, %v3324
        %v3327 = vunpack.c.l.s4 1966171168
        %v3328 = vunpack.c.0.s8 %v3327
        %v3329 = vlaneseq
        %v3330 = vshrl.u32 %v3329, 7
        %v3331 = vsub.s32 %v3328, %v3330
        %v3332 = vrot.slane %v3316, %v3331
        %v3334 = vunpack.c.l.s4 1966171168
        %v3335 = vunpack.c.0.s8 %v3334
        %v3336 = vlaneseq
        %v3337 = vshrl.u32 %v3336, 7
        %v3338 = vsub.s32 %v3335, %v3337
        %v3339 = vrot.slane %v3317, %v3338
        %v3341 = vunpack.c.l.s4 1966171168
        %v3342 = vunpack.c.0.s8 %v3341
        %v3343 = vlaneseq
        %v3344 = vshrl.u32 %v3343, 7
        %v3345 = vsub.s32 %v3342, %v3344
        %v3346 = vrot.slane %v3318, %v3345
        %v3347 = vcombine.high %v3325, %v3325
        %v3348 = vcombine.high %v3332, %v3332
        %v3349 = vcombine.high %v3339, %v3339
        %v3350 = vcombine.high %v3346, %v3346
        %v3351 = vcombine.high %v3223, %v3223
        %v3353 = vunpack.c.l.s4 1966171168
        %v3354 = vunpack.c.0.s8 %v3353
        %v3355 = vlaneseq
        %v3356 = vshrl.u32 %v3355, 7
        %v3357 = vsub.s32 %v3354, %v3356
        %v3358 = vrot.slane %v3223, %v3357
        %v3360 = vunpack.c.l.s4 1966171168
        %v3361 = vunpack.c.0.s8 %v3360
        %v3362 = vlaneseq
        %v3363 = vshrl.u32 %v3362, 7
        %v3364 = vsub.s32 %v3361, %v3363
        %v3365 = vrot.slane %v3351, %v3364
        %v3366 = vcombine.high %v3358, %v3358
        %v3367 = vcombine.high %v3365, %v3365
        %v3369 = vunpack.c.l.s4 1966171168
        %v3370 = vunpack.c.0.s8 %v3369
        %v3371 = vlaneseq
        %v3372 = vshrl.u32 %v3371, 7
        %v3373 = vsub.s32 %v3370, %v3372
        %v3374 = vrot.slane %v3358, %v3373
        %v3376 = vunpack.c.l.s4 1966171168
        %v3377 = vunpack.c.0.s8 %v3376
        %v3378 = vlaneseq
        %v3379 = vshrl.u32 %v3378, 7
        %v3380 = vsub.s32 %v3377, %v3379
        %v3381 = vrot.slane %v3365, %v3380
        %v3383 = vunpack.c.l.s4 1966171168
        %v3384 = vunpack.c.0.s8 %v3383
        %v3385 = vlaneseq
        %v3386 = vshrl.u32 %v3385, 7
        %v3387 = vsub.s32 %v3384, %v3386
        %v3388 = vrot.slane %v3366, %v3387
        %v3390 = vunpack.c.l.s4 1966171168
        %v3391 = vunpack.c.0.s8 %v3390
        %v3392 = vlaneseq
        %v3393 = vshrl.u32 %v3392, 7
        %v3394 = vsub.s32 %v3391, %v3393
        %v3395 = vrot.slane %v3367, %v3394
        %v3396 = vcombine.high %v3374, %v3374
        %v3397 = vcombine.high %v3381, %v3381
        %v3398 = vcombine.high %v3388, %v3388
        %v3399 = vcombine.high %v3395, %v3395
        %v3400 = vcombine.high %v3224, %v3224
        %v3402 = vunpack.c.l.s4 1966171168
        %v3403 = vunpack.c.0.s8 %v3402
        %v3404 = vlaneseq
        %v3405 = vshrl.u32 %v3404, 7
        %v3406 = vsub.s32 %v3403, %v3405
        %v3407 = vrot.slane %v3224, %v3406
        %v3409 = vunpack.c.l.s4 1966171168
        %v3410 = vunpack.c.0.s8 %v3409
        %v3411 = vlaneseq
        %v3412 = vshrl.u32 %v3411, 7
        %v3413 = vsub.s32 %v3410, %v3412
        %v3414 = vrot.slane %v3400, %v3413
        %v3415 = vcombine.high %v3407, %v3407
        %v3416 = vcombine.high %v3414, %v3414
        %v3418 = vunpack.c.l.s4 1966171168
        %v3419 = vunpack.c.0.s8 %v3418
        %v3420 = vlaneseq
        %v3421 = vshrl.u32 %v3420, 7
        %v3422 = vsub.s32 %v3419, %v3421
        %v3423 = vrot.slane %v3407, %v3422
        %v3425 = vunpack.c.l.s4 1966171168
        %v3426 = vunpack.c.0.s8 %v3425
        %v3427 = vlaneseq
        %v3428 = vshrl.u32 %v3427, 7
        %v3429 = vsub.s32 %v3426, %v3428
        %v3430 = vrot.slane %v3414, %v3429
        %v3432 = vunpack.c.l.s4 1966171168
        %v3433 = vunpack.c.0.s8 %v3432
        %v3434 = vlaneseq
        %v3435 = vshrl.u32 %v3434, 7
        %v3436 = vsub.s32 %v3433, %v3435
        %v3437 = vrot.slane %v3415, %v3436
        %v3439 = vunpack.c.l.s4 1966171168
        %v3440 = vunpack.c.0.s8 %v3439
        %v3441 = vlaneseq
        %v3442 = vshrl.u32 %v3441, 7
        %v3443 = vsub.s32 %v3440, %v3442
        %v3444 = vrot.slane %v3416, %v3443
        %v3445 = vcombine.high %v3423, %v3423
        %v3446 = vcombine.high %v3430, %v3430
        %v3447 = vcombine.high %v3437, %v3437
        %v3448 = vcombine.high %v3444, %v3444
        %v3449 = vcombine.high %v3225, %v3225
        %v3451 = vunpack.c.l.s4 1966171168
        %v3452 = vunpack.c.0.s8 %v3451
        %v3453 = vlaneseq
        %v3454 = vshrl.u32 %v3453, 7
        %v3455 = vsub.s32 %v3452, %v3454
        %v3456 = vrot.slane %v3225, %v3455
        %v3458 = vunpack.c.l.s4 1966171168
        %v3459 = vunpack.c.0.s8 %v3458
        %v3460 = vlaneseq
        %v3461 = vshrl.u32 %v3460, 7
        %v3462 = vsub.s32 %v3459, %v3461
        %v3463 = vrot.slane %v3449, %v3462
        %v3464 = vcombine.high %v3456, %v3456
        %v3465 = vcombine.high %v3463, %v3463
        %v3467 = vunpack.c.l.s4 1966171168
        %v3468 = vunpack.c.0.s8 %v3467
        %v3469 = vlaneseq
        %v3470 = vshrl.u32 %v3469, 7
        %v3471 = vsub.s32 %v3468, %v3470
        %v3472 = vrot.slane %v3456, %v3471
        %v3474 = vunpack.c.l.s4 1966171168
        %v3475 = vunpack.c.0.s8 %v3474
        %v3476 = vlaneseq
        %v3477 = vshrl.u32 %v3476, 7
        %v3478 = vsub.s32 %v3475, %v3477
        %v3479 = vrot.slane %v3463, %v3478
        %v3481 = vunpack.c.l.s4 1966171168
        %v3482 = vunpack.c.0.s8 %v3481
        %v3483 = vlaneseq
        %v3484 = vshrl.u32 %v3483, 7
        %v3485 = vsub.s32 %v3482, %v3484
        %v3486 = vrot.slane %v3464, %v3485
        %v3488 = vunpack.c.l.s4 1966171168
        %v3489 = vunpack.c.0.s8 %v3488
        %v3490 = vlaneseq
        %v3491 = vshrl.u32 %v3490, 7
        %v3492 = vsub.s32 %v3489, %v3491
        %v3493 = vrot.slane %v3465, %v3492
        %v3494 = vcombine.high %v3472, %v3472
        %v3495 = vcombine.high %v3479, %v3479
        %v3496 = vcombine.high %v3486, %v3486
        %v3497 = vcombine.high %v3493, %v3493
        %v3498 = vcombine.high %v3226, %v3226
        %v3500 = vunpack.c.l.s4 1966171168
        %v3501 = vunpack.c.0.s8 %v3500
        %v3502 = vlaneseq
        %v3503 = vshrl.u32 %v3502, 7
        %v3504 = vsub.s32 %v3501, %v3503
        %v3505 = vrot.slane %v3226, %v3504
        %v3507 = vunpack.c.l.s4 1966171168
        %v3508 = vunpack.c.0.s8 %v3507
        %v3509 = vlaneseq
        %v3510 = vshrl.u32 %v3509, 7
        %v3511 = vsub.s32 %v3508, %v3510
        %v3512 = vrot.slane %v3498, %v3511
        %v3513 = vcombine.high %v3505, %v3505
        %v3514 = vcombine.high %v3512, %v3512
        %v3516 = vunpack.c.l.s4 1966171168
        %v3517 = vunpack.c.0.s8 %v3516
        %v3518 = vlaneseq
        %v3519 = vshrl.u32 %v3518, 7
        %v3520 = vsub.s32 %v3517, %v3519
        %v3521 = vrot.slane %v3505, %v3520
        %v3523 = vunpack.c.l.s4 1966171168
        %v3524 = vunpack.c.0.s8 %v3523
        %v3525 = vlaneseq
        %v3526 = vshrl.u32 %v3525, 7
        %v3527 = vsub.s32 %v3524, %v3526
        %v3528 = vrot.slane %v3512, %v3527
        %v3530 = vunpack.c.l.s4 1966171168
        %v3531 = vunpack.c.0.s8 %v3530
        %v3532 = vlaneseq
        %v3533 = vshrl.u32 %v3532, 7
        %v3534 = vsub.s32 %v3531, %v3533
        %v3535 = vrot.slane %v3513, %v3534
        %v3537 = vunpack.c.l.s4 1966171168
        %v3538 = vunpack.c.0.s8 %v3537
        %v3539 = vlaneseq
        %v3540 = vshrl.u32 %v3539, 7
        %v3541 = vsub.s32 %v3538, %v3540
        %v3542 = vrot.slane %v3514, %v3541
        %v3543 = vcombine.high %v3521, %v3521
        %v3544 = vcombine.high %v3528, %v3528
        %v3545 = vcombine.high %v3535, %v3535
        %v3546 = vcombine.high %v3542, %v3542
        %v3547 = vcombine.high %v3227, %v3227
        %v3549 = vunpack.c.l.s4 1966171168
        %v3550 = vunpack.c.0.s8 %v3549
        %v3551 = vlaneseq
        %v3552 = vshrl.u32 %v3551, 7
        %v3553 = vsub.s32 %v3550, %v3552
        %v3554 = vrot.slane %v3227, %v3553
        %v3556 = vunpack.c.l.s4 1966171168
        %v3557 = vunpack.c.0.s8 %v3556
        %v3558 = vlaneseq
        %v3559 = vshrl.u32 %v3558, 7
        %v3560 = vsub.s32 %v3557, %v3559
        %v3561 = vrot.slane %v3547, %v3560
        %v3562 = vcombine.high %v3554, %v3554
        %v3563 = vcombine.high %v3561, %v3561
        %v3565 = vunpack.c.l.s4 1966171168
        %v3566 = vunpack.c.0.s8 %v3565
        %v3567 = vlaneseq
        %v3568 = vshrl.u32 %v3567, 7
        %v3569 = vsub.s32 %v3566, %v3568
        %v3570 = vrot.slane %v3554, %v3569
        %v3572 = vunpack.c.l.s4 1966171168
        %v3573 = vunpack.c.0.s8 %v3572
        %v3574 = vlaneseq
        %v3575 = vshrl.u32 %v3574, 7
        %v3576 = vsub.s32 %v3573, %v3575
        %v3577 = vrot.slane %v3561, %v3576
        %v3579 = vunpack.c.l.s4 1966171168
        %v3580 = vunpack.c.0.s8 %v3579
        %v3581 = vlaneseq
        %v3582 = vshrl.u32 %v3581, 7
        %v3583 = vsub.s32 %v3580, %v3582
        %v3584 = vrot.slane %v3562, %v3583
        %v3586 = vunpack.c.l.s4 1966171168
        %v3587 = vunpack.c.0.s8 %v3586
        %v3588 = vlaneseq
        %v3589 = vshrl.u32 %v3588, 7
        %v3590 = vsub.s32 %v3587, %v3589
        %v3591 = vrot.slane %v3563, %v3590
        %v3592 = vcombine.high %v3570, %v3570
        %v3593 = vcombine.high %v3577, %v3577
        %v3594 = vcombine.high %v3584, %v3584
        %v3595 = vcombine.high %v3591, %v3591
        %v3596 = vcombine.high %v3228, %v3228
        %v3598 = vunpack.c.l.s4 1966171168
        %v3599 = vunpack.c.0.s8 %v3598
        %v3600 = vlaneseq
        %v3601 = vshrl.u32 %v3600, 7
        %v3602 = vsub.s32 %v3599, %v3601
        %v3603 = vrot.slane %v3228, %v3602
        %v3605 = vunpack.c.l.s4 1966171168
        %v3606 = vunpack.c.0.s8 %v3605
        %v3607 = vlaneseq
        %v3608 = vshrl.u32 %v3607, 7
        %v3609 = vsub.s32 %v3606, %v3608
        %v3610 = vrot.slane %v3596, %v3609
        %v3611 = vcombine.high %v3603, %v3603
        %v3612 = vcombine.high %v3610, %v3610
        %v3614 = vunpack.c.l.s4 1966171168
        %v3615 = vunpack.c.0.s8 %v3614
        %v3616 = vlaneseq
        %v3617 = vshrl.u32 %v3616, 7
        %v3618 = vsub.s32 %v3615, %v3617
        %v3619 = vrot.slane %v3603, %v3618
        %v3621 = vunpack.c.l.s4 1966171168
        %v3622 = vunpack.c.0.s8 %v3621
        %v3623 = vlaneseq
        %v3624 = vshrl.u32 %v3623, 7
        %v3625 = vsub.s32 %v3622, %v3624
        %v3626 = vrot.slane %v3610, %v3625
        %v3628 = vunpack.c.l.s4 1966171168
        %v3629 = vunpack.c.0.s8 %v3628
        %v3630 = vlaneseq
        %v3631 = vshrl.u32 %v3630, 7
        %v3632 = vsub.s32 %v3629, %v3631
        %v3633 = vrot.slane %v3611, %v3632
        %v3635 = vunpack.c.l.s4 1966171168
        %v3636 = vunpack.c.0.s8 %v3635
        %v3637 = vlaneseq
        %v3638 = vshrl.u32 %v3637, 7
        %v3639 = vsub.s32 %v3636, %v3638
        %v3640 = vrot.slane %v3612, %v3639
        %v3641 = vcombine.high %v3619, %v3619
        %v3642 = vcombine.high %v3626, %v3626
        %v3643 = vcombine.high %v3633, %v3633
        %v3644 = vcombine.high %v3640, %v3640
        %v3645 = vcombine.high %v3229, %v3229
        %v3647 = vunpack.c.l.s4 1966171168
        %v3648 = vunpack.c.0.s8 %v3647
        %v3649 = vlaneseq
        %v3650 = vshrl.u32 %v3649, 7
        %v3651 = vsub.s32 %v3648, %v3650
        %v3652 = vrot.slane %v3229, %v3651
        %v3654 = vunpack.c.l.s4 1966171168
        %v3655 = vunpack.c.0.s8 %v3654
        %v3656 = vlaneseq
        %v3657 = vshrl.u32 %v3656, 7
        %v3658 = vsub.s32 %v3655, %v3657
        %v3659 = vrot.slane %v3645, %v3658
        %v3660 = vcombine.high %v3652, %v3652
        %v3661 = vcombine.high %v3659, %v3659
        %v3663 = vunpack.c.l.s4 1966171168
        %v3664 = vunpack.c.0.s8 %v3663
        %v3665 = vlaneseq
        %v3666 = vshrl.u32 %v3665, 7
        %v3667 = vsub.s32 %v3664, %v3666
        %v3668 = vrot.slane %v3652, %v3667
        %v3670 = vunpack.c.l.s4 1966171168
        %v3671 = vunpack.c.0.s8 %v3670
        %v3672 = vlaneseq
        %v3673 = vshrl.u32 %v3672, 7
        %v3674 = vsub.s32 %v3671, %v3673
        %v3675 = vrot.slane %v3659, %v3674
        %v3677 = vunpack.c.l.s4 1966171168
        %v3678 = vunpack.c.0.s8 %v3677
        %v3679 = vlaneseq
        %v3680 = vshrl.u32 %v3679, 7
        %v3681 = vsub.s32 %v3678, %v3680
        %v3682 = vrot.slane %v3660, %v3681
        %v3684 = vunpack.c.l.s4 1966171168
        %v3685 = vunpack.c.0.s8 %v3684
        %v3686 = vlaneseq
        %v3687 = vshrl.u32 %v3686, 7
        %v3688 = vsub.s32 %v3685, %v3687
        %v3689 = vrot.slane %v3661, %v3688
        %v3690 = vcombine.high %v3668, %v3668
        %v3691 = vcombine.high %v3675, %v3675
        %v3692 = vcombine.high %v3682, %v3682
        %v3693 = vcombine.high %v3689, %v3689
        %v3694 = vcombine.high %v3230, %v3230
        %v3696 = vunpack.c.l.s4 1966171168
        %v3697 = vunpack.c.0.s8 %v3696
        %v3698 = vlaneseq
        %v3699 = vshrl.u32 %v3698, 7
        %v3700 = vsub.s32 %v3697, %v3699
        %v3701 = vrot.slane %v3230, %v3700
        %v3703 = vunpack.c.l.s4 1966171168
        %v3704 = vunpack.c.0.s8 %v3703
        %v3705 = vlaneseq
        %v3706 = vshrl.u32 %v3705, 7
        %v3707 = vsub.s32 %v3704, %v3706
        %v3708 = vrot.slane %v3694, %v3707
        %v3709 = vcombine.high %v3701, %v3701
        %v3710 = vcombine.high %v3708, %v3708
        %v3712 = vunpack.c.l.s4 1966171168
        %v3713 = vunpack.c.0.s8 %v3712
        %v3714 = vlaneseq
        %v3715 = vshrl.u32 %v3714, 7
        %v3716 = vsub.s32 %v3713, %v3715
        %v3717 = vrot.slane %v3701, %v3716
        %v3719 = vunpack.c.l.s4 1966171168
        %v3720 = vunpack.c.0.s8 %v3719
        %v3721 = vlaneseq
        %v3722 = vshrl.u32 %v3721, 7
        %v3723 = vsub.s32 %v3720, %v3722
        %v3724 = vrot.slane %v3708, %v3723
        %v3726 = vunpack.c.l.s4 1966171168
        %v3727 = vunpack.c.0.s8 %v3726
        %v3728 = vlaneseq
        %v3729 = vshrl.u32 %v3728, 7
        %v3730 = vsub.s32 %v3727, %v3729
        %v3731 = vrot.slane %v3709, %v3730
        %v3733 = vunpack.c.l.s4 1966171168
        %v3734 = vunpack.c.0.s8 %v3733
        %v3735 = vlaneseq
        %v3736 = vshrl.u32 %v3735, 7
        %v3737 = vsub.s32 %v3734, %v3736
        %v3738 = vrot.slane %v3710, %v3737
        %v3739 = vcombine.high %v3717, %v3717
        %v3740 = vcombine.high %v3724, %v3724
        %v3741 = vcombine.high %v3731, %v3731
        %v3742 = vcombine.high %v3738, %v3738
        %v3743 = vcombine.high %v3231, %v3231
        %v3745 = vunpack.c.l.s4 1966171168
        %v3746 = vunpack.c.0.s8 %v3745
        %v3747 = vlaneseq
        %v3748 = vshrl.u32 %v3747, 7
        %v3749 = vsub.s32 %v3746, %v3748
        %v3750 = vrot.slane %v3231, %v3749
        %v3752 = vunpack.c.l.s4 1966171168
        %v3753 = vunpack.c.0.s8 %v3752
        %v3754 = vlaneseq
        %v3755 = vshrl.u32 %v3754, 7
        %v3756 = vsub.s32 %v3753, %v3755
        %v3757 = vrot.slane %v3743, %v3756
        %v3758 = vcombine.high %v3750, %v3750
        %v3759 = vcombine.high %v3757, %v3757
        %v3761 = vunpack.c.l.s4 1966171168
        %v3762 = vunpack.c.0.s8 %v3761
        %v3763 = vlaneseq
        %v3764 = vshrl.u32 %v3763, 7
        %v3765 = vsub.s32 %v3762, %v3764
        %v3766 = vrot.slane %v3750, %v3765
        %v3768 = vunpack.c.l.s4 1966171168
        %v3769 = vunpack.c.0.s8 %v3768
        %v3770 = vlaneseq
        %v3771 = vshrl.u32 %v3770, 7
        %v3772 = vsub.s32 %v3769, %v3771
        %v3773 = vrot.slane %v3757, %v3772
        %v3775 = vunpack.c.l.s4 1966171168
        %v3776 = vunpack.c.0.s8 %v3775
        %v3777 = vlaneseq
        %v3778 = vshrl.u32 %v3777, 7
        %v3779 = vsub.s32 %v3776, %v3778
        %v3780 = vrot.slane %v3758, %v3779
        %v3782 = vunpack.c.l.s4 1966171168
        %v3783 = vunpack.c.0.s8 %v3782
        %v3784 = vlaneseq
        %v3785 = vshrl.u32 %v3784, 7
        %v3786 = vsub.s32 %v3783, %v3785
        %v3787 = vrot.slane %v3759, %v3786
        %v3788 = vcombine.high %v3766, %v3766
        %v3789 = vcombine.high %v3773, %v3773
        %v3790 = vcombine.high %v3780, %v3780
        %v3791 = vcombine.high %v3787, %v3787
        %v3792 = vcombine.high %v3232, %v3232
        %v3794 = vunpack.c.l.s4 1966171168
        %v3795 = vunpack.c.0.s8 %v3794
        %v3796 = vlaneseq
        %v3797 = vshrl.u32 %v3796, 7
        %v3798 = vsub.s32 %v3795, %v3797
        %v3799 = vrot.slane %v3232, %v3798
        %v3801 = vunpack.c.l.s4 1966171168
        %v3802 = vunpack.c.0.s8 %v3801
        %v3803 = vlaneseq
        %v3804 = vshrl.u32 %v3803, 7
        %v3805 = vsub.s32 %v3802, %v3804
        %v3806 = vrot.slane %v3792, %v3805
        %v3807 = vcombine.high %v3799, %v3799
        %v3808 = vcombine.high %v3806, %v3806
        %v3810 = vunpack.c.l.s4 1966171168
        %v3811 = vunpack.c.0.s8 %v3810
        %v3812 = vlaneseq
        %v3813 = vshrl.u32 %v3812, 7
        %v3814 = vsub.s32 %v3811, %v3813
        %v3815 = vrot.slane %v3799, %v3814
        %v3817 = vunpack.c.l.s4 1966171168
        %v3818 = vunpack.c.0.s8 %v3817
        %v3819 = vlaneseq
        %v3820 = vshrl.u32 %v3819, 7
        %v3821 = vsub.s32 %v3818, %v3820
        %v3822 = vrot.slane %v3806, %v3821
        %v3824 = vunpack.c.l.s4 1966171168
        %v3825 = vunpack.c.0.s8 %v3824
        %v3826 = vlaneseq
        %v3827 = vshrl.u32 %v3826, 7
        %v3828 = vsub.s32 %v3825, %v3827
        %v3829 = vrot.slane %v3807, %v3828
        %v3831 = vunpack.c.l.s4 1966171168
        %v3832 = vunpack.c.0.s8 %v3831
        %v3833 = vlaneseq
        %v3834 = vshrl.u32 %v3833, 7
        %v3835 = vsub.s32 %v3832, %v3834
        %v3836 = vrot.slane %v3808, %v3835
        %v3837 = vcombine.high %v3815, %v3815
        %v3838 = vcombine.high %v3822, %v3822
        %v3839 = vcombine.high %v3829, %v3829
        %v3840 = vcombine.high %v3836, %v3836
        %v3841 = vcombine.high %v3233, %v3233
        %v3843 = vunpack.c.l.s4 1966171168
        %v3844 = vunpack.c.0.s8 %v3843
        %v3845 = vlaneseq
        %v3846 = vshrl.u32 %v3845, 7
        %v3847 = vsub.s32 %v3844, %v3846
        %v3848 = vrot.slane %v3233, %v3847
        %v3850 = vunpack.c.l.s4 1966171168
        %v3851 = vunpack.c.0.s8 %v3850
        %v3852 = vlaneseq
        %v3853 = vshrl.u32 %v3852, 7
        %v3854 = vsub.s32 %v3851, %v3853
        %v3855 = vrot.slane %v3841, %v3854
        %v3856 = vcombine.high %v3848, %v3848
        %v3857 = vcombine.high %v3855, %v3855
        %v3859 = vunpack.c.l.s4 1966171168
        %v3860 = vunpack.c.0.s8 %v3859
        %v3861 = vlaneseq
        %v3862 = vshrl.u32 %v3861, 7
        %v3863 = vsub.s32 %v3860, %v3862
        %v3864 = vrot.slane %v3848, %v3863
        %v3866 = vunpack.c.l.s4 1966171168
        %v3867 = vunpack.c.0.s8 %v3866
        %v3868 = vlaneseq
        %v3869 = vshrl.u32 %v3868, 7
        %v3870 = vsub.s32 %v3867, %v3869
        %v3871 = vrot.slane %v3855, %v3870
        %v3873 = vunpack.c.l.s4 1966171168
        %v3874 = vunpack.c.0.s8 %v3873
        %v3875 = vlaneseq
        %v3876 = vshrl.u32 %v3875, 7
        %v3877 = vsub.s32 %v3874, %v3876
        %v3878 = vrot.slane %v3856, %v3877
        %v3880 = vunpack.c.l.s4 1966171168
        %v3881 = vunpack.c.0.s8 %v3880
        %v3882 = vlaneseq
        %v3883 = vshrl.u32 %v3882, 7
        %v3884 = vsub.s32 %v3881, %v3883
        %v3885 = vrot.slane %v3857, %v3884
        %v3886 = vcombine.high %v3864, %v3864
        %v3887 = vcombine.high %v3871, %v3871
        %v3888 = vcombine.high %v3878, %v3878
        %v3889 = vcombine.high %v3885, %v3885
        %v3890 = vcombine.high %v3234, %v3234
        %v3892 = vunpack.c.l.s4 1966171168
        %v3893 = vunpack.c.0.s8 %v3892
        %v3894 = vlaneseq
        %v3895 = vshrl.u32 %v3894, 7
        %v3896 = vsub.s32 %v3893, %v3895
        %v3897 = vrot.slane %v3234, %v3896
        %v3899 = vunpack.c.l.s4 1966171168
        %v3900 = vunpack.c.0.s8 %v3899
        %v3901 = vlaneseq
        %v3902 = vshrl.u32 %v3901, 7
        %v3903 = vsub.s32 %v3900, %v3902
        %v3904 = vrot.slane %v3890, %v3903
        %v3905 = vcombine.high %v3897, %v3897
        %v3906 = vcombine.high %v3904, %v3904
        %v3908 = vunpack.c.l.s4 1966171168
        %v3909 = vunpack.c.0.s8 %v3908
        %v3910 = vlaneseq
        %v3911 = vshrl.u32 %v3910, 7
        %v3912 = vsub.s32 %v3909, %v3911
        %v3913 = vrot.slane %v3897, %v3912
        %v3915 = vunpack.c.l.s4 1966171168
        %v3916 = vunpack.c.0.s8 %v3915
        %v3917 = vlaneseq
        %v3918 = vshrl.u32 %v3917, 7
        %v3919 = vsub.s32 %v3916, %v3918
        %v3920 = vrot.slane %v3904, %v3919
        %v3922 = vunpack.c.l.s4 1966171168
        %v3923 = vunpack.c.0.s8 %v3922
        %v3924 = vlaneseq
        %v3925 = vshrl.u32 %v3924, 7
        %v3926 = vsub.s32 %v3923, %v3925
        %v3927 = vrot.slane %v3905, %v3926
        %v3929 = vunpack.c.l.s4 1966171168
        %v3930 = vunpack.c.0.s8 %v3929
        %v3931 = vlaneseq
        %v3932 = vshrl.u32 %v3931, 7
        %v3933 = vsub.s32 %v3930, %v3932
        %v3934 = vrot.slane %v3906, %v3933
        %v3935 = vcombine.high %v3913, %v3913
        %v3936 = vcombine.high %v3920, %v3920
        %v3937 = vcombine.high %v3927, %v3927
        %v3938 = vcombine.high %v3934, %v3934
        %v3939 = vcombine.high %v3235, %v3235
        %v3941 = vunpack.c.l.s4 1966171168
        %v3942 = vunpack.c.0.s8 %v3941
        %v3943 = vlaneseq
        %v3944 = vshrl.u32 %v3943, 7
        %v3945 = vsub.s32 %v3942, %v3944
        %v3946 = vrot.slane %v3235, %v3945
        %v3948 = vunpack.c.l.s4 1966171168
        %v3949 = vunpack.c.0.s8 %v3948
        %v3950 = vlaneseq
        %v3951 = vshrl.u32 %v3950, 7
        %v3952 = vsub.s32 %v3949, %v3951
        %v3953 = vrot.slane %v3939, %v3952
        %v3954 = vcombine.high %v3946, %v3946
        %v3955 = vcombine.high %v3953, %v3953
        %v3957 = vunpack.c.l.s4 1966171168
        %v3958 = vunpack.c.0.s8 %v3957
        %v3959 = vlaneseq
        %v3960 = vshrl.u32 %v3959, 7
        %v3961 = vsub.s32 %v3958, %v3960
        %v3962 = vrot.slane %v3946, %v3961
        %v3964 = vunpack.c.l.s4 1966171168
        %v3965 = vunpack.c.0.s8 %v3964
        %v3966 = vlaneseq
        %v3967 = vshrl.u32 %v3966, 7
        %v3968 = vsub.s32 %v3965, %v3967
        %v3969 = vrot.slane %v3953, %v3968
        %v3971 = vunpack.c.l.s4 1966171168
        %v3972 = vunpack.c.0.s8 %v3971
        %v3973 = vlaneseq
        %v3974 = vshrl.u32 %v3973, 7
        %v3975 = vsub.s32 %v3972, %v3974
        %v3976 = vrot.slane %v3954, %v3975
        %v3978 = vunpack.c.l.s4 1966171168
        %v3979 = vunpack.c.0.s8 %v3978
        %v3980 = vlaneseq
        %v3981 = vshrl.u32 %v3980, 7
        %v3982 = vsub.s32 %v3979, %v3981
        %v3983 = vrot.slane %v3955, %v3982
        %v3984 = vcombine.high %v3962, %v3962
        %v3985 = vcombine.high %v3969, %v3969
        %v3986 = vcombine.high %v3976, %v3976
        %v3987 = vcombine.high %v3983, %v3983
        %v3988 = vcombine.high %v3236, %v3236
        %v3990 = vunpack.c.l.s4 1966171168
        %v3991 = vunpack.c.0.s8 %v3990
        %v3992 = vlaneseq
        %v3993 = vshrl.u32 %v3992, 7
        %v3994 = vsub.s32 %v3991, %v3993
        %v3995 = vrot.slane %v3236, %v3994
        %v3997 = vunpack.c.l.s4 1966171168
        %v3998 = vunpack.c.0.s8 %v3997
        %v3999 = vlaneseq
        %v4000 = vshrl.u32 %v3999, 7
        %v4001 = vsub.s32 %v3998, %v4000
        %v4002 = vrot.slane %v3988, %v4001
        %v4003 = vcombine.high %v3995, %v3995
        %v4004 = vcombine.high %v4002, %v4002
        %v4006 = vunpack.c.l.s4 1966171168
        %v4007 = vunpack.c.0.s8 %v4006
        %v4008 = vlaneseq
        %v4009 = vshrl.u32 %v4008, 7
        %v4010 = vsub.s32 %v4007, %v4009
        %v4011 = vrot.slane %v3995, %v4010
        %v4013 = vunpack.c.l.s4 1966171168
        %v4014 = vunpack.c.0.s8 %v4013
        %v4015 = vlaneseq
        %v4016 = vshrl.u32 %v4015, 7
        %v4017 = vsub.s32 %v4014, %v4016
        %v4018 = vrot.slane %v4002, %v4017
        %v4020 = vunpack.c.l.s4 1966171168
        %v4021 = vunpack.c.0.s8 %v4020
        %v4022 = vlaneseq
        %v4023 = vshrl.u32 %v4022, 7
        %v4024 = vsub.s32 %v4021, %v4023
        %v4025 = vrot.slane %v4003, %v4024
        %v4027 = vunpack.c.l.s4 1966171168
        %v4028 = vunpack.c.0.s8 %v4027
        %v4029 = vlaneseq
        %v4030 = vshrl.u32 %v4029, 7
        %v4031 = vsub.s32 %v4028, %v4030
        %v4032 = vrot.slane %v4004, %v4031
        %v4033 = vcombine.high %v4011, %v4011
        %v4034 = vcombine.high %v4018, %v4018
        %v4035 = vcombine.high %v4025, %v4025
        %v4036 = vcombine.high %v4032, %v4032
        %v4037 = vcombine.high %v3237, %v3237
        %v4039 = vunpack.c.l.s4 1966171168
        %v4040 = vunpack.c.0.s8 %v4039
        %v4041 = vlaneseq
        %v4042 = vshrl.u32 %v4041, 7
        %v4043 = vsub.s32 %v4040, %v4042
        %v4044 = vrot.slane %v3237, %v4043
        %v4046 = vunpack.c.l.s4 1966171168
        %v4047 = vunpack.c.0.s8 %v4046
        %v4048 = vlaneseq
        %v4049 = vshrl.u32 %v4048, 7
        %v4050 = vsub.s32 %v4047, %v4049
        %v4051 = vrot.slane %v4037, %v4050
        %v4052 = vcombine.high %v4044, %v4044
        %v4053 = vcombine.high %v4051, %v4051
        %v4055 = vunpack.c.l.s4 1966171168
        %v4056 = vunpack.c.0.s8 %v4055
        %v4057 = vlaneseq
        %v4058 = vshrl.u32 %v4057, 7
        %v4059 = vsub.s32 %v4056, %v4058
        %v4060 = vrot.slane %v4044, %v4059
        %v4062 = vunpack.c.l.s4 1966171168
        %v4063 = vunpack.c.0.s8 %v4062
        %v4064 = vlaneseq
        %v4065 = vshrl.u32 %v4064, 7
        %v4066 = vsub.s32 %v4063, %v4065
        %v4067 = vrot.slane %v4051, %v4066
        %v4069 = vunpack.c.l.s4 1966171168
        %v4070 = vunpack.c.0.s8 %v4069
        %v4071 = vlaneseq
        %v4072 = vshrl.u32 %v4071, 7
        %v4073 = vsub.s32 %v4070, %v4072
        %v4074 = vrot.slane %v4052, %v4073
        %v4076 = vunpack.c.l.s4 1966171168
        %v4077 = vunpack.c.0.s8 %v4076
        %v4078 = vlaneseq
        %v4079 = vshrl.u32 %v4078, 7
        %v4080 = vsub.s32 %v4077, %v4079
        %v4081 = vrot.slane %v4053, %v4080
        %v4082 = vcombine.high %v4060, %v4060
        %v4083 = vcombine.high %v4067, %v4067
        %v4084 = vcombine.high %v4074, %v4074
        %v4085 = vcombine.high %v4081, %v4081
        %v4086 = vlaneseq
        %v4087 = vshrl.u32 %v4086, 7
        %v4088 = vsub.s32 0, %v4087
        %v4089 = vrot.slane %v3325, %v4088
        %v4090 = vlaneseq
        %v4091 = vshrl.u32 %v4090, 7
        %v4092 = vsub.s32 0, %v4091
        %v4093 = vrot.slane %v3339, %v4092
        %v4094 = vlaneseq
        %v4095 = vshrl.u32 %v4094, 7
        %v4096 = vsub.s32 0, %v4095
        %v4097 = vrot.slane %v3347, %v4096
        %v4098 = vlaneseq
        %v4099 = vshrl.u32 %v4098, 7
        %v4100 = vsub.s32 0, %v4099
        %v4101 = vrot.slane %v3349, %v4100
        %v4102 = vlaneseq
        %v4103 = vshrl.u32 %v4102, 7
        %v4104 = vsub.s32 0, %v4103
        %v4105 = vrot.slane %v3332, %v4104
        %v4106 = vlaneseq
        %v4107 = vshrl.u32 %v4106, 7
        %v4108 = vsub.s32 0, %v4107
        %v4109 = vrot.slane %v3346, %v4108
        %v4110 = vlaneseq
        %v4111 = vshrl.u32 %v4110, 7
        %v4112 = vsub.s32 0, %v4111
        %v4113 = vrot.slane %v3348, %v4112
        %v4114 = vlaneseq
        %v4115 = vshrl.u32 %v4114, 7
        %v4116 = vsub.s32 0, %v4115
        %v4117 = vrot.slane %v3350, %v4116
        %v4118 = vlaneseq
        %v4119 = vshrl.u32 %v4118, 7
        %v4120 = vsub.s32 0, %v4119
        %v4121 = vrot.slane %v3374, %v4120
        %v4122 = vlaneseq
        %v4123 = vshrl.u32 %v4122, 7
        %v4124 = vsub.s32 0, %v4123
        %v4125 = vrot.slane %v3388, %v4124
        %v4126 = vlaneseq
        %v4127 = vshrl.u32 %v4126, 7
        %v4128 = vsub.s32 0, %v4127
        %v4129 = vrot.slane %v3396, %v4128
        %v4130 = vlaneseq
        %v4131 = vshrl.u32 %v4130, 7
        %v4132 = vsub.s32 0, %v4131
        %v4133 = vrot.slane %v3398, %v4132
        %v4134 = vlaneseq
        %v4135 = vshrl.u32 %v4134, 7
        %v4136 = vsub.s32 0, %v4135
        %v4137 = vrot.slane %v3381, %v4136
        %v4138 = vlaneseq
        %v4139 = vshrl.u32 %v4138, 7
        %v4140 = vsub.s32 0, %v4139
        %v4141 = vrot.slane %v3395, %v4140
        %v4142 = vlaneseq
        %v4143 = vshrl.u32 %v4142, 7
        %v4144 = vsub.s32 0, %v4143
        %v4145 = vrot.slane %v3397, %v4144
        %v4146 = vlaneseq
        %v4147 = vshrl.u32 %v4146, 7
        %v4148 = vsub.s32 0, %v4147
        %v4149 = vrot.slane %v3399, %v4148
        %v4150 = vlaneseq
        %v4151 = vshrl.u32 %v4150, 7
        %v4152 = vsub.s32 0, %v4151
        %v4153 = vrot.slane %v3423, %v4152
        %v4154 = vlaneseq
        %v4155 = vshrl.u32 %v4154, 7
        %v4156 = vsub.s32 0, %v4155
        %v4157 = vrot.slane %v3437, %v4156
        %v4158 = vlaneseq
        %v4159 = vshrl.u32 %v4158, 7
        %v4160 = vsub.s32 0, %v4159
        %v4161 = vrot.slane %v3445, %v4160
        %v4162 = vlaneseq
        %v4163 = vshrl.u32 %v4162, 7
        %v4164 = vsub.s32 0, %v4163
        %v4165 = vrot.slane %v3447, %v4164
        %v4166 = vlaneseq
        %v4167 = vshrl.u32 %v4166, 7
        %v4168 = vsub.s32 0, %v4167
        %v4169 = vrot.slane %v3430, %v4168
        %v4170 = vlaneseq
        %v4171 = vshrl.u32 %v4170, 7
        %v4172 = vsub.s32 0, %v4171
        %v4173 = vrot.slane %v3444, %v4172
        %v4174 = vlaneseq
        %v4175 = vshrl.u32 %v4174, 7
        %v4176 = vsub.s32 0, %v4175
        %v4177 = vrot.slane %v3446, %v4176
        %v4178 = vlaneseq
        %v4179 = vshrl.u32 %v4178, 7
        %v4180 = vsub.s32 0, %v4179
        %v4181 = vrot.slane %v3448, %v4180
        %v4182 = vlaneseq
        %v4183 = vshrl.u32 %v4182, 7
        %v4184 = vsub.s32 0, %v4183
        %v4185 = vrot.slane %v3472, %v4184
        %v4186 = vlaneseq
        %v4187 = vshrl.u32 %v4186, 7
        %v4188 = vsub.s32 0, %v4187
        %v4189 = vrot.slane %v3486, %v4188
        %v4190 = vlaneseq
        %v4191 = vshrl.u32 %v4190, 7
        %v4192 = vsub.s32 0, %v4191
        %v4193 = vrot.slane %v3494, %v4192
        %v4194 = vlaneseq
        %v4195 = vshrl.u32 %v4194, 7
        %v4196 = vsub.s32 0, %v4195
        %v4197 = vrot.slane %v3496, %v4196
        %v4198 = vlaneseq
        %v4199 = vshrl.u32 %v4198, 7
        %v4200 = vsub.s32 0, %v4199
        %v4201 = vrot.slane %v3479, %v4200
        %v4202 = vlaneseq
        %v4203 = vshrl.u32 %v4202, 7
        %v4204 = vsub.s32 0, %v4203
        %v4205 = vrot.slane %v3493, %v4204
        %v4206 = vlaneseq
        %v4207 = vshrl.u32 %v4206, 7
        %v4208 = vsub.s32 0, %v4207
        %v4209 = vrot.slane %v3495, %v4208
        %v4210 = vlaneseq
        %v4211 = vshrl.u32 %v4210, 7
        %v4212 = vsub.s32 0, %v4211
        %v4213 = vrot.slane %v3497, %v4212
        %v4214 = vlaneseq
        %v4215 = vshrl.u32 %v4214, 7
        %v4216 = vsub.s32 0, %v4215
        %v4217 = vrot.slane %v3521, %v4216
        %v4218 = vlaneseq
        %v4219 = vshrl.u32 %v4218, 7
        %v4220 = vsub.s32 0, %v4219
        %v4221 = vrot.slane %v3535, %v4220
        %v4222 = vlaneseq
        %v4223 = vshrl.u32 %v4222, 7
        %v4224 = vsub.s32 0, %v4223
        %v4225 = vrot.slane %v3543, %v4224
        %v4226 = vlaneseq
        %v4227 = vshrl.u32 %v4226, 7
        %v4228 = vsub.s32 0, %v4227
        %v4229 = vrot.slane %v3545, %v4228
        %v4230 = vlaneseq
        %v4231 = vshrl.u32 %v4230, 7
        %v4232 = vsub.s32 0, %v4231
        %v4233 = vrot.slane %v3528, %v4232
        %v4234 = vlaneseq
        %v4235 = vshrl.u32 %v4234, 7
        %v4236 = vsub.s32 0, %v4235
        %v4237 = vrot.slane %v3542, %v4236
        %v4238 = vlaneseq
        %v4239 = vshrl.u32 %v4238, 7
        %v4240 = vsub.s32 0, %v4239
        %v4241 = vrot.slane %v3544, %v4240
        %v4242 = vlaneseq
        %v4243 = vshrl.u32 %v4242, 7
        %v4244 = vsub.s32 0, %v4243
        %v4245 = vrot.slane %v3546, %v4244
        %v4246 = vlaneseq
        %v4247 = vshrl.u32 %v4246, 7
        %v4248 = vsub.s32 0, %v4247
        %v4249 = vrot.slane %v3570, %v4248
        %v4250 = vlaneseq
        %v4251 = vshrl.u32 %v4250, 7
        %v4252 = vsub.s32 0, %v4251
        %v4253 = vrot.slane %v3584, %v4252
        %v4254 = vlaneseq
        %v4255 = vshrl.u32 %v4254, 7
        %v4256 = vsub.s32 0, %v4255
        %v4257 = vrot.slane %v3592, %v4256
        %v4258 = vlaneseq
        %v4259 = vshrl.u32 %v4258, 7
        %v4260 = vsub.s32 0, %v4259
        %v4261 = vrot.slane %v3594, %v4260
        %v4262 = vlaneseq
        %v4263 = vshrl.u32 %v4262, 7
        %v4264 = vsub.s32 0, %v4263
        %v4265 = vrot.slane %v3577, %v4264
        %v4266 = vlaneseq
        %v4267 = vshrl.u32 %v4266, 7
        %v4268 = vsub.s32 0, %v4267
        %v4269 = vrot.slane %v3591, %v4268
        %v4270 = vlaneseq
        %v4271 = vshrl.u32 %v4270, 7
        %v4272 = vsub.s32 0, %v4271
        %v4273 = vrot.slane %v3593, %v4272
        %v4274 = vlaneseq
        %v4275 = vshrl.u32 %v4274, 7
        %v4276 = vsub.s32 0, %v4275
        %v4277 = vrot.slane %v3595, %v4276
        %v4278 = vlaneseq
        %v4279 = vshrl.u32 %v4278, 7
        %v4280 = vsub.s32 0, %v4279
        %v4281 = vrot.slane %v3619, %v4280
        %v4282 = vlaneseq
        %v4283 = vshrl.u32 %v4282, 7
        %v4284 = vsub.s32 0, %v4283
        %v4285 = vrot.slane %v3633, %v4284
        %v4286 = vlaneseq
        %v4287 = vshrl.u32 %v4286, 7
        %v4288 = vsub.s32 0, %v4287
        %v4289 = vrot.slane %v3641, %v4288
        %v4290 = vlaneseq
        %v4291 = vshrl.u32 %v4290, 7
        %v4292 = vsub.s32 0, %v4291
        %v4293 = vrot.slane %v3643, %v4292
        %v4294 = vlaneseq
        %v4295 = vshrl.u32 %v4294, 7
        %v4296 = vsub.s32 0, %v4295
        %v4297 = vrot.slane %v3626, %v4296
        %v4298 = vlaneseq
        %v4299 = vshrl.u32 %v4298, 7
        %v4300 = vsub.s32 0, %v4299
        %v4301 = vrot.slane %v3640, %v4300
        %v4302 = vlaneseq
        %v4303 = vshrl.u32 %v4302, 7
        %v4304 = vsub.s32 0, %v4303
        %v4305 = vrot.slane %v3642, %v4304
        %v4306 = vlaneseq
        %v4307 = vshrl.u32 %v4306, 7
        %v4308 = vsub.s32 0, %v4307
        %v4309 = vrot.slane %v3644, %v4308
        %v4310 = vlaneseq
        %v4311 = vshrl.u32 %v4310, 7
        %v4312 = vsub.s32 0, %v4311
        %v4313 = vrot.slane %v3668, %v4312
        %v4314 = vlaneseq
        %v4315 = vshrl.u32 %v4314, 7
        %v4316 = vsub.s32 0, %v4315
        %v4317 = vrot.slane %v3682, %v4316
        %v4318 = vlaneseq
        %v4319 = vshrl.u32 %v4318, 7
        %v4320 = vsub.s32 0, %v4319
        %v4321 = vrot.slane %v3690, %v4320
        %v4322 = vlaneseq
        %v4323 = vshrl.u32 %v4322, 7
        %v4324 = vsub.s32 0, %v4323
        %v4325 = vrot.slane %v3692, %v4324
        %v4326 = vlaneseq
        %v4327 = vshrl.u32 %v4326, 7
        %v4328 = vsub.s32 0, %v4327
        %v4329 = vrot.slane %v3675, %v4328
        %v4330 = vlaneseq
        %v4331 = vshrl.u32 %v4330, 7
        %v4332 = vsub.s32 0, %v4331
        %v4333 = vrot.slane %v3689, %v4332
        %v4334 = vlaneseq
        %v4335 = vshrl.u32 %v4334, 7
        %v4336 = vsub.s32 0, %v4335
        %v4337 = vrot.slane %v3691, %v4336
        %v4338 = vlaneseq
        %v4339 = vshrl.u32 %v4338, 7
        %v4340 = vsub.s32 0, %v4339
        %v4341 = vrot.slane %v3693, %v4340
        %v4342 = vlaneseq
        %v4343 = vshrl.u32 %v4342, 7
        %v4344 = vsub.s32 0, %v4343
        %v4345 = vrot.slane %v3717, %v4344
        %v4346 = vlaneseq
        %v4347 = vshrl.u32 %v4346, 7
        %v4348 = vsub.s32 0, %v4347
        %v4349 = vrot.slane %v3731, %v4348
        %v4350 = vlaneseq
        %v4351 = vshrl.u32 %v4350, 7
        %v4352 = vsub.s32 0, %v4351
        %v4353 = vrot.slane %v3739, %v4352
        %v4354 = vlaneseq
        %v4355 = vshrl.u32 %v4354, 7
        %v4356 = vsub.s32 0, %v4355
        %v4357 = vrot.slane %v3741, %v4356
        %v4358 = vlaneseq
        %v4359 = vshrl.u32 %v4358, 7
        %v4360 = vsub.s32 0, %v4359
        %v4361 = vrot.slane %v3724, %v4360
        %v4362 = vlaneseq
        %v4363 = vshrl.u32 %v4362, 7
        %v4364 = vsub.s32 0, %v4363
        %v4365 = vrot.slane %v3738, %v4364
        %v4366 = vlaneseq
        %v4367 = vshrl.u32 %v4366, 7
        %v4368 = vsub.s32 0, %v4367
        %v4369 = vrot.slane %v3740, %v4368
        %v4370 = vlaneseq
        %v4371 = vshrl.u32 %v4370, 7
        %v4372 = vsub.s32 0, %v4371
        %v4373 = vrot.slane %v3742, %v4372
        %v4374 = vlaneseq
        %v4375 = vshrl.u32 %v4374, 7
        %v4376 = vsub.s32 0, %v4375
        %v4377 = vrot.slane %v3766, %v4376
        %v4378 = vlaneseq
        %v4379 = vshrl.u32 %v4378, 7
        %v4380 = vsub.s32 0, %v4379
        %v4381 = vrot.slane %v3780, %v4380
        %v4382 = vlaneseq
        %v4383 = vshrl.u32 %v4382, 7
        %v4384 = vsub.s32 0, %v4383
        %v4385 = vrot.slane %v3788, %v4384
        %v4386 = vlaneseq
        %v4387 = vshrl.u32 %v4386, 7
        %v4388 = vsub.s32 0, %v4387
        %v4389 = vrot.slane %v3790, %v4388
        %v4390 = vlaneseq
        %v4391 = vshrl.u32 %v4390, 7
        %v4392 = vsub.s32 0, %v4391
        %v4393 = vrot.slane %v3773, %v4392
        %v4394 = vlaneseq
        %v4395 = vshrl.u32 %v4394, 7
        %v4396 = vsub.s32 0, %v4395
        %v4397 = vrot.slane %v3787, %v4396
        %v4398 = vlaneseq
        %v4399 = vshrl.u32 %v4398, 7
        %v4400 = vsub.s32 0, %v4399
        %v4401 = vrot.slane %v3789, %v4400
        %v4402 = vlaneseq
        %v4403 = vshrl.u32 %v4402, 7
        %v4404 = vsub.s32 0, %v4403
        %v4405 = vrot.slane %v3791, %v4404
        %v4406 = vlaneseq
        %v4407 = vshrl.u32 %v4406, 7
        %v4408 = vsub.s32 0, %v4407
        %v4409 = vrot.slane %v3815, %v4408
        %v4410 = vlaneseq
        %v4411 = vshrl.u32 %v4410, 7
        %v4412 = vsub.s32 0, %v4411
        %v4413 = vrot.slane %v3829, %v4412
        %v4414 = vlaneseq
        %v4415 = vshrl.u32 %v4414, 7
        %v4416 = vsub.s32 0, %v4415
        %v4417 = vrot.slane %v3837, %v4416
        %v4418 = vlaneseq
        %v4419 = vshrl.u32 %v4418, 7
        %v4420 = vsub.s32 0, %v4419
        %v4421 = vrot.slane %v3839, %v4420
        %v4422 = vlaneseq
        %v4423 = vshrl.u32 %v4422, 7
        %v4424 = vsub.s32 0, %v4423
        %v4425 = vrot.slane %v3822, %v4424
        %v4426 = vlaneseq
        %v4427 = vshrl.u32 %v4426, 7
        %v4428 = vsub.s32 0, %v4427
        %v4429 = vrot.slane %v3836, %v4428
        %v4430 = vlaneseq
        %v4431 = vshrl.u32 %v4430, 7
        %v4432 = vsub.s32 0, %v4431
        %v4433 = vrot.slane %v3838, %v4432
        %v4434 = vlaneseq
        %v4435 = vshrl.u32 %v4434, 7
        %v4436 = vsub.s32 0, %v4435
        %v4437 = vrot.slane %v3840, %v4436
        %v4438 = vlaneseq
        %v4439 = vshrl.u32 %v4438, 7
        %v4440 = vsub.s32 0, %v4439
        %v4441 = vrot.slane %v3864, %v4440
        %v4442 = vlaneseq
        %v4443 = vshrl.u32 %v4442, 7
        %v4444 = vsub.s32 0, %v4443
        %v4445 = vrot.slane %v3878, %v4444
        %v4446 = vlaneseq
        %v4447 = vshrl.u32 %v4446, 7
        %v4448 = vsub.s32 0, %v4447
        %v4449 = vrot.slane %v3886, %v4448
        %v4450 = vlaneseq
        %v4451 = vshrl.u32 %v4450, 7
        %v4452 = vsub.s32 0, %v4451
        %v4453 = vrot.slane %v3888, %v4452
        %v4454 = vlaneseq
        %v4455 = vshrl.u32 %v4454, 7
        %v4456 = vsub.s32 0, %v4455
        %v4457 = vrot.slane %v3871, %v4456
        %v4458 = vlaneseq
        %v4459 = vshrl.u32 %v4458, 7
        %v4460 = vsub.s32 0, %v4459
        %v4461 = vrot.slane %v3885, %v4460
        %v4462 = vlaneseq
        %v4463 = vshrl.u32 %v4462, 7
        %v4464 = vsub.s32 0, %v4463
        %v4465 = vrot.slane %v3887, %v4464
        %v4466 = vlaneseq
        %v4467 = vshrl.u32 %v4466, 7
        %v4468 = vsub.s32 0, %v4467
        %v4469 = vrot.slane %v3889, %v4468
        %v4470 = vlaneseq
        %v4471 = vshrl.u32 %v4470, 7
        %v4472 = vsub.s32 0, %v4471
        %v4473 = vrot.slane %v3913, %v4472
        %v4474 = vlaneseq
        %v4475 = vshrl.u32 %v4474, 7
        %v4476 = vsub.s32 0, %v4475
        %v4477 = vrot.slane %v3927, %v4476
        %v4478 = vlaneseq
        %v4479 = vshrl.u32 %v4478, 7
        %v4480 = vsub.s32 0, %v4479
        %v4481 = vrot.slane %v3935, %v4480
        %v4482 = vlaneseq
        %v4483 = vshrl.u32 %v4482, 7
        %v4484 = vsub.s32 0, %v4483
        %v4485 = vrot.slane %v3937, %v4484
        %v4486 = vlaneseq
        %v4487 = vshrl.u32 %v4486, 7
        %v4488 = vsub.s32 0, %v4487
        %v4489 = vrot.slane %v3920, %v4488
        %v4490 = vlaneseq
        %v4491 = vshrl.u32 %v4490, 7
        %v4492 = vsub.s32 0, %v4491
        %v4493 = vrot.slane %v3934, %v4492
        %v4494 = vlaneseq
        %v4495 = vshrl.u32 %v4494, 7
        %v4496 = vsub.s32 0, %v4495
        %v4497 = vrot.slane %v3936, %v4496
        %v4498 = vlaneseq
        %v4499 = vshrl.u32 %v4498, 7
        %v4500 = vsub.s32 0, %v4499
        %v4501 = vrot.slane %v3938, %v4500
        %v4502 = vlaneseq
        %v4503 = vshrl.u32 %v4502, 7
        %v4504 = vsub.s32 0, %v4503
        %v4505 = vrot.slane %v3962, %v4504
        %v4506 = vlaneseq
        %v4507 = vshrl.u32 %v4506, 7
        %v4508 = vsub.s32 0, %v4507
        %v4509 = vrot.slane %v3976, %v4508
        %v4510 = vlaneseq
        %v4511 = vshrl.u32 %v4510, 7
        %v4512 = vsub.s32 0, %v4511
        %v4513 = vrot.slane %v3984, %v4512
        %v4514 = vlaneseq
        %v4515 = vshrl.u32 %v4514, 7
        %v4516 = vsub.s32 0, %v4515
        %v4517 = vrot.slane %v3986, %v4516
        %v4518 = vlaneseq
        %v4519 = vshrl.u32 %v4518, 7
        %v4520 = vsub.s32 0, %v4519
        %v4521 = vrot.slane %v3969, %v4520
        %v4522 = vlaneseq
        %v4523 = vshrl.u32 %v4522, 7
        %v4524 = vsub.s32 0, %v4523
        %v4525 = vrot.slane %v3983, %v4524
        %v4526 = vlaneseq
        %v4527 = vshrl.u32 %v4526, 7
        %v4528 = vsub.s32 0, %v4527
        %v4529 = vrot.slane %v3985, %v4528
        %v4530 = vlaneseq
        %v4531 = vshrl.u32 %v4530, 7
        %v4532 = vsub.s32 0, %v4531
        %v4533 = vrot.slane %v3987, %v4532
        %v4534 = vlaneseq
        %v4535 = vshrl.u32 %v4534, 7
        %v4536 = vsub.s32 0, %v4535
        %v4537 = vrot.slane %v4011, %v4536
        %v4538 = vlaneseq
        %v4539 = vshrl.u32 %v4538, 7
        %v4540 = vsub.s32 0, %v4539
        %v4541 = vrot.slane %v4025, %v4540
        %v4542 = vlaneseq
        %v4543 = vshrl.u32 %v4542, 7
        %v4544 = vsub.s32 0, %v4543
        %v4545 = vrot.slane %v4033, %v4544
        %v4546 = vlaneseq
        %v4547 = vshrl.u32 %v4546, 7
        %v4548 = vsub.s32 0, %v4547
        %v4549 = vrot.slane %v4035, %v4548
        %v4550 = vlaneseq
        %v4551 = vshrl.u32 %v4550, 7
        %v4552 = vsub.s32 0, %v4551
        %v4553 = vrot.slane %v4018, %v4552
        %v4554 = vlaneseq
        %v4555 = vshrl.u32 %v4554, 7
        %v4556 = vsub.s32 0, %v4555
        %v4557 = vrot.slane %v4032, %v4556
        %v4558 = vlaneseq
        %v4559 = vshrl.u32 %v4558, 7
        %v4560 = vsub.s32 0, %v4559
        %v4561 = vrot.slane %v4034, %v4560
        %v4562 = vlaneseq
        %v4563 = vshrl.u32 %v4562, 7
        %v4564 = vsub.s32 0, %v4563
        %v4565 = vrot.slane %v4036, %v4564
        %v4566 = vlaneseq
        %v4567 = vshrl.u32 %v4566, 7
        %v4568 = vsub.s32 0, %v4567
        %v4569 = vrot.slane %v4060, %v4568
        %v4570 = vlaneseq
        %v4571 = vshrl.u32 %v4570, 7
        %v4572 = vsub.s32 0, %v4571
        %v4573 = vrot.slane %v4074, %v4572
        %v4574 = vlaneseq
        %v4575 = vshrl.u32 %v4574, 7
        %v4576 = vsub.s32 0, %v4575
        %v4577 = vrot.slane %v4082, %v4576
        %v4578 = vlaneseq
        %v4579 = vshrl.u32 %v4578, 7
        %v4580 = vsub.s32 0, %v4579
        %v4581 = vrot.slane %v4084, %v4580
        %v4582 = vlaneseq
        %v4583 = vshrl.u32 %v4582, 7
        %v4584 = vsub.s32 0, %v4583
        %v4585 = vrot.slane %v4067, %v4584
        %v4586 = vlaneseq
        %v4587 = vshrl.u32 %v4586, 7
        %v4588 = vsub.s32 0, %v4587
        %v4589 = vrot.slane %v4081, %v4588
        %v4590 = vlaneseq
        %v4591 = vshrl.u32 %v4590, 7
        %v4592 = vsub.s32 0, %v4591
        %v4593 = vrot.slane %v4083, %v4592
        %v4594 = vlaneseq
        %v4595 = vshrl.u32 %v4594, 7
        %v4596 = vsub.s32 0, %v4595
        %v4597 = vrot.slane %v4085, %v4596
        %4598 = vset.pattern.permute.xlu0 0
        %4599 = vperm.xlu0 %4598, %v4089
        %v4600 = vpop.permute.xlu0 %4599
        %4602 = vset.pattern.permute.xlu0 0
        %4603 = vperm.xlu0 %4602, %v4093
        %v4604 = vpop.permute.xlu0 %4603
        %4606 = vset.pattern.permute.xlu0 0
        %4607 = vperm.xlu0 %4606, %v4097
        %v4608 = vpop.permute.xlu0 %4607
        %4610 = vset.pattern.permute.xlu0 0
        %4611 = vperm.xlu0 %4610, %v4101
        %v4612 = vpop.permute.xlu0 %4611
        %4614 = vset.pattern.permute.xlu0 0
        %4615 = vperm.xlu0 %4614, %v4105
        %v4616 = vpop.permute.xlu0 %4615
        %4618 = vset.pattern.permute.xlu0 0
        %4619 = vperm.xlu0 %4618, %v4109
        %v4620 = vpop.permute.xlu0 %4619
        %4622 = vset.pattern.permute.xlu0 0
        %4623 = vperm.xlu0 %4622, %v4113
        %v4624 = vpop.permute.xlu0 %4623
        %4626 = vset.pattern.permute.xlu0 0
        %4627 = vperm.xlu0 %4626, %v4117
        %v4628 = vpop.permute.xlu0 %4627
        %4630 = vset.pattern.permute.xlu0 0
        %4631 = vperm.xlu0 %4630, %v4121
        %v4632 = vpop.permute.xlu0 %4631
        %4634 = vset.pattern.permute.xlu0 0
        %4635 = vperm.xlu0 %4634, %v4125
        %v4636 = vpop.permute.xlu0 %4635
        %4638 = vset.pattern.permute.xlu0 0
        %4639 = vperm.xlu0 %4638, %v4129
        %v4640 = vpop.permute.xlu0 %4639
        %4642 = vset.pattern.permute.xlu0 0
        %4643 = vperm.xlu0 %4642, %v4133
        %v4644 = vpop.permute.xlu0 %4643
        %4646 = vset.pattern.permute.xlu0 0
        %4647 = vperm.xlu0 %4646, %v4137
        %v4648 = vpop.permute.xlu0 %4647
        %4650 = vset.pattern.permute.xlu0 0
        %4651 = vperm.xlu0 %4650, %v4141
        %v4652 = vpop.permute.xlu0 %4651
        %4654 = vset.pattern.permute.xlu0 0
        %4655 = vperm.xlu0 %4654, %v4145
        %v4656 = vpop.permute.xlu0 %4655
        %4658 = vset.pattern.permute.xlu0 0
        %4659 = vperm.xlu0 %4658, %v4149
        %v4660 = vpop.permute.xlu0 %4659
        %4662 = vset.pattern.permute.xlu0 0
        %4663 = vperm.xlu0 %4662, %v4153
        %v4664 = vpop.permute.xlu0 %4663
        %4666 = vset.pattern.permute.xlu0 0
        %4667 = vperm.xlu0 %4666, %v4157
        %v4668 = vpop.permute.xlu0 %4667
        %4670 = vset.pattern.permute.xlu0 0
        %4671 = vperm.xlu0 %4670, %v4161
        %v4672 = vpop.permute.xlu0 %4671
        %4674 = vset.pattern.permute.xlu0 0
        %4675 = vperm.xlu0 %4674, %v4165
        %v4676 = vpop.permute.xlu0 %4675
        %4678 = vset.pattern.permute.xlu0 0
        %4679 = vperm.xlu0 %4678, %v4169
        %v4680 = vpop.permute.xlu0 %4679
        %4682 = vset.pattern.permute.xlu0 0
        %4683 = vperm.xlu0 %4682, %v4173
        %v4684 = vpop.permute.xlu0 %4683
        %4686 = vset.pattern.permute.xlu0 0
        %4687 = vperm.xlu0 %4686, %v4177
        %v4688 = vpop.permute.xlu0 %4687
        %4690 = vset.pattern.permute.xlu0 0
        %4691 = vperm.xlu0 %4690, %v4181
        %v4692 = vpop.permute.xlu0 %4691
        %4694 = vset.pattern.permute.xlu0 0
        %4695 = vperm.xlu0 %4694, %v4185
        %v4696 = vpop.permute.xlu0 %4695
        %4698 = vset.pattern.permute.xlu0 0
        %4699 = vperm.xlu0 %4698, %v4189
        %v4700 = vpop.permute.xlu0 %4699
        %4702 = vset.pattern.permute.xlu0 0
        %4703 = vperm.xlu0 %4702, %v4193
        %v4704 = vpop.permute.xlu0 %4703
        %4706 = vset.pattern.permute.xlu0 0
        %4707 = vperm.xlu0 %4706, %v4197
        %v4708 = vpop.permute.xlu0 %4707
        %4710 = vset.pattern.permute.xlu0 0
        %4711 = vperm.xlu0 %4710, %v4201
        %v4712 = vpop.permute.xlu0 %4711
        %4714 = vset.pattern.permute.xlu0 0
        %4715 = vperm.xlu0 %4714, %v4205
        %v4716 = vpop.permute.xlu0 %4715
        %4718 = vset.pattern.permute.xlu0 0
        %4719 = vperm.xlu0 %4718, %v4209
        %v4720 = vpop.permute.xlu0 %4719
        %4722 = vset.pattern.permute.xlu0 0
        %4723 = vperm.xlu0 %4722, %v4213
        %v4724 = vpop.permute.xlu0 %4723
        %4726 = vset.pattern.permute.xlu0 0
        %4727 = vperm.xlu0 %4726, %v4217
        %v4728 = vpop.permute.xlu0 %4727
        %4730 = vset.pattern.permute.xlu0 0
        %4731 = vperm.xlu0 %4730, %v4221
        %v4732 = vpop.permute.xlu0 %4731
        %4734 = vset.pattern.permute.xlu0 0
        %4735 = vperm.xlu0 %4734, %v4225
        %v4736 = vpop.permute.xlu0 %4735
        %4738 = vset.pattern.permute.xlu0 0
        %4739 = vperm.xlu0 %4738, %v4229
        %v4740 = vpop.permute.xlu0 %4739
        %4742 = vset.pattern.permute.xlu0 0
        %4743 = vperm.xlu0 %4742, %v4233
        %v4744 = vpop.permute.xlu0 %4743
        %4746 = vset.pattern.permute.xlu0 0
        %4747 = vperm.xlu0 %4746, %v4237
        %v4748 = vpop.permute.xlu0 %4747
        %4750 = vset.pattern.permute.xlu0 0
        %4751 = vperm.xlu0 %4750, %v4241
        %v4752 = vpop.permute.xlu0 %4751
        %4754 = vset.pattern.permute.xlu0 0
        %4755 = vperm.xlu0 %4754, %v4245
        %v4756 = vpop.permute.xlu0 %4755
        %4758 = vset.pattern.permute.xlu0 0
        %4759 = vperm.xlu0 %4758, %v4249
        %v4760 = vpop.permute.xlu0 %4759
        %4762 = vset.pattern.permute.xlu0 0
        %4763 = vperm.xlu0 %4762, %v4253
        %v4764 = vpop.permute.xlu0 %4763
        %4766 = vset.pattern.permute.xlu0 0
        %4767 = vperm.xlu0 %4766, %v4257
        %v4768 = vpop.permute.xlu0 %4767
        %4770 = vset.pattern.permute.xlu0 0
        %4771 = vperm.xlu0 %4770, %v4261
        %v4772 = vpop.permute.xlu0 %4771
        %4774 = vset.pattern.permute.xlu0 0
        %4775 = vperm.xlu0 %4774, %v4265
        %v4776 = vpop.permute.xlu0 %4775
        %4778 = vset.pattern.permute.xlu0 0
        %4779 = vperm.xlu0 %4778, %v4269
        %v4780 = vpop.permute.xlu0 %4779
        %4782 = vset.pattern.permute.xlu0 0
        %4783 = vperm.xlu0 %4782, %v4273
        %v4784 = vpop.permute.xlu0 %4783
        %4786 = vset.pattern.permute.xlu0 0
        %4787 = vperm.xlu0 %4786, %v4277
        %v4788 = vpop.permute.xlu0 %4787
        %4790 = vset.pattern.permute.xlu0 0
        %4791 = vperm.xlu0 %4790, %v4281
        %v4792 = vpop.permute.xlu0 %4791
        %4794 = vset.pattern.permute.xlu0 0
        %4795 = vperm.xlu0 %4794, %v4285
        %v4796 = vpop.permute.xlu0 %4795
        %4798 = vset.pattern.permute.xlu0 0
        %4799 = vperm.xlu0 %4798, %v4289
        %v4800 = vpop.permute.xlu0 %4799
        %4802 = vset.pattern.permute.xlu0 0
        %4803 = vperm.xlu0 %4802, %v4293
        %v4804 = vpop.permute.xlu0 %4803
        %4806 = vset.pattern.permute.xlu0 0
        %4807 = vperm.xlu0 %4806, %v4297
        %v4808 = vpop.permute.xlu0 %4807
        %4810 = vset.pattern.permute.xlu0 0
        %4811 = vperm.xlu0 %4810, %v4301
        %v4812 = vpop.permute.xlu0 %4811
        %4814 = vset.pattern.permute.xlu0 0
        %4815 = vperm.xlu0 %4814, %v4305
        %v4816 = vpop.permute.xlu0 %4815
        %4818 = vset.pattern.permute.xlu0 0
        %4819 = vperm.xlu0 %4818, %v4309
        %v4820 = vpop.permute.xlu0 %4819
        %4822 = vset.pattern.permute.xlu0 0
        %4823 = vperm.xlu0 %4822, %v4313
        %v4824 = vpop.permute.xlu0 %4823
        %4826 = vset.pattern.permute.xlu0 0
        %4827 = vperm.xlu0 %4826, %v4317
        %v4828 = vpop.permute.xlu0 %4827
        %4830 = vset.pattern.permute.xlu0 0
        %4831 = vperm.xlu0 %4830, %v4321
        %v4832 = vpop.permute.xlu0 %4831
        %4834 = vset.pattern.permute.xlu0 0
        %4835 = vperm.xlu0 %4834, %v4325
        %v4836 = vpop.permute.xlu0 %4835
        %4838 = vset.pattern.permute.xlu0 0
        %4839 = vperm.xlu0 %4838, %v4329
        %v4840 = vpop.permute.xlu0 %4839
        %4842 = vset.pattern.permute.xlu0 0
        %4843 = vperm.xlu0 %4842, %v4333
        %v4844 = vpop.permute.xlu0 %4843
        %4846 = vset.pattern.permute.xlu0 0
        %4847 = vperm.xlu0 %4846, %v4337
        %v4848 = vpop.permute.xlu0 %4847
        %4850 = vset.pattern.permute.xlu0 0
        %4851 = vperm.xlu0 %4850, %v4341
        %v4852 = vpop.permute.xlu0 %4851
        %4854 = vset.pattern.permute.xlu0 0
        %4855 = vperm.xlu0 %4854, %v4345
        %v4856 = vpop.permute.xlu0 %4855
        %4858 = vset.pattern.permute.xlu0 0
        %4859 = vperm.xlu0 %4858, %v4349
        %v4860 = vpop.permute.xlu0 %4859
        %4862 = vset.pattern.permute.xlu0 0
        %4863 = vperm.xlu0 %4862, %v4353
        %v4864 = vpop.permute.xlu0 %4863
        %4866 = vset.pattern.permute.xlu0 0
        %4867 = vperm.xlu0 %4866, %v4357
        %v4868 = vpop.permute.xlu0 %4867
        %4870 = vset.pattern.permute.xlu0 0
        %4871 = vperm.xlu0 %4870, %v4361
        %v4872 = vpop.permute.xlu0 %4871
        %4874 = vset.pattern.permute.xlu0 0
        %4875 = vperm.xlu0 %4874, %v4365
        %v4876 = vpop.permute.xlu0 %4875
        %4878 = vset.pattern.permute.xlu0 0
        %4879 = vperm.xlu0 %4878, %v4369
        %v4880 = vpop.permute.xlu0 %4879
        %4882 = vset.pattern.permute.xlu0 0
        %4883 = vperm.xlu0 %4882, %v4373
        %v4884 = vpop.permute.xlu0 %4883
        %4886 = vset.pattern.permute.xlu0 0
        %4887 = vperm.xlu0 %4886, %v4377
        %v4888 = vpop.permute.xlu0 %4887
        %4890 = vset.pattern.permute.xlu0 0
        %4891 = vperm.xlu0 %4890, %v4381
        %v4892 = vpop.permute.xlu0 %4891
        %4894 = vset.pattern.permute.xlu0 0
        %4895 = vperm.xlu0 %4894, %v4385
        %v4896 = vpop.permute.xlu0 %4895
        %4898 = vset.pattern.permute.xlu0 0
        %4899 = vperm.xlu0 %4898, %v4389
        %v4900 = vpop.permute.xlu0 %4899
        %4902 = vset.pattern.permute.xlu0 0
        %4903 = vperm.xlu0 %4902, %v4393
        %v4904 = vpop.permute.xlu0 %4903
        %4906 = vset.pattern.permute.xlu0 0
        %4907 = vperm.xlu0 %4906, %v4397
        %v4908 = vpop.permute.xlu0 %4907
        %4910 = vset.pattern.permute.xlu0 0
        %4911 = vperm.xlu0 %4910, %v4401
        %v4912 = vpop.permute.xlu0 %4911
        %4914 = vset.pattern.permute.xlu0 0
        %4915 = vperm.xlu0 %4914, %v4405
        %v4916 = vpop.permute.xlu0 %4915
        %4918 = vset.pattern.permute.xlu0 0
        %4919 = vperm.xlu0 %4918, %v4409
        %v4920 = vpop.permute.xlu0 %4919
        %4922 = vset.pattern.permute.xlu0 0
        %4923 = vperm.xlu0 %4922, %v4413
        %v4924 = vpop.permute.xlu0 %4923
        %4926 = vset.pattern.permute.xlu0 0
        %4927 = vperm.xlu0 %4926, %v4417
        %v4928 = vpop.permute.xlu0 %4927
        %4930 = vset.pattern.permute.xlu0 0
        %4931 = vperm.xlu0 %4930, %v4421
        %v4932 = vpop.permute.xlu0 %4931
        %4934 = vset.pattern.permute.xlu0 0
        %4935 = vperm.xlu0 %4934, %v4425
        %v4936 = vpop.permute.xlu0 %4935
        %4938 = vset.pattern.permute.xlu0 0
        %4939 = vperm.xlu0 %4938, %v4429
        %v4940 = vpop.permute.xlu0 %4939
        %4942 = vset.pattern.permute.xlu0 0
        %4943 = vperm.xlu0 %4942, %v4433
        %v4944 = vpop.permute.xlu0 %4943
        %4946 = vset.pattern.permute.xlu0 0
        %4947 = vperm.xlu0 %4946, %v4437
        %v4948 = vpop.permute.xlu0 %4947
        %4950 = vset.pattern.permute.xlu0 0
        %4951 = vperm.xlu0 %4950, %v4441
        %v4952 = vpop.permute.xlu0 %4951
        %4954 = vset.pattern.permute.xlu0 0
        %4955 = vperm.xlu0 %4954, %v4445
        %v4956 = vpop.permute.xlu0 %4955
        %4958 = vset.pattern.permute.xlu0 0
        %4959 = vperm.xlu0 %4958, %v4449
        %v4960 = vpop.permute.xlu0 %4959
        %4962 = vset.pattern.permute.xlu0 0
        %4963 = vperm.xlu0 %4962, %v4453
        %v4964 = vpop.permute.xlu0 %4963
        %4966 = vset.pattern.permute.xlu0 0
        %4967 = vperm.xlu0 %4966, %v4457
        %v4968 = vpop.permute.xlu0 %4967
        %4970 = vset.pattern.permute.xlu0 0
        %4971 = vperm.xlu0 %4970, %v4461
        %v4972 = vpop.permute.xlu0 %4971
        %4974 = vset.pattern.permute.xlu0 0
        %4975 = vperm.xlu0 %4974, %v4465
        %v4976 = vpop.permute.xlu0 %4975
        %4978 = vset.pattern.permute.xlu0 0
        %4979 = vperm.xlu0 %4978, %v4469
        %v4980 = vpop.permute.xlu0 %4979
        %4982 = vset.pattern.permute.xlu0 0
        %4983 = vperm.xlu0 %4982, %v4473
        %v4984 = vpop.permute.xlu0 %4983
        %4986 = vset.pattern.permute.xlu0 0
        %4987 = vperm.xlu0 %4986, %v4477
        %v4988 = vpop.permute.xlu0 %4987
        %4990 = vset.pattern.permute.xlu0 0
        %4991 = vperm.xlu0 %4990, %v4481
        %v4992 = vpop.permute.xlu0 %4991
        %4994 = vset.pattern.permute.xlu0 0
        %4995 = vperm.xlu0 %4994, %v4485
        %v4996 = vpop.permute.xlu0 %4995
        %4998 = vset.pattern.permute.xlu0 0
        %4999 = vperm.xlu0 %4998, %v4489
        %v5000 = vpop.permute.xlu0 %4999
        %5002 = vset.pattern.permute.xlu0 0
        %5003 = vperm.xlu0 %5002, %v4493
        %v5004 = vpop.permute.xlu0 %5003
        %5006 = vset.pattern.permute.xlu0 0
        %5007 = vperm.xlu0 %5006, %v4497
        %v5008 = vpop.permute.xlu0 %5007
        %5010 = vset.pattern.permute.xlu0 0
        %5011 = vperm.xlu0 %5010, %v4501
        %v5012 = vpop.permute.xlu0 %5011
        %5014 = vset.pattern.permute.xlu0 0
        %5015 = vperm.xlu0 %5014, %v4505
        %v5016 = vpop.permute.xlu0 %5015
        %5018 = vset.pattern.permute.xlu0 0
        %5019 = vperm.xlu0 %5018, %v4509
        %v5020 = vpop.permute.xlu0 %5019
        %5022 = vset.pattern.permute.xlu0 0
        %5023 = vperm.xlu0 %5022, %v4513
        %v5024 = vpop.permute.xlu0 %5023
        %5026 = vset.pattern.permute.xlu0 0
        %5027 = vperm.xlu0 %5026, %v4517
        %v5028 = vpop.permute.xlu0 %5027
        %5030 = vset.pattern.permute.xlu0 0
        %5031 = vperm.xlu0 %5030, %v4521
        %v5032 = vpop.permute.xlu0 %5031
        %5034 = vset.pattern.permute.xlu0 0
        %5035 = vperm.xlu0 %5034, %v4525
        %v5036 = vpop.permute.xlu0 %5035
        %5038 = vset.pattern.permute.xlu0 0
        %5039 = vperm.xlu0 %5038, %v4529
        %v5040 = vpop.permute.xlu0 %5039
        %5042 = vset.pattern.permute.xlu0 0
        %5043 = vperm.xlu0 %5042, %v4533
        %v5044 = vpop.permute.xlu0 %5043
        %5046 = vset.pattern.permute.xlu0 0
        %5047 = vperm.xlu0 %5046, %v4537
        %v5048 = vpop.permute.xlu0 %5047
        %5050 = vset.pattern.permute.xlu0 0
        %5051 = vperm.xlu0 %5050, %v4541
        %v5052 = vpop.permute.xlu0 %5051
        %5054 = vset.pattern.permute.xlu0 0
        %5055 = vperm.xlu0 %5054, %v4545
        %v5056 = vpop.permute.xlu0 %5055
        %5058 = vset.pattern.permute.xlu0 0
        %5059 = vperm.xlu0 %5058, %v4549
        %v5060 = vpop.permute.xlu0 %5059
        %5062 = vset.pattern.permute.xlu0 0
        %5063 = vperm.xlu0 %5062, %v4553
        %v5064 = vpop.permute.xlu0 %5063
        %5066 = vset.pattern.permute.xlu0 0
        %5067 = vperm.xlu0 %5066, %v4557
        %v5068 = vpop.permute.xlu0 %5067
        %5070 = vset.pattern.permute.xlu0 0
        %5071 = vperm.xlu0 %5070, %v4561
        %v5072 = vpop.permute.xlu0 %5071
        %5074 = vset.pattern.permute.xlu0 0
        %5075 = vperm.xlu0 %5074, %v4565
        %v5076 = vpop.permute.xlu0 %5075
        %5078 = vset.pattern.permute.xlu0 0
        %5079 = vperm.xlu0 %5078, %v4569
        %v5080 = vpop.permute.xlu0 %5079
        %5082 = vset.pattern.permute.xlu0 0
        %5083 = vperm.xlu0 %5082, %v4573
        %v5084 = vpop.permute.xlu0 %5083
        %5086 = vset.pattern.permute.xlu0 0
        %5087 = vperm.xlu0 %5086, %v4577
        %v5088 = vpop.permute.xlu0 %5087
        %5090 = vset.pattern.permute.xlu0 0
        %5091 = vperm.xlu0 %5090, %v4581
        %v5092 = vpop.permute.xlu0 %5091
        %5094 = vset.pattern.permute.xlu0 0
        %5095 = vperm.xlu0 %5094, %v4585
        %v5096 = vpop.permute.xlu0 %5095
        %5098 = vset.pattern.permute.xlu0 0
        %5099 = vperm.xlu0 %5098, %v4589
        %v5100 = vpop.permute.xlu0 %5099
        %5102 = vset.pattern.permute.xlu0 0
        %5103 = vperm.xlu0 %5102, %v4593
        %v5104 = vpop.permute.xlu0 %5103
        %5106 = vset.pattern.permute.xlu0 0
        %5107 = vperm.xlu0 %5106, %v4597
        %v5108 = vpop.permute.xlu0 %5107
        %v5110 = vsub.f32 %v1740, %v4600
        %v5111 = vsub.f32 %v1741, %v4600
        %v5112 = vsub.f32 %v1742, %v4604
        %v5113 = vsub.f32 %v1743, %v4604
        %v5114 = vsub.f32 %v1744, %v4608
        %v5115 = vsub.f32 %v1745, %v4608
        %v5116 = vsub.f32 %v1746, %v4612
        %v5117 = vsub.f32 %v1747, %v4612
        %v5118 = vsub.f32 %v1748, %v4616
        %v5119 = vsub.f32 %v1749, %v4616
        %v5120 = vsub.f32 %v1750, %v4620
        %v5121 = vsub.f32 %v1751, %v4620
        %v5122 = vsub.f32 %v1752, %v4624
        %v5123 = vsub.f32 %v1753, %v4624
        %v5124 = vsub.f32 %v1754, %v4628
        %v5125 = vsub.f32 %v1755, %v4628
        %v5126 = vsub.f32 %v1756, %v4632
        %v5127 = vsub.f32 %v1757, %v4632
        %v5128 = vsub.f32 %v1758, %v4636
        %v5129 = vsub.f32 %v1759, %v4636
        %v5130 = vsub.f32 %v1760, %v4640
        %v5131 = vsub.f32 %v1761, %v4640
        %v5132 = vsub.f32 %v1762, %v4644
        %v5133 = vsub.f32 %v1763, %v4644
        %v5134 = vsub.f32 %v1764, %v4648
        %v5135 = vsub.f32 %v1765, %v4648
        %v5136 = vsub.f32 %v1766, %v4652
        %v5137 = vsub.f32 %v1767, %v4652
        %v5138 = vsub.f32 %v1768, %v4656
        %v5139 = vsub.f32 %v1769, %v4656
        %v5140 = vsub.f32 %v1770, %v4660
        %v5141 = vsub.f32 %v1771, %v4660
        %v5142 = vsub.f32 %v1772, %v4664
        %v5143 = vsub.f32 %v1773, %v4664
        %v5144 = vsub.f32 %v1774, %v4668
        %v5145 = vsub.f32 %v1775, %v4668
        %v5146 = vsub.f32 %v1776, %v4672
        %v5147 = vsub.f32 %v1777, %v4672
        %v5148 = vsub.f32 %v1778, %v4676
        %v5149 = vsub.f32 %v1779, %v4676
        %v5150 = vsub.f32 %v1780, %v4680
        %v5151 = vsub.f32 %v1781, %v4680
        %v5152 = vsub.f32 %v1782, %v4684
        %v5153 = vsub.f32 %v1783, %v4684
        %v5154 = vsub.f32 %v1784, %v4688
        %v5155 = vsub.f32 %v1785, %v4688
        %v5156 = vsub.f32 %v1786, %v4692
        %v5157 = vsub.f32 %v1787, %v4692
        %v5158 = vsub.f32 %v1788, %v4696
        %v5159 = vsub.f32 %v1789, %v4696
        %v5160 = vsub.f32 %v1790, %v4700
        %v5161 = vsub.f32 %v1791, %v4700
        %v5162 = vsub.f32 %v1792, %v4704
        %v5163 = vsub.f32 %v1793, %v4704
        %v5164 = vsub.f32 %v1794, %v4708
        %v5165 = vsub.f32 %v1795, %v4708
        %v5166 = vsub.f32 %v1796, %v4712
        %v5167 = vsub.f32 %v1797, %v4712
        %v5168 = vsub.f32 %v1798, %v4716
        %v5169 = vsub.f32 %v1799, %v4716
        %v5170 = vsub.f32 %v1800, %v4720
        %v5171 = vsub.f32 %v1801, %v4720
        %v5172 = vsub.f32 %v1802, %v4724
        %v5173 = vsub.f32 %v1803, %v4724
        %v5174 = vsub.f32 %v1804, %v4728
        %v5175 = vsub.f32 %v1805, %v4728
        %v5176 = vsub.f32 %v1806, %v4732
        %v5177 = vsub.f32 %v1807, %v4732
        %v5178 = vsub.f32 %v1808, %v4736
        %v5179 = vsub.f32 %v1809, %v4736
        %v5180 = vsub.f32 %v1810, %v4740
        %v5181 = vsub.f32 %v1811, %v4740
        %v5182 = vsub.f32 %v1812, %v4744
        %v5183 = vsub.f32 %v1813, %v4744
        %v5184 = vsub.f32 %v1814, %v4748
        %v5185 = vsub.f32 %v1815, %v4748
        %v5186 = vsub.f32 %v1816, %v4752
        %v5187 = vsub.f32 %v1817, %v4752
        %v5188 = vsub.f32 %v1818, %v4756
        %v5189 = vsub.f32 %v1819, %v4756
        %v5190 = vsub.f32 %v1820, %v4760
        %v5191 = vsub.f32 %v1821, %v4760
        %v5192 = vsub.f32 %v1822, %v4764
        %v5193 = vsub.f32 %v1823, %v4764
        %v5194 = vsub.f32 %v1824, %v4768
        %v5195 = vsub.f32 %v1825, %v4768
        %v5196 = vsub.f32 %v1826, %v4772
        %v5197 = vsub.f32 %v1827, %v4772
        %v5198 = vsub.f32 %v1828, %v4776
        %v5199 = vsub.f32 %v1829, %v4776
        %v5200 = vsub.f32 %v1830, %v4780
        %v5201 = vsub.f32 %v1831, %v4780
        %v5202 = vsub.f32 %v1832, %v4784
        %v5203 = vsub.f32 %v1833, %v4784
        %v5204 = vsub.f32 %v1834, %v4788
        %v5205 = vsub.f32 %v1835, %v4788
        %v5206 = vsub.f32 %v1836, %v4792
        %v5207 = vsub.f32 %v1837, %v4792
        %v5208 = vsub.f32 %v1838, %v4796
        %v5209 = vsub.f32 %v1839, %v4796
        %v5210 = vsub.f32 %v1840, %v4800
        %v5211 = vsub.f32 %v1841, %v4800
        %v5212 = vsub.f32 %v1842, %v4804
        %v5213 = vsub.f32 %v1843, %v4804
        %v5214 = vsub.f32 %v1844, %v4808
        %v5215 = vsub.f32 %v1845, %v4808
        %v5216 = vsub.f32 %v1846, %v4812
        %v5217 = vsub.f32 %v1847, %v4812
        %v5218 = vsub.f32 %v1848, %v4816
        %v5219 = vsub.f32 %v1849, %v4816
        %v5220 = vsub.f32 %v1850, %v4820
        %v5221 = vsub.f32 %v1851, %v4820
        %v5222 = vsub.f32 %v1852, %v4824
        %v5223 = vsub.f32 %v1853, %v4824
        %v5224 = vsub.f32 %v1854, %v4828
        %v5225 = vsub.f32 %v1855, %v4828
        %v5226 = vsub.f32 %v1856, %v4832
        %v5227 = vsub.f32 %v1857, %v4832
        %v5228 = vsub.f32 %v1858, %v4836
        %v5229 = vsub.f32 %v1859, %v4836
        %v5230 = vsub.f32 %v1860, %v4840
        %v5231 = vsub.f32 %v1861, %v4840
        %v5232 = vsub.f32 %v1862, %v4844
        %v5233 = vsub.f32 %v1863, %v4844
        %v5234 = vsub.f32 %v1864, %v4848
        %v5235 = vsub.f32 %v1865, %v4848
        %v5236 = vsub.f32 %v1866, %v4852
        %v5237 = vsub.f32 %v1867, %v4852
        %v5238 = vsub.f32 %v1868, %v4856
        %v5239 = vsub.f32 %v1869, %v4856
        %v5240 = vsub.f32 %v1870, %v4860
        %v5241 = vsub.f32 %v1871, %v4860
        %v5242 = vsub.f32 %v1872, %v4864
        %v5243 = vsub.f32 %v1873, %v4864
        %v5244 = vsub.f32 %v1874, %v4868
        %v5245 = vsub.f32 %v1875, %v4868
        %v5246 = vsub.f32 %v1876, %v4872
        %v5247 = vsub.f32 %v1877, %v4872
        %v5248 = vsub.f32 %v1878, %v4876
        %v5249 = vsub.f32 %v1879, %v4876
        %v5250 = vsub.f32 %v1880, %v4880
        %v5251 = vsub.f32 %v1881, %v4880
        %v5252 = vsub.f32 %v1882, %v4884
        %v5253 = vsub.f32 %v1883, %v4884
        %v5254 = vsub.f32 %v1884, %v4888
        %v5255 = vsub.f32 %v1885, %v4888
        %v5256 = vsub.f32 %v1886, %v4892
        %v5257 = vsub.f32 %v1887, %v4892
        %v5258 = vsub.f32 %v1888, %v4896
        %v5259 = vsub.f32 %v1889, %v4896
        %v5260 = vsub.f32 %v1890, %v4900
        %v5261 = vsub.f32 %v1891, %v4900
        %v5262 = vsub.f32 %v1892, %v4904
        %v5263 = vsub.f32 %v1893, %v4904
        %v5264 = vsub.f32 %v1894, %v4908
        %v5265 = vsub.f32 %v1895, %v4908
        %v5266 = vsub.f32 %v1896, %v4912
        %v5267 = vsub.f32 %v1897, %v4912
        %v5268 = vsub.f32 %v1898, %v4916
        %v5269 = vsub.f32 %v1899, %v4916
        %v5270 = vsub.f32 %v1900, %v4920
        %v5271 = vsub.f32 %v1901, %v4920
        %v5272 = vsub.f32 %v1902, %v4924
        %v5273 = vsub.f32 %v1903, %v4924
        %v5274 = vsub.f32 %v1904, %v4928
        %v5275 = vsub.f32 %v1905, %v4928
        %v5276 = vsub.f32 %v1906, %v4932
        %v5277 = vsub.f32 %v1907, %v4932
        %v5278 = vsub.f32 %v1908, %v4936
        %v5279 = vsub.f32 %v1909, %v4936
        %v5280 = vsub.f32 %v1910, %v4940
        %v5281 = vsub.f32 %v1911, %v4940
        %v5282 = vsub.f32 %v1912, %v4944
        %v5283 = vsub.f32 %v1913, %v4944
        %v5284 = vsub.f32 %v1914, %v4948
        %v5285 = vsub.f32 %v1915, %v4948
        %v5286 = vsub.f32 %v1916, %v4952
        %v5287 = vsub.f32 %v1917, %v4952
        %v5288 = vsub.f32 %v1918, %v4956
        %v5289 = vsub.f32 %v1919, %v4956
        %v5290 = vsub.f32 %v1920, %v4960
        %v5291 = vsub.f32 %v1921, %v4960
        %v5292 = vsub.f32 %v1922, %v4964
        %v5293 = vsub.f32 %v1923, %v4964
        %v5294 = vsub.f32 %v1924, %v4968
        %v5295 = vsub.f32 %v1925, %v4968
        %v5296 = vsub.f32 %v1926, %v4972
        %v5297 = vsub.f32 %v1927, %v4972
        %v5298 = vsub.f32 %v1928, %v4976
        %v5299 = vsub.f32 %v1929, %v4976
        %v5300 = vsub.f32 %v1930, %v4980
        %v5301 = vsub.f32 %v1931, %v4980
        %v5302 = vsub.f32 %v1932, %v4984
        %v5303 = vsub.f32 %v1933, %v4984
        %v5304 = vsub.f32 %v1934, %v4988
        %v5305 = vsub.f32 %v1935, %v4988
        %v5306 = vsub.f32 %v1936, %v4992
        %v5307 = vsub.f32 %v1937, %v4992
        %v5308 = vsub.f32 %v1938, %v4996
        %v5309 = vsub.f32 %v1939, %v4996
        %v5310 = vsub.f32 %v1940, %v5000
        %v5311 = vsub.f32 %v1941, %v5000
        %v5312 = vsub.f32 %v1942, %v5004
        %v5313 = vsub.f32 %v1943, %v5004
        %v5314 = vsub.f32 %v1944, %v5008
        %v5315 = vsub.f32 %v1945, %v5008
        %v5316 = vsub.f32 %v1946, %v5012
        %v5317 = vsub.f32 %v1947, %v5012
        %v5318 = vsub.f32 %v1948, %v5016
        %v5319 = vsub.f32 %v1949, %v5016
        %v5320 = vsub.f32 %v1950, %v5020
        %v5321 = vsub.f32 %v1951, %v5020
        %v5322 = vsub.f32 %v1952, %v5024
        %v5323 = vsub.f32 %v1953, %v5024
        %v5324 = vsub.f32 %v1954, %v5028
        %v5325 = vsub.f32 %v1955, %v5028
        %v5326 = vsub.f32 %v1956, %v5032
        %v5327 = vsub.f32 %v1957, %v5032
        %v5328 = vsub.f32 %v1958, %v5036
        %v5329 = vsub.f32 %v1959, %v5036
        %v5330 = vsub.f32 %v1960, %v5040
        %v5331 = vsub.f32 %v1961, %v5040
        %v5332 = vsub.f32 %v1962, %v5044
        %v5333 = vsub.f32 %v1963, %v5044
        %v5334 = vsub.f32 %v1964, %v5048
        %v5335 = vsub.f32 %v1965, %v5048
        %v5336 = vsub.f32 %v1966, %v5052
        %v5337 = vsub.f32 %v1967, %v5052
        %v5338 = vsub.f32 %v1968, %v5056
        %v5339 = vsub.f32 %v1969, %v5056
        %v5340 = vsub.f32 %v1970, %v5060
        %v5341 = vsub.f32 %v1971, %v5060
        %v5342 = vsub.f32 %v1972, %v5064
        %v5343 = vsub.f32 %v1973, %v5064
        %v5344 = vsub.f32 %v1974, %v5068
        %v5345 = vsub.f32 %v1975, %v5068
        %v5346 = vsub.f32 %v1976, %v5072
        %v5347 = vsub.f32 %v1977, %v5072
        %v5348 = vsub.f32 %v1978, %v5076
        %v5349 = vsub.f32 %v1979, %v5076
        %v5350 = vsub.f32 %v1980, %v5080
        %v5351 = vsub.f32 %v1981, %v5080
        %v5352 = vsub.f32 %v1982, %v5084
        %v5353 = vsub.f32 %v1983, %v5084
        %v5354 = vsub.f32 %v1984, %v5088
        %v5355 = vsub.f32 %v1985, %v5088
        %v5356 = vsub.f32 %v1986, %v5092
        %v5357 = vsub.f32 %v1987, %v5092
        %v5358 = vsub.f32 %v1988, %v5096
        %v5359 = vsub.f32 %v1989, %v5096
        %v5360 = vsub.f32 %v1990, %v5100
        %v5361 = vsub.f32 %v1991, %v5100
        %v5362 = vsub.f32 %v1992, %v5104
        %v5363 = vsub.f32 %v1993, %v5104
        %v5364 = vsub.f32 %v1994, %v5108
        %v5365 = vsub.f32 %v1995, %v5108
        %v5366 = vmul.f32 %v5110, 1.442695
        %v5367 = vpow.pop %v5366
        %v5368 = vmul.f32 %v5111, 1.442695
        %v5369 = vpow.pop %v5368
        %v5370 = vmul.f32 %v5112, 1.442695
        %v5371 = vpow.pop %v5370
        %v5372 = vmul.f32 %v5113, 1.442695
        %v5373 = vpow.pop %v5372
        %v5374 = vmul.f32 %v5114, 1.442695
        %v5375 = vpow.pop %v5374
        %v5376 = vmul.f32 %v5115, 1.442695
        %v5377 = vpow.pop %v5376
        %v5378 = vmul.f32 %v5116, 1.442695
        %v5379 = vpow.pop %v5378
        %v5380 = vmul.f32 %v5117, 1.442695
        %v5381 = vpow.pop %v5380
        %v5382 = vmul.f32 %v5118, 1.442695
        %v5383 = vpow.pop %v5382
        %v5384 = vmul.f32 %v5119, 1.442695
        %v5385 = vpow.pop %v5384
        %v5386 = vmul.f32 %v5120, 1.442695
        %v5387 = vpow.pop %v5386
        %v5388 = vmul.f32 %v5121, 1.442695
        %v5389 = vpow.pop %v5388
        %v5390 = vmul.f32 %v5122, 1.442695
        %v5391 = vpow.pop %v5390
        %v5392 = vmul.f32 %v5123, 1.442695
        %v5393 = vpow.pop %v5392
        %v5394 = vmul.f32 %v5124, 1.442695
        %v5395 = vpow.pop %v5394
        %v5396 = vmul.f32 %v5125, 1.442695
        %v5397 = vpow.pop %v5396
        %v5398 = vmul.f32 %v5126, 1.442695
        %v5399 = vpow.pop %v5398
        %v5400 = vmul.f32 %v5127, 1.442695
        %v5401 = vpow.pop %v5400
        %v5402 = vmul.f32 %v5128, 1.442695
        %v5403 = vpow.pop %v5402
        %v5404 = vmul.f32 %v5129, 1.442695
        %v5405 = vpow.pop %v5404
        %v5406 = vmul.f32 %v5130, 1.442695
        %v5407 = vpow.pop %v5406
        %v5408 = vmul.f32 %v5131, 1.442695
        %v5409 = vpow.pop %v5408
        %v5410 = vmul.f32 %v5132, 1.442695
        %v5411 = vpow.pop %v5410
        %v5412 = vmul.f32 %v5133, 1.442695
        %v5413 = vpow.pop %v5412
        %v5414 = vmul.f32 %v5134, 1.442695
        %v5415 = vpow.pop %v5414
        %v5416 = vmul.f32 %v5135, 1.442695
        %v5417 = vpow.pop %v5416
        %v5418 = vmul.f32 %v5136, 1.442695
        %v5419 = vpow.pop %v5418
        %v5420 = vmul.f32 %v5137, 1.442695
        %v5421 = vpow.pop %v5420
        %v5422 = vmul.f32 %v5138, 1.442695
        %v5423 = vpow.pop %v5422
        %v5424 = vmul.f32 %v5139, 1.442695
        %v5425 = vpow.pop %v5424
        %v5426 = vmul.f32 %v5140, 1.442695
        %v5427 = vpow.pop %v5426
        %v5428 = vmul.f32 %v5141, 1.442695
        %v5429 = vpow.pop %v5428
        %v5430 = vmul.f32 %v5142, 1.442695
        %v5431 = vpow.pop %v5430
        %v5432 = vmul.f32 %v5143, 1.442695
        %v5433 = vpow.pop %v5432
        %v5434 = vmul.f32 %v5144, 1.442695
        %v5435 = vpow.pop %v5434
        %v5436 = vmul.f32 %v5145, 1.442695
        %v5437 = vpow.pop %v5436
        %v5438 = vmul.f32 %v5146, 1.442695
        %v5439 = vpow.pop %v5438
        %v5440 = vmul.f32 %v5147, 1.442695
        %v5441 = vpow.pop %v5440
        %v5442 = vmul.f32 %v5148, 1.442695
        %v5443 = vpow.pop %v5442
        %v5444 = vmul.f32 %v5149, 1.442695
        %v5445 = vpow.pop %v5444
        %v5446 = vmul.f32 %v5150, 1.442695
        %v5447 = vpow.pop %v5446
        %v5448 = vmul.f32 %v5151, 1.442695
        %v5449 = vpow.pop %v5448
        %v5450 = vmul.f32 %v5152, 1.442695
        %v5451 = vpow.pop %v5450
        %v5452 = vmul.f32 %v5153, 1.442695
        %v5453 = vpow.pop %v5452
        %v5454 = vmul.f32 %v5154, 1.442695
        %v5455 = vpow.pop %v5454
        %v5456 = vmul.f32 %v5155, 1.442695
        %v5457 = vpow.pop %v5456
        %v5458 = vmul.f32 %v5156, 1.442695
        %v5459 = vpow.pop %v5458
        %v5460 = vmul.f32 %v5157, 1.442695
        %v5461 = vpow.pop %v5460
        %v5462 = vmul.f32 %v5158, 1.442695
        %v5463 = vpow.pop %v5462
        %v5464 = vmul.f32 %v5159, 1.442695
        %v5465 = vpow.pop %v5464
        %v5466 = vmul.f32 %v5160, 1.442695
        %v5467 = vpow.pop %v5466
        %v5468 = vmul.f32 %v5161, 1.442695
        %v5469 = vpow.pop %v5468
        %v5470 = vmul.f32 %v5162, 1.442695
        %v5471 = vpow.pop %v5470
        %v5472 = vmul.f32 %v5163, 1.442695
        %v5473 = vpow.pop %v5472
        %v5474 = vmul.f32 %v5164, 1.442695
        %v5475 = vpow.pop %v5474
        %v5476 = vmul.f32 %v5165, 1.442695
        %v5477 = vpow.pop %v5476
        %v5478 = vmul.f32 %v5166, 1.442695
        %v5479 = vpow.pop %v5478
        %v5480 = vmul.f32 %v5167, 1.442695
        %v5481 = vpow.pop %v5480
        %v5482 = vmul.f32 %v5168, 1.442695
        %v5483 = vpow.pop %v5482
        %v5484 = vmul.f32 %v5169, 1.442695
        %v5485 = vpow.pop %v5484
        %v5486 = vmul.f32 %v5170, 1.442695
        %v5487 = vpow.pop %v5486
        %v5488 = vmul.f32 %v5171, 1.442695
        %v5489 = vpow.pop %v5488
        %v5490 = vmul.f32 %v5172, 1.442695
        %v5491 = vpow.pop %v5490
        %v5492 = vmul.f32 %v5173, 1.442695
        %v5493 = vpow.pop %v5492
        %v5494 = vmul.f32 %v5174, 1.442695
        %v5495 = vpow.pop %v5494
        %v5496 = vmul.f32 %v5175, 1.442695
        %v5497 = vpow.pop %v5496
        %v5498 = vmul.f32 %v5176, 1.442695
        %v5499 = vpow.pop %v5498
        %v5500 = vmul.f32 %v5177, 1.442695
        %v5501 = vpow.pop %v5500
        %v5502 = vmul.f32 %v5178, 1.442695
        %v5503 = vpow.pop %v5502
        %v5504 = vmul.f32 %v5179, 1.442695
        %v5505 = vpow.pop %v5504
        %v5506 = vmul.f32 %v5180, 1.442695
        %v5507 = vpow.pop %v5506
        %v5508 = vmul.f32 %v5181, 1.442695
        %v5509 = vpow.pop %v5508
        %v5510 = vmul.f32 %v5182, 1.442695
        %v5511 = vpow.pop %v5510
        %v5512 = vmul.f32 %v5183, 1.442695
        %v5513 = vpow.pop %v5512
        %v5514 = vmul.f32 %v5184, 1.442695
        %v5515 = vpow.pop %v5514
        %v5516 = vmul.f32 %v5185, 1.442695
        %v5517 = vpow.pop %v5516
        %v5518 = vmul.f32 %v5186, 1.442695
        %v5519 = vpow.pop %v5518
        %v5520 = vmul.f32 %v5187, 1.442695
        %v5521 = vpow.pop %v5520
        %v5522 = vmul.f32 %v5188, 1.442695
        %v5523 = vpow.pop %v5522
        %v5524 = vmul.f32 %v5189, 1.442695
        %v5525 = vpow.pop %v5524
        %v5526 = vmul.f32 %v5190, 1.442695
        %v5527 = vpow.pop %v5526
        %v5528 = vmul.f32 %v5191, 1.442695
        %v5529 = vpow.pop %v5528
        %v5530 = vmul.f32 %v5192, 1.442695
        %v5531 = vpow.pop %v5530
        %v5532 = vmul.f32 %v5193, 1.442695
        %v5533 = vpow.pop %v5532
        %v5534 = vmul.f32 %v5194, 1.442695
        %v5535 = vpow.pop %v5534
        %v5536 = vmul.f32 %v5195, 1.442695
        %v5537 = vpow.pop %v5536
        %v5538 = vmul.f32 %v5196, 1.442695
        %v5539 = vpow.pop %v5538
        %v5540 = vmul.f32 %v5197, 1.442695
        %v5541 = vpow.pop %v5540
        %v5542 = vmul.f32 %v5198, 1.442695
        %v5543 = vpow.pop %v5542
        %v5544 = vmul.f32 %v5199, 1.442695
        %v5545 = vpow.pop %v5544
        %v5546 = vmul.f32 %v5200, 1.442695
        %v5547 = vpow.pop %v5546
        %v5548 = vmul.f32 %v5201, 1.442695
        %v5549 = vpow.pop %v5548
        %v5550 = vmul.f32 %v5202, 1.442695
        %v5551 = vpow.pop %v5550
        %v5552 = vmul.f32 %v5203, 1.442695
        %v5553 = vpow.pop %v5552
        %v5554 = vmul.f32 %v5204, 1.442695
        %v5555 = vpow.pop %v5554
        %v5556 = vmul.f32 %v5205, 1.442695
        %v5557 = vpow.pop %v5556
        %v5558 = vmul.f32 %v5206, 1.442695
        %v5559 = vpow.pop %v5558
        %v5560 = vmul.f32 %v5207, 1.442695
        %v5561 = vpow.pop %v5560
        %v5562 = vmul.f32 %v5208, 1.442695
        %v5563 = vpow.pop %v5562
        %v5564 = vmul.f32 %v5209, 1.442695
        %v5565 = vpow.pop %v5564
        %v5566 = vmul.f32 %v5210, 1.442695
        %v5567 = vpow.pop %v5566
        %v5568 = vmul.f32 %v5211, 1.442695
        %v5569 = vpow.pop %v5568
        %v5570 = vmul.f32 %v5212, 1.442695
        %v5571 = vpow.pop %v5570
        %v5572 = vmul.f32 %v5213, 1.442695
        %v5573 = vpow.pop %v5572
        %v5574 = vmul.f32 %v5214, 1.442695
        %v5575 = vpow.pop %v5574
        %v5576 = vmul.f32 %v5215, 1.442695
        %v5577 = vpow.pop %v5576
        %v5578 = vmul.f32 %v5216, 1.442695
        %v5579 = vpow.pop %v5578
        %v5580 = vmul.f32 %v5217, 1.442695
        %v5581 = vpow.pop %v5580
        %v5582 = vmul.f32 %v5218, 1.442695
        %v5583 = vpow.pop %v5582
        %v5584 = vmul.f32 %v5219, 1.442695
        %v5585 = vpow.pop %v5584
        %v5586 = vmul.f32 %v5220, 1.442695
        %v5587 = vpow.pop %v5586
        %v5588 = vmul.f32 %v5221, 1.442695
        %v5589 = vpow.pop %v5588
        %v5590 = vmul.f32 %v5222, 1.442695
        %v5591 = vpow.pop %v5590
        %v5592 = vmul.f32 %v5223, 1.442695
        %v5593 = vpow.pop %v5592
        %v5594 = vmul.f32 %v5224, 1.442695
        %v5595 = vpow.pop %v5594
        %v5596 = vmul.f32 %v5225, 1.442695
        %v5597 = vpow.pop %v5596
        %v5598 = vmul.f32 %v5226, 1.442695
        %v5599 = vpow.pop %v5598
        %v5600 = vmul.f32 %v5227, 1.442695
        %v5601 = vpow.pop %v5600
        %v5602 = vmul.f32 %v5228, 1.442695
        %v5603 = vpow.pop %v5602
        %v5604 = vmul.f32 %v5229, 1.442695
        %v5605 = vpow.pop %v5604
        %v5606 = vmul.f32 %v5230, 1.442695
        %v5607 = vpow.pop %v5606
        %v5608 = vmul.f32 %v5231, 1.442695
        %v5609 = vpow.pop %v5608
        %v5610 = vmul.f32 %v5232, 1.442695
        %v5611 = vpow.pop %v5610
        %v5612 = vmul.f32 %v5233, 1.442695
        %v5613 = vpow.pop %v5612
        %v5614 = vmul.f32 %v5234, 1.442695
        %v5615 = vpow.pop %v5614
        %v5616 = vmul.f32 %v5235, 1.442695
        %v5617 = vpow.pop %v5616
        %v5618 = vmul.f32 %v5236, 1.442695
        %v5619 = vpow.pop %v5618
        %v5620 = vmul.f32 %v5237, 1.442695
        %v5621 = vpow.pop %v5620
        %v5622 = vmul.f32 %v5238, 1.442695
        %v5623 = vpow.pop %v5622
        %v5624 = vmul.f32 %v5239, 1.442695
        %v5625 = vpow.pop %v5624
        %v5626 = vmul.f32 %v5240, 1.442695
        %v5627 = vpow.pop %v5626
        %v5628 = vmul.f32 %v5241, 1.442695
        %v5629 = vpow.pop %v5628
        %v5630 = vmul.f32 %v5242, 1.442695
        %v5631 = vpow.pop %v5630
        %v5632 = vmul.f32 %v5243, 1.442695
        %v5633 = vpow.pop %v5632
        %v5634 = vmul.f32 %v5244, 1.442695
        %v5635 = vpow.pop %v5634
        %v5636 = vmul.f32 %v5245, 1.442695
        %v5637 = vpow.pop %v5636
        %v5638 = vmul.f32 %v5246, 1.442695
        %v5639 = vpow.pop %v5638
        %v5640 = vmul.f32 %v5247, 1.442695
        %v5641 = vpow.pop %v5640
        %v5642 = vmul.f32 %v5248, 1.442695
        %v5643 = vpow.pop %v5642
        %v5644 = vmul.f32 %v5249, 1.442695
        %v5645 = vpow.pop %v5644
        %v5646 = vmul.f32 %v5250, 1.442695
        %v5647 = vpow.pop %v5646
        %v5648 = vmul.f32 %v5251, 1.442695
        %v5649 = vpow.pop %v5648
        %v5650 = vmul.f32 %v5252, 1.442695
        %v5651 = vpow.pop %v5650
        %v5652 = vmul.f32 %v5253, 1.442695
        %v5653 = vpow.pop %v5652
        %v5654 = vmul.f32 %v5254, 1.442695
        %v5655 = vpow.pop %v5654
        %v5656 = vmul.f32 %v5255, 1.442695
        %v5657 = vpow.pop %v5656
        %v5658 = vmul.f32 %v5256, 1.442695
        %v5659 = vpow.pop %v5658
        %v5660 = vmul.f32 %v5257, 1.442695
        %v5661 = vpow.pop %v5660
        %v5662 = vmul.f32 %v5258, 1.442695
        %v5663 = vpow.pop %v5662
        %v5664 = vmul.f32 %v5259, 1.442695
        %v5665 = vpow.pop %v5664
        %v5666 = vmul.f32 %v5260, 1.442695
        %v5667 = vpow.pop %v5666
        %v5668 = vmul.f32 %v5261, 1.442695
        %v5669 = vpow.pop %v5668
        %v5670 = vmul.f32 %v5262, 1.442695
        %v5671 = vpow.pop %v5670
        %v5672 = vmul.f32 %v5263, 1.442695
        %v5673 = vpow.pop %v5672
        %v5674 = vmul.f32 %v5264, 1.442695
        %v5675 = vpow.pop %v5674
        %v5676 = vmul.f32 %v5265, 1.442695
        %v5677 = vpow.pop %v5676
        %v5678 = vmul.f32 %v5266, 1.442695
        %v5679 = vpow.pop %v5678
        %v5680 = vmul.f32 %v5267, 1.442695
        %v5681 = vpow.pop %v5680
        %v5682 = vmul.f32 %v5268, 1.442695
        %v5683 = vpow.pop %v5682
        %v5684 = vmul.f32 %v5269, 1.442695
        %v5685 = vpow.pop %v5684
        %v5686 = vmul.f32 %v5270, 1.442695
        %v5687 = vpow.pop %v5686
        %v5688 = vmul.f32 %v5271, 1.442695
        %v5689 = vpow.pop %v5688
        %v5690 = vmul.f32 %v5272, 1.442695
        %v5691 = vpow.pop %v5690
        %v5692 = vmul.f32 %v5273, 1.442695
        %v5693 = vpow.pop %v5692
        %v5694 = vmul.f32 %v5274, 1.442695
        %v5695 = vpow.pop %v5694
        %v5696 = vmul.f32 %v5275, 1.442695
        %v5697 = vpow.pop %v5696
        %v5698 = vmul.f32 %v5276, 1.442695
        %v5699 = vpow.pop %v5698
        %v5700 = vmul.f32 %v5277, 1.442695
        %v5701 = vpow.pop %v5700
        %v5702 = vmul.f32 %v5278, 1.442695
        %v5703 = vpow.pop %v5702
        %v5704 = vmul.f32 %v5279, 1.442695
        %v5705 = vpow.pop %v5704
        %v5706 = vmul.f32 %v5280, 1.442695
        %v5707 = vpow.pop %v5706
        %v5708 = vmul.f32 %v5281, 1.442695
        %v5709 = vpow.pop %v5708
        %v5710 = vmul.f32 %v5282, 1.442695
        %v5711 = vpow.pop %v5710
        %v5712 = vmul.f32 %v5283, 1.442695
        %v5713 = vpow.pop %v5712
        %v5714 = vmul.f32 %v5284, 1.442695
        %v5715 = vpow.pop %v5714
        %v5716 = vmul.f32 %v5285, 1.442695
        %v5717 = vpow.pop %v5716
        %v5718 = vmul.f32 %v5286, 1.442695
        %v5719 = vpow.pop %v5718
        %v5720 = vmul.f32 %v5287, 1.442695
        %v5721 = vpow.pop %v5720
        %v5722 = vmul.f32 %v5288, 1.442695
        %v5723 = vpow.pop %v5722
        %v5724 = vmul.f32 %v5289, 1.442695
        %v5725 = vpow.pop %v5724
        %v5726 = vmul.f32 %v5290, 1.442695
        %v5727 = vpow.pop %v5726
        %v5728 = vmul.f32 %v5291, 1.442695
        %v5729 = vpow.pop %v5728
        %v5730 = vmul.f32 %v5292, 1.442695
        %v5731 = vpow.pop %v5730
        %v5732 = vmul.f32 %v5293, 1.442695
        %v5733 = vpow.pop %v5732
        %v5734 = vmul.f32 %v5294, 1.442695
        %v5735 = vpow.pop %v5734
        %v5736 = vmul.f32 %v5295, 1.442695
        %v5737 = vpow.pop %v5736
        %v5738 = vmul.f32 %v5296, 1.442695
        %v5739 = vpow.pop %v5738
        %v5740 = vmul.f32 %v5297, 1.442695
        %v5741 = vpow.pop %v5740
        %v5742 = vmul.f32 %v5298, 1.442695
        %v5743 = vpow.pop %v5742
        %v5744 = vmul.f32 %v5299, 1.442695
        %v5745 = vpow.pop %v5744
        %v5746 = vmul.f32 %v5300, 1.442695
        %v5747 = vpow.pop %v5746
        %v5748 = vmul.f32 %v5301, 1.442695
        %v5749 = vpow.pop %v5748
        %v5750 = vmul.f32 %v5302, 1.442695
        %v5751 = vpow.pop %v5750
        %v5752 = vmul.f32 %v5303, 1.442695
        %v5753 = vpow.pop %v5752
        %v5754 = vmul.f32 %v5304, 1.442695
        %v5755 = vpow.pop %v5754
        %v5756 = vmul.f32 %v5305, 1.442695
        %v5757 = vpow.pop %v5756
        %v5758 = vmul.f32 %v5306, 1.442695
        %v5759 = vpow.pop %v5758
        %v5760 = vmul.f32 %v5307, 1.442695
        %v5761 = vpow.pop %v5760
        %v5762 = vmul.f32 %v5308, 1.442695
        %v5763 = vpow.pop %v5762
        %v5764 = vmul.f32 %v5309, 1.442695
        %v5765 = vpow.pop %v5764
        %v5766 = vmul.f32 %v5310, 1.442695
        %v5767 = vpow.pop %v5766
        %v5768 = vmul.f32 %v5311, 1.442695
        %v5769 = vpow.pop %v5768
        %v5770 = vmul.f32 %v5312, 1.442695
        %v5771 = vpow.pop %v5770
        %v5772 = vmul.f32 %v5313, 1.442695
        %v5773 = vpow.pop %v5772
        %v5774 = vmul.f32 %v5314, 1.442695
        %v5775 = vpow.pop %v5774
        %v5776 = vmul.f32 %v5315, 1.442695
        %v5777 = vpow.pop %v5776
        %v5778 = vmul.f32 %v5316, 1.442695
        %v5779 = vpow.pop %v5778
        %v5780 = vmul.f32 %v5317, 1.442695
        %v5781 = vpow.pop %v5780
        %v5782 = vmul.f32 %v5318, 1.442695
        %v5783 = vpow.pop %v5782
        %v5784 = vmul.f32 %v5319, 1.442695
        %v5785 = vpow.pop %v5784
        %v5786 = vmul.f32 %v5320, 1.442695
        %v5787 = vpow.pop %v5786
        %v5788 = vmul.f32 %v5321, 1.442695
        %v5789 = vpow.pop %v5788
        %v5790 = vmul.f32 %v5322, 1.442695
        %v5791 = vpow.pop %v5790
        %v5792 = vmul.f32 %v5323, 1.442695
        %v5793 = vpow.pop %v5792
        %v5794 = vmul.f32 %v5324, 1.442695
        %v5795 = vpow.pop %v5794
        %v5796 = vmul.f32 %v5325, 1.442695
        %v5797 = vpow.pop %v5796
        %v5798 = vmul.f32 %v5326, 1.442695
        %v5799 = vpow.pop %v5798
        %v5800 = vmul.f32 %v5327, 1.442695
        %v5801 = vpow.pop %v5800
        %v5802 = vmul.f32 %v5328, 1.442695
        %v5803 = vpow.pop %v5802
        %v5804 = vmul.f32 %v5329, 1.442695
        %v5805 = vpow.pop %v5804
        %v5806 = vmul.f32 %v5330, 1.442695
        %v5807 = vpow.pop %v5806
        %v5808 = vmul.f32 %v5331, 1.442695
        %v5809 = vpow.pop %v5808
        %v5810 = vmul.f32 %v5332, 1.442695
        %v5811 = vpow.pop %v5810
        %v5812 = vmul.f32 %v5333, 1.442695
        %v5813 = vpow.pop %v5812
        %v5814 = vmul.f32 %v5334, 1.442695
        %v5815 = vpow.pop %v5814
        %v5816 = vmul.f32 %v5335, 1.442695
        %v5817 = vpow.pop %v5816
        %v5818 = vmul.f32 %v5336, 1.442695
        %v5819 = vpow.pop %v5818
        %v5820 = vmul.f32 %v5337, 1.442695
        %v5821 = vpow.pop %v5820
        %v5822 = vmul.f32 %v5338, 1.442695
        %v5823 = vpow.pop %v5822
        %v5824 = vmul.f32 %v5339, 1.442695
        %v5825 = vpow.pop %v5824
        %v5826 = vmul.f32 %v5340, 1.442695
        %v5827 = vpow.pop %v5826
        %v5828 = vmul.f32 %v5341, 1.442695
        %v5829 = vpow.pop %v5828
        %v5830 = vmul.f32 %v5342, 1.442695
        %v5831 = vpow.pop %v5830
        %v5832 = vmul.f32 %v5343, 1.442695
        %v5833 = vpow.pop %v5832
        %v5834 = vmul.f32 %v5344, 1.442695
        %v5835 = vpow.pop %v5834
        %v5836 = vmul.f32 %v5345, 1.442695
        %v5837 = vpow.pop %v5836
        %v5838 = vmul.f32 %v5346, 1.442695
        %v5839 = vpow.pop %v5838
        %v5840 = vmul.f32 %v5347, 1.442695
        %v5841 = vpow.pop %v5840
        %v5842 = vmul.f32 %v5348, 1.442695
        %v5843 = vpow.pop %v5842
        %v5844 = vmul.f32 %v5349, 1.442695
        %v5845 = vpow.pop %v5844
        %v5846 = vmul.f32 %v5350, 1.442695
        %v5847 = vpow.pop %v5846
        %v5848 = vmul.f32 %v5351, 1.442695
        %v5849 = vpow.pop %v5848
        %v5850 = vmul.f32 %v5352, 1.442695
        %v5851 = vpow.pop %v5850
        %v5852 = vmul.f32 %v5353, 1.442695
        %v5853 = vpow.pop %v5852
        %v5854 = vmul.f32 %v5354, 1.442695
        %v5855 = vpow.pop %v5854
        %v5856 = vmul.f32 %v5355, 1.442695
        %v5857 = vpow.pop %v5856
        %v5858 = vmul.f32 %v5356, 1.442695
        %v5859 = vpow.pop %v5858
        %v5860 = vmul.f32 %v5357, 1.442695
        %v5861 = vpow.pop %v5860
        %v5862 = vmul.f32 %v5358, 1.442695
        %v5863 = vpow.pop %v5862
        %v5864 = vmul.f32 %v5359, 1.442695
        %v5865 = vpow.pop %v5864
        %v5866 = vmul.f32 %v5360, 1.442695
        %v5867 = vpow.pop %v5866
        %v5868 = vmul.f32 %v5361, 1.442695
        %v5869 = vpow.pop %v5868
        %v5870 = vmul.f32 %v5362, 1.442695
        %v5871 = vpow.pop %v5870
        %v5872 = vmul.f32 %v5363, 1.442695
        %v5873 = vpow.pop %v5872
        %v5874 = vmul.f32 %v5364, 1.442695
        %v5875 = vpow.pop %v5874
        %v5876 = vmul.f32 %v5365, 1.442695
        %v5877 = vpow.pop %v5876
        %v5878 = vld [vmem:[%s295] sm:$0xff]
        %v5879 = vld [vmem:[%s295 + $0x8] sm:$0xff]
        %v5880 = vld [vmem:[%s295 + $0x10] sm:$0xff]
        %v5881 = vld [vmem:[%s295 + $0x18] sm:$0xff]
        %v5882 = vld [vmem:[%s295 + $0x20] sm:$0xff]
        %v5883 = vld [vmem:[%s295 + $0x28] sm:$0xff]
        %v5884 = vld [vmem:[%s295 + $0x30] sm:$0xff]
        %v5885 = vld [vmem:[%s295 + $0x38] sm:$0xff]
        %v5886 = vunpack.c.0.s8 %v5878
        %v5887 = vunpack.c.0.s8 %v5879
        %v5888 = vunpack.c.1.s8 %v5878
        %v5889 = vunpack.c.1.s8 %v5879
        %v5890 = vunpack.c.2.s8 %v5878
        %v5891 = vunpack.c.2.s8 %v5879
        %v5892 = vunpack.c.3.s8 %v5878
        %v5893 = vunpack.c.3.s8 %v5879
        %v5894 = vunpack.c.0.s8 %v5880
        %v5895 = vunpack.c.0.s8 %v5881
        %v5896 = vunpack.c.1.s8 %v5880
        %v5897 = vunpack.c.1.s8 %v5881
        %v5898 = vunpack.c.2.s8 %v5880
        %v5899 = vunpack.c.2.s8 %v5881
        %v5900 = vunpack.c.3.s8 %v5880
        %v5901 = vunpack.c.3.s8 %v5881
        %v5902 = vunpack.c.0.s8 %v5882
        %v5903 = vunpack.c.0.s8 %v5883
        %v5904 = vunpack.c.1.s8 %v5882
        %v5905 = vunpack.c.1.s8 %v5883
        %v5906 = vunpack.c.2.s8 %v5882
        %v5907 = vunpack.c.2.s8 %v5883
        %v5908 = vunpack.c.3.s8 %v5882
        %v5909 = vunpack.c.3.s8 %v5883
        %v5910 = vunpack.c.0.s8 %v5884
        %v5911 = vunpack.c.0.s8 %v5885
        %v5912 = vunpack.c.1.s8 %v5884
        %v5913 = vunpack.c.1.s8 %v5885
        %v5914 = vunpack.c.2.s8 %v5884
        %v5915 = vunpack.c.2.s8 %v5885
        %v5916 = vunpack.c.3.s8 %v5884
        %v5917 = vunpack.c.3.s8 %v5885
        %v5918 = vcvt.s32.f32 %v5886
        %v5919 = vcvt.s32.f32 %v5887
        %v5920 = vcvt.s32.f32 %v5888
        %v5921 = vcvt.s32.f32 %v5889
        %v5922 = vcvt.s32.f32 %v5890
        %v5923 = vcvt.s32.f32 %v5891
        %v5924 = vcvt.s32.f32 %v5892
        %v5925 = vcvt.s32.f32 %v5893
        %v5926 = vcvt.s32.f32 %v5894
        %v5927 = vcvt.s32.f32 %v5895
        %v5928 = vcvt.s32.f32 %v5896
        %v5929 = vcvt.s32.f32 %v5897
        %v5930 = vcvt.s32.f32 %v5898
        %v5931 = vcvt.s32.f32 %v5899
        %v5932 = vcvt.s32.f32 %v5900
        %v5933 = vcvt.s32.f32 %v5901
        %v5934 = vcvt.s32.f32 %v5902
        %v5935 = vcvt.s32.f32 %v5903
        %v5936 = vcvt.s32.f32 %v5904
        %v5937 = vcvt.s32.f32 %v5905
        %v5938 = vcvt.s32.f32 %v5906
        %v5939 = vcvt.s32.f32 %v5907
        %v5940 = vcvt.s32.f32 %v5908
        %v5941 = vcvt.s32.f32 %v5909
        %v5942 = vcvt.s32.f32 %v5910
        %v5943 = vcvt.s32.f32 %v5911
        %v5944 = vcvt.s32.f32 %v5912
        %v5945 = vcvt.s32.f32 %v5913
        %v5946 = vcvt.s32.f32 %v5914
        %v5947 = vcvt.s32.f32 %v5915
        %v5948 = vcvt.s32.f32 %v5916
        %v5949 = vcvt.s32.f32 %v5917
        %v5982 = vcombine.low %v5918, %v5919
        %v5983 = vcombine.high %v5918, %v5919
        %v5985 = vunpack.c.l.s4 1966171168
        %v5986 = vunpack.c.0.s8 %v5985
        %v5987 = vlaneseq
        %v5988 = vshrl.u32 %v5987, 7
        %v5989 = vsub.s32 %v5986, %v5988
        %v5990 = vrot.slane %v5982, %v5989
        %v5992 = vunpack.c.l.s4 1966171168
        %v5993 = vunpack.c.0.s8 %v5992
        %v5994 = vlaneseq
        %v5995 = vshrl.u32 %v5994, 7
        %v5996 = vsub.s32 %v5993, %v5995
        %v5997 = vrot.slane %v5983, %v5996
        %v5998 = vcombine.high %v5990, %v5990
        %v5999 = vcombine.high %v5997, %v5997
        %v6001 = vunpack.c.l.s4 1966171168
        %v6002 = vunpack.c.0.s8 %v6001
        %v6003 = vlaneseq
        %v6004 = vshrl.u32 %v6003, 7
        %v6005 = vsub.s32 %v6002, %v6004
        %v6006 = vrot.slane %v5990, %v6005
        %v6008 = vunpack.c.l.s4 1966171168
        %v6009 = vunpack.c.0.s8 %v6008
        %v6010 = vlaneseq
        %v6011 = vshrl.u32 %v6010, 7
        %v6012 = vsub.s32 %v6009, %v6011
        %v6013 = vrot.slane %v5997, %v6012
        %v6015 = vunpack.c.l.s4 1966171168
        %v6016 = vunpack.c.0.s8 %v6015
        %v6017 = vlaneseq
        %v6018 = vshrl.u32 %v6017, 7
        %v6019 = vsub.s32 %v6016, %v6018
        %v6020 = vrot.slane %v5998, %v6019
        %v6022 = vunpack.c.l.s4 1966171168
        %v6023 = vunpack.c.0.s8 %v6022
        %v6024 = vlaneseq
        %v6025 = vshrl.u32 %v6024, 7
        %v6026 = vsub.s32 %v6023, %v6025
        %v6027 = vrot.slane %v5999, %v6026
        %v6028 = vcombine.high %v6006, %v6006
        %v6029 = vcombine.high %v6013, %v6013
        %v6030 = vcombine.high %v6020, %v6020
        %v6031 = vcombine.high %v6027, %v6027
        %v6032 = vcombine.low %v5920, %v5921
        %v6033 = vcombine.high %v5920, %v5921
        %v6035 = vunpack.c.l.s4 1966171168
        %v6036 = vunpack.c.0.s8 %v6035
        %v6037 = vlaneseq
        %v6038 = vshrl.u32 %v6037, 7
        %v6039 = vsub.s32 %v6036, %v6038
        %v6040 = vrot.slane %v6032, %v6039
        %v6042 = vunpack.c.l.s4 1966171168
        %v6043 = vunpack.c.0.s8 %v6042
        %v6044 = vlaneseq
        %v6045 = vshrl.u32 %v6044, 7
        %v6046 = vsub.s32 %v6043, %v6045
        %v6047 = vrot.slane %v6033, %v6046
        %v6048 = vcombine.high %v6040, %v6040
        %v6049 = vcombine.high %v6047, %v6047
        %v6051 = vunpack.c.l.s4 1966171168
        %v6052 = vunpack.c.0.s8 %v6051
        %v6053 = vlaneseq
        %v6054 = vshrl.u32 %v6053, 7
        %v6055 = vsub.s32 %v6052, %v6054
        %v6056 = vrot.slane %v6040, %v6055
        %v6058 = vunpack.c.l.s4 1966171168
        %v6059 = vunpack.c.0.s8 %v6058
        %v6060 = vlaneseq
        %v6061 = vshrl.u32 %v6060, 7
        %v6062 = vsub.s32 %v6059, %v6061
        %v6063 = vrot.slane %v6047, %v6062
        %v6065 = vunpack.c.l.s4 1966171168
        %v6066 = vunpack.c.0.s8 %v6065
        %v6067 = vlaneseq
        %v6068 = vshrl.u32 %v6067, 7
        %v6069 = vsub.s32 %v6066, %v6068
        %v6070 = vrot.slane %v6048, %v6069
        %v6072 = vunpack.c.l.s4 1966171168
        %v6073 = vunpack.c.0.s8 %v6072
        %v6074 = vlaneseq
        %v6075 = vshrl.u32 %v6074, 7
        %v6076 = vsub.s32 %v6073, %v6075
        %v6077 = vrot.slane %v6049, %v6076
        %v6078 = vcombine.high %v6056, %v6056
        %v6079 = vcombine.high %v6063, %v6063
        %v6080 = vcombine.high %v6070, %v6070
        %v6081 = vcombine.high %v6077, %v6077
        %v6082 = vcombine.low %v5922, %v5923
        %v6083 = vcombine.high %v5922, %v5923
        %v6085 = vunpack.c.l.s4 1966171168
        %v6086 = vunpack.c.0.s8 %v6085
        %v6087 = vlaneseq
        %v6088 = vshrl.u32 %v6087, 7
        %v6089 = vsub.s32 %v6086, %v6088
        %v6090 = vrot.slane %v6082, %v6089
        %v6092 = vunpack.c.l.s4 1966171168
        %v6093 = vunpack.c.0.s8 %v6092
        %v6094 = vlaneseq
        %v6095 = vshrl.u32 %v6094, 7
        %v6096 = vsub.s32 %v6093, %v6095
        %v6097 = vrot.slane %v6083, %v6096
        %v6098 = vcombine.high %v6090, %v6090
        %v6099 = vcombine.high %v6097, %v6097
        %v6101 = vunpack.c.l.s4 1966171168
        %v6102 = vunpack.c.0.s8 %v6101
        %v6103 = vlaneseq
        %v6104 = vshrl.u32 %v6103, 7
        %v6105 = vsub.s32 %v6102, %v6104
        %v6106 = vrot.slane %v6090, %v6105
        %v6108 = vunpack.c.l.s4 1966171168
        %v6109 = vunpack.c.0.s8 %v6108
        %v6110 = vlaneseq
        %v6111 = vshrl.u32 %v6110, 7
        %v6112 = vsub.s32 %v6109, %v6111
        %v6113 = vrot.slane %v6097, %v6112
        %v6115 = vunpack.c.l.s4 1966171168
        %v6116 = vunpack.c.0.s8 %v6115
        %v6117 = vlaneseq
        %v6118 = vshrl.u32 %v6117, 7
        %v6119 = vsub.s32 %v6116, %v6118
        %v6120 = vrot.slane %v6098, %v6119
        %v6122 = vunpack.c.l.s4 1966171168
        %v6123 = vunpack.c.0.s8 %v6122
        %v6124 = vlaneseq
        %v6125 = vshrl.u32 %v6124, 7
        %v6126 = vsub.s32 %v6123, %v6125
        %v6127 = vrot.slane %v6099, %v6126
        %v6128 = vcombine.high %v6106, %v6106
        %v6129 = vcombine.high %v6113, %v6113
        %v6130 = vcombine.high %v6120, %v6120
        %v6131 = vcombine.high %v6127, %v6127
        %v6132 = vcombine.low %v5924, %v5925
        %v6133 = vcombine.high %v5924, %v5925
        %v6135 = vunpack.c.l.s4 1966171168
        %v6136 = vunpack.c.0.s8 %v6135
        %v6137 = vlaneseq
        %v6138 = vshrl.u32 %v6137, 7
        %v6139 = vsub.s32 %v6136, %v6138
        %v6140 = vrot.slane %v6132, %v6139
        %v6142 = vunpack.c.l.s4 1966171168
        %v6143 = vunpack.c.0.s8 %v6142
        %v6144 = vlaneseq
        %v6145 = vshrl.u32 %v6144, 7
        %v6146 = vsub.s32 %v6143, %v6145
        %v6147 = vrot.slane %v6133, %v6146
        %v6148 = vcombine.high %v6140, %v6140
        %v6149 = vcombine.high %v6147, %v6147
        %v6151 = vunpack.c.l.s4 1966171168
        %v6152 = vunpack.c.0.s8 %v6151
        %v6153 = vlaneseq
        %v6154 = vshrl.u32 %v6153, 7
        %v6155 = vsub.s32 %v6152, %v6154
        %v6156 = vrot.slane %v6140, %v6155
        %v6158 = vunpack.c.l.s4 1966171168
        %v6159 = vunpack.c.0.s8 %v6158
        %v6160 = vlaneseq
        %v6161 = vshrl.u32 %v6160, 7
        %v6162 = vsub.s32 %v6159, %v6161
        %v6163 = vrot.slane %v6147, %v6162
        %v6165 = vunpack.c.l.s4 1966171168
        %v6166 = vunpack.c.0.s8 %v6165
        %v6167 = vlaneseq
        %v6168 = vshrl.u32 %v6167, 7
        %v6169 = vsub.s32 %v6166, %v6168
        %v6170 = vrot.slane %v6148, %v6169
        %v6172 = vunpack.c.l.s4 1966171168
        %v6173 = vunpack.c.0.s8 %v6172
        %v6174 = vlaneseq
        %v6175 = vshrl.u32 %v6174, 7
        %v6176 = vsub.s32 %v6173, %v6175
        %v6177 = vrot.slane %v6149, %v6176
        %v6178 = vcombine.high %v6156, %v6156
        %v6179 = vcombine.high %v6163, %v6163
        %v6180 = vcombine.high %v6170, %v6170
        %v6181 = vcombine.high %v6177, %v6177
        %v6182 = vcombine.low %v5926, %v5927
        %v6183 = vcombine.high %v5926, %v5927
        %v6185 = vunpack.c.l.s4 1966171168
        %v6186 = vunpack.c.0.s8 %v6185
        %v6187 = vlaneseq
        %v6188 = vshrl.u32 %v6187, 7
        %v6189 = vsub.s32 %v6186, %v6188
        %v6190 = vrot.slane %v6182, %v6189
        %v6192 = vunpack.c.l.s4 1966171168
        %v6193 = vunpack.c.0.s8 %v6192
        %v6194 = vlaneseq
        %v6195 = vshrl.u32 %v6194, 7
        %v6196 = vsub.s32 %v6193, %v6195
        %v6197 = vrot.slane %v6183, %v6196
        %v6198 = vcombine.high %v6190, %v6190
        %v6199 = vcombine.high %v6197, %v6197
        %v6201 = vunpack.c.l.s4 1966171168
        %v6202 = vunpack.c.0.s8 %v6201
        %v6203 = vlaneseq
        %v6204 = vshrl.u32 %v6203, 7
        %v6205 = vsub.s32 %v6202, %v6204
        %v6206 = vrot.slane %v6190, %v6205
        %v6208 = vunpack.c.l.s4 1966171168
        %v6209 = vunpack.c.0.s8 %v6208
        %v6210 = vlaneseq
        %v6211 = vshrl.u32 %v6210, 7
        %v6212 = vsub.s32 %v6209, %v6211
        %v6213 = vrot.slane %v6197, %v6212
        %v6215 = vunpack.c.l.s4 1966171168
        %v6216 = vunpack.c.0.s8 %v6215
        %v6217 = vlaneseq
        %v6218 = vshrl.u32 %v6217, 7
        %v6219 = vsub.s32 %v6216, %v6218
        %v6220 = vrot.slane %v6198, %v6219
        %v6222 = vunpack.c.l.s4 1966171168
        %v6223 = vunpack.c.0.s8 %v6222
        %v6224 = vlaneseq
        %v6225 = vshrl.u32 %v6224, 7
        %v6226 = vsub.s32 %v6223, %v6225
        %v6227 = vrot.slane %v6199, %v6226
        %v6228 = vcombine.high %v6206, %v6206
        %v6229 = vcombine.high %v6213, %v6213
        %v6230 = vcombine.high %v6220, %v6220
        %v6231 = vcombine.high %v6227, %v6227
        %v6232 = vcombine.low %v5928, %v5929
        %v6233 = vcombine.high %v5928, %v5929
        %v6235 = vunpack.c.l.s4 1966171168
        %v6236 = vunpack.c.0.s8 %v6235
        %v6237 = vlaneseq
        %v6238 = vshrl.u32 %v6237, 7
        %v6239 = vsub.s32 %v6236, %v6238
        %v6240 = vrot.slane %v6232, %v6239
        %v6242 = vunpack.c.l.s4 1966171168
        %v6243 = vunpack.c.0.s8 %v6242
        %v6244 = vlaneseq
        %v6245 = vshrl.u32 %v6244, 7
        %v6246 = vsub.s32 %v6243, %v6245
        %v6247 = vrot.slane %v6233, %v6246
        %v6248 = vcombine.high %v6240, %v6240
        %v6249 = vcombine.high %v6247, %v6247
        %v6251 = vunpack.c.l.s4 1966171168
        %v6252 = vunpack.c.0.s8 %v6251
        %v6253 = vlaneseq
        %v6254 = vshrl.u32 %v6253, 7
        %v6255 = vsub.s32 %v6252, %v6254
        %v6256 = vrot.slane %v6240, %v6255
        %v6258 = vunpack.c.l.s4 1966171168
        %v6259 = vunpack.c.0.s8 %v6258
        %v6260 = vlaneseq
        %v6261 = vshrl.u32 %v6260, 7
        %v6262 = vsub.s32 %v6259, %v6261
        %v6263 = vrot.slane %v6247, %v6262
        %v6265 = vunpack.c.l.s4 1966171168
        %v6266 = vunpack.c.0.s8 %v6265
        %v6267 = vlaneseq
        %v6268 = vshrl.u32 %v6267, 7
        %v6269 = vsub.s32 %v6266, %v6268
        %v6270 = vrot.slane %v6248, %v6269
        %v6272 = vunpack.c.l.s4 1966171168
        %v6273 = vunpack.c.0.s8 %v6272
        %v6274 = vlaneseq
        %v6275 = vshrl.u32 %v6274, 7
        %v6276 = vsub.s32 %v6273, %v6275
        %v6277 = vrot.slane %v6249, %v6276
        %v6278 = vcombine.high %v6256, %v6256
        %v6279 = vcombine.high %v6263, %v6263
        %v6280 = vcombine.high %v6270, %v6270
        %v6281 = vcombine.high %v6277, %v6277
        %v6282 = vcombine.low %v5930, %v5931
        %v6283 = vcombine.high %v5930, %v5931
        %v6285 = vunpack.c.l.s4 1966171168
        %v6286 = vunpack.c.0.s8 %v6285
        %v6287 = vlaneseq
        %v6288 = vshrl.u32 %v6287, 7
        %v6289 = vsub.s32 %v6286, %v6288
        %v6290 = vrot.slane %v6282, %v6289
        %v6292 = vunpack.c.l.s4 1966171168
        %v6293 = vunpack.c.0.s8 %v6292
        %v6294 = vlaneseq
        %v6295 = vshrl.u32 %v6294, 7
        %v6296 = vsub.s32 %v6293, %v6295
        %v6297 = vrot.slane %v6283, %v6296
        %v6298 = vcombine.high %v6290, %v6290
        %v6299 = vcombine.high %v6297, %v6297
        %v6301 = vunpack.c.l.s4 1966171168
        %v6302 = vunpack.c.0.s8 %v6301
        %v6303 = vlaneseq
        %v6304 = vshrl.u32 %v6303, 7
        %v6305 = vsub.s32 %v6302, %v6304
        %v6306 = vrot.slane %v6290, %v6305
        %v6308 = vunpack.c.l.s4 1966171168
        %v6309 = vunpack.c.0.s8 %v6308
        %v6310 = vlaneseq
        %v6311 = vshrl.u32 %v6310, 7
        %v6312 = vsub.s32 %v6309, %v6311
        %v6313 = vrot.slane %v6297, %v6312
        %v6315 = vunpack.c.l.s4 1966171168
        %v6316 = vunpack.c.0.s8 %v6315
        %v6317 = vlaneseq
        %v6318 = vshrl.u32 %v6317, 7
        %v6319 = vsub.s32 %v6316, %v6318
        %v6320 = vrot.slane %v6298, %v6319
        %v6322 = vunpack.c.l.s4 1966171168
        %v6323 = vunpack.c.0.s8 %v6322
        %v6324 = vlaneseq
        %v6325 = vshrl.u32 %v6324, 7
        %v6326 = vsub.s32 %v6323, %v6325
        %v6327 = vrot.slane %v6299, %v6326
        %v6328 = vcombine.high %v6306, %v6306
        %v6329 = vcombine.high %v6313, %v6313
        %v6330 = vcombine.high %v6320, %v6320
        %v6331 = vcombine.high %v6327, %v6327
        %v6332 = vcombine.low %v5932, %v5933
        %v6333 = vcombine.high %v5932, %v5933
        %v6335 = vunpack.c.l.s4 1966171168
        %v6336 = vunpack.c.0.s8 %v6335
        %v6337 = vlaneseq
        %v6338 = vshrl.u32 %v6337, 7
        %v6339 = vsub.s32 %v6336, %v6338
        %v6340 = vrot.slane %v6332, %v6339
        %v6342 = vunpack.c.l.s4 1966171168
        %v6343 = vunpack.c.0.s8 %v6342
        %v6344 = vlaneseq
        %v6345 = vshrl.u32 %v6344, 7
        %v6346 = vsub.s32 %v6343, %v6345
        %v6347 = vrot.slane %v6333, %v6346
        %v6348 = vcombine.high %v6340, %v6340
        %v6349 = vcombine.high %v6347, %v6347
        %v6351 = vunpack.c.l.s4 1966171168
        %v6352 = vunpack.c.0.s8 %v6351
        %v6353 = vlaneseq
        %v6354 = vshrl.u32 %v6353, 7
        %v6355 = vsub.s32 %v6352, %v6354
        %v6356 = vrot.slane %v6340, %v6355
        %v6358 = vunpack.c.l.s4 1966171168
        %v6359 = vunpack.c.0.s8 %v6358
        %v6360 = vlaneseq
        %v6361 = vshrl.u32 %v6360, 7
        %v6362 = vsub.s32 %v6359, %v6361
        %v6363 = vrot.slane %v6347, %v6362
        %v6365 = vunpack.c.l.s4 1966171168
        %v6366 = vunpack.c.0.s8 %v6365
        %v6367 = vlaneseq
        %v6368 = vshrl.u32 %v6367, 7
        %v6369 = vsub.s32 %v6366, %v6368
        %v6370 = vrot.slane %v6348, %v6369
        %v6372 = vunpack.c.l.s4 1966171168
        %v6373 = vunpack.c.0.s8 %v6372
        %v6374 = vlaneseq
        %v6375 = vshrl.u32 %v6374, 7
        %v6376 = vsub.s32 %v6373, %v6375
        %v6377 = vrot.slane %v6349, %v6376
        %v6378 = vcombine.high %v6356, %v6356
        %v6379 = vcombine.high %v6363, %v6363
        %v6380 = vcombine.high %v6370, %v6370
        %v6381 = vcombine.high %v6377, %v6377
        %v6382 = vcombine.low %v5934, %v5935
        %v6383 = vcombine.high %v5934, %v5935
        %v6385 = vunpack.c.l.s4 1966171168
        %v6386 = vunpack.c.0.s8 %v6385
        %v6387 = vlaneseq
        %v6388 = vshrl.u32 %v6387, 7
        %v6389 = vsub.s32 %v6386, %v6388
        %v6390 = vrot.slane %v6382, %v6389
        %v6392 = vunpack.c.l.s4 1966171168
        %v6393 = vunpack.c.0.s8 %v6392
        %v6394 = vlaneseq
        %v6395 = vshrl.u32 %v6394, 7
        %v6396 = vsub.s32 %v6393, %v6395
        %v6397 = vrot.slane %v6383, %v6396
        %v6398 = vcombine.high %v6390, %v6390
        %v6399 = vcombine.high %v6397, %v6397
        %v6401 = vunpack.c.l.s4 1966171168
        %v6402 = vunpack.c.0.s8 %v6401
        %v6403 = vlaneseq
        %v6404 = vshrl.u32 %v6403, 7
        %v6405 = vsub.s32 %v6402, %v6404
        %v6406 = vrot.slane %v6390, %v6405
        %v6408 = vunpack.c.l.s4 1966171168
        %v6409 = vunpack.c.0.s8 %v6408
        %v6410 = vlaneseq
        %v6411 = vshrl.u32 %v6410, 7
        %v6412 = vsub.s32 %v6409, %v6411
        %v6413 = vrot.slane %v6397, %v6412
        %v6415 = vunpack.c.l.s4 1966171168
        %v6416 = vunpack.c.0.s8 %v6415
        %v6417 = vlaneseq
        %v6418 = vshrl.u32 %v6417, 7
        %v6419 = vsub.s32 %v6416, %v6418
        %v6420 = vrot.slane %v6398, %v6419
        %v6422 = vunpack.c.l.s4 1966171168
        %v6423 = vunpack.c.0.s8 %v6422
        %v6424 = vlaneseq
        %v6425 = vshrl.u32 %v6424, 7
        %v6426 = vsub.s32 %v6423, %v6425
        %v6427 = vrot.slane %v6399, %v6426
        %v6428 = vcombine.high %v6406, %v6406
        %v6429 = vcombine.high %v6413, %v6413
        %v6430 = vcombine.high %v6420, %v6420
        %v6431 = vcombine.high %v6427, %v6427
        %v6432 = vcombine.low %v5936, %v5937
        %v6433 = vcombine.high %v5936, %v5937
        %v6435 = vunpack.c.l.s4 1966171168
        %v6436 = vunpack.c.0.s8 %v6435
        %v6437 = vlaneseq
        %v6438 = vshrl.u32 %v6437, 7
        %v6439 = vsub.s32 %v6436, %v6438
        %v6440 = vrot.slane %v6432, %v6439
        %v6442 = vunpack.c.l.s4 1966171168
        %v6443 = vunpack.c.0.s8 %v6442
        %v6444 = vlaneseq
        %v6445 = vshrl.u32 %v6444, 7
        %v6446 = vsub.s32 %v6443, %v6445
        %v6447 = vrot.slane %v6433, %v6446
        %v6448 = vcombine.high %v6440, %v6440
        %v6449 = vcombine.high %v6447, %v6447
        %v6451 = vunpack.c.l.s4 1966171168
        %v6452 = vunpack.c.0.s8 %v6451
        %v6453 = vlaneseq
        %v6454 = vshrl.u32 %v6453, 7
        %v6455 = vsub.s32 %v6452, %v6454
        %v6456 = vrot.slane %v6440, %v6455
        %v6458 = vunpack.c.l.s4 1966171168
        %v6459 = vunpack.c.0.s8 %v6458
        %v6460 = vlaneseq
        %v6461 = vshrl.u32 %v6460, 7
        %v6462 = vsub.s32 %v6459, %v6461
        %v6463 = vrot.slane %v6447, %v6462
        %v6465 = vunpack.c.l.s4 1966171168
        %v6466 = vunpack.c.0.s8 %v6465
        %v6467 = vlaneseq
        %v6468 = vshrl.u32 %v6467, 7
        %v6469 = vsub.s32 %v6466, %v6468
        %v6470 = vrot.slane %v6448, %v6469
        %v6472 = vunpack.c.l.s4 1966171168
        %v6473 = vunpack.c.0.s8 %v6472
        %v6474 = vlaneseq
        %v6475 = vshrl.u32 %v6474, 7
        %v6476 = vsub.s32 %v6473, %v6475
        %v6477 = vrot.slane %v6449, %v6476
        %v6478 = vcombine.high %v6456, %v6456
        %v6479 = vcombine.high %v6463, %v6463
        %v6480 = vcombine.high %v6470, %v6470
        %v6481 = vcombine.high %v6477, %v6477
        %v6482 = vcombine.low %v5938, %v5939
        %v6483 = vcombine.high %v5938, %v5939
        %v6485 = vunpack.c.l.s4 1966171168
        %v6486 = vunpack.c.0.s8 %v6485
        %v6487 = vlaneseq
        %v6488 = vshrl.u32 %v6487, 7
        %v6489 = vsub.s32 %v6486, %v6488
        %v6490 = vrot.slane %v6482, %v6489
        %v6492 = vunpack.c.l.s4 1966171168
        %v6493 = vunpack.c.0.s8 %v6492
        %v6494 = vlaneseq
        %v6495 = vshrl.u32 %v6494, 7
        %v6496 = vsub.s32 %v6493, %v6495
        %v6497 = vrot.slane %v6483, %v6496
        %v6498 = vcombine.high %v6490, %v6490
        %v6499 = vcombine.high %v6497, %v6497
        %v6501 = vunpack.c.l.s4 1966171168
        %v6502 = vunpack.c.0.s8 %v6501
        %v6503 = vlaneseq
        %v6504 = vshrl.u32 %v6503, 7
        %v6505 = vsub.s32 %v6502, %v6504
        %v6506 = vrot.slane %v6490, %v6505
        %v6508 = vunpack.c.l.s4 1966171168
        %v6509 = vunpack.c.0.s8 %v6508
        %v6510 = vlaneseq
        %v6511 = vshrl.u32 %v6510, 7
        %v6512 = vsub.s32 %v6509, %v6511
        %v6513 = vrot.slane %v6497, %v6512
        %v6515 = vunpack.c.l.s4 1966171168
        %v6516 = vunpack.c.0.s8 %v6515
        %v6517 = vlaneseq
        %v6518 = vshrl.u32 %v6517, 7
        %v6519 = vsub.s32 %v6516, %v6518
        %v6520 = vrot.slane %v6498, %v6519
        %v6522 = vunpack.c.l.s4 1966171168
        %v6523 = vunpack.c.0.s8 %v6522
        %v6524 = vlaneseq
        %v6525 = vshrl.u32 %v6524, 7
        %v6526 = vsub.s32 %v6523, %v6525
        %v6527 = vrot.slane %v6499, %v6526
        %v6528 = vcombine.high %v6506, %v6506
        %v6529 = vcombine.high %v6513, %v6513
        %v6530 = vcombine.high %v6520, %v6520
        %v6531 = vcombine.high %v6527, %v6527
        %v6532 = vcombine.low %v5940, %v5941
        %v6533 = vcombine.high %v5940, %v5941
        %v6535 = vunpack.c.l.s4 1966171168
        %v6536 = vunpack.c.0.s8 %v6535
        %v6537 = vlaneseq
        %v6538 = vshrl.u32 %v6537, 7
        %v6539 = vsub.s32 %v6536, %v6538
        %v6540 = vrot.slane %v6532, %v6539
        %v6542 = vunpack.c.l.s4 1966171168
        %v6543 = vunpack.c.0.s8 %v6542
        %v6544 = vlaneseq
        %v6545 = vshrl.u32 %v6544, 7
        %v6546 = vsub.s32 %v6543, %v6545
        %v6547 = vrot.slane %v6533, %v6546
        %v6548 = vcombine.high %v6540, %v6540
        %v6549 = vcombine.high %v6547, %v6547
        %v6551 = vunpack.c.l.s4 1966171168
        %v6552 = vunpack.c.0.s8 %v6551
        %v6553 = vlaneseq
        %v6554 = vshrl.u32 %v6553, 7
        %v6555 = vsub.s32 %v6552, %v6554
        %v6556 = vrot.slane %v6540, %v6555
        %v6558 = vunpack.c.l.s4 1966171168
        %v6559 = vunpack.c.0.s8 %v6558
        %v6560 = vlaneseq
        %v6561 = vshrl.u32 %v6560, 7
        %v6562 = vsub.s32 %v6559, %v6561
        %v6563 = vrot.slane %v6547, %v6562
        %v6565 = vunpack.c.l.s4 1966171168
        %v6566 = vunpack.c.0.s8 %v6565
        %v6567 = vlaneseq
        %v6568 = vshrl.u32 %v6567, 7
        %v6569 = vsub.s32 %v6566, %v6568
        %v6570 = vrot.slane %v6548, %v6569
        %v6572 = vunpack.c.l.s4 1966171168
        %v6573 = vunpack.c.0.s8 %v6572
        %v6574 = vlaneseq
        %v6575 = vshrl.u32 %v6574, 7
        %v6576 = vsub.s32 %v6573, %v6575
        %v6577 = vrot.slane %v6549, %v6576
        %v6578 = vcombine.high %v6556, %v6556
        %v6579 = vcombine.high %v6563, %v6563
        %v6580 = vcombine.high %v6570, %v6570
        %v6581 = vcombine.high %v6577, %v6577
        %v6582 = vcombine.low %v5942, %v5943
        %v6583 = vcombine.high %v5942, %v5943
        %v6585 = vunpack.c.l.s4 1966171168
        %v6586 = vunpack.c.0.s8 %v6585
        %v6587 = vlaneseq
        %v6588 = vshrl.u32 %v6587, 7
        %v6589 = vsub.s32 %v6586, %v6588
        %v6590 = vrot.slane %v6582, %v6589
        %v6592 = vunpack.c.l.s4 1966171168
        %v6593 = vunpack.c.0.s8 %v6592
        %v6594 = vlaneseq
        %v6595 = vshrl.u32 %v6594, 7
        %v6596 = vsub.s32 %v6593, %v6595
        %v6597 = vrot.slane %v6583, %v6596
        %v6598 = vcombine.high %v6590, %v6590
        %v6599 = vcombine.high %v6597, %v6597
        %v6601 = vunpack.c.l.s4 1966171168
        %v6602 = vunpack.c.0.s8 %v6601
        %v6603 = vlaneseq
        %v6604 = vshrl.u32 %v6603, 7
        %v6605 = vsub.s32 %v6602, %v6604
        %v6606 = vrot.slane %v6590, %v6605
        %v6608 = vunpack.c.l.s4 1966171168
        %v6609 = vunpack.c.0.s8 %v6608
        %v6610 = vlaneseq
        %v6611 = vshrl.u32 %v6610, 7
        %v6612 = vsub.s32 %v6609, %v6611
        %v6613 = vrot.slane %v6597, %v6612
        %v6615 = vunpack.c.l.s4 1966171168
        %v6616 = vunpack.c.0.s8 %v6615
        %v6617 = vlaneseq
        %v6618 = vshrl.u32 %v6617, 7
        %v6619 = vsub.s32 %v6616, %v6618
        %v6620 = vrot.slane %v6598, %v6619
        %v6622 = vunpack.c.l.s4 1966171168
        %v6623 = vunpack.c.0.s8 %v6622
        %v6624 = vlaneseq
        %v6625 = vshrl.u32 %v6624, 7
        %v6626 = vsub.s32 %v6623, %v6625
        %v6627 = vrot.slane %v6599, %v6626
        %v6628 = vcombine.high %v6606, %v6606
        %v6629 = vcombine.high %v6613, %v6613
        %v6630 = vcombine.high %v6620, %v6620
        %v6631 = vcombine.high %v6627, %v6627
        %v6632 = vcombine.low %v5944, %v5945
        %v6633 = vcombine.high %v5944, %v5945
        %v6635 = vunpack.c.l.s4 1966171168
        %v6636 = vunpack.c.0.s8 %v6635
        %v6637 = vlaneseq
        %v6638 = vshrl.u32 %v6637, 7
        %v6639 = vsub.s32 %v6636, %v6638
        %v6640 = vrot.slane %v6632, %v6639
        %v6642 = vunpack.c.l.s4 1966171168
        %v6643 = vunpack.c.0.s8 %v6642
        %v6644 = vlaneseq
        %v6645 = vshrl.u32 %v6644, 7
        %v6646 = vsub.s32 %v6643, %v6645
        %v6647 = vrot.slane %v6633, %v6646
        %v6648 = vcombine.high %v6640, %v6640
        %v6649 = vcombine.high %v6647, %v6647
        %v6651 = vunpack.c.l.s4 1966171168
        %v6652 = vunpack.c.0.s8 %v6651
        %v6653 = vlaneseq
        %v6654 = vshrl.u32 %v6653, 7
        %v6655 = vsub.s32 %v6652, %v6654
        %v6656 = vrot.slane %v6640, %v6655
        %v6658 = vunpack.c.l.s4 1966171168
        %v6659 = vunpack.c.0.s8 %v6658
        %v6660 = vlaneseq
        %v6661 = vshrl.u32 %v6660, 7
        %v6662 = vsub.s32 %v6659, %v6661
        %v6663 = vrot.slane %v6647, %v6662
        %v6665 = vunpack.c.l.s4 1966171168
        %v6666 = vunpack.c.0.s8 %v6665
        %v6667 = vlaneseq
        %v6668 = vshrl.u32 %v6667, 7
        %v6669 = vsub.s32 %v6666, %v6668
        %v6670 = vrot.slane %v6648, %v6669
        %v6672 = vunpack.c.l.s4 1966171168
        %v6673 = vunpack.c.0.s8 %v6672
        %v6674 = vlaneseq
        %v6675 = vshrl.u32 %v6674, 7
        %v6676 = vsub.s32 %v6673, %v6675
        %v6677 = vrot.slane %v6649, %v6676
        %v6678 = vcombine.high %v6656, %v6656
        %v6679 = vcombine.high %v6663, %v6663
        %v6680 = vcombine.high %v6670, %v6670
        %v6681 = vcombine.high %v6677, %v6677
        %v6682 = vcombine.low %v5946, %v5947
        %v6683 = vcombine.high %v5946, %v5947
        %v6685 = vunpack.c.l.s4 1966171168
        %v6686 = vunpack.c.0.s8 %v6685
        %v6687 = vlaneseq
        %v6688 = vshrl.u32 %v6687, 7
        %v6689 = vsub.s32 %v6686, %v6688
        %v6690 = vrot.slane %v6682, %v6689
        %v6692 = vunpack.c.l.s4 1966171168
        %v6693 = vunpack.c.0.s8 %v6692
        %v6694 = vlaneseq
        %v6695 = vshrl.u32 %v6694, 7
        %v6696 = vsub.s32 %v6693, %v6695
        %v6697 = vrot.slane %v6683, %v6696
        %v6698 = vcombine.high %v6690, %v6690
        %v6699 = vcombine.high %v6697, %v6697
        %v6701 = vunpack.c.l.s4 1966171168
        %v6702 = vunpack.c.0.s8 %v6701
        %v6703 = vlaneseq
        %v6704 = vshrl.u32 %v6703, 7
        %v6705 = vsub.s32 %v6702, %v6704
        %v6706 = vrot.slane %v6690, %v6705
        %v6708 = vunpack.c.l.s4 1966171168
        %v6709 = vunpack.c.0.s8 %v6708
        %v6710 = vlaneseq
        %v6711 = vshrl.u32 %v6710, 7
        %v6712 = vsub.s32 %v6709, %v6711
        %v6713 = vrot.slane %v6697, %v6712
        %v6715 = vunpack.c.l.s4 1966171168
        %v6716 = vunpack.c.0.s8 %v6715
        %v6717 = vlaneseq
        %v6718 = vshrl.u32 %v6717, 7
        %v6719 = vsub.s32 %v6716, %v6718
        %v6720 = vrot.slane %v6698, %v6719
        %v6722 = vunpack.c.l.s4 1966171168
        %v6723 = vunpack.c.0.s8 %v6722
        %v6724 = vlaneseq
        %v6725 = vshrl.u32 %v6724, 7
        %v6726 = vsub.s32 %v6723, %v6725
        %v6727 = vrot.slane %v6699, %v6726
        %v6728 = vcombine.high %v6706, %v6706
        %v6729 = vcombine.high %v6713, %v6713
        %v6730 = vcombine.high %v6720, %v6720
        %v6731 = vcombine.high %v6727, %v6727
        %v6732 = vcombine.low %v5948, %v5949
        %v6733 = vcombine.high %v5948, %v5949
        %v6735 = vunpack.c.l.s4 1966171168
        %v6736 = vunpack.c.0.s8 %v6735
        %v6737 = vlaneseq
        %v6738 = vshrl.u32 %v6737, 7
        %v6739 = vsub.s32 %v6736, %v6738
        %v6740 = vrot.slane %v6732, %v6739
        %v6742 = vunpack.c.l.s4 1966171168
        %v6743 = vunpack.c.0.s8 %v6742
        %v6744 = vlaneseq
        %v6745 = vshrl.u32 %v6744, 7
        %v6746 = vsub.s32 %v6743, %v6745
        %v6747 = vrot.slane %v6733, %v6746
        %v6748 = vcombine.high %v6740, %v6740
        %v6749 = vcombine.high %v6747, %v6747
        %v6751 = vunpack.c.l.s4 1966171168
        %v6752 = vunpack.c.0.s8 %v6751
        %v6753 = vlaneseq
        %v6754 = vshrl.u32 %v6753, 7
        %v6755 = vsub.s32 %v6752, %v6754
        %v6756 = vrot.slane %v6740, %v6755
        %v6758 = vunpack.c.l.s4 1966171168
        %v6759 = vunpack.c.0.s8 %v6758
        %v6760 = vlaneseq
        %v6761 = vshrl.u32 %v6760, 7
        %v6762 = vsub.s32 %v6759, %v6761
        %v6763 = vrot.slane %v6747, %v6762
        %v6765 = vunpack.c.l.s4 1966171168
        %v6766 = vunpack.c.0.s8 %v6765
        %v6767 = vlaneseq
        %v6768 = vshrl.u32 %v6767, 7
        %v6769 = vsub.s32 %v6766, %v6768
        %v6770 = vrot.slane %v6748, %v6769
        %v6772 = vunpack.c.l.s4 1966171168
        %v6773 = vunpack.c.0.s8 %v6772
        %v6774 = vlaneseq
        %v6775 = vshrl.u32 %v6774, 7
        %v6776 = vsub.s32 %v6773, %v6775
        %v6777 = vrot.slane %v6749, %v6776
        %v6778 = vcombine.high %v6756, %v6756
        %v6779 = vcombine.high %v6763, %v6763
        %v6780 = vcombine.high %v6770, %v6770
        %v6781 = vcombine.high %v6777, %v6777
        %v6782 = vlaneseq
        %v6783 = vshrl.u32 %v6782, 7
        %v6784 = vsub.s32 0, %v6783
        %v6785 = vrot.slane %v6006, %v6784
        %v6786 = vlaneseq
        %v6787 = vshrl.u32 %v6786, 7
        %v6788 = vsub.s32 1, %v6787
        %v6789 = vrot.slane %v6006, %v6788
        %v6790 = vlaneseq
        %v6791 = vshrl.u32 %v6790, 7
        %v6792 = vsub.s32 0, %v6791
        %v6793 = vrot.slane %v6020, %v6792
        %v6794 = vlaneseq
        %v6795 = vshrl.u32 %v6794, 7
        %v6796 = vsub.s32 1, %v6795
        %v6797 = vrot.slane %v6020, %v6796
        %v6798 = vlaneseq
        %v6799 = vshrl.u32 %v6798, 7
        %v6800 = vsub.s32 0, %v6799
        %v6801 = vrot.slane %v6028, %v6800
        %v6802 = vlaneseq
        %v6803 = vshrl.u32 %v6802, 7
        %v6804 = vsub.s32 1, %v6803
        %v6805 = vrot.slane %v6028, %v6804
        %v6806 = vlaneseq
        %v6807 = vshrl.u32 %v6806, 7
        %v6808 = vsub.s32 0, %v6807
        %v6809 = vrot.slane %v6030, %v6808
        %v6810 = vlaneseq
        %v6811 = vshrl.u32 %v6810, 7
        %v6812 = vsub.s32 1, %v6811
        %v6813 = vrot.slane %v6030, %v6812
        %v6814 = vlaneseq
        %v6815 = vshrl.u32 %v6814, 7
        %v6816 = vsub.s32 0, %v6815
        %v6817 = vrot.slane %v6013, %v6816
        %v6818 = vlaneseq
        %v6819 = vshrl.u32 %v6818, 7
        %v6820 = vsub.s32 1, %v6819
        %v6821 = vrot.slane %v6013, %v6820
        %v6822 = vlaneseq
        %v6823 = vshrl.u32 %v6822, 7
        %v6824 = vsub.s32 0, %v6823
        %v6825 = vrot.slane %v6027, %v6824
        %v6826 = vlaneseq
        %v6827 = vshrl.u32 %v6826, 7
        %v6828 = vsub.s32 1, %v6827
        %v6829 = vrot.slane %v6027, %v6828
        %v6830 = vlaneseq
        %v6831 = vshrl.u32 %v6830, 7
        %v6832 = vsub.s32 0, %v6831
        %v6833 = vrot.slane %v6029, %v6832
        %v6834 = vlaneseq
        %v6835 = vshrl.u32 %v6834, 7
        %v6836 = vsub.s32 1, %v6835
        %v6837 = vrot.slane %v6029, %v6836
        %v6838 = vlaneseq
        %v6839 = vshrl.u32 %v6838, 7
        %v6840 = vsub.s32 0, %v6839
        %v6841 = vrot.slane %v6031, %v6840
        %v6842 = vlaneseq
        %v6843 = vshrl.u32 %v6842, 7
        %v6844 = vsub.s32 1, %v6843
        %v6845 = vrot.slane %v6031, %v6844
        %v6846 = vlaneseq
        %v6847 = vshrl.u32 %v6846, 7
        %v6848 = vsub.s32 0, %v6847
        %v6849 = vrot.slane %v6056, %v6848
        %v6850 = vlaneseq
        %v6851 = vshrl.u32 %v6850, 7
        %v6852 = vsub.s32 1, %v6851
        %v6853 = vrot.slane %v6056, %v6852
        %v6854 = vlaneseq
        %v6855 = vshrl.u32 %v6854, 7
        %v6856 = vsub.s32 0, %v6855
        %v6857 = vrot.slane %v6070, %v6856
        %v6858 = vlaneseq
        %v6859 = vshrl.u32 %v6858, 7
        %v6860 = vsub.s32 1, %v6859
        %v6861 = vrot.slane %v6070, %v6860
        %v6862 = vlaneseq
        %v6863 = vshrl.u32 %v6862, 7
        %v6864 = vsub.s32 0, %v6863
        %v6865 = vrot.slane %v6078, %v6864
        %v6866 = vlaneseq
        %v6867 = vshrl.u32 %v6866, 7
        %v6868 = vsub.s32 1, %v6867
        %v6869 = vrot.slane %v6078, %v6868
        %v6870 = vlaneseq
        %v6871 = vshrl.u32 %v6870, 7
        %v6872 = vsub.s32 0, %v6871
        %v6873 = vrot.slane %v6080, %v6872
        %v6874 = vlaneseq
        %v6875 = vshrl.u32 %v6874, 7
        %v6876 = vsub.s32 1, %v6875
        %v6877 = vrot.slane %v6080, %v6876
        %v6878 = vlaneseq
        %v6879 = vshrl.u32 %v6878, 7
        %v6880 = vsub.s32 0, %v6879
        %v6881 = vrot.slane %v6063, %v6880
        %v6882 = vlaneseq
        %v6883 = vshrl.u32 %v6882, 7
        %v6884 = vsub.s32 1, %v6883
        %v6885 = vrot.slane %v6063, %v6884
        %v6886 = vlaneseq
        %v6887 = vshrl.u32 %v6886, 7
        %v6888 = vsub.s32 0, %v6887
        %v6889 = vrot.slane %v6077, %v6888
        %v6890 = vlaneseq
        %v6891 = vshrl.u32 %v6890, 7
        %v6892 = vsub.s32 1, %v6891
        %v6893 = vrot.slane %v6077, %v6892
        %v6894 = vlaneseq
        %v6895 = vshrl.u32 %v6894, 7
        %v6896 = vsub.s32 0, %v6895
        %v6897 = vrot.slane %v6079, %v6896
        %v6898 = vlaneseq
        %v6899 = vshrl.u32 %v6898, 7
        %v6900 = vsub.s32 1, %v6899
        %v6901 = vrot.slane %v6079, %v6900
        %v6902 = vlaneseq
        %v6903 = vshrl.u32 %v6902, 7
        %v6904 = vsub.s32 0, %v6903
        %v6905 = vrot.slane %v6081, %v6904
        %v6906 = vlaneseq
        %v6907 = vshrl.u32 %v6906, 7
        %v6908 = vsub.s32 1, %v6907
        %v6909 = vrot.slane %v6081, %v6908
        %v6910 = vlaneseq
        %v6911 = vshrl.u32 %v6910, 7
        %v6912 = vsub.s32 0, %v6911
        %v6913 = vrot.slane %v6106, %v6912
        %v6914 = vlaneseq
        %v6915 = vshrl.u32 %v6914, 7
        %v6916 = vsub.s32 1, %v6915
        %v6917 = vrot.slane %v6106, %v6916
        %v6918 = vlaneseq
        %v6919 = vshrl.u32 %v6918, 7
        %v6920 = vsub.s32 0, %v6919
        %v6921 = vrot.slane %v6120, %v6920
        %v6922 = vlaneseq
        %v6923 = vshrl.u32 %v6922, 7
        %v6924 = vsub.s32 1, %v6923
        %v6925 = vrot.slane %v6120, %v6924
        %v6926 = vlaneseq
        %v6927 = vshrl.u32 %v6926, 7
        %v6928 = vsub.s32 0, %v6927
        %v6929 = vrot.slane %v6128, %v6928
        %v6930 = vlaneseq
        %v6931 = vshrl.u32 %v6930, 7
        %v6932 = vsub.s32 1, %v6931
        %v6933 = vrot.slane %v6128, %v6932
        %v6934 = vlaneseq
        %v6935 = vshrl.u32 %v6934, 7
        %v6936 = vsub.s32 0, %v6935
        %v6937 = vrot.slane %v6130, %v6936
        %v6938 = vlaneseq
        %v6939 = vshrl.u32 %v6938, 7
        %v6940 = vsub.s32 1, %v6939
        %v6941 = vrot.slane %v6130, %v6940
        %v6942 = vlaneseq
        %v6943 = vshrl.u32 %v6942, 7
        %v6944 = vsub.s32 0, %v6943
        %v6945 = vrot.slane %v6113, %v6944
        %v6946 = vlaneseq
        %v6947 = vshrl.u32 %v6946, 7
        %v6948 = vsub.s32 1, %v6947
        %v6949 = vrot.slane %v6113, %v6948
        %v6950 = vlaneseq
        %v6951 = vshrl.u32 %v6950, 7
        %v6952 = vsub.s32 0, %v6951
        %v6953 = vrot.slane %v6127, %v6952
        %v6954 = vlaneseq
        %v6955 = vshrl.u32 %v6954, 7
        %v6956 = vsub.s32 1, %v6955
        %v6957 = vrot.slane %v6127, %v6956
        %v6958 = vlaneseq
        %v6959 = vshrl.u32 %v6958, 7
        %v6960 = vsub.s32 0, %v6959
        %v6961 = vrot.slane %v6129, %v6960
        %v6962 = vlaneseq
        %v6963 = vshrl.u32 %v6962, 7
        %v6964 = vsub.s32 1, %v6963
        %v6965 = vrot.slane %v6129, %v6964
        %v6966 = vlaneseq
        %v6967 = vshrl.u32 %v6966, 7
        %v6968 = vsub.s32 0, %v6967
        %v6969 = vrot.slane %v6131, %v6968
        %v6970 = vlaneseq
        %v6971 = vshrl.u32 %v6970, 7
        %v6972 = vsub.s32 1, %v6971
        %v6973 = vrot.slane %v6131, %v6972
        %v6974 = vlaneseq
        %v6975 = vshrl.u32 %v6974, 7
        %v6976 = vsub.s32 0, %v6975
        %v6977 = vrot.slane %v6156, %v6976
        %v6978 = vlaneseq
        %v6979 = vshrl.u32 %v6978, 7
        %v6980 = vsub.s32 1, %v6979
        %v6981 = vrot.slane %v6156, %v6980
        %v6982 = vlaneseq
        %v6983 = vshrl.u32 %v6982, 7
        %v6984 = vsub.s32 0, %v6983
        %v6985 = vrot.slane %v6170, %v6984
        %v6986 = vlaneseq
        %v6987 = vshrl.u32 %v6986, 7
        %v6988 = vsub.s32 1, %v6987
        %v6989 = vrot.slane %v6170, %v6988
        %v6990 = vlaneseq
        %v6991 = vshrl.u32 %v6990, 7
        %v6992 = vsub.s32 0, %v6991
        %v6993 = vrot.slane %v6178, %v6992
        %v6994 = vlaneseq
        %v6995 = vshrl.u32 %v6994, 7
        %v6996 = vsub.s32 1, %v6995
        %v6997 = vrot.slane %v6178, %v6996
        %v6998 = vlaneseq
        %v6999 = vshrl.u32 %v6998, 7
        %v7000 = vsub.s32 0, %v6999
        %v7001 = vrot.slane %v6180, %v7000
        %v7002 = vlaneseq
        %v7003 = vshrl.u32 %v7002, 7
        %v7004 = vsub.s32 1, %v7003
        %v7005 = vrot.slane %v6180, %v7004
        %v7006 = vlaneseq
        %v7007 = vshrl.u32 %v7006, 7
        %v7008 = vsub.s32 0, %v7007
        %v7009 = vrot.slane %v6163, %v7008
        %v7010 = vlaneseq
        %v7011 = vshrl.u32 %v7010, 7
        %v7012 = vsub.s32 1, %v7011
        %v7013 = vrot.slane %v6163, %v7012
        %v7014 = vlaneseq
        %v7015 = vshrl.u32 %v7014, 7
        %v7016 = vsub.s32 0, %v7015
        %v7017 = vrot.slane %v6177, %v7016
        %v7018 = vlaneseq
        %v7019 = vshrl.u32 %v7018, 7
        %v7020 = vsub.s32 1, %v7019
        %v7021 = vrot.slane %v6177, %v7020
        %v7022 = vlaneseq
        %v7023 = vshrl.u32 %v7022, 7
        %v7024 = vsub.s32 0, %v7023
        %v7025 = vrot.slane %v6179, %v7024
        %v7026 = vlaneseq
        %v7027 = vshrl.u32 %v7026, 7
        %v7028 = vsub.s32 1, %v7027
        %v7029 = vrot.slane %v6179, %v7028
        %v7030 = vlaneseq
        %v7031 = vshrl.u32 %v7030, 7
        %v7032 = vsub.s32 0, %v7031
        %v7033 = vrot.slane %v6181, %v7032
        %v7034 = vlaneseq
        %v7035 = vshrl.u32 %v7034, 7
        %v7036 = vsub.s32 1, %v7035
        %v7037 = vrot.slane %v6181, %v7036
        %v7038 = vlaneseq
        %v7039 = vshrl.u32 %v7038, 7
        %v7040 = vsub.s32 0, %v7039
        %v7041 = vrot.slane %v6206, %v7040
        %v7042 = vlaneseq
        %v7043 = vshrl.u32 %v7042, 7
        %v7044 = vsub.s32 1, %v7043
        %v7045 = vrot.slane %v6206, %v7044
        %v7046 = vlaneseq
        %v7047 = vshrl.u32 %v7046, 7
        %v7048 = vsub.s32 0, %v7047
        %v7049 = vrot.slane %v6220, %v7048
        %v7050 = vlaneseq
        %v7051 = vshrl.u32 %v7050, 7
        %v7052 = vsub.s32 1, %v7051
        %v7053 = vrot.slane %v6220, %v7052
        %v7054 = vlaneseq
        %v7055 = vshrl.u32 %v7054, 7
        %v7056 = vsub.s32 0, %v7055
        %v7057 = vrot.slane %v6228, %v7056
        %v7058 = vlaneseq
        %v7059 = vshrl.u32 %v7058, 7
        %v7060 = vsub.s32 1, %v7059
        %v7061 = vrot.slane %v6228, %v7060
        %v7062 = vlaneseq
        %v7063 = vshrl.u32 %v7062, 7
        %v7064 = vsub.s32 0, %v7063
        %v7065 = vrot.slane %v6230, %v7064
        %v7066 = vlaneseq
        %v7067 = vshrl.u32 %v7066, 7
        %v7068 = vsub.s32 1, %v7067
        %v7069 = vrot.slane %v6230, %v7068
        %v7070 = vlaneseq
        %v7071 = vshrl.u32 %v7070, 7
        %v7072 = vsub.s32 0, %v7071
        %v7073 = vrot.slane %v6213, %v7072
        %v7074 = vlaneseq
        %v7075 = vshrl.u32 %v7074, 7
        %v7076 = vsub.s32 1, %v7075
        %v7077 = vrot.slane %v6213, %v7076
        %v7078 = vlaneseq
        %v7079 = vshrl.u32 %v7078, 7
        %v7080 = vsub.s32 0, %v7079
        %v7081 = vrot.slane %v6227, %v7080
        %v7082 = vlaneseq
        %v7083 = vshrl.u32 %v7082, 7
        %v7084 = vsub.s32 1, %v7083
        %v7085 = vrot.slane %v6227, %v7084
        %v7086 = vlaneseq
        %v7087 = vshrl.u32 %v7086, 7
        %v7088 = vsub.s32 0, %v7087
        %v7089 = vrot.slane %v6229, %v7088
        %v7090 = vlaneseq
        %v7091 = vshrl.u32 %v7090, 7
        %v7092 = vsub.s32 1, %v7091
        %v7093 = vrot.slane %v6229, %v7092
        %v7094 = vlaneseq
        %v7095 = vshrl.u32 %v7094, 7
        %v7096 = vsub.s32 0, %v7095
        %v7097 = vrot.slane %v6231, %v7096
        %v7098 = vlaneseq
        %v7099 = vshrl.u32 %v7098, 7
        %v7100 = vsub.s32 1, %v7099
        %v7101 = vrot.slane %v6231, %v7100
        %v7102 = vlaneseq
        %v7103 = vshrl.u32 %v7102, 7
        %v7104 = vsub.s32 0, %v7103
        %v7105 = vrot.slane %v6256, %v7104
        %v7106 = vlaneseq
        %v7107 = vshrl.u32 %v7106, 7
        %v7108 = vsub.s32 1, %v7107
        %v7109 = vrot.slane %v6256, %v7108
        %v7110 = vlaneseq
        %v7111 = vshrl.u32 %v7110, 7
        %v7112 = vsub.s32 0, %v7111
        %v7113 = vrot.slane %v6270, %v7112
        %v7114 = vlaneseq
        %v7115 = vshrl.u32 %v7114, 7
        %v7116 = vsub.s32 1, %v7115
        %v7117 = vrot.slane %v6270, %v7116
        %v7118 = vlaneseq
        %v7119 = vshrl.u32 %v7118, 7
        %v7120 = vsub.s32 0, %v7119
        %v7121 = vrot.slane %v6278, %v7120
        %v7122 = vlaneseq
        %v7123 = vshrl.u32 %v7122, 7
        %v7124 = vsub.s32 1, %v7123
        %v7125 = vrot.slane %v6278, %v7124
        %v7126 = vlaneseq
        %v7127 = vshrl.u32 %v7126, 7
        %v7128 = vsub.s32 0, %v7127
        %v7129 = vrot.slane %v6280, %v7128
        %v7130 = vlaneseq
        %v7131 = vshrl.u32 %v7130, 7
        %v7132 = vsub.s32 1, %v7131
        %v7133 = vrot.slane %v6280, %v7132
        %v7134 = vlaneseq
        %v7135 = vshrl.u32 %v7134, 7
        %v7136 = vsub.s32 0, %v7135
        %v7137 = vrot.slane %v6263, %v7136
        %v7138 = vlaneseq
        %v7139 = vshrl.u32 %v7138, 7
        %v7140 = vsub.s32 1, %v7139
        %v7141 = vrot.slane %v6263, %v7140
        %v7142 = vlaneseq
        %v7143 = vshrl.u32 %v7142, 7
        %v7144 = vsub.s32 0, %v7143
        %v7145 = vrot.slane %v6277, %v7144
        %v7146 = vlaneseq
        %v7147 = vshrl.u32 %v7146, 7
        %v7148 = vsub.s32 1, %v7147
        %v7149 = vrot.slane %v6277, %v7148
        %v7150 = vlaneseq
        %v7151 = vshrl.u32 %v7150, 7
        %v7152 = vsub.s32 0, %v7151
        %v7153 = vrot.slane %v6279, %v7152
        %v7154 = vlaneseq
        %v7155 = vshrl.u32 %v7154, 7
        %v7156 = vsub.s32 1, %v7155
        %v7157 = vrot.slane %v6279, %v7156
        %v7158 = vlaneseq
        %v7159 = vshrl.u32 %v7158, 7
        %v7160 = vsub.s32 0, %v7159
        %v7161 = vrot.slane %v6281, %v7160
        %v7162 = vlaneseq
        %v7163 = vshrl.u32 %v7162, 7
        %v7164 = vsub.s32 1, %v7163
        %v7165 = vrot.slane %v6281, %v7164
        %v7166 = vlaneseq
        %v7167 = vshrl.u32 %v7166, 7
        %v7168 = vsub.s32 0, %v7167
        %v7169 = vrot.slane %v6306, %v7168
        %v7170 = vlaneseq
        %v7171 = vshrl.u32 %v7170, 7
        %v7172 = vsub.s32 1, %v7171
        %v7173 = vrot.slane %v6306, %v7172
        %v7174 = vlaneseq
        %v7175 = vshrl.u32 %v7174, 7
        %v7176 = vsub.s32 0, %v7175
        %v7177 = vrot.slane %v6320, %v7176
        %v7178 = vlaneseq
        %v7179 = vshrl.u32 %v7178, 7
        %v7180 = vsub.s32 1, %v7179
        %v7181 = vrot.slane %v6320, %v7180
        %v7182 = vlaneseq
        %v7183 = vshrl.u32 %v7182, 7
        %v7184 = vsub.s32 0, %v7183
        %v7185 = vrot.slane %v6328, %v7184
        %v7186 = vlaneseq
        %v7187 = vshrl.u32 %v7186, 7
        %v7188 = vsub.s32 1, %v7187
        %v7189 = vrot.slane %v6328, %v7188
        %v7190 = vlaneseq
        %v7191 = vshrl.u32 %v7190, 7
        %v7192 = vsub.s32 0, %v7191
        %v7193 = vrot.slane %v6330, %v7192
        %v7194 = vlaneseq
        %v7195 = vshrl.u32 %v7194, 7
        %v7196 = vsub.s32 1, %v7195
        %v7197 = vrot.slane %v6330, %v7196
        %v7198 = vlaneseq
        %v7199 = vshrl.u32 %v7198, 7
        %v7200 = vsub.s32 0, %v7199
        %v7201 = vrot.slane %v6313, %v7200
        %v7202 = vlaneseq
        %v7203 = vshrl.u32 %v7202, 7
        %v7204 = vsub.s32 1, %v7203
        %v7205 = vrot.slane %v6313, %v7204
        %v7206 = vlaneseq
        %v7207 = vshrl.u32 %v7206, 7
        %v7208 = vsub.s32 0, %v7207
        %v7209 = vrot.slane %v6327, %v7208
        %v7210 = vlaneseq
        %v7211 = vshrl.u32 %v7210, 7
        %v7212 = vsub.s32 1, %v7211
        %v7213 = vrot.slane %v6327, %v7212
        %v7214 = vlaneseq
        %v7215 = vshrl.u32 %v7214, 7
        %v7216 = vsub.s32 0, %v7215
        %v7217 = vrot.slane %v6329, %v7216
        %v7218 = vlaneseq
        %v7219 = vshrl.u32 %v7218, 7
        %v7220 = vsub.s32 1, %v7219
        %v7221 = vrot.slane %v6329, %v7220
        %v7222 = vlaneseq
        %v7223 = vshrl.u32 %v7222, 7
        %v7224 = vsub.s32 0, %v7223
        %v7225 = vrot.slane %v6331, %v7224
        %v7226 = vlaneseq
        %v7227 = vshrl.u32 %v7226, 7
        %v7228 = vsub.s32 1, %v7227
        %v7229 = vrot.slane %v6331, %v7228
        %v7230 = vlaneseq
        %v7231 = vshrl.u32 %v7230, 7
        %v7232 = vsub.s32 0, %v7231
        %v7233 = vrot.slane %v6356, %v7232
        %v7234 = vlaneseq
        %v7235 = vshrl.u32 %v7234, 7
        %v7236 = vsub.s32 1, %v7235
        %v7237 = vrot.slane %v6356, %v7236
        %v7238 = vlaneseq
        %v7239 = vshrl.u32 %v7238, 7
        %v7240 = vsub.s32 0, %v7239
        %v7241 = vrot.slane %v6370, %v7240
        %v7242 = vlaneseq
        %v7243 = vshrl.u32 %v7242, 7
        %v7244 = vsub.s32 1, %v7243
        %v7245 = vrot.slane %v6370, %v7244
        %v7246 = vlaneseq
        %v7247 = vshrl.u32 %v7246, 7
        %v7248 = vsub.s32 0, %v7247
        %v7249 = vrot.slane %v6378, %v7248
        %v7250 = vlaneseq
        %v7251 = vshrl.u32 %v7250, 7
        %v7252 = vsub.s32 1, %v7251
        %v7253 = vrot.slane %v6378, %v7252
        %v7254 = vlaneseq
        %v7255 = vshrl.u32 %v7254, 7
        %v7256 = vsub.s32 0, %v7255
        %v7257 = vrot.slane %v6380, %v7256
        %v7258 = vlaneseq
        %v7259 = vshrl.u32 %v7258, 7
        %v7260 = vsub.s32 1, %v7259
        %v7261 = vrot.slane %v6380, %v7260
        %v7262 = vlaneseq
        %v7263 = vshrl.u32 %v7262, 7
        %v7264 = vsub.s32 0, %v7263
        %v7265 = vrot.slane %v6363, %v7264
        %v7266 = vlaneseq
        %v7267 = vshrl.u32 %v7266, 7
        %v7268 = vsub.s32 1, %v7267
        %v7269 = vrot.slane %v6363, %v7268
        %v7270 = vlaneseq
        %v7271 = vshrl.u32 %v7270, 7
        %v7272 = vsub.s32 0, %v7271
        %v7273 = vrot.slane %v6377, %v7272
        %v7274 = vlaneseq
        %v7275 = vshrl.u32 %v7274, 7
        %v7276 = vsub.s32 1, %v7275
        %v7277 = vrot.slane %v6377, %v7276
        %v7278 = vlaneseq
        %v7279 = vshrl.u32 %v7278, 7
        %v7280 = vsub.s32 0, %v7279
        %v7281 = vrot.slane %v6379, %v7280
        %v7282 = vlaneseq
        %v7283 = vshrl.u32 %v7282, 7
        %v7284 = vsub.s32 1, %v7283
        %v7285 = vrot.slane %v6379, %v7284
        %v7286 = vlaneseq
        %v7287 = vshrl.u32 %v7286, 7
        %v7288 = vsub.s32 0, %v7287
        %v7289 = vrot.slane %v6381, %v7288
        %v7290 = vlaneseq
        %v7291 = vshrl.u32 %v7290, 7
        %v7292 = vsub.s32 1, %v7291
        %v7293 = vrot.slane %v6381, %v7292
        %v7294 = vlaneseq
        %v7295 = vshrl.u32 %v7294, 7
        %v7296 = vsub.s32 0, %v7295
        %v7297 = vrot.slane %v6406, %v7296
        %v7298 = vlaneseq
        %v7299 = vshrl.u32 %v7298, 7
        %v7300 = vsub.s32 1, %v7299
        %v7301 = vrot.slane %v6406, %v7300
        %v7302 = vlaneseq
        %v7303 = vshrl.u32 %v7302, 7
        %v7304 = vsub.s32 0, %v7303
        %v7305 = vrot.slane %v6420, %v7304
        %v7306 = vlaneseq
        %v7307 = vshrl.u32 %v7306, 7
        %v7308 = vsub.s32 1, %v7307
        %v7309 = vrot.slane %v6420, %v7308
        %v7310 = vlaneseq
        %v7311 = vshrl.u32 %v7310, 7
        %v7312 = vsub.s32 0, %v7311
        %v7313 = vrot.slane %v6428, %v7312
        %v7314 = vlaneseq
        %v7315 = vshrl.u32 %v7314, 7
        %v7316 = vsub.s32 1, %v7315
        %v7317 = vrot.slane %v6428, %v7316
        %v7318 = vlaneseq
        %v7319 = vshrl.u32 %v7318, 7
        %v7320 = vsub.s32 0, %v7319
        %v7321 = vrot.slane %v6430, %v7320
        %v7322 = vlaneseq
        %v7323 = vshrl.u32 %v7322, 7
        %v7324 = vsub.s32 1, %v7323
        %v7325 = vrot.slane %v6430, %v7324
        %v7326 = vlaneseq
        %v7327 = vshrl.u32 %v7326, 7
        %v7328 = vsub.s32 0, %v7327
        %v7329 = vrot.slane %v6413, %v7328
        %v7330 = vlaneseq
        %v7331 = vshrl.u32 %v7330, 7
        %v7332 = vsub.s32 1, %v7331
        %v7333 = vrot.slane %v6413, %v7332
        %v7334 = vlaneseq
        %v7335 = vshrl.u32 %v7334, 7
        %v7336 = vsub.s32 0, %v7335
        %v7337 = vrot.slane %v6427, %v7336
        %v7338 = vlaneseq
        %v7339 = vshrl.u32 %v7338, 7
        %v7340 = vsub.s32 1, %v7339
        %v7341 = vrot.slane %v6427, %v7340
        %v7342 = vlaneseq
        %v7343 = vshrl.u32 %v7342, 7
        %v7344 = vsub.s32 0, %v7343
        %v7345 = vrot.slane %v6429, %v7344
        %v7346 = vlaneseq
        %v7347 = vshrl.u32 %v7346, 7
        %v7348 = vsub.s32 1, %v7347
        %v7349 = vrot.slane %v6429, %v7348
        %v7350 = vlaneseq
        %v7351 = vshrl.u32 %v7350, 7
        %v7352 = vsub.s32 0, %v7351
        %v7353 = vrot.slane %v6431, %v7352
        %v7354 = vlaneseq
        %v7355 = vshrl.u32 %v7354, 7
        %v7356 = vsub.s32 1, %v7355
        %v7357 = vrot.slane %v6431, %v7356
        %v7358 = vlaneseq
        %v7359 = vshrl.u32 %v7358, 7
        %v7360 = vsub.s32 0, %v7359
        %v7361 = vrot.slane %v6456, %v7360
        %v7362 = vlaneseq
        %v7363 = vshrl.u32 %v7362, 7
        %v7364 = vsub.s32 1, %v7363
        %v7365 = vrot.slane %v6456, %v7364
        %v7366 = vlaneseq
        %v7367 = vshrl.u32 %v7366, 7
        %v7368 = vsub.s32 0, %v7367
        %v7369 = vrot.slane %v6470, %v7368
        %v7370 = vlaneseq
        %v7371 = vshrl.u32 %v7370, 7
        %v7372 = vsub.s32 1, %v7371
        %v7373 = vrot.slane %v6470, %v7372
        %v7374 = vlaneseq
        %v7375 = vshrl.u32 %v7374, 7
        %v7376 = vsub.s32 0, %v7375
        %v7377 = vrot.slane %v6478, %v7376
        %v7378 = vlaneseq
        %v7379 = vshrl.u32 %v7378, 7
        %v7380 = vsub.s32 1, %v7379
        %v7381 = vrot.slane %v6478, %v7380
        %v7382 = vlaneseq
        %v7383 = vshrl.u32 %v7382, 7
        %v7384 = vsub.s32 0, %v7383
        %v7385 = vrot.slane %v6480, %v7384
        %v7386 = vlaneseq
        %v7387 = vshrl.u32 %v7386, 7
        %v7388 = vsub.s32 1, %v7387
        %v7389 = vrot.slane %v6480, %v7388
        %v7390 = vlaneseq
        %v7391 = vshrl.u32 %v7390, 7
        %v7392 = vsub.s32 0, %v7391
        %v7393 = vrot.slane %v6463, %v7392
        %v7394 = vlaneseq
        %v7395 = vshrl.u32 %v7394, 7
        %v7396 = vsub.s32 1, %v7395
        %v7397 = vrot.slane %v6463, %v7396
        %v7398 = vlaneseq
        %v7399 = vshrl.u32 %v7398, 7
        %v7400 = vsub.s32 0, %v7399
        %v7401 = vrot.slane %v6477, %v7400
        %v7402 = vlaneseq
        %v7403 = vshrl.u32 %v7402, 7
        %v7404 = vsub.s32 1, %v7403
        %v7405 = vrot.slane %v6477, %v7404
        %v7406 = vlaneseq
        %v7407 = vshrl.u32 %v7406, 7
        %v7408 = vsub.s32 0, %v7407
        %v7409 = vrot.slane %v6479, %v7408
        %v7410 = vlaneseq
        %v7411 = vshrl.u32 %v7410, 7
        %v7412 = vsub.s32 1, %v7411
        %v7413 = vrot.slane %v6479, %v7412
        %v7414 = vlaneseq
        %v7415 = vshrl.u32 %v7414, 7
        %v7416 = vsub.s32 0, %v7415
        %v7417 = vrot.slane %v6481, %v7416
        %v7418 = vlaneseq
        %v7419 = vshrl.u32 %v7418, 7
        %v7420 = vsub.s32 1, %v7419
        %v7421 = vrot.slane %v6481, %v7420
        %v7422 = vlaneseq
        %v7423 = vshrl.u32 %v7422, 7
        %v7424 = vsub.s32 0, %v7423
        %v7425 = vrot.slane %v6506, %v7424
        %v7426 = vlaneseq
        %v7427 = vshrl.u32 %v7426, 7
        %v7428 = vsub.s32 1, %v7427
        %v7429 = vrot.slane %v6506, %v7428
        %v7430 = vlaneseq
        %v7431 = vshrl.u32 %v7430, 7
        %v7432 = vsub.s32 0, %v7431
        %v7433 = vrot.slane %v6520, %v7432
        %v7434 = vlaneseq
        %v7435 = vshrl.u32 %v7434, 7
        %v7436 = vsub.s32 1, %v7435
        %v7437 = vrot.slane %v6520, %v7436
        %v7438 = vlaneseq
        %v7439 = vshrl.u32 %v7438, 7
        %v7440 = vsub.s32 0, %v7439
        %v7441 = vrot.slane %v6528, %v7440
        %v7442 = vlaneseq
        %v7443 = vshrl.u32 %v7442, 7
        %v7444 = vsub.s32 1, %v7443
        %v7445 = vrot.slane %v6528, %v7444
        %v7446 = vlaneseq
        %v7447 = vshrl.u32 %v7446, 7
        %v7448 = vsub.s32 0, %v7447
        %v7449 = vrot.slane %v6530, %v7448
        %v7450 = vlaneseq
        %v7451 = vshrl.u32 %v7450, 7
        %v7452 = vsub.s32 1, %v7451
        %v7453 = vrot.slane %v6530, %v7452
        %v7454 = vlaneseq
        %v7455 = vshrl.u32 %v7454, 7
        %v7456 = vsub.s32 0, %v7455
        %v7457 = vrot.slane %v6513, %v7456
        %v7458 = vlaneseq
        %v7459 = vshrl.u32 %v7458, 7
        %v7460 = vsub.s32 1, %v7459
        %v7461 = vrot.slane %v6513, %v7460
        %v7462 = vlaneseq
        %v7463 = vshrl.u32 %v7462, 7
        %v7464 = vsub.s32 0, %v7463
        %v7465 = vrot.slane %v6527, %v7464
        %v7466 = vlaneseq
        %v7467 = vshrl.u32 %v7466, 7
        %v7468 = vsub.s32 1, %v7467
        %v7469 = vrot.slane %v6527, %v7468
        %v7470 = vlaneseq
        %v7471 = vshrl.u32 %v7470, 7
        %v7472 = vsub.s32 0, %v7471
        %v7473 = vrot.slane %v6529, %v7472
        %v7474 = vlaneseq
        %v7475 = vshrl.u32 %v7474, 7
        %v7476 = vsub.s32 1, %v7475
        %v7477 = vrot.slane %v6529, %v7476
        %v7478 = vlaneseq
        %v7479 = vshrl.u32 %v7478, 7
        %v7480 = vsub.s32 0, %v7479
        %v7481 = vrot.slane %v6531, %v7480
        %v7482 = vlaneseq
        %v7483 = vshrl.u32 %v7482, 7
        %v7484 = vsub.s32 1, %v7483
        %v7485 = vrot.slane %v6531, %v7484
        %v7486 = vlaneseq
        %v7487 = vshrl.u32 %v7486, 7
        %v7488 = vsub.s32 0, %v7487
        %v7489 = vrot.slane %v6556, %v7488
        %v7490 = vlaneseq
        %v7491 = vshrl.u32 %v7490, 7
        %v7492 = vsub.s32 1, %v7491
        %v7493 = vrot.slane %v6556, %v7492
        %v7494 = vlaneseq
        %v7495 = vshrl.u32 %v7494, 7
        %v7496 = vsub.s32 0, %v7495
        %v7497 = vrot.slane %v6570, %v7496
        %v7498 = vlaneseq
        %v7499 = vshrl.u32 %v7498, 7
        %v7500 = vsub.s32 1, %v7499
        %v7501 = vrot.slane %v6570, %v7500
        %v7502 = vlaneseq
        %v7503 = vshrl.u32 %v7502, 7
        %v7504 = vsub.s32 0, %v7503
        %v7505 = vrot.slane %v6578, %v7504
        %v7506 = vlaneseq
        %v7507 = vshrl.u32 %v7506, 7
        %v7508 = vsub.s32 1, %v7507
        %v7509 = vrot.slane %v6578, %v7508
        %v7510 = vlaneseq
        %v7511 = vshrl.u32 %v7510, 7
        %v7512 = vsub.s32 0, %v7511
        %v7513 = vrot.slane %v6580, %v7512
        %v7514 = vlaneseq
        %v7515 = vshrl.u32 %v7514, 7
        %v7516 = vsub.s32 1, %v7515
        %v7517 = vrot.slane %v6580, %v7516
        %v7518 = vlaneseq
        %v7519 = vshrl.u32 %v7518, 7
        %v7520 = vsub.s32 0, %v7519
        %v7521 = vrot.slane %v6563, %v7520
        %v7522 = vlaneseq
        %v7523 = vshrl.u32 %v7522, 7
        %v7524 = vsub.s32 1, %v7523
        %v7525 = vrot.slane %v6563, %v7524
        %v7526 = vlaneseq
        %v7527 = vshrl.u32 %v7526, 7
        %v7528 = vsub.s32 0, %v7527
        %v7529 = vrot.slane %v6577, %v7528
        %v7530 = vlaneseq
        %v7531 = vshrl.u32 %v7530, 7
        %v7532 = vsub.s32 1, %v7531
        %v7533 = vrot.slane %v6577, %v7532
        %v7534 = vlaneseq
        %v7535 = vshrl.u32 %v7534, 7
        %v7536 = vsub.s32 0, %v7535
        %v7537 = vrot.slane %v6579, %v7536
        %v7538 = vlaneseq
        %v7539 = vshrl.u32 %v7538, 7
        %v7540 = vsub.s32 1, %v7539
        %v7541 = vrot.slane %v6579, %v7540
        %v7542 = vlaneseq
        %v7543 = vshrl.u32 %v7542, 7
        %v7544 = vsub.s32 0, %v7543
        %v7545 = vrot.slane %v6581, %v7544
        %v7546 = vlaneseq
        %v7547 = vshrl.u32 %v7546, 7
        %v7548 = vsub.s32 1, %v7547
        %v7549 = vrot.slane %v6581, %v7548
        %v7550 = vlaneseq
        %v7551 = vshrl.u32 %v7550, 7
        %v7552 = vsub.s32 0, %v7551
        %v7553 = vrot.slane %v6606, %v7552
        %v7554 = vlaneseq
        %v7555 = vshrl.u32 %v7554, 7
        %v7556 = vsub.s32 1, %v7555
        %v7557 = vrot.slane %v6606, %v7556
        %v7558 = vlaneseq
        %v7559 = vshrl.u32 %v7558, 7
        %v7560 = vsub.s32 0, %v7559
        %v7561 = vrot.slane %v6620, %v7560
        %v7562 = vlaneseq
        %v7563 = vshrl.u32 %v7562, 7
        %v7564 = vsub.s32 1, %v7563
        %v7565 = vrot.slane %v6620, %v7564
        %v7566 = vlaneseq
        %v7567 = vshrl.u32 %v7566, 7
        %v7568 = vsub.s32 0, %v7567
        %v7569 = vrot.slane %v6628, %v7568
        %v7570 = vlaneseq
        %v7571 = vshrl.u32 %v7570, 7
        %v7572 = vsub.s32 1, %v7571
        %v7573 = vrot.slane %v6628, %v7572
        %v7574 = vlaneseq
        %v7575 = vshrl.u32 %v7574, 7
        %v7576 = vsub.s32 0, %v7575
        %v7577 = vrot.slane %v6630, %v7576
        %v7578 = vlaneseq
        %v7579 = vshrl.u32 %v7578, 7
        %v7580 = vsub.s32 1, %v7579
        %v7581 = vrot.slane %v6630, %v7580
        %v7582 = vlaneseq
        %v7583 = vshrl.u32 %v7582, 7
        %v7584 = vsub.s32 0, %v7583
        %v7585 = vrot.slane %v6613, %v7584
        %v7586 = vlaneseq
        %v7587 = vshrl.u32 %v7586, 7
        %v7588 = vsub.s32 1, %v7587
        %v7589 = vrot.slane %v6613, %v7588
        %v7590 = vlaneseq
        %v7591 = vshrl.u32 %v7590, 7
        %v7592 = vsub.s32 0, %v7591
        %v7593 = vrot.slane %v6627, %v7592
        %v7594 = vlaneseq
        %v7595 = vshrl.u32 %v7594, 7
        %v7596 = vsub.s32 1, %v7595
        %v7597 = vrot.slane %v6627, %v7596
        %v7598 = vlaneseq
        %v7599 = vshrl.u32 %v7598, 7
        %v7600 = vsub.s32 0, %v7599
        %v7601 = vrot.slane %v6629, %v7600
        %v7602 = vlaneseq
        %v7603 = vshrl.u32 %v7602, 7
        %v7604 = vsub.s32 1, %v7603
        %v7605 = vrot.slane %v6629, %v7604
        %v7606 = vlaneseq
        %v7607 = vshrl.u32 %v7606, 7
        %v7608 = vsub.s32 0, %v7607
        %v7609 = vrot.slane %v6631, %v7608
        %v7610 = vlaneseq
        %v7611 = vshrl.u32 %v7610, 7
        %v7612 = vsub.s32 1, %v7611
        %v7613 = vrot.slane %v6631, %v7612
        %v7614 = vlaneseq
        %v7615 = vshrl.u32 %v7614, 7
        %v7616 = vsub.s32 0, %v7615
        %v7617 = vrot.slane %v6656, %v7616
        %v7618 = vlaneseq
        %v7619 = vshrl.u32 %v7618, 7
        %v7620 = vsub.s32 1, %v7619
        %v7621 = vrot.slane %v6656, %v7620
        %v7622 = vlaneseq
        %v7623 = vshrl.u32 %v7622, 7
        %v7624 = vsub.s32 0, %v7623
        %v7625 = vrot.slane %v6670, %v7624
        %v7626 = vlaneseq
        %v7627 = vshrl.u32 %v7626, 7
        %v7628 = vsub.s32 1, %v7627
        %v7629 = vrot.slane %v6670, %v7628
        %v7630 = vlaneseq
        %v7631 = vshrl.u32 %v7630, 7
        %v7632 = vsub.s32 0, %v7631
        %v7633 = vrot.slane %v6678, %v7632
        %v7634 = vlaneseq
        %v7635 = vshrl.u32 %v7634, 7
        %v7636 = vsub.s32 1, %v7635
        %v7637 = vrot.slane %v6678, %v7636
        %v7638 = vlaneseq
        %v7639 = vshrl.u32 %v7638, 7
        %v7640 = vsub.s32 0, %v7639
        %v7641 = vrot.slane %v6680, %v7640
        %v7642 = vlaneseq
        %v7643 = vshrl.u32 %v7642, 7
        %v7644 = vsub.s32 1, %v7643
        %v7645 = vrot.slane %v6680, %v7644
        %v7646 = vlaneseq
        %v7647 = vshrl.u32 %v7646, 7
        %v7648 = vsub.s32 0, %v7647
        %v7649 = vrot.slane %v6663, %v7648
        %v7650 = vlaneseq
        %v7651 = vshrl.u32 %v7650, 7
        %v7652 = vsub.s32 1, %v7651
        %v7653 = vrot.slane %v6663, %v7652
        %v7654 = vlaneseq
        %v7655 = vshrl.u32 %v7654, 7
        %v7656 = vsub.s32 0, %v7655
        %v7657 = vrot.slane %v6677, %v7656
        %v7658 = vlaneseq
        %v7659 = vshrl.u32 %v7658, 7
        %v7660 = vsub.s32 1, %v7659
        %v7661 = vrot.slane %v6677, %v7660
        %v7662 = vlaneseq
        %v7663 = vshrl.u32 %v7662, 7
        %v7664 = vsub.s32 0, %v7663
        %v7665 = vrot.slane %v6679, %v7664
        %v7666 = vlaneseq
        %v7667 = vshrl.u32 %v7666, 7
        %v7668 = vsub.s32 1, %v7667
        %v7669 = vrot.slane %v6679, %v7668
        %v7670 = vlaneseq
        %v7671 = vshrl.u32 %v7670, 7
        %v7672 = vsub.s32 0, %v7671
        %v7673 = vrot.slane %v6681, %v7672
        %v7674 = vlaneseq
        %v7675 = vshrl.u32 %v7674, 7
        %v7676 = vsub.s32 1, %v7675
        %v7677 = vrot.slane %v6681, %v7676
        %v7678 = vlaneseq
        %v7679 = vshrl.u32 %v7678, 7
        %v7680 = vsub.s32 0, %v7679
        %v7681 = vrot.slane %v6706, %v7680
        %v7682 = vlaneseq
        %v7683 = vshrl.u32 %v7682, 7
        %v7684 = vsub.s32 1, %v7683
        %v7685 = vrot.slane %v6706, %v7684
        %v7686 = vlaneseq
        %v7687 = vshrl.u32 %v7686, 7
        %v7688 = vsub.s32 0, %v7687
        %v7689 = vrot.slane %v6720, %v7688
        %v7690 = vlaneseq
        %v7691 = vshrl.u32 %v7690, 7
        %v7692 = vsub.s32 1, %v7691
        %v7693 = vrot.slane %v6720, %v7692
        %v7694 = vlaneseq
        %v7695 = vshrl.u32 %v7694, 7
        %v7696 = vsub.s32 0, %v7695
        %v7697 = vrot.slane %v6728, %v7696
        %v7698 = vlaneseq
        %v7699 = vshrl.u32 %v7698, 7
        %v7700 = vsub.s32 1, %v7699
        %v7701 = vrot.slane %v6728, %v7700
        %v7702 = vlaneseq
        %v7703 = vshrl.u32 %v7702, 7
        %v7704 = vsub.s32 0, %v7703
        %v7705 = vrot.slane %v6730, %v7704
        %v7706 = vlaneseq
        %v7707 = vshrl.u32 %v7706, 7
        %v7708 = vsub.s32 1, %v7707
        %v7709 = vrot.slane %v6730, %v7708
        %v7710 = vlaneseq
        %v7711 = vshrl.u32 %v7710, 7
        %v7712 = vsub.s32 0, %v7711
        %v7713 = vrot.slane %v6713, %v7712
        %v7714 = vlaneseq
        %v7715 = vshrl.u32 %v7714, 7
        %v7716 = vsub.s32 1, %v7715
        %v7717 = vrot.slane %v6713, %v7716
        %v7718 = vlaneseq
        %v7719 = vshrl.u32 %v7718, 7
        %v7720 = vsub.s32 0, %v7719
        %v7721 = vrot.slane %v6727, %v7720
        %v7722 = vlaneseq
        %v7723 = vshrl.u32 %v7722, 7
        %v7724 = vsub.s32 1, %v7723
        %v7725 = vrot.slane %v6727, %v7724
        %v7726 = vlaneseq
        %v7727 = vshrl.u32 %v7726, 7
        %v7728 = vsub.s32 0, %v7727
        %v7729 = vrot.slane %v6729, %v7728
        %v7730 = vlaneseq
        %v7731 = vshrl.u32 %v7730, 7
        %v7732 = vsub.s32 1, %v7731
        %v7733 = vrot.slane %v6729, %v7732
        %v7734 = vlaneseq
        %v7735 = vshrl.u32 %v7734, 7
        %v7736 = vsub.s32 0, %v7735
        %v7737 = vrot.slane %v6731, %v7736
        %v7738 = vlaneseq
        %v7739 = vshrl.u32 %v7738, 7
        %v7740 = vsub.s32 1, %v7739
        %v7741 = vrot.slane %v6731, %v7740
        %v7742 = vlaneseq
        %v7743 = vshrl.u32 %v7742, 7
        %v7744 = vsub.s32 0, %v7743
        %v7745 = vrot.slane %v6756, %v7744
        %v7746 = vlaneseq
        %v7747 = vshrl.u32 %v7746, 7
        %v7748 = vsub.s32 1, %v7747
        %v7749 = vrot.slane %v6756, %v7748
        %v7750 = vlaneseq
        %v7751 = vshrl.u32 %v7750, 7
        %v7752 = vsub.s32 0, %v7751
        %v7753 = vrot.slane %v6770, %v7752
        %v7754 = vlaneseq
        %v7755 = vshrl.u32 %v7754, 7
        %v7756 = vsub.s32 1, %v7755
        %v7757 = vrot.slane %v6770, %v7756
        %v7758 = vlaneseq
        %v7759 = vshrl.u32 %v7758, 7
        %v7760 = vsub.s32 0, %v7759
        %v7761 = vrot.slane %v6778, %v7760
        %v7762 = vlaneseq
        %v7763 = vshrl.u32 %v7762, 7
        %v7764 = vsub.s32 1, %v7763
        %v7765 = vrot.slane %v6778, %v7764
        %v7766 = vlaneseq
        %v7767 = vshrl.u32 %v7766, 7
        %v7768 = vsub.s32 0, %v7767
        %v7769 = vrot.slane %v6780, %v7768
        %v7770 = vlaneseq
        %v7771 = vshrl.u32 %v7770, 7
        %v7772 = vsub.s32 1, %v7771
        %v7773 = vrot.slane %v6780, %v7772
        %v7774 = vlaneseq
        %v7775 = vshrl.u32 %v7774, 7
        %v7776 = vsub.s32 0, %v7775
        %v7777 = vrot.slane %v6763, %v7776
        %v7778 = vlaneseq
        %v7779 = vshrl.u32 %v7778, 7
        %v7780 = vsub.s32 1, %v7779
        %v7781 = vrot.slane %v6763, %v7780
        %v7782 = vlaneseq
        %v7783 = vshrl.u32 %v7782, 7
        %v7784 = vsub.s32 0, %v7783
        %v7785 = vrot.slane %v6777, %v7784
        %v7786 = vlaneseq
        %v7787 = vshrl.u32 %v7786, 7
        %v7788 = vsub.s32 1, %v7787
        %v7789 = vrot.slane %v6777, %v7788
        %v7790 = vlaneseq
        %v7791 = vshrl.u32 %v7790, 7
        %v7792 = vsub.s32 0, %v7791
        %v7793 = vrot.slane %v6779, %v7792
        %v7794 = vlaneseq
        %v7795 = vshrl.u32 %v7794, 7
        %v7796 = vsub.s32 1, %v7795
        %v7797 = vrot.slane %v6779, %v7796
        %v7798 = vlaneseq
        %v7799 = vshrl.u32 %v7798, 7
        %v7800 = vsub.s32 0, %v7799
        %v7801 = vrot.slane %v6781, %v7800
        %v7802 = vlaneseq
        %v7803 = vshrl.u32 %v7802, 7
        %v7804 = vsub.s32 1, %v7803
        %v7805 = vrot.slane %v6781, %v7804
        %v8062 = vmul.f32 %v5367, %v6785
        %v8063 = vmul.f32 %v5369, %v6789
        %v8064 = vmul.f32 %v5371, %v6793
        %v8065 = vmul.f32 %v5373, %v6797
        %v8066 = vmul.f32 %v5375, %v6801
        %v8067 = vmul.f32 %v5377, %v6805
        %v8068 = vmul.f32 %v5379, %v6809
        %v8069 = vmul.f32 %v5381, %v6813
        %v8070 = vmul.f32 %v5383, %v6817
        %v8071 = vmul.f32 %v5385, %v6821
        %v8072 = vmul.f32 %v5387, %v6825
        %v8073 = vmul.f32 %v5389, %v6829
        %v8074 = vmul.f32 %v5391, %v6833
        %v8075 = vmul.f32 %v5393, %v6837
        %v8076 = vmul.f32 %v5395, %v6841
        %v8077 = vmul.f32 %v5397, %v6845
        %v8078 = vmul.f32 %v5399, %v6849
        %v8079 = vmul.f32 %v5401, %v6853
        %v8080 = vmul.f32 %v5403, %v6857
        %v8081 = vmul.f32 %v5405, %v6861
        %v8082 = vmul.f32 %v5407, %v6865
        %v8083 = vmul.f32 %v5409, %v6869
        %v8084 = vmul.f32 %v5411, %v6873
        %v8085 = vmul.f32 %v5413, %v6877
        %v8086 = vmul.f32 %v5415, %v6881
        %v8087 = vmul.f32 %v5417, %v6885
        %v8088 = vmul.f32 %v5419, %v6889
        %v8089 = vmul.f32 %v5421, %v6893
        %v8090 = vmul.f32 %v5423, %v6897
        %v8091 = vmul.f32 %v5425, %v6901
        %v8092 = vmul.f32 %v5427, %v6905
        %v8093 = vmul.f32 %v5429, %v6909
        %v8094 = vmul.f32 %v5431, %v6913
        %v8095 = vmul.f32 %v5433, %v6917
        %v8096 = vmul.f32 %v5435, %v6921
        %v8097 = vmul.f32 %v5437, %v6925
        %v8098 = vmul.f32 %v5439, %v6929
        %v8099 = vmul.f32 %v5441, %v6933
        %v8100 = vmul.f32 %v5443, %v6937
        %v8101 = vmul.f32 %v5445, %v6941
        %v8102 = vmul.f32 %v5447, %v6945
        %v8103 = vmul.f32 %v5449, %v6949
        %v8104 = vmul.f32 %v5451, %v6953
        %v8105 = vmul.f32 %v5453, %v6957
        %v8106 = vmul.f32 %v5455, %v6961
        %v8107 = vmul.f32 %v5457, %v6965
        %v8108 = vmul.f32 %v5459, %v6969
        %v8109 = vmul.f32 %v5461, %v6973
        %v8110 = vmul.f32 %v5463, %v6977
        %v8111 = vmul.f32 %v5465, %v6981
        %v8112 = vmul.f32 %v5467, %v6985
        %v8113 = vmul.f32 %v5469, %v6989
        %v8114 = vmul.f32 %v5471, %v6993
        %v8115 = vmul.f32 %v5473, %v6997
        %v8116 = vmul.f32 %v5475, %v7001
        %v8117 = vmul.f32 %v5477, %v7005
        %v8118 = vmul.f32 %v5479, %v7009
        %v8119 = vmul.f32 %v5481, %v7013
        %v8120 = vmul.f32 %v5483, %v7017
        %v8121 = vmul.f32 %v5485, %v7021
        %v8122 = vmul.f32 %v5487, %v7025
        %v8123 = vmul.f32 %v5489, %v7029
        %v8124 = vmul.f32 %v5491, %v7033
        %v8125 = vmul.f32 %v5493, %v7037
        %v8126 = vmul.f32 %v5495, %v7041
        %v8127 = vmul.f32 %v5497, %v7045
        %v8128 = vmul.f32 %v5499, %v7049
        %v8129 = vmul.f32 %v5501, %v7053
        %v8130 = vmul.f32 %v5503, %v7057
        %v8131 = vmul.f32 %v5505, %v7061
        %v8132 = vmul.f32 %v5507, %v7065
        %v8133 = vmul.f32 %v5509, %v7069
        %v8134 = vmul.f32 %v5511, %v7073
        %v8135 = vmul.f32 %v5513, %v7077
        %v8136 = vmul.f32 %v5515, %v7081
        %v8137 = vmul.f32 %v5517, %v7085
        %v8138 = vmul.f32 %v5519, %v7089
        %v8139 = vmul.f32 %v5521, %v7093
        %v8140 = vmul.f32 %v5523, %v7097
        %v8141 = vmul.f32 %v5525, %v7101
        %v8142 = vmul.f32 %v5527, %v7105
        %v8143 = vmul.f32 %v5529, %v7109
        %v8144 = vmul.f32 %v5531, %v7113
        %v8145 = vmul.f32 %v5533, %v7117
        %v8146 = vmul.f32 %v5535, %v7121
        %v8147 = vmul.f32 %v5537, %v7125
        %v8148 = vmul.f32 %v5539, %v7129
        %v8149 = vmul.f32 %v5541, %v7133
        %v8150 = vmul.f32 %v5543, %v7137
        %v8151 = vmul.f32 %v5545, %v7141
        %v8152 = vmul.f32 %v5547, %v7145
        %v8153 = vmul.f32 %v5549, %v7149
        %v8154 = vmul.f32 %v5551, %v7153
        %v8155 = vmul.f32 %v5553, %v7157
        %v8156 = vmul.f32 %v5555, %v7161
        %v8157 = vmul.f32 %v5557, %v7165
        %v8158 = vmul.f32 %v5559, %v7169
        %v8159 = vmul.f32 %v5561, %v7173
        %v8160 = vmul.f32 %v5563, %v7177
        %v8161 = vmul.f32 %v5565, %v7181
        %v8162 = vmul.f32 %v5567, %v7185
        %v8163 = vmul.f32 %v5569, %v7189
        %v8164 = vmul.f32 %v5571, %v7193
        %v8165 = vmul.f32 %v5573, %v7197
        %v8166 = vmul.f32 %v5575, %v7201
        %v8167 = vmul.f32 %v5577, %v7205
        %v8168 = vmul.f32 %v5579, %v7209
        %v8169 = vmul.f32 %v5581, %v7213
        %v8170 = vmul.f32 %v5583, %v7217
        %v8171 = vmul.f32 %v5585, %v7221
        %v8172 = vmul.f32 %v5587, %v7225
        %v8173 = vmul.f32 %v5589, %v7229
        %v8174 = vmul.f32 %v5591, %v7233
        %v8175 = vmul.f32 %v5593, %v7237
        %v8176 = vmul.f32 %v5595, %v7241
        %v8177 = vmul.f32 %v5597, %v7245
        %v8178 = vmul.f32 %v5599, %v7249
        %v8179 = vmul.f32 %v5601, %v7253
        %v8180 = vmul.f32 %v5603, %v7257
        %v8181 = vmul.f32 %v5605, %v7261
        %v8182 = vmul.f32 %v5607, %v7265
        %v8183 = vmul.f32 %v5609, %v7269
        %v8184 = vmul.f32 %v5611, %v7273
        %v8185 = vmul.f32 %v5613, %v7277
        %v8186 = vmul.f32 %v5615, %v7281
        %v8187 = vmul.f32 %v5617, %v7285
        %v8188 = vmul.f32 %v5619, %v7289
        %v8189 = vmul.f32 %v5621, %v7293
        %v8190 = vmul.f32 %v5623, %v7297
        %v8191 = vmul.f32 %v5625, %v7301
        %v8192 = vmul.f32 %v5627, %v7305
        %v8193 = vmul.f32 %v5629, %v7309
        %v8194 = vmul.f32 %v5631, %v7313
        %v8195 = vmul.f32 %v5633, %v7317
        %v8196 = vmul.f32 %v5635, %v7321
        %v8197 = vmul.f32 %v5637, %v7325
        %v8198 = vmul.f32 %v5639, %v7329
        %v8199 = vmul.f32 %v5641, %v7333
        %v8200 = vmul.f32 %v5643, %v7337
        %v8201 = vmul.f32 %v5645, %v7341
        %v8202 = vmul.f32 %v5647, %v7345
        %v8203 = vmul.f32 %v5649, %v7349
        %v8204 = vmul.f32 %v5651, %v7353
        %v8205 = vmul.f32 %v5653, %v7357
        %v8206 = vmul.f32 %v5655, %v7361
        %v8207 = vmul.f32 %v5657, %v7365
        %v8208 = vmul.f32 %v5659, %v7369
        %v8209 = vmul.f32 %v5661, %v7373
        %v8210 = vmul.f32 %v5663, %v7377
        %v8211 = vmul.f32 %v5665, %v7381
        %v8212 = vmul.f32 %v5667, %v7385
        %v8213 = vmul.f32 %v5669, %v7389
        %v8214 = vmul.f32 %v5671, %v7393
        %v8215 = vmul.f32 %v5673, %v7397
        %v8216 = vmul.f32 %v5675, %v7401
        %v8217 = vmul.f32 %v5677, %v7405
        %v8218 = vmul.f32 %v5679, %v7409
        %v8219 = vmul.f32 %v5681, %v7413
        %v8220 = vmul.f32 %v5683, %v7417
        %v8221 = vmul.f32 %v5685, %v7421
        %v8222 = vmul.f32 %v5687, %v7425
        %v8223 = vmul.f32 %v5689, %v7429
        %v8224 = vmul.f32 %v5691, %v7433
        %v8225 = vmul.f32 %v5693, %v7437
        %v8226 = vmul.f32 %v5695, %v7441
        %v8227 = vmul.f32 %v5697, %v7445
        %v8228 = vmul.f32 %v5699, %v7449
        %v8229 = vmul.f32 %v5701, %v7453
        %v8230 = vmul.f32 %v5703, %v7457
        %v8231 = vmul.f32 %v5705, %v7461
        %v8232 = vmul.f32 %v5707, %v7465
        %v8233 = vmul.f32 %v5709, %v7469
        %v8234 = vmul.f32 %v5711, %v7473
        %v8235 = vmul.f32 %v5713, %v7477
        %v8236 = vmul.f32 %v5715, %v7481
        %v8237 = vmul.f32 %v5717, %v7485
        %v8238 = vmul.f32 %v5719, %v7489
        %v8239 = vmul.f32 %v5721, %v7493
        %v8240 = vmul.f32 %v5723, %v7497
        %v8241 = vmul.f32 %v5725, %v7501
        %v8242 = vmul.f32 %v5727, %v7505
        %v8243 = vmul.f32 %v5729, %v7509
        %v8244 = vmul.f32 %v5731, %v7513
        %v8245 = vmul.f32 %v5733, %v7517
        %v8246 = vmul.f32 %v5735, %v7521
        %v8247 = vmul.f32 %v5737, %v7525
        %v8248 = vmul.f32 %v5739, %v7529
        %v8249 = vmul.f32 %v5741, %v7533
        %v8250 = vmul.f32 %v5743, %v7537
        %v8251 = vmul.f32 %v5745, %v7541
        %v8252 = vmul.f32 %v5747, %v7545
        %v8253 = vmul.f32 %v5749, %v7549
        %v8254 = vmul.f32 %v5751, %v7553
        %v8255 = vmul.f32 %v5753, %v7557
        %v8256 = vmul.f32 %v5755, %v7561
        %v8257 = vmul.f32 %v5757, %v7565
        %v8258 = vmul.f32 %v5759, %v7569
        %v8259 = vmul.f32 %v5761, %v7573
        %v8260 = vmul.f32 %v5763, %v7577
        %v8261 = vmul.f32 %v5765, %v7581
        %v8262 = vmul.f32 %v5767, %v7585
        %v8263 = vmul.f32 %v5769, %v7589
        %v8264 = vmul.f32 %v5771, %v7593
        %v8265 = vmul.f32 %v5773, %v7597
        %v8266 = vmul.f32 %v5775, %v7601
        %v8267 = vmul.f32 %v5777, %v7605
        %v8268 = vmul.f32 %v5779, %v7609
        %v8269 = vmul.f32 %v5781, %v7613
        %v8270 = vmul.f32 %v5783, %v7617
        %v8271 = vmul.f32 %v5785, %v7621
        %v8272 = vmul.f32 %v5787, %v7625
        %v8273 = vmul.f32 %v5789, %v7629
        %v8274 = vmul.f32 %v5791, %v7633
        %v8275 = vmul.f32 %v5793, %v7637
        %v8276 = vmul.f32 %v5795, %v7641
        %v8277 = vmul.f32 %v5797, %v7645
        %v8278 = vmul.f32 %v5799, %v7649
        %v8279 = vmul.f32 %v5801, %v7653
        %v8280 = vmul.f32 %v5803, %v7657
        %v8281 = vmul.f32 %v5805, %v7661
        %v8282 = vmul.f32 %v5807, %v7665
        %v8283 = vmul.f32 %v5809, %v7669
        %v8284 = vmul.f32 %v5811, %v7673
        %v8285 = vmul.f32 %v5813, %v7677
        %v8286 = vmul.f32 %v5815, %v7681
        %v8287 = vmul.f32 %v5817, %v7685
        %v8288 = vmul.f32 %v5819, %v7689
        %v8289 = vmul.f32 %v5821, %v7693
        %v8290 = vmul.f32 %v5823, %v7697
        %v8291 = vmul.f32 %v5825, %v7701
        %v8292 = vmul.f32 %v5827, %v7705
        %v8293 = vmul.f32 %v5829, %v7709
        %v8294 = vmul.f32 %v5831, %v7713
        %v8295 = vmul.f32 %v5833, %v7717
        %v8296 = vmul.f32 %v5835, %v7721
        %v8297 = vmul.f32 %v5837, %v7725
        %v8298 = vmul.f32 %v5839, %v7729
        %v8299 = vmul.f32 %v5841, %v7733
        %v8300 = vmul.f32 %v5843, %v7737
        %v8301 = vmul.f32 %v5845, %v7741
        %v8302 = vmul.f32 %v5847, %v7745
        %v8303 = vmul.f32 %v5849, %v7749
        %v8304 = vmul.f32 %v5851, %v7753
        %v8305 = vmul.f32 %v5853, %v7757
        %v8306 = vmul.f32 %v5855, %v7761
        %v8307 = vmul.f32 %v5857, %v7765
        %v8308 = vmul.f32 %v5859, %v7769
        %v8309 = vmul.f32 %v5861, %v7773
        %v8310 = vmul.f32 %v5863, %v7777
        %v8311 = vmul.f32 %v5865, %v7781
        %v8312 = vmul.f32 %v5867, %v7785
        %v8313 = vmul.f32 %v5869, %v7789
        %v8314 = vmul.f32 %v5871, %v7793
        %v8315 = vmul.f32 %v5873, %v7797
        %v8316 = vmul.f32 %v5875, %v7801
        %v8317 = vmul.f32 %v5877, %v7805
        %v8318 = vld [vmem:[#allocation4] sm:$0xff]
        %v8319 = vld [vmem:[#allocation4 + $0x8] sm:$0xff]
        %v8320 = vld [vmem:[#allocation4 + $0x10] sm:$0xff]
        %v8321 = vld [vmem:[#allocation4 + $0x18] sm:$0xff]
        %v8322 = vld [vmem:[#allocation4 + $0x20] sm:$0xff]
        %v8323 = vld [vmem:[#allocation4 + $0x28] sm:$0xff]
        %v8324 = vld [vmem:[#allocation4 + $0x30] sm:$0xff]
        %v8325 = vld [vmem:[#allocation4 + $0x38] sm:$0xff]
        %v8326 = vld [vmem:[#allocation4 + $0x40] sm:$0xff]
        %v8327 = vld [vmem:[#allocation4 + $0x48] sm:$0xff]
        %v8328 = vld [vmem:[#allocation4 + $0x50] sm:$0xff]
        %v8329 = vld [vmem:[#allocation4 + $0x58] sm:$0xff]
        %v8330 = vld [vmem:[#allocation4 + $0x60] sm:$0xff]
        %v8331 = vld [vmem:[#allocation4 + $0x68] sm:$0xff]
        %v8332 = vld [vmem:[#allocation4 + $0x70] sm:$0xff]
        %v8333 = vld [vmem:[#allocation4 + $0x78] sm:$0xff]
        %8335 = vset.pattern.permute.xlu0 0
        %8336 = vperm.xlu0 %8335, %v3255
        %v8337 = vpop.permute.xlu0 %8336
        %8340 = vset.pattern.permute.xlu0 0
        %8341 = vperm.xlu0 %8340, %v3257
        %v8342 = vpop.permute.xlu0 %8341
        %8345 = vset.pattern.permute.xlu0 0
        %8346 = vperm.xlu0 %8345, %v3259
        %v8347 = vpop.permute.xlu0 %8346
        %8350 = vset.pattern.permute.xlu0 0
        %8351 = vperm.xlu0 %8350, %v3261
        %v8352 = vpop.permute.xlu0 %8351
        %8355 = vset.pattern.permute.xlu0 0
        %8356 = vperm.xlu0 %8355, %v3263
        %v8357 = vpop.permute.xlu0 %8356
        %8360 = vset.pattern.permute.xlu0 0
        %8361 = vperm.xlu0 %8360, %v3265
        %v8362 = vpop.permute.xlu0 %8361
        %8365 = vset.pattern.permute.xlu0 0
        %8366 = vperm.xlu0 %8365, %v3267
        %v8367 = vpop.permute.xlu0 %8366
        %8370 = vset.pattern.permute.xlu0 0
        %8371 = vperm.xlu0 %8370, %v3269
        %v8372 = vpop.permute.xlu0 %8371
        %8375 = vset.pattern.permute.xlu0 0
        %8376 = vperm.xlu0 %8375, %v3271
        %v8377 = vpop.permute.xlu0 %8376
        %8380 = vset.pattern.permute.xlu0 0
        %8381 = vperm.xlu0 %8380, %v3273
        %v8382 = vpop.permute.xlu0 %8381
        %8385 = vset.pattern.permute.xlu0 0
        %8386 = vperm.xlu0 %8385, %v3275
        %v8387 = vpop.permute.xlu0 %8386
        %8390 = vset.pattern.permute.xlu0 0
        %8391 = vperm.xlu0 %8390, %v3277
        %v8392 = vpop.permute.xlu0 %8391
        %8395 = vset.pattern.permute.xlu0 0
        %8396 = vperm.xlu0 %8395, %v3279
        %v8397 = vpop.permute.xlu0 %8396
        %8400 = vset.pattern.permute.xlu0 0
        %8401 = vperm.xlu0 %8400, %v3281
        %v8402 = vpop.permute.xlu0 %8401
        %8405 = vset.pattern.permute.xlu0 0
        %8406 = vperm.xlu0 %8405, %v3283
        %v8407 = vpop.permute.xlu0 %8406
        %8410 = vset.pattern.permute.xlu0 0
        %8411 = vperm.xlu0 %8410, %v3285
        %v8412 = vpop.permute.xlu0 %8411
        %v8414 = vmul.f32 %v8318, %v8337
        %v8415 = vmul.f32 %v8319, %v8342
        %v8416 = vmul.f32 %v8320, %v8347
        %v8417 = vmul.f32 %v8321, %v8352
        %v8418 = vmul.f32 %v8322, %v8357
        %v8419 = vmul.f32 %v8323, %v8362
        %v8420 = vmul.f32 %v8324, %v8367
        %v8421 = vmul.f32 %v8325, %v8372
        %v8422 = vmul.f32 %v8326, %v8377
        %v8423 = vmul.f32 %v8327, %v8382
        %v8424 = vmul.f32 %v8328, %v8387
        %v8425 = vmul.f32 %v8329, %v8392
        %v8426 = vmul.f32 %v8330, %v8397
        %v8427 = vmul.f32 %v8331, %v8402
        %v8428 = vmul.f32 %v8332, %v8407
        %v8429 = vmul.f32 %v8333, %v8412
        %v8430 = vadd.f32 %v8062, %v8063
        %8431 = vadd.xlane.f32.xlu0 %v8430
        %v8432 = vpop.xlane.xlu0 %8431
        %v8433 = vadd.f32 %v8064, %v8065
        %8434 = vadd.xlane.f32.xlu0 %v8433
        %v8435 = vpop.xlane.xlu0 %8434
        %v8436 = vadd.f32 %v8066, %v8067
        %8437 = vadd.xlane.f32.xlu0 %v8436
        %v8438 = vpop.xlane.xlu0 %8437
        %v8439 = vadd.f32 %v8068, %v8069
        %8440 = vadd.xlane.f32.xlu0 %v8439
        %v8441 = vpop.xlane.xlu0 %8440
        %v8442 = vadd.f32 %v8070, %v8071
        %8443 = vadd.xlane.f32.xlu0 %v8442
        %v8444 = vpop.xlane.xlu0 %8443
        %v8445 = vadd.f32 %v8072, %v8073
        %8446 = vadd.xlane.f32.xlu0 %v8445
        %v8447 = vpop.xlane.xlu0 %8446
        %v8448 = vadd.f32 %v8074, %v8075
        %8449 = vadd.xlane.f32.xlu0 %v8448
        %v8450 = vpop.xlane.xlu0 %8449
        %v8451 = vadd.f32 %v8076, %v8077
        %8452 = vadd.xlane.f32.xlu0 %v8451
        %v8453 = vpop.xlane.xlu0 %8452
        %v8454 = vadd.f32 %v8078, %v8079
        %8455 = vadd.xlane.f32.xlu0 %v8454
        %v8456 = vpop.xlane.xlu0 %8455
        %v8457 = vadd.f32 %v8080, %v8081
        %8458 = vadd.xlane.f32.xlu0 %v8457
        %v8459 = vpop.xlane.xlu0 %8458
        %v8460 = vadd.f32 %v8082, %v8083
        %8461 = vadd.xlane.f32.xlu0 %v8460
        %v8462 = vpop.xlane.xlu0 %8461
        %v8463 = vadd.f32 %v8084, %v8085
        %8464 = vadd.xlane.f32.xlu0 %v8463
        %v8465 = vpop.xlane.xlu0 %8464
        %v8466 = vadd.f32 %v8086, %v8087
        %8467 = vadd.xlane.f32.xlu0 %v8466
        %v8468 = vpop.xlane.xlu0 %8467
        %v8469 = vadd.f32 %v8088, %v8089
        %8470 = vadd.xlane.f32.xlu0 %v8469
        %v8471 = vpop.xlane.xlu0 %8470
        %v8472 = vadd.f32 %v8090, %v8091
        %8473 = vadd.xlane.f32.xlu0 %v8472
        %v8474 = vpop.xlane.xlu0 %8473
        %v8475 = vadd.f32 %v8092, %v8093
        %8476 = vadd.xlane.f32.xlu0 %v8475
        %v8477 = vpop.xlane.xlu0 %8476
        %v8478 = vadd.f32 %v8094, %v8095
        %8479 = vadd.xlane.f32.xlu0 %v8478
        %v8480 = vpop.xlane.xlu0 %8479
        %v8481 = vadd.f32 %v8096, %v8097
        %8482 = vadd.xlane.f32.xlu0 %v8481
        %v8483 = vpop.xlane.xlu0 %8482
        %v8484 = vadd.f32 %v8098, %v8099
        %8485 = vadd.xlane.f32.xlu0 %v8484
        %v8486 = vpop.xlane.xlu0 %8485
        %v8487 = vadd.f32 %v8100, %v8101
        %8488 = vadd.xlane.f32.xlu0 %v8487
        %v8489 = vpop.xlane.xlu0 %8488
        %v8490 = vadd.f32 %v8102, %v8103
        %8491 = vadd.xlane.f32.xlu0 %v8490
        %v8492 = vpop.xlane.xlu0 %8491
        %v8493 = vadd.f32 %v8104, %v8105
        %8494 = vadd.xlane.f32.xlu0 %v8493
        %v8495 = vpop.xlane.xlu0 %8494
        %v8496 = vadd.f32 %v8106, %v8107
        %8497 = vadd.xlane.f32.xlu0 %v8496
        %v8498 = vpop.xlane.xlu0 %8497
        %v8499 = vadd.f32 %v8108, %v8109
        %8500 = vadd.xlane.f32.xlu0 %v8499
        %v8501 = vpop.xlane.xlu0 %8500
        %v8502 = vadd.f32 %v8110, %v8111
        %8503 = vadd.xlane.f32.xlu0 %v8502
        %v8504 = vpop.xlane.xlu0 %8503
        %v8505 = vadd.f32 %v8112, %v8113
        %8506 = vadd.xlane.f32.xlu0 %v8505
        %v8507 = vpop.xlane.xlu0 %8506
        %v8508 = vadd.f32 %v8114, %v8115
        %8509 = vadd.xlane.f32.xlu0 %v8508
        %v8510 = vpop.xlane.xlu0 %8509
        %v8511 = vadd.f32 %v8116, %v8117
        %8512 = vadd.xlane.f32.xlu0 %v8511
        %v8513 = vpop.xlane.xlu0 %8512
        %v8514 = vadd.f32 %v8118, %v8119
        %8515 = vadd.xlane.f32.xlu0 %v8514
        %v8516 = vpop.xlane.xlu0 %8515
        %v8517 = vadd.f32 %v8120, %v8121
        %8518 = vadd.xlane.f32.xlu0 %v8517
        %v8519 = vpop.xlane.xlu0 %8518
        %v8520 = vadd.f32 %v8122, %v8123
        %8521 = vadd.xlane.f32.xlu0 %v8520
        %v8522 = vpop.xlane.xlu0 %8521
        %v8523 = vadd.f32 %v8124, %v8125
        %8524 = vadd.xlane.f32.xlu0 %v8523
        %v8525 = vpop.xlane.xlu0 %8524
        %v8526 = vadd.f32 %v8126, %v8127
        %8527 = vadd.xlane.f32.xlu0 %v8526
        %v8528 = vpop.xlane.xlu0 %8527
        %v8529 = vadd.f32 %v8128, %v8129
        %8530 = vadd.xlane.f32.xlu0 %v8529
        %v8531 = vpop.xlane.xlu0 %8530
        %v8532 = vadd.f32 %v8130, %v8131
        %8533 = vadd.xlane.f32.xlu0 %v8532
        %v8534 = vpop.xlane.xlu0 %8533
        %v8535 = vadd.f32 %v8132, %v8133
        %8536 = vadd.xlane.f32.xlu0 %v8535
        %v8537 = vpop.xlane.xlu0 %8536
        %v8538 = vadd.f32 %v8134, %v8135
        %8539 = vadd.xlane.f32.xlu0 %v8538
        %v8540 = vpop.xlane.xlu0 %8539
        %v8541 = vadd.f32 %v8136, %v8137
        %8542 = vadd.xlane.f32.xlu0 %v8541
        %v8543 = vpop.xlane.xlu0 %8542
        %v8544 = vadd.f32 %v8138, %v8139
        %8545 = vadd.xlane.f32.xlu0 %v8544
        %v8546 = vpop.xlane.xlu0 %8545
        %v8547 = vadd.f32 %v8140, %v8141
        %8548 = vadd.xlane.f32.xlu0 %v8547
        %v8549 = vpop.xlane.xlu0 %8548
        %v8550 = vadd.f32 %v8142, %v8143
        %8551 = vadd.xlane.f32.xlu0 %v8550
        %v8552 = vpop.xlane.xlu0 %8551
        %v8553 = vadd.f32 %v8144, %v8145
        %8554 = vadd.xlane.f32.xlu0 %v8553
        %v8555 = vpop.xlane.xlu0 %8554
        %v8556 = vadd.f32 %v8146, %v8147
        %8557 = vadd.xlane.f32.xlu0 %v8556
        %v8558 = vpop.xlane.xlu0 %8557
        %v8559 = vadd.f32 %v8148, %v8149
        %8560 = vadd.xlane.f32.xlu0 %v8559
        %v8561 = vpop.xlane.xlu0 %8560
        %v8562 = vadd.f32 %v8150, %v8151
        %8563 = vadd.xlane.f32.xlu0 %v8562
        %v8564 = vpop.xlane.xlu0 %8563
        %v8565 = vadd.f32 %v8152, %v8153
        %8566 = vadd.xlane.f32.xlu0 %v8565
        %v8567 = vpop.xlane.xlu0 %8566
        %v8568 = vadd.f32 %v8154, %v8155
        %8569 = vadd.xlane.f32.xlu0 %v8568
        %v8570 = vpop.xlane.xlu0 %8569
        %v8571 = vadd.f32 %v8156, %v8157
        %8572 = vadd.xlane.f32.xlu0 %v8571
        %v8573 = vpop.xlane.xlu0 %8572
        %v8574 = vadd.f32 %v8158, %v8159
        %8575 = vadd.xlane.f32.xlu0 %v8574
        %v8576 = vpop.xlane.xlu0 %8575
        %v8577 = vadd.f32 %v8160, %v8161
        %8578 = vadd.xlane.f32.xlu0 %v8577
        %v8579 = vpop.xlane.xlu0 %8578
        %v8580 = vadd.f32 %v8162, %v8163
        %8581 = vadd.xlane.f32.xlu0 %v8580
        %v8582 = vpop.xlane.xlu0 %8581
        %v8583 = vadd.f32 %v8164, %v8165
        %8584 = vadd.xlane.f32.xlu0 %v8583
        %v8585 = vpop.xlane.xlu0 %8584
        %v8586 = vadd.f32 %v8166, %v8167
        %8587 = vadd.xlane.f32.xlu0 %v8586
        %v8588 = vpop.xlane.xlu0 %8587
        %v8589 = vadd.f32 %v8168, %v8169
        %8590 = vadd.xlane.f32.xlu0 %v8589
        %v8591 = vpop.xlane.xlu0 %8590
        %v8592 = vadd.f32 %v8170, %v8171
        %8593 = vadd.xlane.f32.xlu0 %v8592
        %v8594 = vpop.xlane.xlu0 %8593
        %v8595 = vadd.f32 %v8172, %v8173
        %8596 = vadd.xlane.f32.xlu0 %v8595
        %v8597 = vpop.xlane.xlu0 %8596
        %v8598 = vadd.f32 %v8174, %v8175
        %8599 = vadd.xlane.f32.xlu0 %v8598
        %v8600 = vpop.xlane.xlu0 %8599
        %v8601 = vadd.f32 %v8176, %v8177
        %8602 = vadd.xlane.f32.xlu0 %v8601
        %v8603 = vpop.xlane.xlu0 %8602
        %v8604 = vadd.f32 %v8178, %v8179
        %8605 = vadd.xlane.f32.xlu0 %v8604
        %v8606 = vpop.xlane.xlu0 %8605
        %v8607 = vadd.f32 %v8180, %v8181
        %8608 = vadd.xlane.f32.xlu0 %v8607
        %v8609 = vpop.xlane.xlu0 %8608
        %v8610 = vadd.f32 %v8182, %v8183
        %8611 = vadd.xlane.f32.xlu0 %v8610
        %v8612 = vpop.xlane.xlu0 %8611
        %v8613 = vadd.f32 %v8184, %v8185
        %8614 = vadd.xlane.f32.xlu0 %v8613
        %v8615 = vpop.xlane.xlu0 %8614
        %v8616 = vadd.f32 %v8186, %v8187
        %8617 = vadd.xlane.f32.xlu0 %v8616
        %v8618 = vpop.xlane.xlu0 %8617
        %v8619 = vadd.f32 %v8188, %v8189
        %8620 = vadd.xlane.f32.xlu0 %v8619
        %v8621 = vpop.xlane.xlu0 %8620
        %v8622 = vadd.f32 %v8190, %v8191
        %8623 = vadd.xlane.f32.xlu0 %v8622
        %v8624 = vpop.xlane.xlu0 %8623
        %v8625 = vadd.f32 %v8192, %v8193
        %8626 = vadd.xlane.f32.xlu0 %v8625
        %v8627 = vpop.xlane.xlu0 %8626
        %v8628 = vadd.f32 %v8194, %v8195
        %8629 = vadd.xlane.f32.xlu0 %v8628
        %v8630 = vpop.xlane.xlu0 %8629
        %v8631 = vadd.f32 %v8196, %v8197
        %8632 = vadd.xlane.f32.xlu0 %v8631
        %v8633 = vpop.xlane.xlu0 %8632
        %v8634 = vadd.f32 %v8198, %v8199
        %8635 = vadd.xlane.f32.xlu0 %v8634
        %v8636 = vpop.xlane.xlu0 %8635
        %v8637 = vadd.f32 %v8200, %v8201
        %8638 = vadd.xlane.f32.xlu0 %v8637
        %v8639 = vpop.xlane.xlu0 %8638
        %v8640 = vadd.f32 %v8202, %v8203
        %8641 = vadd.xlane.f32.xlu0 %v8640
        %v8642 = vpop.xlane.xlu0 %8641
        %v8643 = vadd.f32 %v8204, %v8205
        %8644 = vadd.xlane.f32.xlu0 %v8643
        %v8645 = vpop.xlane.xlu0 %8644
        %v8646 = vadd.f32 %v8206, %v8207
        %8647 = vadd.xlane.f32.xlu0 %v8646
        %v8648 = vpop.xlane.xlu0 %8647
        %v8649 = vadd.f32 %v8208, %v8209
        %8650 = vadd.xlane.f32.xlu0 %v8649
        %v8651 = vpop.xlane.xlu0 %8650
        %v8652 = vadd.f32 %v8210, %v8211
        %8653 = vadd.xlane.f32.xlu0 %v8652
        %v8654 = vpop.xlane.xlu0 %8653
        %v8655 = vadd.f32 %v8212, %v8213
        %8656 = vadd.xlane.f32.xlu0 %v8655
        %v8657 = vpop.xlane.xlu0 %8656
        %v8658 = vadd.f32 %v8214, %v8215
        %8659 = vadd.xlane.f32.xlu0 %v8658
        %v8660 = vpop.xlane.xlu0 %8659
        %v8661 = vadd.f32 %v8216, %v8217
        %8662 = vadd.xlane.f32.xlu0 %v8661
        %v8663 = vpop.xlane.xlu0 %8662
        %v8664 = vadd.f32 %v8218, %v8219
        %8665 = vadd.xlane.f32.xlu0 %v8664
        %v8666 = vpop.xlane.xlu0 %8665
        %v8667 = vadd.f32 %v8220, %v8221
        %8668 = vadd.xlane.f32.xlu0 %v8667
        %v8669 = vpop.xlane.xlu0 %8668
        %v8670 = vadd.f32 %v8222, %v8223
        %8671 = vadd.xlane.f32.xlu0 %v8670
        %v8672 = vpop.xlane.xlu0 %8671
        %v8673 = vadd.f32 %v8224, %v8225
        %8674 = vadd.xlane.f32.xlu0 %v8673
        %v8675 = vpop.xlane.xlu0 %8674
        %v8676 = vadd.f32 %v8226, %v8227
        %8677 = vadd.xlane.f32.xlu0 %v8676
        %v8678 = vpop.xlane.xlu0 %8677
        %v8679 = vadd.f32 %v8228, %v8229
        %8680 = vadd.xlane.f32.xlu0 %v8679
        %v8681 = vpop.xlane.xlu0 %8680
        %v8682 = vadd.f32 %v8230, %v8231
        %8683 = vadd.xlane.f32.xlu0 %v8682
        %v8684 = vpop.xlane.xlu0 %8683
        %v8685 = vadd.f32 %v8232, %v8233
        %8686 = vadd.xlane.f32.xlu0 %v8685
        %v8687 = vpop.xlane.xlu0 %8686
        %v8688 = vadd.f32 %v8234, %v8235
        %8689 = vadd.xlane.f32.xlu0 %v8688
        %v8690 = vpop.xlane.xlu0 %8689
        %v8691 = vadd.f32 %v8236, %v8237
        %8692 = vadd.xlane.f32.xlu0 %v8691
        %v8693 = vpop.xlane.xlu0 %8692
        %v8694 = vadd.f32 %v8238, %v8239
        %8695 = vadd.xlane.f32.xlu0 %v8694
        %v8696 = vpop.xlane.xlu0 %8695
        %v8697 = vadd.f32 %v8240, %v8241
        %8698 = vadd.xlane.f32.xlu0 %v8697
        %v8699 = vpop.xlane.xlu0 %8698
        %v8700 = vadd.f32 %v8242, %v8243
        %8701 = vadd.xlane.f32.xlu0 %v8700
        %v8702 = vpop.xlane.xlu0 %8701
        %v8703 = vadd.f32 %v8244, %v8245
        %8704 = vadd.xlane.f32.xlu0 %v8703
        %v8705 = vpop.xlane.xlu0 %8704
        %v8706 = vadd.f32 %v8246, %v8247
        %8707 = vadd.xlane.f32.xlu0 %v8706
        %v8708 = vpop.xlane.xlu0 %8707
        %v8709 = vadd.f32 %v8248, %v8249
        %8710 = vadd.xlane.f32.xlu0 %v8709
        %v8711 = vpop.xlane.xlu0 %8710
        %v8712 = vadd.f32 %v8250, %v8251
        %8713 = vadd.xlane.f32.xlu0 %v8712
        %v8714 = vpop.xlane.xlu0 %8713
        %v8715 = vadd.f32 %v8252, %v8253
        %8716 = vadd.xlane.f32.xlu0 %v8715
        %v8717 = vpop.xlane.xlu0 %8716
        %v8718 = vadd.f32 %v8254, %v8255
        %8719 = vadd.xlane.f32.xlu0 %v8718
        %v8720 = vpop.xlane.xlu0 %8719
        %v8721 = vadd.f32 %v8256, %v8257
        %8722 = vadd.xlane.f32.xlu0 %v8721
        %v8723 = vpop.xlane.xlu0 %8722
        %v8724 = vadd.f32 %v8258, %v8259
        %8725 = vadd.xlane.f32.xlu0 %v8724
        %v8726 = vpop.xlane.xlu0 %8725
        %v8727 = vadd.f32 %v8260, %v8261
        %8728 = vadd.xlane.f32.xlu0 %v8727
        %v8729 = vpop.xlane.xlu0 %8728
        %v8730 = vadd.f32 %v8262, %v8263
        %8731 = vadd.xlane.f32.xlu0 %v8730
        %v8732 = vpop.xlane.xlu0 %8731
        %v8733 = vadd.f32 %v8264, %v8265
        %8734 = vadd.xlane.f32.xlu0 %v8733
        %v8735 = vpop.xlane.xlu0 %8734
        %v8736 = vadd.f32 %v8266, %v8267
        %8737 = vadd.xlane.f32.xlu0 %v8736
        %v8738 = vpop.xlane.xlu0 %8737
        %v8739 = vadd.f32 %v8268, %v8269
        %8740 = vadd.xlane.f32.xlu0 %v8739
        %v8741 = vpop.xlane.xlu0 %8740
        %v8742 = vadd.f32 %v8270, %v8271
        %8743 = vadd.xlane.f32.xlu0 %v8742
        %v8744 = vpop.xlane.xlu0 %8743
        %v8745 = vadd.f32 %v8272, %v8273
        %8746 = vadd.xlane.f32.xlu0 %v8745
        %v8747 = vpop.xlane.xlu0 %8746
        %v8748 = vadd.f32 %v8274, %v8275
        %8749 = vadd.xlane.f32.xlu0 %v8748
        %v8750 = vpop.xlane.xlu0 %8749
        %v8751 = vadd.f32 %v8276, %v8277
        %8752 = vadd.xlane.f32.xlu0 %v8751
        %v8753 = vpop.xlane.xlu0 %8752
        %v8754 = vadd.f32 %v8278, %v8279
        %8755 = vadd.xlane.f32.xlu0 %v8754
        %v8756 = vpop.xlane.xlu0 %8755
        %v8757 = vadd.f32 %v8280, %v8281
        %8758 = vadd.xlane.f32.xlu0 %v8757
        %v8759 = vpop.xlane.xlu0 %8758
        %v8760 = vadd.f32 %v8282, %v8283
        %8761 = vadd.xlane.f32.xlu0 %v8760
        %v8762 = vpop.xlane.xlu0 %8761
        %v8763 = vadd.f32 %v8284, %v8285
        %8764 = vadd.xlane.f32.xlu0 %v8763
        %v8765 = vpop.xlane.xlu0 %8764
        %v8766 = vadd.f32 %v8286, %v8287
        %8767 = vadd.xlane.f32.xlu0 %v8766
        %v8768 = vpop.xlane.xlu0 %8767
        %v8769 = vadd.f32 %v8288, %v8289
        %8770 = vadd.xlane.f32.xlu0 %v8769
        %v8771 = vpop.xlane.xlu0 %8770
        %v8772 = vadd.f32 %v8290, %v8291
        %8773 = vadd.xlane.f32.xlu0 %v8772
        %v8774 = vpop.xlane.xlu0 %8773
        %v8775 = vadd.f32 %v8292, %v8293
        %8776 = vadd.xlane.f32.xlu0 %v8775
        %v8777 = vpop.xlane.xlu0 %8776
        %v8778 = vadd.f32 %v8294, %v8295
        %8779 = vadd.xlane.f32.xlu0 %v8778
        %v8780 = vpop.xlane.xlu0 %8779
        %v8781 = vadd.f32 %v8296, %v8297
        %8782 = vadd.xlane.f32.xlu0 %v8781
        %v8783 = vpop.xlane.xlu0 %8782
        %v8784 = vadd.f32 %v8298, %v8299
        %8785 = vadd.xlane.f32.xlu0 %v8784
        %v8786 = vpop.xlane.xlu0 %8785
        %v8787 = vadd.f32 %v8300, %v8301
        %8788 = vadd.xlane.f32.xlu0 %v8787
        %v8789 = vpop.xlane.xlu0 %8788
        %v8790 = vadd.f32 %v8302, %v8303
        %8791 = vadd.xlane.f32.xlu0 %v8790
        %v8792 = vpop.xlane.xlu0 %8791
        %v8793 = vadd.f32 %v8304, %v8305
        %8794 = vadd.xlane.f32.xlu0 %v8793
        %v8795 = vpop.xlane.xlu0 %8794
        %v8796 = vadd.f32 %v8306, %v8307
        %8797 = vadd.xlane.f32.xlu0 %v8796
        %v8798 = vpop.xlane.xlu0 %8797
        %v8799 = vadd.f32 %v8308, %v8309
        %8800 = vadd.xlane.f32.xlu0 %v8799
        %v8801 = vpop.xlane.xlu0 %8800
        %v8802 = vadd.f32 %v8310, %v8311
        %8803 = vadd.xlane.f32.xlu0 %v8802
        %v8804 = vpop.xlane.xlu0 %8803
        %v8805 = vadd.f32 %v8312, %v8313
        %8806 = vadd.xlane.f32.xlu0 %v8805
        %v8807 = vpop.xlane.xlu0 %8806
        %v8808 = vadd.f32 %v8314, %v8315
        %8809 = vadd.xlane.f32.xlu0 %v8808
        %v8810 = vpop.xlane.xlu0 %8809
        %v8811 = vadd.f32 %v8316, %v8317
        %8812 = vadd.xlane.f32.xlu0 %v8811
        %v8813 = vpop.xlane.xlu0 %8812
        %v8942 = vlaneseq
        %v8943 = vshrl.u32 %v8942, 7
        %v8944 = vsub.s32 %v2525, %v8943
        %v8945 = vrot.slane %v8432, %v8944
        %v8946 = vlaneseq
        %v8947 = vshrl.u32 %v8946, 7
        %v8948 = vsub.s32 %v2525, %v8947
        %v8949 = vrot.slane %v8435, %v8948
        %v8950 = vlaneseq
        %v8951 = vshrl.u32 %v8950, 7
        %v8952 = vsub.s32 %v2525, %v8951
        %v8953 = vrot.slane %v8438, %v8952
        %v8954 = vlaneseq
        %v8955 = vshrl.u32 %v8954, 7
        %v8956 = vsub.s32 %v2525, %v8955
        %v8957 = vrot.slane %v8441, %v8956
        %v8958 = vlaneseq
        %v8959 = vshrl.u32 %v8958, 7
        %v8960 = vsub.s32 %v2525, %v8959
        %v8961 = vrot.slane %v8444, %v8960
        %v8962 = vlaneseq
        %v8963 = vshrl.u32 %v8962, 7
        %v8964 = vsub.s32 %v2525, %v8963
        %v8965 = vrot.slane %v8447, %v8964
        %v8966 = vlaneseq
        %v8967 = vshrl.u32 %v8966, 7
        %v8968 = vsub.s32 %v2525, %v8967
        %v8969 = vrot.slane %v8450, %v8968
        %v8970 = vlaneseq
        %v8971 = vshrl.u32 %v8970, 7
        %v8972 = vsub.s32 %v2525, %v8971
        %v8973 = vrot.slane %v8453, %v8972
        %v8974 = vlaneseq
        %v8975 = vshrl.u32 %v8974, 7
        %v8976 = vsub.s32 %v2525, %v8975
        %v8977 = vrot.slane %v8456, %v8976
        %v8978 = vlaneseq
        %v8979 = vshrl.u32 %v8978, 7
        %v8980 = vsub.s32 %v2525, %v8979
        %v8981 = vrot.slane %v8459, %v8980
        %v8982 = vlaneseq
        %v8983 = vshrl.u32 %v8982, 7
        %v8984 = vsub.s32 %v2525, %v8983
        %v8985 = vrot.slane %v8462, %v8984
        %v8986 = vlaneseq
        %v8987 = vshrl.u32 %v8986, 7
        %v8988 = vsub.s32 %v2525, %v8987
        %v8989 = vrot.slane %v8465, %v8988
        %v8990 = vlaneseq
        %v8991 = vshrl.u32 %v8990, 7
        %v8992 = vsub.s32 %v2525, %v8991
        %v8993 = vrot.slane %v8468, %v8992
        %v8994 = vlaneseq
        %v8995 = vshrl.u32 %v8994, 7
        %v8996 = vsub.s32 %v2525, %v8995
        %v8997 = vrot.slane %v8471, %v8996
        %v8998 = vlaneseq
        %v8999 = vshrl.u32 %v8998, 7
        %v9000 = vsub.s32 %v2525, %v8999
        %v9001 = vrot.slane %v8474, %v9000
        %v9002 = vlaneseq
        %v9003 = vshrl.u32 %v9002, 7
        %v9004 = vsub.s32 %v2525, %v9003
        %v9005 = vrot.slane %v8477, %v9004
        %v9006 = vlaneseq
        %v9007 = vshrl.u32 %v9006, 7
        %v9008 = vsub.s32 %v2525, %v9007
        %v9009 = vrot.slane %v8480, %v9008
        %v9010 = vlaneseq
        %v9011 = vshrl.u32 %v9010, 7
        %v9012 = vsub.s32 %v2525, %v9011
        %v9013 = vrot.slane %v8483, %v9012
        %v9014 = vlaneseq
        %v9015 = vshrl.u32 %v9014, 7
        %v9016 = vsub.s32 %v2525, %v9015
        %v9017 = vrot.slane %v8486, %v9016
        %v9018 = vlaneseq
        %v9019 = vshrl.u32 %v9018, 7
        %v9020 = vsub.s32 %v2525, %v9019
        %v9021 = vrot.slane %v8489, %v9020
        %v9022 = vlaneseq
        %v9023 = vshrl.u32 %v9022, 7
        %v9024 = vsub.s32 %v2525, %v9023
        %v9025 = vrot.slane %v8492, %v9024
        %v9026 = vlaneseq
        %v9027 = vshrl.u32 %v9026, 7
        %v9028 = vsub.s32 %v2525, %v9027
        %v9029 = vrot.slane %v8495, %v9028
        %v9030 = vlaneseq
        %v9031 = vshrl.u32 %v9030, 7
        %v9032 = vsub.s32 %v2525, %v9031
        %v9033 = vrot.slane %v8498, %v9032
        %v9034 = vlaneseq
        %v9035 = vshrl.u32 %v9034, 7
        %v9036 = vsub.s32 %v2525, %v9035
        %v9037 = vrot.slane %v8501, %v9036
        %v9038 = vlaneseq
        %v9039 = vshrl.u32 %v9038, 7
        %v9040 = vsub.s32 %v2525, %v9039
        %v9041 = vrot.slane %v8504, %v9040
        %v9042 = vlaneseq
        %v9043 = vshrl.u32 %v9042, 7
        %v9044 = vsub.s32 %v2525, %v9043
        %v9045 = vrot.slane %v8507, %v9044
        %v9046 = vlaneseq
        %v9047 = vshrl.u32 %v9046, 7
        %v9048 = vsub.s32 %v2525, %v9047
        %v9049 = vrot.slane %v8510, %v9048
        %v9050 = vlaneseq
        %v9051 = vshrl.u32 %v9050, 7
        %v9052 = vsub.s32 %v2525, %v9051
        %v9053 = vrot.slane %v8513, %v9052
        %v9054 = vlaneseq
        %v9055 = vshrl.u32 %v9054, 7
        %v9056 = vsub.s32 %v2525, %v9055
        %v9057 = vrot.slane %v8516, %v9056
        %v9058 = vlaneseq
        %v9059 = vshrl.u32 %v9058, 7
        %v9060 = vsub.s32 %v2525, %v9059
        %v9061 = vrot.slane %v8519, %v9060
        %v9062 = vlaneseq
        %v9063 = vshrl.u32 %v9062, 7
        %v9064 = vsub.s32 %v2525, %v9063
        %v9065 = vrot.slane %v8522, %v9064
        %v9066 = vlaneseq
        %v9067 = vshrl.u32 %v9066, 7
        %v9068 = vsub.s32 %v2525, %v9067
        %v9069 = vrot.slane %v8525, %v9068
        %v9070 = vlaneseq
        %v9071 = vshrl.u32 %v9070, 7
        %v9072 = vsub.s32 %v2525, %v9071
        %v9073 = vrot.slane %v8528, %v9072
        %v9074 = vlaneseq
        %v9075 = vshrl.u32 %v9074, 7
        %v9076 = vsub.s32 %v2525, %v9075
        %v9077 = vrot.slane %v8531, %v9076
        %v9078 = vlaneseq
        %v9079 = vshrl.u32 %v9078, 7
        %v9080 = vsub.s32 %v2525, %v9079
        %v9081 = vrot.slane %v8534, %v9080
        %v9082 = vlaneseq
        %v9083 = vshrl.u32 %v9082, 7
        %v9084 = vsub.s32 %v2525, %v9083
        %v9085 = vrot.slane %v8537, %v9084
        %v9086 = vlaneseq
        %v9087 = vshrl.u32 %v9086, 7
        %v9088 = vsub.s32 %v2525, %v9087
        %v9089 = vrot.slane %v8540, %v9088
        %v9090 = vlaneseq
        %v9091 = vshrl.u32 %v9090, 7
        %v9092 = vsub.s32 %v2525, %v9091
        %v9093 = vrot.slane %v8543, %v9092
        %v9094 = vlaneseq
        %v9095 = vshrl.u32 %v9094, 7
        %v9096 = vsub.s32 %v2525, %v9095
        %v9097 = vrot.slane %v8546, %v9096
        %v9098 = vlaneseq
        %v9099 = vshrl.u32 %v9098, 7
        %v9100 = vsub.s32 %v2525, %v9099
        %v9101 = vrot.slane %v8549, %v9100
        %v9102 = vlaneseq
        %v9103 = vshrl.u32 %v9102, 7
        %v9104 = vsub.s32 %v2525, %v9103
        %v9105 = vrot.slane %v8552, %v9104
        %v9106 = vlaneseq
        %v9107 = vshrl.u32 %v9106, 7
        %v9108 = vsub.s32 %v2525, %v9107
        %v9109 = vrot.slane %v8555, %v9108
        %v9110 = vlaneseq
        %v9111 = vshrl.u32 %v9110, 7
        %v9112 = vsub.s32 %v2525, %v9111
        %v9113 = vrot.slane %v8558, %v9112
        %v9114 = vlaneseq
        %v9115 = vshrl.u32 %v9114, 7
        %v9116 = vsub.s32 %v2525, %v9115
        %v9117 = vrot.slane %v8561, %v9116
        %v9118 = vlaneseq
        %v9119 = vshrl.u32 %v9118, 7
        %v9120 = vsub.s32 %v2525, %v9119
        %v9121 = vrot.slane %v8564, %v9120
        %v9122 = vlaneseq
        %v9123 = vshrl.u32 %v9122, 7
        %v9124 = vsub.s32 %v2525, %v9123
        %v9125 = vrot.slane %v8567, %v9124
        %v9126 = vlaneseq
        %v9127 = vshrl.u32 %v9126, 7
        %v9128 = vsub.s32 %v2525, %v9127
        %v9129 = vrot.slane %v8570, %v9128
        %v9130 = vlaneseq
        %v9131 = vshrl.u32 %v9130, 7
        %v9132 = vsub.s32 %v2525, %v9131
        %v9133 = vrot.slane %v8573, %v9132
        %v9134 = vlaneseq
        %v9135 = vshrl.u32 %v9134, 7
        %v9136 = vsub.s32 %v2525, %v9135
        %v9137 = vrot.slane %v8576, %v9136
        %v9138 = vlaneseq
        %v9139 = vshrl.u32 %v9138, 7
        %v9140 = vsub.s32 %v2525, %v9139
        %v9141 = vrot.slane %v8579, %v9140
        %v9142 = vlaneseq
        %v9143 = vshrl.u32 %v9142, 7
        %v9144 = vsub.s32 %v2525, %v9143
        %v9145 = vrot.slane %v8582, %v9144
        %v9146 = vlaneseq
        %v9147 = vshrl.u32 %v9146, 7
        %v9148 = vsub.s32 %v2525, %v9147
        %v9149 = vrot.slane %v8585, %v9148
        %v9150 = vlaneseq
        %v9151 = vshrl.u32 %v9150, 7
        %v9152 = vsub.s32 %v2525, %v9151
        %v9153 = vrot.slane %v8588, %v9152
        %v9154 = vlaneseq
        %v9155 = vshrl.u32 %v9154, 7
        %v9156 = vsub.s32 %v2525, %v9155
        %v9157 = vrot.slane %v8591, %v9156
        %v9158 = vlaneseq
        %v9159 = vshrl.u32 %v9158, 7
        %v9160 = vsub.s32 %v2525, %v9159
        %v9161 = vrot.slane %v8594, %v9160
        %v9162 = vlaneseq
        %v9163 = vshrl.u32 %v9162, 7
        %v9164 = vsub.s32 %v2525, %v9163
        %v9165 = vrot.slane %v8597, %v9164
        %v9166 = vlaneseq
        %v9167 = vshrl.u32 %v9166, 7
        %v9168 = vsub.s32 %v2525, %v9167
        %v9169 = vrot.slane %v8600, %v9168
        %v9170 = vlaneseq
        %v9171 = vshrl.u32 %v9170, 7
        %v9172 = vsub.s32 %v2525, %v9171
        %v9173 = vrot.slane %v8603, %v9172
        %v9174 = vlaneseq
        %v9175 = vshrl.u32 %v9174, 7
        %v9176 = vsub.s32 %v2525, %v9175
        %v9177 = vrot.slane %v8606, %v9176
        %v9178 = vlaneseq
        %v9179 = vshrl.u32 %v9178, 7
        %v9180 = vsub.s32 %v2525, %v9179
        %v9181 = vrot.slane %v8609, %v9180
        %v9182 = vlaneseq
        %v9183 = vshrl.u32 %v9182, 7
        %v9184 = vsub.s32 %v2525, %v9183
        %v9185 = vrot.slane %v8612, %v9184
        %v9186 = vlaneseq
        %v9187 = vshrl.u32 %v9186, 7
        %v9188 = vsub.s32 %v2525, %v9187
        %v9189 = vrot.slane %v8615, %v9188
        %v9190 = vlaneseq
        %v9191 = vshrl.u32 %v9190, 7
        %v9192 = vsub.s32 %v2525, %v9191
        %v9193 = vrot.slane %v8618, %v9192
        %v9194 = vlaneseq
        %v9195 = vshrl.u32 %v9194, 7
        %v9196 = vsub.s32 %v2525, %v9195
        %v9197 = vrot.slane %v8621, %v9196
        %v9198 = vlaneseq
        %v9199 = vshrl.u32 %v9198, 7
        %v9200 = vsub.s32 %v2525, %v9199
        %v9201 = vrot.slane %v8624, %v9200
        %v9202 = vlaneseq
        %v9203 = vshrl.u32 %v9202, 7
        %v9204 = vsub.s32 %v2525, %v9203
        %v9205 = vrot.slane %v8627, %v9204
        %v9206 = vlaneseq
        %v9207 = vshrl.u32 %v9206, 7
        %v9208 = vsub.s32 %v2525, %v9207
        %v9209 = vrot.slane %v8630, %v9208
        %v9210 = vlaneseq
        %v9211 = vshrl.u32 %v9210, 7
        %v9212 = vsub.s32 %v2525, %v9211
        %v9213 = vrot.slane %v8633, %v9212
        %v9214 = vlaneseq
        %v9215 = vshrl.u32 %v9214, 7
        %v9216 = vsub.s32 %v2525, %v9215
        %v9217 = vrot.slane %v8636, %v9216
        %v9218 = vlaneseq
        %v9219 = vshrl.u32 %v9218, 7
        %v9220 = vsub.s32 %v2525, %v9219
        %v9221 = vrot.slane %v8639, %v9220
        %v9222 = vlaneseq
        %v9223 = vshrl.u32 %v9222, 7
        %v9224 = vsub.s32 %v2525, %v9223
        %v9225 = vrot.slane %v8642, %v9224
        %v9226 = vlaneseq
        %v9227 = vshrl.u32 %v9226, 7
        %v9228 = vsub.s32 %v2525, %v9227
        %v9229 = vrot.slane %v8645, %v9228
        %v9230 = vlaneseq
        %v9231 = vshrl.u32 %v9230, 7
        %v9232 = vsub.s32 %v2525, %v9231
        %v9233 = vrot.slane %v8648, %v9232
        %v9234 = vlaneseq
        %v9235 = vshrl.u32 %v9234, 7
        %v9236 = vsub.s32 %v2525, %v9235
        %v9237 = vrot.slane %v8651, %v9236
        %v9238 = vlaneseq
        %v9239 = vshrl.u32 %v9238, 7
        %v9240 = vsub.s32 %v2525, %v9239
        %v9241 = vrot.slane %v8654, %v9240
        %v9242 = vlaneseq
        %v9243 = vshrl.u32 %v9242, 7
        %v9244 = vsub.s32 %v2525, %v9243
        %v9245 = vrot.slane %v8657, %v9244
        %v9246 = vlaneseq
        %v9247 = vshrl.u32 %v9246, 7
        %v9248 = vsub.s32 %v2525, %v9247
        %v9249 = vrot.slane %v8660, %v9248
        %v9250 = vlaneseq
        %v9251 = vshrl.u32 %v9250, 7
        %v9252 = vsub.s32 %v2525, %v9251
        %v9253 = vrot.slane %v8663, %v9252
        %v9254 = vlaneseq
        %v9255 = vshrl.u32 %v9254, 7
        %v9256 = vsub.s32 %v2525, %v9255
        %v9257 = vrot.slane %v8666, %v9256
        %v9258 = vlaneseq
        %v9259 = vshrl.u32 %v9258, 7
        %v9260 = vsub.s32 %v2525, %v9259
        %v9261 = vrot.slane %v8669, %v9260
        %v9262 = vlaneseq
        %v9263 = vshrl.u32 %v9262, 7
        %v9264 = vsub.s32 %v2525, %v9263
        %v9265 = vrot.slane %v8672, %v9264
        %v9266 = vlaneseq
        %v9267 = vshrl.u32 %v9266, 7
        %v9268 = vsub.s32 %v2525, %v9267
        %v9269 = vrot.slane %v8675, %v9268
        %v9270 = vlaneseq
        %v9271 = vshrl.u32 %v9270, 7
        %v9272 = vsub.s32 %v2525, %v9271
        %v9273 = vrot.slane %v8678, %v9272
        %v9274 = vlaneseq
        %v9275 = vshrl.u32 %v9274, 7
        %v9276 = vsub.s32 %v2525, %v9275
        %v9277 = vrot.slane %v8681, %v9276
        %v9278 = vlaneseq
        %v9279 = vshrl.u32 %v9278, 7
        %v9280 = vsub.s32 %v2525, %v9279
        %v9281 = vrot.slane %v8684, %v9280
        %v9282 = vlaneseq
        %v9283 = vshrl.u32 %v9282, 7
        %v9284 = vsub.s32 %v2525, %v9283
        %v9285 = vrot.slane %v8687, %v9284
        %v9286 = vlaneseq
        %v9287 = vshrl.u32 %v9286, 7
        %v9288 = vsub.s32 %v2525, %v9287
        %v9289 = vrot.slane %v8690, %v9288
        %v9290 = vlaneseq
        %v9291 = vshrl.u32 %v9290, 7
        %v9292 = vsub.s32 %v2525, %v9291
        %v9293 = vrot.slane %v8693, %v9292
        %v9294 = vlaneseq
        %v9295 = vshrl.u32 %v9294, 7
        %v9296 = vsub.s32 %v2525, %v9295
        %v9297 = vrot.slane %v8696, %v9296
        %v9298 = vlaneseq
        %v9299 = vshrl.u32 %v9298, 7
        %v9300 = vsub.s32 %v2525, %v9299
        %v9301 = vrot.slane %v8699, %v9300
        %v9302 = vlaneseq
        %v9303 = vshrl.u32 %v9302, 7
        %v9304 = vsub.s32 %v2525, %v9303
        %v9305 = vrot.slane %v8702, %v9304
        %v9306 = vlaneseq
        %v9307 = vshrl.u32 %v9306, 7
        %v9308 = vsub.s32 %v2525, %v9307
        %v9309 = vrot.slane %v8705, %v9308
        %v9310 = vlaneseq
        %v9311 = vshrl.u32 %v9310, 7
        %v9312 = vsub.s32 %v2525, %v9311
        %v9313 = vrot.slane %v8708, %v9312
        %v9314 = vlaneseq
        %v9315 = vshrl.u32 %v9314, 7
        %v9316 = vsub.s32 %v2525, %v9315
        %v9317 = vrot.slane %v8711, %v9316
        %v9318 = vlaneseq
        %v9319 = vshrl.u32 %v9318, 7
        %v9320 = vsub.s32 %v2525, %v9319
        %v9321 = vrot.slane %v8714, %v9320
        %v9322 = vlaneseq
        %v9323 = vshrl.u32 %v9322, 7
        %v9324 = vsub.s32 %v2525, %v9323
        %v9325 = vrot.slane %v8717, %v9324
        %v9326 = vlaneseq
        %v9327 = vshrl.u32 %v9326, 7
        %v9328 = vsub.s32 %v2525, %v9327
        %v9329 = vrot.slane %v8720, %v9328
        %v9330 = vlaneseq
        %v9331 = vshrl.u32 %v9330, 7
        %v9332 = vsub.s32 %v2525, %v9331
        %v9333 = vrot.slane %v8723, %v9332
        %v9334 = vlaneseq
        %v9335 = vshrl.u32 %v9334, 7
        %v9336 = vsub.s32 %v2525, %v9335
        %v9337 = vrot.slane %v8726, %v9336
        %v9338 = vlaneseq
        %v9339 = vshrl.u32 %v9338, 7
        %v9340 = vsub.s32 %v2525, %v9339
        %v9341 = vrot.slane %v8729, %v9340
        %v9342 = vlaneseq
        %v9343 = vshrl.u32 %v9342, 7
        %v9344 = vsub.s32 %v2525, %v9343
        %v9345 = vrot.slane %v8732, %v9344
        %v9346 = vlaneseq
        %v9347 = vshrl.u32 %v9346, 7
        %v9348 = vsub.s32 %v2525, %v9347
        %v9349 = vrot.slane %v8735, %v9348
        %v9350 = vlaneseq
        %v9351 = vshrl.u32 %v9350, 7
        %v9352 = vsub.s32 %v2525, %v9351
        %v9353 = vrot.slane %v8738, %v9352
        %v9354 = vlaneseq
        %v9355 = vshrl.u32 %v9354, 7
        %v9356 = vsub.s32 %v2525, %v9355
        %v9357 = vrot.slane %v8741, %v9356
        %v9358 = vlaneseq
        %v9359 = vshrl.u32 %v9358, 7
        %v9360 = vsub.s32 %v2525, %v9359
        %v9361 = vrot.slane %v8744, %v9360
        %v9362 = vlaneseq
        %v9363 = vshrl.u32 %v9362, 7
        %v9364 = vsub.s32 %v2525, %v9363
        %v9365 = vrot.slane %v8747, %v9364
        %v9366 = vlaneseq
        %v9367 = vshrl.u32 %v9366, 7
        %v9368 = vsub.s32 %v2525, %v9367
        %v9369 = vrot.slane %v8750, %v9368
        %v9370 = vlaneseq
        %v9371 = vshrl.u32 %v9370, 7
        %v9372 = vsub.s32 %v2525, %v9371
        %v9373 = vrot.slane %v8753, %v9372
        %v9374 = vlaneseq
        %v9375 = vshrl.u32 %v9374, 7
        %v9376 = vsub.s32 %v2525, %v9375
        %v9377 = vrot.slane %v8756, %v9376
        %v9378 = vlaneseq
        %v9379 = vshrl.u32 %v9378, 7
        %v9380 = vsub.s32 %v2525, %v9379
        %v9381 = vrot.slane %v8759, %v9380
        %v9382 = vlaneseq
        %v9383 = vshrl.u32 %v9382, 7
        %v9384 = vsub.s32 %v2525, %v9383
        %v9385 = vrot.slane %v8762, %v9384
        %v9386 = vlaneseq
        %v9387 = vshrl.u32 %v9386, 7
        %v9388 = vsub.s32 %v2525, %v9387
        %v9389 = vrot.slane %v8765, %v9388
        %v9390 = vlaneseq
        %v9391 = vshrl.u32 %v9390, 7
        %v9392 = vsub.s32 %v2525, %v9391
        %v9393 = vrot.slane %v8768, %v9392
        %v9394 = vlaneseq
        %v9395 = vshrl.u32 %v9394, 7
        %v9396 = vsub.s32 %v2525, %v9395
        %v9397 = vrot.slane %v8771, %v9396
        %v9398 = vlaneseq
        %v9399 = vshrl.u32 %v9398, 7
        %v9400 = vsub.s32 %v2525, %v9399
        %v9401 = vrot.slane %v8774, %v9400
        %v9402 = vlaneseq
        %v9403 = vshrl.u32 %v9402, 7
        %v9404 = vsub.s32 %v2525, %v9403
        %v9405 = vrot.slane %v8777, %v9404
        %v9406 = vlaneseq
        %v9407 = vshrl.u32 %v9406, 7
        %v9408 = vsub.s32 %v2525, %v9407
        %v9409 = vrot.slane %v8780, %v9408
        %v9410 = vlaneseq
        %v9411 = vshrl.u32 %v9410, 7
        %v9412 = vsub.s32 %v2525, %v9411
        %v9413 = vrot.slane %v8783, %v9412
        %v9414 = vlaneseq
        %v9415 = vshrl.u32 %v9414, 7
        %v9416 = vsub.s32 %v2525, %v9415
        %v9417 = vrot.slane %v8786, %v9416
        %v9418 = vlaneseq
        %v9419 = vshrl.u32 %v9418, 7
        %v9420 = vsub.s32 %v2525, %v9419
        %v9421 = vrot.slane %v8789, %v9420
        %v9422 = vlaneseq
        %v9423 = vshrl.u32 %v9422, 7
        %v9424 = vsub.s32 %v2525, %v9423
        %v9425 = vrot.slane %v8792, %v9424
        %v9426 = vlaneseq
        %v9427 = vshrl.u32 %v9426, 7
        %v9428 = vsub.s32 %v2525, %v9427
        %v9429 = vrot.slane %v8795, %v9428
        %v9430 = vlaneseq
        %v9431 = vshrl.u32 %v9430, 7
        %v9432 = vsub.s32 %v2525, %v9431
        %v9433 = vrot.slane %v8798, %v9432
        %v9434 = vlaneseq
        %v9435 = vshrl.u32 %v9434, 7
        %v9436 = vsub.s32 %v2525, %v9435
        %v9437 = vrot.slane %v8801, %v9436
        %v9438 = vlaneseq
        %v9439 = vshrl.u32 %v9438, 7
        %v9440 = vsub.s32 %v2525, %v9439
        %v9441 = vrot.slane %v8804, %v9440
        %v9442 = vlaneseq
        %v9443 = vshrl.u32 %v9442, 7
        %v9444 = vsub.s32 %v2525, %v9443
        %v9445 = vrot.slane %v8807, %v9444
        %v9446 = vlaneseq
        %v9447 = vshrl.u32 %v9446, 7
        %v9448 = vsub.s32 %v2525, %v9447
        %v9449 = vrot.slane %v8810, %v9448
        %v9450 = vlaneseq
        %v9451 = vshrl.u32 %v9450, 7
        %v9452 = vsub.s32 %v2525, %v9451
        %v9453 = vrot.slane %v8813, %v9452
        %v9454 = vsel %vm3038, %v8949, %v8945
        %v9455 = vsel %vm3040, %v8953, %v9454
        %v9456 = vsel %vm3042, %v8957, %v9455
        %v9457 = vsel %vm3044, %v8961, %v9456
        %v9458 = vsel %vm3046, %v8965, %v9457
        %v9459 = vsel %vm3048, %v8969, %v9458
        %v9460 = vsel %vm3050, %v8973, %v9459
        %v9461 = vsel %vm3038, %v8981, %v8977
        %v9462 = vsel %vm3040, %v8985, %v9461
        %v9463 = vsel %vm3042, %v8989, %v9462
        %v9464 = vsel %vm3044, %v8993, %v9463
        %v9465 = vsel %vm3046, %v8997, %v9464
        %v9466 = vsel %vm3048, %v9001, %v9465
        %v9467 = vsel %vm3050, %v9005, %v9466
        %v9468 = vsel %vm3038, %v9013, %v9009
        %v9469 = vsel %vm3040, %v9017, %v9468
        %v9470 = vsel %vm3042, %v9021, %v9469
        %v9471 = vsel %vm3044, %v9025, %v9470
        %v9472 = vsel %vm3046, %v9029, %v9471
        %v9473 = vsel %vm3048, %v9033, %v9472
        %v9474 = vsel %vm3050, %v9037, %v9473
        %v9475 = vsel %vm3038, %v9045, %v9041
        %v9476 = vsel %vm3040, %v9049, %v9475
        %v9477 = vsel %vm3042, %v9053, %v9476
        %v9478 = vsel %vm3044, %v9057, %v9477
        %v9479 = vsel %vm3046, %v9061, %v9478
        %v9480 = vsel %vm3048, %v9065, %v9479
        %v9481 = vsel %vm3050, %v9069, %v9480
        %v9482 = vsel %vm3038, %v9077, %v9073
        %v9483 = vsel %vm3040, %v9081, %v9482
        %v9484 = vsel %vm3042, %v9085, %v9483
        %v9485 = vsel %vm3044, %v9089, %v9484
        %v9486 = vsel %vm3046, %v9093, %v9485
        %v9487 = vsel %vm3048, %v9097, %v9486
        %v9488 = vsel %vm3050, %v9101, %v9487
        %v9489 = vsel %vm3038, %v9109, %v9105
        %v9490 = vsel %vm3040, %v9113, %v9489
        %v9491 = vsel %vm3042, %v9117, %v9490
        %v9492 = vsel %vm3044, %v9121, %v9491
        %v9493 = vsel %vm3046, %v9125, %v9492
        %v9494 = vsel %vm3048, %v9129, %v9493
        %v9495 = vsel %vm3050, %v9133, %v9494
        %v9496 = vsel %vm3038, %v9141, %v9137
        %v9497 = vsel %vm3040, %v9145, %v9496
        %v9498 = vsel %vm3042, %v9149, %v9497
        %v9499 = vsel %vm3044, %v9153, %v9498
        %v9500 = vsel %vm3046, %v9157, %v9499
        %v9501 = vsel %vm3048, %v9161, %v9500
        %v9502 = vsel %vm3050, %v9165, %v9501
        %v9503 = vsel %vm3038, %v9173, %v9169
        %v9504 = vsel %vm3040, %v9177, %v9503
        %v9505 = vsel %vm3042, %v9181, %v9504
        %v9506 = vsel %vm3044, %v9185, %v9505
        %v9507 = vsel %vm3046, %v9189, %v9506
        %v9508 = vsel %vm3048, %v9193, %v9507
        %v9509 = vsel %vm3050, %v9197, %v9508
        %v9510 = vsel %vm3038, %v9205, %v9201
        %v9511 = vsel %vm3040, %v9209, %v9510
        %v9512 = vsel %vm3042, %v9213, %v9511
        %v9513 = vsel %vm3044, %v9217, %v9512
        %v9514 = vsel %vm3046, %v9221, %v9513
        %v9515 = vsel %vm3048, %v9225, %v9514
        %v9516 = vsel %vm3050, %v9229, %v9515
        %v9517 = vsel %vm3038, %v9237, %v9233
        %v9518 = vsel %vm3040, %v9241, %v9517
        %v9519 = vsel %vm3042, %v9245, %v9518
        %v9520 = vsel %vm3044, %v9249, %v9519
        %v9521 = vsel %vm3046, %v9253, %v9520
        %v9522 = vsel %vm3048, %v9257, %v9521
        %v9523 = vsel %vm3050, %v9261, %v9522
        %v9524 = vsel %vm3038, %v9269, %v9265
        %v9525 = vsel %vm3040, %v9273, %v9524
        %v9526 = vsel %vm3042, %v9277, %v9525
        %v9527 = vsel %vm3044, %v9281, %v9526
        %v9528 = vsel %vm3046, %v9285, %v9527
        %v9529 = vsel %vm3048, %v9289, %v9528
        %v9530 = vsel %vm3050, %v9293, %v9529
        %v9531 = vsel %vm3038, %v9301, %v9297
        %v9532 = vsel %vm3040, %v9305, %v9531
        %v9533 = vsel %vm3042, %v9309, %v9532
        %v9534 = vsel %vm3044, %v9313, %v9533
        %v9535 = vsel %vm3046, %v9317, %v9534
        %v9536 = vsel %vm3048, %v9321, %v9535
        %v9537 = vsel %vm3050, %v9325, %v9536
        %v9538 = vsel %vm3038, %v9333, %v9329
        %v9539 = vsel %vm3040, %v9337, %v9538
        %v9540 = vsel %vm3042, %v9341, %v9539
        %v9541 = vsel %vm3044, %v9345, %v9540
        %v9542 = vsel %vm3046, %v9349, %v9541
        %v9543 = vsel %vm3048, %v9353, %v9542
        %v9544 = vsel %vm3050, %v9357, %v9543
        %v9545 = vsel %vm3038, %v9365, %v9361
        %v9546 = vsel %vm3040, %v9369, %v9545
        %v9547 = vsel %vm3042, %v9373, %v9546
        %v9548 = vsel %vm3044, %v9377, %v9547
        %v9549 = vsel %vm3046, %v9381, %v9548
        %v9550 = vsel %vm3048, %v9385, %v9549
        %v9551 = vsel %vm3050, %v9389, %v9550
        %v9552 = vsel %vm3038, %v9397, %v9393
        %v9553 = vsel %vm3040, %v9401, %v9552
        %v9554 = vsel %vm3042, %v9405, %v9553
        %v9555 = vsel %vm3044, %v9409, %v9554
        %v9556 = vsel %vm3046, %v9413, %v9555
        %v9557 = vsel %vm3048, %v9417, %v9556
        %v9558 = vsel %vm3050, %v9421, %v9557
        %v9559 = vsel %vm3038, %v9429, %v9425
        %v9560 = vsel %vm3040, %v9433, %v9559
        %v9561 = vsel %vm3042, %v9437, %v9560
        %v9562 = vsel %vm3044, %v9441, %v9561
        %v9563 = vsel %vm3046, %v9445, %v9562
        %v9564 = vsel %vm3048, %v9449, %v9563
        %v9565 = vsel %vm3050, %v9453, %v9564
        %v9582 = vadd.f32 %v8414, %v9460
        %v9583 = vadd.f32 %v8415, %v9467
        %v9584 = vadd.f32 %v8416, %v9474
        %v9585 = vadd.f32 %v8417, %v9481
        %v9586 = vadd.f32 %v8418, %v9488
        %v9587 = vadd.f32 %v8419, %v9495
        %v9588 = vadd.f32 %v8420, %v9502
        %v9589 = vadd.f32 %v8421, %v9509
        %v9590 = vadd.f32 %v8422, %v9516
        %v9591 = vadd.f32 %v8423, %v9523
        %v9592 = vadd.f32 %v8424, %v9530
        %v9593 = vadd.f32 %v8425, %v9537
        %v9594 = vadd.f32 %v8426, %v9544
        %v9595 = vadd.f32 %v8427, %v9551
        %v9596 = vadd.f32 %v8428, %v9558
        %v9597 = vadd.f32 %v8429, %v9565
        %9598 = vst.msk [vmem:[#allocation4] sm:$0xff] %vm3173, %v9582
        %9599 = vst.msk [vmem:[#allocation4 + $0x8] sm:$0xff] %vm3173, %v9583
        %9600 = vst.msk [vmem:[#allocation4 + $0x10] sm:$0xff] %vm3173, %v9584
        %9601 = vst.msk [vmem:[#allocation4 + $0x18] sm:$0xff] %vm3173, %v9585
        %9602 = vst.msk [vmem:[#allocation4 + $0x20] sm:$0xff] %vm3173, %v9586
        %9603 = vst.msk [vmem:[#allocation4 + $0x28] sm:$0xff] %vm3173, %v9587
        %9604 = vst.msk [vmem:[#allocation4 + $0x30] sm:$0xff] %vm3173, %v9588
        %9605 = vst.msk [vmem:[#allocation4 + $0x38] sm:$0xff] %vm3173, %v9589
        %9606 = vst.msk [vmem:[#allocation4 + $0x40] sm:$0xff] %vm3173, %v9590
        %9607 = vst.msk [vmem:[#allocation4 + $0x48] sm:$0xff] %vm3173, %v9591
        %9608 = vst.msk [vmem:[#allocation4 + $0x50] sm:$0xff] %vm3173, %v9592
        %9609 = vst.msk [vmem:[#allocation4 + $0x58] sm:$0xff] %vm3173, %v9593
        %9610 = vst.msk [vmem:[#allocation4 + $0x60] sm:$0xff] %vm3173, %v9594
        %9611 = vst.msk [vmem:[#allocation4 + $0x68] sm:$0xff] %vm3173, %v9595
        %9612 = vst.msk [vmem:[#allocation4 + $0x70] sm:$0xff] %vm3173, %v9596
        %9613 = vst.msk [vmem:[#allocation4 + $0x78] sm:$0xff] %vm3173, %v9597
        %vm9614 = vcmask 7168
        %9615 = vst.msk [vmem:[#allocation3] sm:$0xff] %vm9614, %v3222
        %9616 = vst.msk [vmem:[#allocation3 + $0x8] sm:$0xff] %vm9614, %v3223
        %9617 = vst.msk [vmem:[#allocation3 + $0x10] sm:$0xff] %vm9614, %v3224
        %9618 = vst.msk [vmem:[#allocation3 + $0x18] sm:$0xff] %vm9614, %v3225
        %9619 = vst.msk [vmem:[#allocation3 + $0x20] sm:$0xff] %vm9614, %v3226
        %9620 = vst.msk [vmem:[#allocation3 + $0x28] sm:$0xff] %vm9614, %v3227
        %9621 = vst.msk [vmem:[#allocation3 + $0x30] sm:$0xff] %vm9614, %v3228
        %9622 = vst.msk [vmem:[#allocation3 + $0x38] sm:$0xff] %vm9614, %v3229
        %9623 = vst.msk [vmem:[#allocation3 + $0x40] sm:$0xff] %vm9614, %v3230
        %9624 = vst.msk [vmem:[#allocation3 + $0x48] sm:$0xff] %vm9614, %v3231
        %9625 = vst.msk [vmem:[#allocation3 + $0x50] sm:$0xff] %vm9614, %v3232
        %9626 = vst.msk [vmem:[#allocation3 + $0x58] sm:$0xff] %vm9614, %v3233
        %9627 = vst.msk [vmem:[#allocation3 + $0x60] sm:$0xff] %vm9614, %v3234
        %9628 = vst.msk [vmem:[#allocation3 + $0x68] sm:$0xff] %vm9614, %v3235
        %9629 = vst.msk [vmem:[#allocation3 + $0x70] sm:$0xff] %vm9614, %v3236
        %9630 = vst.msk [vmem:[#allocation3 + $0x78] sm:$0xff] %vm9614, %v3237
        %p9631 = scmp.eq.s32.totalorder %s31, 1
        // Predicated region
        $region57: #{tpu_custom_call.1} parent=43 // pred_check
          %p9632 = pneg %p9631
        $region58: #{tpu_custom_call.1} parent=43 // pred_check_branch
          %9634 = sbr.rel (%p9632) target = $region60
        $region59: #{tpu_custom_call.1} parent=43 // pred_region
          %v9635 = vld [vmem:[#allocation2] sm:$0xff]
          %v9636 = vld [vmem:[#allocation2 + $0x8] sm:$0xff]
          %v9637 = vld [vmem:[#allocation2 + $0x10] sm:$0xff]
          %v9638 = vld [vmem:[#allocation2 + $0x18] sm:$0xff]
          %v9639 = vld [vmem:[#allocation2 + $0x20] sm:$0xff]
          %v9640 = vld [vmem:[#allocation2 + $0x28] sm:$0xff]
          %v9641 = vld [vmem:[#allocation2 + $0x30] sm:$0xff]
          %v9642 = vld [vmem:[#allocation2 + $0x38] sm:$0xff]
          %v9643 = vld [vmem:[#allocation2 + $0x40] sm:$0xff]
          %v9644 = vld [vmem:[#allocation2 + $0x48] sm:$0xff]
          %v9645 = vld [vmem:[#allocation2 + $0x50] sm:$0xff]
          %v9646 = vld [vmem:[#allocation2 + $0x58] sm:$0xff]
          %v9647 = vld [vmem:[#allocation2 + $0x60] sm:$0xff]
          %v9648 = vld [vmem:[#allocation2 + $0x68] sm:$0xff]
          %v9649 = vld [vmem:[#allocation2 + $0x70] sm:$0xff]
          %v9650 = vld [vmem:[#allocation2 + $0x78] sm:$0xff]
          %v9651 = vld [vmem:[#allocation3] sm:$0xff]
          %v9652 = vld [vmem:[#allocation3 + $0x8] sm:$0xff]
          %v9653 = vld [vmem:[#allocation3 + $0x10] sm:$0xff]
          %v9654 = vld [vmem:[#allocation3 + $0x18] sm:$0xff]
          %v9655 = vld [vmem:[#allocation3 + $0x20] sm:$0xff]
          %v9656 = vld [vmem:[#allocation3 + $0x28] sm:$0xff]
          %v9657 = vld [vmem:[#allocation3 + $0x30] sm:$0xff]
          %v9658 = vld [vmem:[#allocation3 + $0x38] sm:$0xff]
          %v9659 = vld [vmem:[#allocation3 + $0x40] sm:$0xff]
          %v9660 = vld [vmem:[#allocation3 + $0x48] sm:$0xff]
          %v9661 = vld [vmem:[#allocation3 + $0x50] sm:$0xff]
          %v9662 = vld [vmem:[#allocation3 + $0x58] sm:$0xff]
          %v9663 = vld [vmem:[#allocation3 + $0x60] sm:$0xff]
          %v9664 = vld [vmem:[#allocation3 + $0x68] sm:$0xff]
          %v9665 = vld [vmem:[#allocation3 + $0x70] sm:$0xff]
          %v9666 = vld [vmem:[#allocation3 + $0x78] sm:$0xff]
          %9668 = vset.pattern.permute.xlu0 0
          %9669 = vperm.xlu0 %9668, %v9651
          %v9670 = vpop.permute.xlu0 %9669
          %9673 = vset.pattern.permute.xlu0 0
          %9674 = vperm.xlu0 %9673, %v9652
          %v9675 = vpop.permute.xlu0 %9674
          %9678 = vset.pattern.permute.xlu0 0
          %9679 = vperm.xlu0 %9678, %v9653
          %v9680 = vpop.permute.xlu0 %9679
          %9683 = vset.pattern.permute.xlu0 0
          %9684 = vperm.xlu0 %9683, %v9654
          %v9685 = vpop.permute.xlu0 %9684
          %9688 = vset.pattern.permute.xlu0 0
          %9689 = vperm.xlu0 %9688, %v9655
          %v9690 = vpop.permute.xlu0 %9689
          %9693 = vset.pattern.permute.xlu0 0
          %9694 = vperm.xlu0 %9693, %v9656
          %v9695 = vpop.permute.xlu0 %9694
          %9698 = vset.pattern.permute.xlu0 0
          %9699 = vperm.xlu0 %9698, %v9657
          %v9700 = vpop.permute.xlu0 %9699
          %9703 = vset.pattern.permute.xlu0 0
          %9704 = vperm.xlu0 %9703, %v9658
          %v9705 = vpop.permute.xlu0 %9704
          %9708 = vset.pattern.permute.xlu0 0
          %9709 = vperm.xlu0 %9708, %v9659
          %v9710 = vpop.permute.xlu0 %9709
          %9713 = vset.pattern.permute.xlu0 0
          %9714 = vperm.xlu0 %9713, %v9660
          %v9715 = vpop.permute.xlu0 %9714
          %9718 = vset.pattern.permute.xlu0 0
          %9719 = vperm.xlu0 %9718, %v9661
          %v9720 = vpop.permute.xlu0 %9719
          %9723 = vset.pattern.permute.xlu0 0
          %9724 = vperm.xlu0 %9723, %v9662
          %v9725 = vpop.permute.xlu0 %9724
          %9728 = vset.pattern.permute.xlu0 0
          %9729 = vperm.xlu0 %9728, %v9663
          %v9730 = vpop.permute.xlu0 %9729
          %9733 = vset.pattern.permute.xlu0 0
          %9734 = vperm.xlu0 %9733, %v9664
          %v9735 = vpop.permute.xlu0 %9734
          %9738 = vset.pattern.permute.xlu0 0
          %9739 = vperm.xlu0 %9738, %v9665
          %v9740 = vpop.permute.xlu0 %9739
          %9743 = vset.pattern.permute.xlu0 0
          %9744 = vperm.xlu0 %9743, %v9666
          %v9745 = vpop.permute.xlu0 %9744
          %v9747 = vsub.f32 %v9635, %v9670
          %v9748 = vsub.f32 %v9636, %v9675
          %v9749 = vsub.f32 %v9637, %v9680
          %v9750 = vsub.f32 %v9638, %v9685
          %v9751 = vsub.f32 %v9639, %v9690
          %v9752 = vsub.f32 %v9640, %v9695
          %v9753 = vsub.f32 %v9641, %v9700
          %v9754 = vsub.f32 %v9642, %v9705
          %v9755 = vsub.f32 %v9643, %v9710
          %v9756 = vsub.f32 %v9644, %v9715
          %v9757 = vsub.f32 %v9645, %v9720
          %v9758 = vsub.f32 %v9646, %v9725
          %v9759 = vsub.f32 %v9647, %v9730
          %v9760 = vsub.f32 %v9648, %v9735
          %v9761 = vsub.f32 %v9649, %v9740
          %v9762 = vsub.f32 %v9650, %v9745
          %v9763 = vmul.f32 %v9747, 1.442695
          %v9764 = vpow.pop %v9763
          %v9765 = vmul.f32 %v9748, 1.442695
          %v9766 = vpow.pop %v9765
          %v9767 = vmul.f32 %v9749, 1.442695
          %v9768 = vpow.pop %v9767
          %v9769 = vmul.f32 %v9750, 1.442695
          %v9770 = vpow.pop %v9769
          %v9771 = vmul.f32 %v9751, 1.442695
          %v9772 = vpow.pop %v9771
          %v9773 = vmul.f32 %v9752, 1.442695
          %v9774 = vpow.pop %v9773
          %v9775 = vmul.f32 %v9753, 1.442695
          %v9776 = vpow.pop %v9775
          %v9777 = vmul.f32 %v9754, 1.442695
          %v9778 = vpow.pop %v9777
          %v9779 = vmul.f32 %v9755, 1.442695
          %v9780 = vpow.pop %v9779
          %v9781 = vmul.f32 %v9756, 1.442695
          %v9782 = vpow.pop %v9781
          %v9783 = vmul.f32 %v9757, 1.442695
          %v9784 = vpow.pop %v9783
          %v9785 = vmul.f32 %v9758, 1.442695
          %v9786 = vpow.pop %v9785
          %v9787 = vmul.f32 %v9759, 1.442695
          %v9788 = vpow.pop %v9787
          %v9789 = vmul.f32 %v9760, 1.442695
          %v9790 = vpow.pop %v9789
          %v9791 = vmul.f32 %v9761, 1.442695
          %v9792 = vpow.pop %v9791
          %v9793 = vmul.f32 %v9762, 1.442695
          %v9794 = vpow.pop %v9793
          %v9795 = vld [vmem:[#allocation4] sm:$0xff]
          %v9796 = vld [vmem:[#allocation4 + $0x8] sm:$0xff]
          %v9797 = vld [vmem:[#allocation4 + $0x10] sm:$0xff]
          %v9798 = vld [vmem:[#allocation4 + $0x18] sm:$0xff]
          %v9799 = vld [vmem:[#allocation4 + $0x20] sm:$0xff]
          %v9800 = vld [vmem:[#allocation4 + $0x28] sm:$0xff]
          %v9801 = vld [vmem:[#allocation4 + $0x30] sm:$0xff]
          %v9802 = vld [vmem:[#allocation4 + $0x38] sm:$0xff]
          %v9803 = vld [vmem:[#allocation4 + $0x40] sm:$0xff]
          %v9804 = vld [vmem:[#allocation4 + $0x48] sm:$0xff]
          %v9805 = vld [vmem:[#allocation4 + $0x50] sm:$0xff]
          %v9806 = vld [vmem:[#allocation4 + $0x58] sm:$0xff]
          %v9807 = vld [vmem:[#allocation4 + $0x60] sm:$0xff]
          %v9808 = vld [vmem:[#allocation4 + $0x68] sm:$0xff]
          %v9809 = vld [vmem:[#allocation4 + $0x70] sm:$0xff]
          %v9810 = vld [vmem:[#allocation4 + $0x78] sm:$0xff]
          %9827 = vrot.lane.b32.xlu0 %v9795, 8
          %v9828 = vpop.permute.xlu0 %9827
          %9829 = vrot.lane.b32.xlu0 %v9796, 8
          %v9830 = vpop.permute.xlu0 %9829
          %9831 = vrot.lane.b32.xlu0 %v9797, 8
          %v9832 = vpop.permute.xlu0 %9831
          %9833 = vrot.lane.b32.xlu0 %v9798, 8
          %v9834 = vpop.permute.xlu0 %9833
          %9835 = vrot.lane.b32.xlu0 %v9799, 8
          %v9836 = vpop.permute.xlu0 %9835
          %9837 = vrot.lane.b32.xlu0 %v9800, 8
          %v9838 = vpop.permute.xlu0 %9837
          %9839 = vrot.lane.b32.xlu0 %v9801, 8
          %v9840 = vpop.permute.xlu0 %9839
          %9841 = vrot.lane.b32.xlu0 %v9802, 8
          %v9842 = vpop.permute.xlu0 %9841
          %9843 = vrot.lane.b32.xlu0 %v9803, 8
          %v9844 = vpop.permute.xlu0 %9843
          %9845 = vrot.lane.b32.xlu0 %v9804, 8
          %v9846 = vpop.permute.xlu0 %9845
          %9847 = vrot.lane.b32.xlu0 %v9805, 8
          %v9848 = vpop.permute.xlu0 %9847
          %9849 = vrot.lane.b32.xlu0 %v9806, 8
          %v9850 = vpop.permute.xlu0 %9849
          %9851 = vrot.lane.b32.xlu0 %v9807, 8
          %v9852 = vpop.permute.xlu0 %9851
          %9853 = vrot.lane.b32.xlu0 %v9808, 8
          %v9854 = vpop.permute.xlu0 %9853
          %9855 = vrot.lane.b32.xlu0 %v9809, 8
          %v9856 = vpop.permute.xlu0 %9855
          %9857 = vrot.lane.b32.xlu0 %v9810, 8
          %v9858 = vpop.permute.xlu0 %9857
          %v9875 = vsel %vm3173, %v9764, %v9828
          %v9876 = vsel %vm3173, %v9766, %v9830
          %v9877 = vsel %vm3173, %v9768, %v9832
          %v9878 = vsel %vm3173, %v9770, %v9834
          %v9879 = vsel %vm3173, %v9772, %v9836
          %v9880 = vsel %vm3173, %v9774, %v9838
          %v9881 = vsel %vm3173, %v9776, %v9840
          %v9882 = vsel %vm3173, %v9778, %v9842
          %v9883 = vsel %vm3173, %v9780, %v9844
          %v9884 = vsel %vm3173, %v9782, %v9846
          %v9885 = vsel %vm3173, %v9784, %v9848
          %v9886 = vsel %vm3173, %v9786, %v9850
          %v9887 = vsel %vm3173, %v9788, %v9852
          %v9888 = vsel %vm3173, %v9790, %v9854
          %v9889 = vsel %vm3173, %v9792, %v9856
          %v9890 = vsel %vm3173, %v9794, %v9858
          %vm9891 = vcmask 130048
          %v9892 = vsel %vm9891, %v9875, %v9764
          %v9893 = vsel %vm9891, %v9876, %v9766
          %v9894 = vsel %vm9891, %v9877, %v9768
          %v9895 = vsel %vm9891, %v9878, %v9770
          %v9896 = vsel %vm9891, %v9879, %v9772
          %v9897 = vsel %vm9891, %v9880, %v9774
          %v9898 = vsel %vm9891, %v9881, %v9776
          %v9899 = vsel %vm9891, %v9882, %v9778
          %v9900 = vsel %vm9891, %v9883, %v9780
          %v9901 = vsel %vm9891, %v9884, %v9782
          %v9902 = vsel %vm9891, %v9885, %v9784
          %v9903 = vsel %vm9891, %v9886, %v9786
          %v9904 = vsel %vm9891, %v9887, %v9788
          %v9905 = vsel %vm9891, %v9888, %v9790
          %v9906 = vsel %vm9891, %v9889, %v9792
          %v9907 = vsel %vm9891, %v9890, %v9794
          %vm9908 = vcmask 162816
          %v9909 = vsel %vm9908, %v9892, 0.0
          %9910 = vadd.xlane.f32.xlu0 %v9909
          %v9911 = vpop.xlane.xlu0 %9910
          %v9912 = vsel %vm9908, %v9893, 0.0
          %9913 = vadd.xlane.f32.xlu0 %v9912
          %v9914 = vpop.xlane.xlu0 %9913
          %v9915 = vsel %vm9908, %v9894, 0.0
          %9916 = vadd.xlane.f32.xlu0 %v9915
          %v9917 = vpop.xlane.xlu0 %9916
          %v9918 = vsel %vm9908, %v9895, 0.0
          %9919 = vadd.xlane.f32.xlu0 %v9918
          %v9920 = vpop.xlane.xlu0 %9919
          %v9921 = vsel %vm9908, %v9896, 0.0
          %9922 = vadd.xlane.f32.xlu0 %v9921
          %v9923 = vpop.xlane.xlu0 %9922
          %v9924 = vsel %vm9908, %v9897, 0.0
          %9925 = vadd.xlane.f32.xlu0 %v9924
          %v9926 = vpop.xlane.xlu0 %9925
          %v9927 = vsel %vm9908, %v9898, 0.0
          %9928 = vadd.xlane.f32.xlu0 %v9927
          %v9929 = vpop.xlane.xlu0 %9928
          %v9930 = vsel %vm9908, %v9899, 0.0
          %9931 = vadd.xlane.f32.xlu0 %v9930
          %v9932 = vpop.xlane.xlu0 %9931
          %v9933 = vsel %vm9908, %v9900, 0.0
          %9934 = vadd.xlane.f32.xlu0 %v9933
          %v9935 = vpop.xlane.xlu0 %9934
          %v9936 = vsel %vm9908, %v9901, 0.0
          %9937 = vadd.xlane.f32.xlu0 %v9936
          %v9938 = vpop.xlane.xlu0 %9937
          %v9939 = vsel %vm9908, %v9902, 0.0
          %9940 = vadd.xlane.f32.xlu0 %v9939
          %v9941 = vpop.xlane.xlu0 %9940
          %v9942 = vsel %vm9908, %v9903, 0.0
          %9943 = vadd.xlane.f32.xlu0 %v9942
          %v9944 = vpop.xlane.xlu0 %9943
          %v9945 = vsel %vm9908, %v9904, 0.0
          %9946 = vadd.xlane.f32.xlu0 %v9945
          %v9947 = vpop.xlane.xlu0 %9946
          %v9948 = vsel %vm9908, %v9905, 0.0
          %9949 = vadd.xlane.f32.xlu0 %v9948
          %v9950 = vpop.xlane.xlu0 %9949
          %v9951 = vsel %vm9908, %v9906, 0.0
          %9952 = vadd.xlane.f32.xlu0 %v9951
          %v9953 = vpop.xlane.xlu0 %9952
          %v9954 = vsel %vm9908, %v9907, 0.0
          %9955 = vadd.xlane.f32.xlu0 %v9954
          %v9956 = vpop.xlane.xlu0 %9955
          %v9957 = vrcp.pop %v9911
          %v9958 = vrcp.pop %v9914
          %v9959 = vrcp.pop %v9917
          %v9960 = vrcp.pop %v9920
          %v9961 = vrcp.pop %v9923
          %v9962 = vrcp.pop %v9926
          %v9963 = vrcp.pop %v9929
          %v9964 = vrcp.pop %v9932
          %v9965 = vrcp.pop %v9935
          %v9966 = vrcp.pop %v9938
          %v9967 = vrcp.pop %v9941
          %v9968 = vrcp.pop %v9944
          %v9969 = vrcp.pop %v9947
          %v9970 = vrcp.pop %v9950
          %v9971 = vrcp.pop %v9953
          %v9972 = vrcp.pop %v9956
          %v9973 = vmul.f32 %v9892, %v9957
          %v9974 = vmul.f32 %v9893, %v9958
          %v9975 = vmul.f32 %v9894, %v9959
          %v9976 = vmul.f32 %v9895, %v9960
          %v9977 = vmul.f32 %v9896, %v9961
          %v9978 = vmul.f32 %v9897, %v9962
          %v9979 = vmul.f32 %v9898, %v9963
          %v9980 = vmul.f32 %v9899, %v9964
          %v9981 = vmul.f32 %v9900, %v9965
          %v9982 = vmul.f32 %v9901, %v9966
          %v9983 = vmul.f32 %v9902, %v9967
          %v9984 = vmul.f32 %v9903, %v9968
          %v9985 = vmul.f32 %v9904, %v9969
          %v9986 = vmul.f32 %v9905, %v9970
          %v9987 = vmul.f32 %v9906, %v9971
          %v9988 = vmul.f32 %v9907, %v9972
          %v9989 = vld [vmem:[%s4] sm:$0xff]
          %v9990 = vld [vmem:[%s4 + $0x8] sm:$0xff]
          %v9991 = vld [vmem:[%s4 + $0x10] sm:$0xf]
          %v9992 = vld [vmem:[%s5] sm:$0x1]
          %v9994 = vlaneseq
          %v9995 = vshrl.u32 %v9994, 7
          %v9996 = vsub.s32 0, %v9995
          %v9997 = vrot.slane %v9992, %v9996
          %v10000 = vsel %vm9908, %v9973, 0
          %v10003 = vsel %vm9908, %v9974, 0
          %v10006 = vsel %vm9908, %v9975, 0
          %v10009 = vsel %vm9908, %v9976, 0
          %v10012 = vsel %vm9908, %v9977, 0
          %v10015 = vsel %vm9908, %v9978, 0
          %v10018 = vsel %vm9908, %v9979, 0
          %v10021 = vsel %vm9908, %v9980, 0
          %v10024 = vsel %vm9908, %v9981, 0
          %v10027 = vsel %vm9908, %v9982, 0
          %v10030 = vsel %vm9908, %v9983, 0
          %v10033 = vsel %vm9908, %v9984, 0
          %v10036 = vsel %vm9908, %v9985, 0
          %v10039 = vsel %vm9908, %v9986, 0
          %v10042 = vsel %vm9908, %v9987, 0
          %v10045 = vsel %vm9908, %v9988, 0
          %vm10047 = vcmask 1043456
          %v10049 = vsel %vm10047, %v9991, 0
          %10051 = vmatprep.subr.mxu0 0.0
          %10052 = vmatpush1.msra.mxu0 %v9989
          %10053 = vmatprep.subr.mxu0 0.0
          %10054 = vmatpush1.msra.mxu0 %v9990
          %10055 = vmatprep.subr.mxu0 0.0
          %10056 = vmatpush1.msra.mxu0 %v10049
          %10057 = vmatprep.subr.mxu0 0.0
          %10058 = vmatpush1.msra.mxu0 0.0
          %10059 = vmatprep.subr.mxu0 0.0
          %10060 = vmatpush1.msra.mxu0 0.0
          %10061 = vmatprep.subr.mxu0 0.0
          %10062 = vmatpush1.msra.mxu0 0.0
          %10063 = vmatprep.subr.mxu0 0.0
          %10064 = vmatpush1.msra.mxu0 0.0
          %10065 = vmatprep.subr.mxu0 0.0
          %10066 = vmatpush1.msra.mxu0 0.0
          %10067 = vmatprep.subr.mxu0 0.0
          %10068 = vmatpush1.msra.mxu0 0.0
          %10069 = vmatprep.subr.mxu0 0.0
          %10070 = vmatpush1.msra.mxu0 0.0
          %10071 = vmatprep.subr.mxu0 0.0
          %10072 = vmatpush1.msra.mxu0 0.0
          %10073 = vmatprep.subr.mxu0 0.0
          %10074 = vmatpush1.msra.mxu0 0.0
          %10075 = vmatprep.subr.mxu0 0.0
          %10076 = vmatpush1.msra.mxu0 0.0
          %10077 = vmatprep.subr.mxu0 0.0
          %10078 = vmatpush1.msra.mxu0 0.0
          %10079 = vmatprep.subr.mxu0 0.0
          %10080 = vmatpush1.msra.mxu0 0.0
          %10081 = vmatprep.subr.mxu0 0.0
          %10082 = vmatpush1.msra.mxu0 0.0
          %10083 = vmatprep.subr.mxu0 0.0
          %10084 = vmatpush1.msra.mxu0 0.0
          %10085 = vmatprep.subr.mxu0 0.0
          %10086 = vmatpush1.msra.mxu0 0.0
          %10087 = vmatprep.subr.mxu0 0.0
          %10088 = vmatpush1.msra.mxu0 0.0
          %10089 = vmatprep.subr.mxu0 0.0
          %10090 = vmatpush1.msra.mxu0 0.0
          %10091 = vmatprep.subr.mxu0 0.0
          %10092 = vmatpush1.msra.mxu0 0.0
          %10093 = vmatprep.subr.mxu0 0.0
          %10094 = vmatpush1.msra.mxu0 0.0
          %10095 = vmatprep.subr.mxu0 0.0
          %10096 = vmatpush1.msra.mxu0 0.0
          %10097 = vmatprep.subr.mxu0 0.0
          %10098 = vmatpush1.msra.mxu0 0.0
          %10099 = vmatprep.subr.mxu0 0.0
          %10100 = vmatpush1.msra.mxu0 0.0
          %10101 = vmatprep.subr.mxu0 0.0
          %10102 = vmatpush1.msra.mxu0 0.0
          %10103 = vmatprep.subr.mxu0 0.0
          %10104 = vmatpush1.msra.mxu0 0.0
          %10105 = vmatprep.subr.mxu0 0.0
          %10106 = vmatpush1.msra.mxu0 0.0
          %10107 = vmatprep.subr.mxu0 0.0
          %10108 = vmatpush1.msra.mxu0 0.0
          %10109 = vmatprep.subr.mxu0 0.0
          %10110 = vmatpush1.msra.mxu0 0.0
          %10111 = vmatprep.subr.mxu0 0.0
          %10112 = vmatpush1.msra.mxu0 0.0
          %10113 = vmatprep.subr.mxu0 0.0
          %10114 = vmatpush1.msra.mxu0 0.0
          %10115 = vmatprep.mubr.f32.mxu0 0.0
          %10116 = vmatmul.mubr.f32.gmra.mrb[0].mxu0 %v10000
          %v10117 = vpop.f32.mrb[0].mxu0
          %v10118 = vadd.f32 %v9997, %v10117
          %v10119 = vpop.f32.mrb[0].mxu0
          %10120 = vmatprep.mubr.f32.mxu0 0.0
          %10121 = vmatmul.mubr.f32.gmra.mrb[0].mxu0 %v10003
          %v10122 = vpop.f32.mrb[0].mxu0
          %v10123 = vadd.f32 %v9997, %v10122
          %v10124 = vpop.f32.mrb[0].mxu0
          %10125 = vmatprep.mubr.f32.mxu0 0.0
          %10126 = vmatmul.mubr.f32.gmra.mrb[0].mxu0 %v10006
          %v10127 = vpop.f32.mrb[0].mxu0
          %v10128 = vadd.f32 %v9997, %v10127
          %v10129 = vpop.f32.mrb[0].mxu0
          %10130 = vmatprep.mubr.f32.mxu0 0.0
          %10131 = vmatmul.mubr.f32.gmra.mrb[0].mxu0 %v10009
          %v10132 = vpop.f32.mrb[0].mxu0
          %v10133 = vadd.f32 %v9997, %v10132
          %v10134 = vpop.f32.mrb[0].mxu0
          %10135 = vmatprep.mubr.f32.mxu0 0.0
          %10136 = vmatmul.mubr.f32.gmra.mrb[0].mxu0 %v10012
          %v10137 = vpop.f32.mrb[0].mxu0
          %v10138 = vadd.f32 %v9997, %v10137
          %v10139 = vpop.f32.mrb[0].mxu0
          %10140 = vmatprep.mubr.f32.mxu0 0.0
          %10141 = vmatmul.mubr.f32.gmra.mrb[0].mxu0 %v10015
          %v10142 = vpop.f32.mrb[0].mxu0
          %v10143 = vadd.f32 %v9997, %v10142
          %v10144 = vpop.f32.mrb[0].mxu0
          %10145 = vmatprep.mubr.f32.mxu0 0.0
          %10146 = vmatmul.mubr.f32.gmra.mrb[0].mxu0 %v10018
          %v10147 = vpop.f32.mrb[0].mxu0
          %v10148 = vadd.f32 %v9997, %v10147
          %v10149 = vpop.f32.mrb[0].mxu0
          %10150 = vmatprep.mubr.f32.mxu0 0.0
          %10151 = vmatmul.mubr.f32.gmra.mrb[0].mxu0 %v10021
          %v10152 = vpop.f32.mrb[0].mxu0
          %v10153 = vadd.f32 %v9997, %v10152
          %v10154 = vpop.f32.mrb[0].mxu0
          %10155 = vmatprep.mubr.f32.mxu0 0.0
          %10156 = vmatmul.mubr.f32.gmra.mrb[0].mxu0 %v10024
          %v10157 = vpop.f32.mrb[0].mxu0
          %v10158 = vadd.f32 %v9997, %v10157
          %v10159 = vpop.f32.mrb[0].mxu0
          %10160 = vmatprep.mubr.f32.mxu0 0.0
          %10161 = vmatmul.mubr.f32.gmra.mrb[0].mxu0 %v10027
          %v10162 = vpop.f32.mrb[0].mxu0
          %v10163 = vadd.f32 %v9997, %v10162
          %v10164 = vpop.f32.mrb[0].mxu0
          %10165 = vmatprep.mubr.f32.mxu0 0.0
          %10166 = vmatmul.mubr.f32.gmra.mrb[0].mxu0 %v10030
          %v10167 = vpop.f32.mrb[0].mxu0
          %v10168 = vadd.f32 %v9997, %v10167
          %v10169 = vpop.f32.mrb[0].mxu0
          %10170 = vmatprep.mubr.f32.mxu0 0.0
          %10171 = vmatmul.mubr.f32.gmra.mrb[0].mxu0 %v10033
          %v10172 = vpop.f32.mrb[0].mxu0
          %v10173 = vadd.f32 %v9997, %v10172
          %v10174 = vpop.f32.mrb[0].mxu0
          %10175 = vmatprep.mubr.f32.mxu0 0.0
          %10176 = vmatmul.mubr.f32.gmra.mrb[0].mxu0 %v10036
          %v10177 = vpop.f32.mrb[0].mxu0
          %v10178 = vadd.f32 %v9997, %v10177
          %v10179 = vpop.f32.mrb[0].mxu0
          %10180 = vmatprep.mubr.f32.mxu0 0.0
          %10181 = vmatmul.mubr.f32.gmra.mrb[0].mxu0 %v10039
          %v10182 = vpop.f32.mrb[0].mxu0
          %v10183 = vadd.f32 %v9997, %v10182
          %v10184 = vpop.f32.mrb[0].mxu0
          %10185 = vmatprep.mubr.f32.mxu0 0.0
          %10186 = vmatmul.mubr.f32.gmra.mrb[0].mxu0 %v10042
          %v10187 = vpop.f32.mrb[0].mxu0
          %v10188 = vadd.f32 %v9997, %v10187
          %v10189 = vpop.f32.mrb[0].mxu0
          %10190 = vmatprep.mubr.f32.mxu0 0.0
          %10191 = vmatmul.mubr.f32.gmra.mrb[0].mxu0 %v10045
          %v10192 = vpop.f32.mrb[0].mxu0
          %v10193 = vadd.f32 %v9997, %v10192
          %v10194 = vpop.f32.mrb[0].mxu0
          %10195 = vdwg.mxu0
          %10196 = vst [vmem:[%s342] sm:$0xff] %v10118
          %10197 = vst [vmem:[%s342 + $0x8] sm:$0xff] %v10123
          %10198 = vst [vmem:[%s342 + $0x10] sm:$0xff] %v10128
          %10199 = vst [vmem:[%s342 + $0x18] sm:$0xff] %v10133
          %10200 = vst [vmem:[%s342 + $0x20] sm:$0xff] %v10138
          %10201 = vst [vmem:[%s342 + $0x28] sm:$0xff] %v10143
          %10202 = vst [vmem:[%s342 + $0x30] sm:$0xff] %v10148
          %10203 = vst [vmem:[%s342 + $0x38] sm:$0xff] %v10153
          %10204 = vst [vmem:[%s342 + $0x40] sm:$0xff] %v10158
          %10205 = vst [vmem:[%s342 + $0x48] sm:$0xff] %v10163
          %10206 = vst [vmem:[%s342 + $0x50] sm:$0xff] %v10168
          %10207 = vst [vmem:[%s342 + $0x58] sm:$0xff] %v10173
          %10208 = vst [vmem:[%s342 + $0x60] sm:$0xff] %v10178
          %10209 = vst [vmem:[%s342 + $0x68] sm:$0xff] %v10183
          %10210 = vst [vmem:[%s342 + $0x70] sm:$0xff] %v10188
          %10211 = vst [vmem:[%s342 + $0x78] sm:$0xff] %v10193
        $region60: #{tpu_custom_call.1} parent=43 // pred_fallthru
          _
        %s10212 = sand.u32 %s189, 1
        %s10213 = scalar_lea.sflag [#allocation7], %s10212
        %s10214 = sand.u32 %s189, 1
        %s10215 = smul.addr %s10214, 128
        %s10216 = scalar_lea.vmem [#allocation10], %s10215
        // Predicated region
        $region61: #{tpu_custom_call.1} parent=43 // pred_check
          %p10217 = pneg %p199
        $region62: #{tpu_custom_call.1} parent=43 // pred_check_branch
          %10219 = sbr.rel (%p10217) target = $region64
        $region63: #{tpu_custom_call.1} parent=43 // pred_region
          %s10220 = smul.u32 16, %s30
          %s10222 = ssub.s32 2048, 2048
          %10223 = vsyncadd %s10213, %s10222
          %s10224 = smul.addr %s10220, 128
          %s10225 = scalar_lea.hbm %s6, %s10224
          %s10226 = sshll.u32 %s10216, 4
          %s10227 = int_to_ptr.vmem [resolvable:$true] %s10226
          %10232 = dma.vmem_to_hbm [thread:$0]  %s10227, 2048, %s10225, %s10213, 128, 128, 8
        $region64: #{tpu_custom_call.1} parent=43 // pred_fallthru
          _
      $region44: #{tpu_custom_call.1} parent=5 // pred_fallthru
        _
      %p10233 = scmp.le.s32.totalorder 2, %s21
      // Predicated region
      $region65: #{tpu_custom_call.1} parent=5 // pred_check
        %p10234 = pneg %p10233
      $region66: #{tpu_custom_call.1} parent=5 // pred_check_branch
        %10236 = sbr.rel (%p10234) target = $region68
      $region67: #{tpu_custom_call.1} parent=5 // pred_region
        %s10237 = ssub.s32 %s21, 2
        // Predicated region
        $region69: #{tpu_custom_call.1} parent=67 // pred_check
          %p10238 = pneg %p205
        $region70: #{tpu_custom_call.1} parent=67 // pred_check_branch
          %10240 = sbr.rel (%p10238) target = $region72
        $region71: #{tpu_custom_call.1} parent=67 // pred_region
          %s10241 = sand.u32 %s190, 1
          %s10242 = scalar_lea.sflag [#allocation7], %s10241
          %s10243 = sand.u32 %s190, 1
          %s10244 = smul.addr %s10243, 128
          %s10245 = scalar_lea.vmem [#allocation10], %s10244
          %10246 = dma.done %s10242, 2048
        $region72: #{tpu_custom_call.1} parent=67 // pred_fallthru
          _
      $region68: #{tpu_custom_call.1} parent=5 // pred_fallthru
        _
    $region6: #{tpu_custom_call.1} parent=1 // loop_footer
      %s25 = sadd.s32 1, %s21
    $region7: #{tpu_custom_call.1} parent=1 // loop_footer_branch
      %20 = sbr.rel target = $region3
    $region8: #{tpu_custom_call.1} parent=1 // loop_exit
      _
    %10247 = vsyncpa [#allocation6], 1
    %s10248 = scalar_lea.sflag [#allocation6], 1
    %10249 = vsyncpa %s10248, 1
    %10250 = vsyncpa [#allocation9], 1
    %s10251 = scalar_lea.sflag [#allocation9], 1
    %10252 = vsyncpa %s10251, 1
    %10253 = vsyncpa [#allocation7], 1
    %s10254 = scalar_lea.sflag [#allocation7], 1
    %10255 = vsyncpa %s10254, 1

</llo_original>
